<compile_context>
chip_gen: v7x
topology: tpu7x:2x2x1
jax: 0.10.0
libtpu: 0.0.40
codegen_flags: <defaults>
</compile_context>

<pallas_src>
import jax
import jax.numpy as jnp
from jax.experimental import pallas as pl
from jax.experimental.pallas import tpu as pltpu

# Model dims (classic n-gram example).
VOCAB = 32             # vocab_size
EMB = 16               # embedding_dim
CTX = 2                # context_size
HIDDEN = 128           # linear1 output width (fixed at 128 in the module)

# Kernel layout choices.
VOCAB_PAD = 128        # lane-dense padded vocab for the in-kernel compute
TB_MAX = 2048          # max batch tile (v5e scoped-VMEM safe; v6e/v7x MXU-friendly)
COMPUTE_DTYPE = jnp.bfloat16   # MXU input dtype; accumulation stays float32


def ngram_kernel(idx_ref,        # VMEM (TB, CTX) int32 token ids
                 t_ref,          # VMEM (CTX*VOCAB_PAD, HIDDEN) bf16: emb@W1 (+ b1/CTX folded)
                 w2_ref,         # VMEM (HIDDEN, VOCAB_PAD) bf16 (padded cols zero)
                 b2_ref,         # VMEM (1, VOCAB_PAD) f32 (padded lanes zero)
                 out_ref):       # VMEM (TB, VOCAB) f32 log-probs
    tb = idx_ref.shape[0]

    # ---- Layer 1, fused over the context: one K = CTX*VOCAB_PAD matmul. ----
    # Build a (TB, CTX*128) one-hot: lane block i is onehot(tok_i).  All ops are
    # VPU elementwise (no concat / relayout), then a single MXU dot.
    lane_k = jax.lax.broadcasted_iota(jnp.int32, (tb, CTX * VOCAB_PAD), 1)
    lane_mod = lane_k & (VOCAB_PAD - 1)          # lane index within each 128 block
    tok = idx_ref[:, 0:1]                        # (TB, 1)
    for i in range(1, CTX):                      # static, CTX-1 selects
        tok = jnp.where(lane_k >= i * VOCAB_PAD, idx_ref[:, i:i + 1], tok)
    onehot = (lane_mod == tok).astype(COMPUTE_DTYPE)          # (TB, CTX*128)

    # relu(embeds.view(1,-1) @ W1 + b1) == relu(onehot @ T), b1 folded into T.
    h = jnp.dot(onehot, t_ref[...], preferred_element_type=jnp.float32)
    h = jnp.maximum(h, 0.0)                                    # ReLU in f32

    # ---- Layer 2. ----
    logits = jnp.dot(h.astype(COMPUTE_DTYPE), w2_ref[...],
                     preferred_element_type=jnp.float32) + b2_ref[...]

    # Mask padded vocab lanes before the softmax reductions.
    lane_v = jax.lax.broadcasted_iota(jnp.int32, (tb, VOCAB_PAD), 1)
    logits = jnp.where(lane_v < VOCAB, logits, jnp.float32(-1e30))

    # log_softmax over dim=1 (numerically stable, f32).
    m = jnp.max(logits, axis=1, keepdims=True)
    shifted = logits - m
    lse = jnp.log(jnp.sum(jnp.exp(shifted), axis=1, keepdims=True))

    # Store only the real vocab lanes: (TB, 32) direct output, no wrapper slice.
    out_ref[...] = (shifted - lse)[:, :VOCAB]


def prepare_params(emb, w1, b1, w2, b2):
    """One-time fold / pad / cast of the module parameters for the kernel."""
    # T[i] = emb @ W1[i*EMB:(i+1)*EMB, :] + b1/CTX   (b1 folded: each one-hot row
    # sums to exactly 1, so the CTX blocks together contribute the full b1).
    t = jnp.stack([emb @ w1[i * EMB:(i + 1) * EMB, :] + b1 / CTX
                   for i in range(CTX)])                       # (CTX, VOCAB, HIDDEN)
    t_pad = jnp.zeros((CTX, VOCAB_PAD, HIDDEN), jnp.float32).at[:, :VOCAB, :].set(t)
    t_pad = t_pad.reshape(CTX * VOCAB_PAD, HIDDEN).astype(COMPUTE_DTYPE)
    w2_pad = jnp.zeros((HIDDEN, VOCAB_PAD), jnp.float32).at[:, :VOCAB].set(w2)
    w2_pad = w2_pad.astype(COMPUTE_DTYPE)
    b2_pad = jnp.zeros((1, VOCAB_PAD), jnp.float32).at[:, :VOCAB].set(b2)
    return t_pad, w2_pad, b2_pad


def _choose_tile(batch, tb_max=TB_MAX):
    """Pick a batch tile: as large as safe, but keep >= 2 grid steps when we can
    (so v7x's two TensorCores both get a share of the 'parallel' batch axis)."""
    if batch >= 2 * tb_max:
        return tb_max
    tb = max(8, pl.cdiv(batch, 2))
    return ((tb + 7) // 8) * 8          # sublane-aligned


def ngram_forward(indices, params):
    """indices: (B, CTX) int32 token ids.
    Returns (B, VOCAB) float32 log-probs (row b == module forward(indices[b]))."""
    t_pad, w2_pad, b2_pad = params
    B = indices.shape[0]
    tb = _choose_tile(B)
    grid = pl.cdiv(B, tb)
    b_pad = grid * tb
    if b_pad != B:
        indices = jnp.pad(indices, ((0, b_pad - B), (0, 0)))   # pad rows (token 0)

    cost = pl.CostEstimate(
        flops=2 * b_pad * HIDDEN * (CTX * VOCAB_PAD + VOCAB_PAD),
        transcendentals=b_pad * (VOCAB_PAD + 1),
        bytes_accessed=(b_pad * CTX * 4 + t_pad.size * 2 + w2_pad.size * 2
                        + b2_pad.size * 4 + b_pad * VOCAB * 4),
    )

    out = pl.pallas_call(
        ngram_kernel,
        out_shape=jax.ShapeDtypeStruct((b_pad, VOCAB), jnp.float32),
        grid=(grid,),
        in_specs=[
            pl.BlockSpec((tb, CTX), lambda b: (b, 0)),                  # per-tile ids
            pl.BlockSpec((CTX * VOCAB_PAD, HIDDEN), lambda b: (0, 0)),  # resident
            pl.BlockSpec((HIDDEN, VOCAB_PAD), lambda b: (0, 0)),        # resident
            pl.BlockSpec((1, VOCAB_PAD), lambda b: (0, 0)),             # resident
        ],
        out_specs=pl.BlockSpec((tb, VOCAB), lambda b: (b, 0)),
        compiler_params=pltpu.CompilerParams(
            dimension_semantics=("parallel",),      # v7x: shard batch over both TCs
            vmem_limit_bytes=32 * 1024 * 1024,      # headroom for large TB (v5e default is 16 MiB)
        ),
        cost_estimate=cost,
    )(indices, t_pad, w2_pad, b2_pad)
    return out if b_pad == B else out[:B]


def reference_forward(indices, emb, w1, b1, w2, b2):
    """Pure-JAX f32 reference mirroring the PyTorch forward, one row per context."""
    embeds = emb[indices].reshape(indices.shape[0], CTX * EMB)
    out = jnp.maximum(embeds @ w1 + b1, 0.0)
    out = out @ w2 + b2
    return jax.nn.log_softmax(out, axis=-1)


if __name__ == "__main__":
    key = jax.random.PRNGKey(0)
    k_emb, k_w1, k_b1, k_w2, k_b2, k_idx, k_idx2 = jax.random.split(key, 7)

    # Deterministic synthetic parameters (shapes per module __init__).
    emb = jax.random.normal(k_emb, (VOCAB, EMB), dtype=jnp.float32)
    w1 = jax.random.normal(k_w1, (CTX * EMB, HIDDEN), dtype=jnp.float32) * 0.1
    b1 = jax.random.normal(k_b1, (1, HIDDEN), dtype=jnp.float32) * 0.1
    w2 = jax.random.normal(k_w2, (HIDDEN, VOCAB), dtype=jnp.float32) * 0.1
    b2 = jax.random.normal(k_b2, (1, VOCAB), dtype=jnp.float32) * 0.1
    params = prepare_params(emb, w1, b1, w2, b2)

    # Main batch: 2 tiles of TB=2048 (grid of 2 -> both v7x TCs busy).
    # Note: out-of-range ids would merely select a zeroed one-hot row (no OOB
    # VMEM access possible); PyTorch's embedding would raise instead.
    B = 4096
    indices = jax.random.randint(k_idx, (B, CTX), 0, VOCAB, dtype=jnp.int32)
    log_probs = jax.block_until_ready(ngram_forward(indices, params))
    ref = reference_forward(indices, emb, w1, b1, w2, b2)
    assert log_probs.shape == (B, VOCAB)
    max_err = float(jnp.max(jnp.abs(log_probs - ref)))
    # bf16 matmul inputs with f32 accumulation: errors of a few 1e-3 expected.
    assert max_err < 5e-2, f"mismatch vs reference (B={B}): max_err={max_err}"

    # Ragged small batch: exercises tile selection + row padding path.
    B2 = 100
    idx2 = jax.random.randint(k_idx2, (B2, CTX), 0, VOCAB, dtype=jnp.int32)
    out2 = jax.block_until_ready(ngram_forward(idx2, params))
    ref2 = reference_forward(idx2, emb, w1, b1, w2, b2)
    assert out2.shape == (B2, VOCAB)
    max_err2 = float(jnp.max(jnp.abs(out2 - ref2)))
    assert max_err2 < 5e-2, f"mismatch vs reference (B={B2}): max_err={max_err2}"

    print("KERNEL_OK")
</pallas_src>

<mosaic_0001>
module attributes {stable_mosaic.version = 11 : i64} {
  func.func @ngram_kernel(%arg0: i32, %arg1: memref<2048x2xi32, #tpu.memory_space<vmem>>, %arg2: memref<256x128xbf16, #tpu.memory_space<vmem>>, %arg3: memref<128x128xbf16, #tpu.memory_space<vmem>>, %arg4: memref<1x128xf32, #tpu.memory_space<vmem>>, %arg5: memref<2048x32xf32, #tpu.memory_space<vmem>>) attributes {dimension_semantics = [#tpu.dimension_semantics<parallel>], iteration_bounds = array<i64: 2>, scalar_prefetch = 0 : i64, scratch_operands = 0 : i64, tpu.core_type = #tpu.core_type<tc>, window_params = [{transform_indices = @transform_0, window_bounds = array<i64: 2048, 2>}, {pipeline_mode = #tpu.pipeline_mode<synchronous>, transform_indices = @transform_1, window_bounds = array<i64: 256, 128>}, {pipeline_mode = #tpu.pipeline_mode<synchronous>, transform_indices = @transform_2, window_bounds = array<i64: 128, 128>}, {pipeline_mode = #tpu.pipeline_mode<synchronous>, transform_indices = @transform_3, window_bounds = array<i64: 1, 128>}, {transform_indices = @transform_4, window_bounds = array<i64: 2048, 32>}]} {
    %0 = tpu.iota {dimensions = array<i32: 1>} : vector<2048x256xi32>
    %c127_i32 = arith.constant 127 : i32
    %1 = vector.broadcast %c127_i32 : i32 to vector<2048x256xi32>
    %2 = arith.andi %0, %1 : vector<2048x256xi32>
    %c0 = arith.constant 0 : index
    %c0_0 = arith.constant 0 : index
    %3 = vector.load %arg1[%c0, %c0_0] : memref<2048x2xi32, #tpu.memory_space<vmem>>, vector<2048x1xi32>
    %c128_i32 = arith.constant 128 : i32
    %4 = vector.broadcast %c128_i32 : i32 to vector<2048x256xi32>
    %5 = arith.cmpi sge, %0, %4 : vector<2048x256xi32>
    %c0_1 = arith.constant 0 : index
    %c1 = arith.constant 1 : index
    %6 = vector.load %arg1[%c0_1, %c1] : memref<2048x2xi32, #tpu.memory_space<vmem>>, vector<2048x1xi32>
    %7 = vector.shape_cast %6 : vector<2048x1xi32> to vector<2048x1xi32>
    %8 = vector.broadcast %7 : vector<2048x1xi32> to vector<2048x256xi32>
    %9 = vector.shape_cast %3 : vector<2048x1xi32> to vector<2048x1xi32>
    %10 = vector.broadcast %9 : vector<2048x1xi32> to vector<2048x256xi32>
    %11 = arith.select %5, %8, %10 : vector<2048x256xi1>, vector<2048x256xi32>
    %12 = arith.cmpi eq, %2, %11 : vector<2048x256xi32>
    %13 = arith.extui %12 : vector<2048x256xi1> to vector<2048x256xi32>
    %14 = arith.sitofp %13 : vector<2048x256xi32> to vector<2048x256xf32>
    %15 = arith.truncf %14 : vector<2048x256xf32> to vector<2048x256xbf16>
    %c0_2 = arith.constant 0 : index
    %c0_3 = arith.constant 0 : index
    %16 = vector.load %arg2[%c0_2, %c0_3] : memref<256x128xbf16, #tpu.memory_space<vmem>>, vector<256x128xbf16>
    %cst = arith.constant dense<0.000000e+00> : vector<2048x128xf32>
    %17 = tpu.matmul %15, %16, %cst {dimension_numbers = #tpu.dot_dimension_numbers<[1], [0], [0], [1], [0, 0, 1, 1], [], []>} : vector<2048x256xbf16>, vector<256x128xbf16>, vector<2048x128xf32> -> vector<2048x128xf32>
    %cst_4 = arith.constant 0.000000e+00 : f32
    %18 = vector.broadcast %cst_4 : f32 to vector<2048x128xf32>
    %19 = arith.maximumf %17, %18 : vector<2048x128xf32>
    %20 = arith.truncf %19 : vector<2048x128xf32> to vector<2048x128xbf16>
    %c0_5 = arith.constant 0 : index
    %c0_6 = arith.constant 0 : index
    %21 = vector.load %arg3[%c0_5, %c0_6] : memref<128x128xbf16, #tpu.memory_space<vmem>>, vector<128x128xbf16>
    %cst_7 = arith.constant dense<0.000000e+00> : vector<2048x128xf32>
    %22 = tpu.matmul %20, %21, %cst_7 {dimension_numbers = #tpu.dot_dimension_numbers<[1], [0], [0], [1], [0, 0, 1, 1], [], []>} : vector<2048x128xbf16>, vector<128x128xbf16>, vector<2048x128xf32> -> vector<2048x128xf32>
    %c0_8 = arith.constant 0 : index
    %c0_9 = arith.constant 0 : index
    %23 = vector.load %arg4[%c0_8, %c0_9] : memref<1x128xf32, #tpu.memory_space<vmem>>, vector<1x128xf32>
    %24 = vector.broadcast %23 : vector<1x128xf32> to vector<2048x128xf32>
    %25 = arith.addf %22, %24 : vector<2048x128xf32>
    %26 = tpu.iota {dimensions = array<i32: 1>} : vector<2048x128xi32>
    %c32_i32 = arith.constant 32 : i32
    %27 = vector.broadcast %c32_i32 : i32 to vector<2048x128xi32>
    %28 = arith.cmpi slt, %26, %27 : vector<2048x128xi32>
    %cst_10 = arith.constant -1.000000e+30 : f32
    %29 = vector.broadcast %cst_10 : f32 to vector<2048x128xf32>
    %30 = arith.select %28, %25, %29 : vector<2048x128xi1>, vector<2048x128xf32>
    %cst_11 = arith.constant dense<0xFF800000> : vector<2048xf32>
    %31 = vector.multi_reduction <maximumf>, %30, %cst_11 [1] : vector<2048x128xf32> to vector<2048xf32>
    %32 = vector.shape_cast %31 : vector<2048xf32> to vector<2048x1xf32>
    %33 = vector.broadcast %32 : vector<2048x1xf32> to vector<2048x128xf32>
    %34 = arith.subf %30, %33 : vector<2048x128xf32>
    %35 = math.exp %34 : vector<2048x128xf32>
    %cst_12 = arith.constant dense<0.000000e+00> : vector<2048xf32>
    %36 = vector.multi_reduction <add>, %35, %cst_12 [1] : vector<2048x128xf32> to vector<2048xf32>
    %37 = vector.shape_cast %36 : vector<2048xf32> to vector<2048x1xf32>
    %38 = math.log %37 : vector<2048x1xf32>
    %39 = vector.broadcast %38 : vector<2048x1xf32> to vector<2048x128xf32>
    %40 = arith.subf %34, %39 : vector<2048x128xf32>
    %41 = vector.extract_strided_slice %40 {offsets = [0, 0], sizes = [2048, 32], strides = [1, 1]} : vector<2048x128xf32> to vector<2048x32xf32>
    %c0_13 = arith.constant 0 : index
    %c0_14 = arith.constant 0 : index
    %42 = vector.load %arg5[%c0_13, %c0_14] : memref<2048x32xf32, #tpu.memory_space<vmem>>, vector<2048x32xf32>
    tpu.vector_store %arg5[%c0_13, %c0_14], %41 {strides = array<i32>} : memref<2048x32xf32, #tpu.memory_space<vmem>>, vector<2048x32xf32>,
    return
  }
  func.func @transform_0(%arg0: i32) -> (i32, i32) {
    %c0_i32 = arith.constant 0 : i32
    %c0_i32_0 = arith.constant 0 : i32
    return %arg0, %c0_i32 : i32, i32
  }
  func.func @transform_1(%arg0: i32) -> (i32, i32) {
    %c0_i32 = arith.constant 0 : i32
    %c0_i32_0 = arith.constant 0 : i32
    %c0_i32_1 = arith.constant 0 : i32
    return %c0_i32, %c0_i32_0 : i32, i32
  }
  func.func @transform_2(%arg0: i32) -> (i32, i32) {
    %c0_i32 = arith.constant 0 : i32
    %c0_i32_0 = arith.constant 0 : i32
    %c0_i32_1 = arith.constant 0 : i32
    return %c0_i32, %c0_i32_0 : i32, i32
  }
  func.func @transform_3(%arg0: i32) -> (i32, i32) {
    %c0_i32 = arith.constant 0 : i32
    %c0_i32_0 = arith.constant 0 : i32
    %c0_i32_1 = arith.constant 0 : i32
    return %c0_i32, %c0_i32_0 : i32, i32
  }
  func.func @transform_4(%arg0: i32) -> (i32, i32) {
    %c0_i32 = arith.constant 0 : i32
    %c0_i32_0 = arith.constant 0 : i32
    return %arg0, %c0_i32 : i32, i32
  }
}

</mosaic_0001>

<llo_original>
// kernel: tpu_custom_call.1
$region0: #{tpu_custom_call.1}
  #allocation0 [shape = 'u32[]', space=smem, size = 0x4, offset = 0x4, fixed_abs, tag = 'smem constant byte address 0x4 - core index']
  #allocation1 [shape = 'u32[144,128]{1,0:T(1,128)}', space=vmem, size = 0x12000, scoped, tag = 'internal scratch']
  %s0 = inlined_call_operand.vmem [shape: s32[4096,2], index: 0, kind: input, shape index: {}]
  %s1 = inlined_call_operand.vmem [shape: bf16[256,128], index: 1, kind: input, shape index: {}]
  %s2 = inlined_call_operand.vmem [shape: bf16[128,128], index: 2, kind: input, shape index: {}]
  %s3 = inlined_call_operand.vmem [shape: f32[1,128], index: 3, kind: input, shape index: {}]
  %s4 = inlined_call_operand.vmem [shape: f32[4096,32], index: 4, kind: output, shape index: {}]
  %s5 = sld [smem:[#allocation0]]
  $region49: #{tpu_custom_call.1} parent=0
    _
  %s7 = ssub.s32 1, %s5
  %s8 = scalar_select 0, %s7, %s5
  loop: start=0, step=1, limit=4
  $region2: #{tpu_custom_call.1} parent=0 // loop_pre_header
    _
  $region3: #{tpu_custom_call.1} parent=0 // loop_header
    %s10 = sphi 0, %s14
    %p11 = scmp.ge.s32.totalorder %s10, 4
    %s20 = sphi 0, %s22
    %s23 = sphi 0, %s20
    %s24 = sphi 0, %s23
    %s40 = sphi 0, %s24
    %s44 = sphi 0, %s44
    %s46 = sphi 0, %s44
    %s47 = sphi 0, %s46
    %s61 = sphi 0, %s47
    %s65 = sphi 0, %s65
    %s67 = sphi 0, %s65
    %s68 = sphi 0, %s67
    %s82 = sphi 0, %s68
    %s86 = sphi 0, %s86
    %s88 = sphi 0, %s86
    %s89 = sphi 0, %s88
    %s103 = sphi 0, %s89
    %s109 = sphi 0, %s111
    %s112 = sphi 0, %s109
    %s113 = sphi 0, %s112
    %s129 = sphi 0, %s113
  $region4: #{tpu_custom_call.1} parent=0 // loop_header_branch
    %13 = sbr.rel (%p11) target = $region8
  $region5: #{tpu_custom_call.1} parent=0 // loop_body
    %s15 = ssub.s32 %s10, 1
    %s16 = ssub.s32 %s10, 2
    %s17 = sadd.s32 %s10, 1
    %s18 = ssub.s32 %s10, %s17
    %p19 = scmp.eq.s32.totalorder %s18, 0
    %s21 = sadd.s32 %s20, 1
    %s22 = scalar_select %p19, %s20, %s21
    %p25 = pneg %p19
    %p26 = scmp.eq.s32.totalorder %s10, 1
    %p27 = por %p25, %p26
    %p28 = scmp.ne.s32.totalorder %s20, %s23
    %p29 = scmp.eq.s32.totalorder %s10, 0
    %p30 = por %p28, %p29
    %p31 = scmp.ne.s32.totalorder %s20, %s23
    %p32 = scmp.eq.s32.totalorder %s15, 1
    %p33 = por %p31, %p32
    %p34 = scmp.ne.s32.totalorder %s23, %s24
    %p35 = scmp.eq.s32.totalorder %s15, 0
    %p36 = por %p34, %p35
    %p37 = scmp.ne.s32.totalorder %s23, %s24
    %p38 = scmp.eq.s32.totalorder %s16, 1
    %p39 = por %p37, %p38
    %p41 = scmp.ne.s32.totalorder %s24, %s40
    %p42 = scmp.eq.s32.totalorder %s16, 0
    %p43 = por %p41, %p42
    %s45 = sadd.s32 %s44, 1
    %p48 = scmp.eq.s32.totalorder %s10, 1
    %p49 = scmp.ne.s32.totalorder %s44, %s46
    %p50 = scmp.eq.s32.totalorder %s10, 0
    %p51 = por %p49, %p50
    %p52 = scmp.ne.s32.totalorder %s44, %s46
    %p53 = scmp.eq.s32.totalorder %s15, 1
    %p54 = por %p52, %p53
    %p55 = scmp.ne.s32.totalorder %s46, %s47
    %p56 = scmp.eq.s32.totalorder %s15, 0
    %p57 = por %p55, %p56
    %p58 = scmp.ne.s32.totalorder %s46, %s47
    %p59 = scmp.eq.s32.totalorder %s16, 1
    %p60 = por %p58, %p59
    %p62 = scmp.ne.s32.totalorder %s47, %s61
    %p63 = scmp.eq.s32.totalorder %s16, 0
    %p64 = por %p62, %p63
    %s66 = sadd.s32 %s65, 1
    %p69 = scmp.eq.s32.totalorder %s10, 1
    %p70 = scmp.ne.s32.totalorder %s65, %s67
    %p71 = scmp.eq.s32.totalorder %s10, 0
    %p72 = por %p70, %p71
    %p73 = scmp.ne.s32.totalorder %s65, %s67
    %p74 = scmp.eq.s32.totalorder %s15, 1
    %p75 = por %p73, %p74
    %p76 = scmp.ne.s32.totalorder %s67, %s68
    %p77 = scmp.eq.s32.totalorder %s15, 0
    %p78 = por %p76, %p77
    %p79 = scmp.ne.s32.totalorder %s67, %s68
    %p80 = scmp.eq.s32.totalorder %s16, 1
    %p81 = por %p79, %p80
    %p83 = scmp.ne.s32.totalorder %s68, %s82
    %p84 = scmp.eq.s32.totalorder %s16, 0
    %p85 = por %p83, %p84
    %s87 = sadd.s32 %s86, 1
    %p90 = scmp.eq.s32.totalorder %s10, 1
    %p91 = scmp.ne.s32.totalorder %s86, %s88
    %p92 = scmp.eq.s32.totalorder %s10, 0
    %p93 = por %p91, %p92
    %p94 = scmp.ne.s32.totalorder %s86, %s88
    %p95 = scmp.eq.s32.totalorder %s15, 1
    %p96 = por %p94, %p95
    %p97 = scmp.ne.s32.totalorder %s88, %s89
    %p98 = scmp.eq.s32.totalorder %s15, 0
    %p99 = por %p97, %p98
    %p100 = scmp.ne.s32.totalorder %s88, %s89
    %p101 = scmp.eq.s32.totalorder %s16, 1
    %p102 = por %p100, %p101
    %p104 = scmp.ne.s32.totalorder %s89, %s103
    %p105 = scmp.eq.s32.totalorder %s16, 0
    %p106 = por %p104, %p105
    %s107 = ssub.s32 %s10, %s17
    %p108 = scmp.eq.s32.totalorder %s107, 0
    %s110 = sadd.s32 %s109, 1
    %s111 = scalar_select %p108, %s109, %s110
    %p114 = pneg %p108
    %p115 = scmp.eq.s32.totalorder %s10, 1
    %p116 = por %p114, %p115
    %p117 = scmp.ne.s32.totalorder %s109, %s112
    %p118 = scmp.eq.s32.totalorder %s10, 0
    %p119 = por %p117, %p118
    %p120 = scmp.ne.s32.totalorder %s109, %s112
    %p121 = scmp.eq.s32.totalorder %s15, 1
    %p122 = por %p120, %p121
    %p123 = scmp.ne.s32.totalorder %s112, %s113
    %p124 = scmp.eq.s32.totalorder %s15, 0
    %p125 = por %p123, %p124
    %p126 = scmp.ne.s32.totalorder %s112, %s113
    %p127 = scmp.eq.s32.totalorder %s16, 1
    %p128 = por %p126, %p127
    %p130 = scmp.ne.s32.totalorder %s113, %s129
    %p131 = scmp.eq.s32.totalorder %s16, 0
    %p132 = por %p130, %p131
    %p133 = scmp.le.s32.totalorder 1, %s10
    %p134 = scmp.lt.s32.totalorder %s10, 3
    %p135 = pnand %p133, %p134
    %p136 = pneg %p135
    // Predicated region
    $region9: #{tpu_custom_call.1} parent=5 // pred_check
      _
    $region10: #{tpu_custom_call.1} parent=5 // pred_check_branch
      %138 = sbr.rel (%p135) target = $region12
    $region11: #{tpu_custom_call.1} parent=5 // pred_region
      %s139 = ssub.s32 %s10, 1
      // Predicated region
      $region13: #{tpu_custom_call.1} parent=11 // pred_check
        %p140 = pneg %p57
      $region14: #{tpu_custom_call.1} parent=11 // pred_check_branch
        %142 = sbr.rel (%p140) target = $region16
      $region15: #{tpu_custom_call.1} parent=11 // pred_region
        _
      $region16: #{tpu_custom_call.1} parent=11 // pred_fallthru
        _
      // Predicated region
      $region17: #{tpu_custom_call.1} parent=11 // pred_check
        %p143 = pneg %p78
      $region18: #{tpu_custom_call.1} parent=11 // pred_check_branch
        %145 = sbr.rel (%p143) target = $region20
      $region19: #{tpu_custom_call.1} parent=11 // pred_region
        _
      $region20: #{tpu_custom_call.1} parent=11 // pred_fallthru
        _
      // Predicated region
      $region21: #{tpu_custom_call.1} parent=11 // pred_check
        %p146 = pneg %p99
      $region22: #{tpu_custom_call.1} parent=11 // pred_check_branch
        %148 = sbr.rel (%p146) target = $region24
      $region23: #{tpu_custom_call.1} parent=11 // pred_region
        _
      $region24: #{tpu_custom_call.1} parent=11 // pred_fallthru
        _
    $region12: #{tpu_custom_call.1} parent=5 // pred_fallthru
      _
    %p149 = scmp.lt.s32.totalorder %s10, 2
    // Predicated region
    $region25: #{tpu_custom_call.1} parent=5 // pred_check
      %p150 = pneg %p149
    $region26: #{tpu_custom_call.1} parent=5 // pred_check_branch
      %152 = sbr.rel (%p150) target = $region28
    $region27: #{tpu_custom_call.1} parent=5 // pred_region
      // Predicated region
      $region29: #{tpu_custom_call.1} parent=27 // pred_check
        %p153 = pneg %p30
      $region30: #{tpu_custom_call.1} parent=27 // pred_check_branch
        %155 = sbr.rel (%p153) target = $region32
      $region31: #{tpu_custom_call.1} parent=27 // pred_region
        %s156 = smul.u32 256, %s10
        %p157 = scmp.lt.s32.totalorder %s156, 511
        %s158 = scalar_select %p157, %s156, 511
        %s159 = smul.addr %s158, 8
        %s160 = scalar_lea.vmem %s0, %s159
        %s161 = smul.u32 256, %s10
      $region32: #{tpu_custom_call.1} parent=27 // pred_fallthru
        _
    $region28: #{tpu_custom_call.1} parent=5 // pred_fallthru
      _
    %p162 = scmp.le.s32.totalorder 1, %s10
    %p163 = scmp.lt.s32.totalorder %s10, 3
    %p164 = pnand %p162, %p163
    %p165 = pneg %p164
    // Predicated region
    $region33: #{tpu_custom_call.1} parent=5 // pred_check
      _
    $region34: #{tpu_custom_call.1} parent=5 // pred_check_branch
      %167 = sbr.rel (%p164) target = $region36
    $region35: #{tpu_custom_call.1} parent=5 // pred_region
      %s168 = ssub.s32 %s10, 1
      %s169 = smul.u32 256, %s15
      %p170 = scmp.lt.s32.totalorder %s169, 511
      %s171 = scalar_select %p170, %s169, 511
      %s172 = smul.addr %s171, 8
      %s173 = scalar_lea.vmem %s0, %s172
      %p174 = pneg %p36
      %p175 = pneg %p33
      %p176 = pneg %p57
      %p177 = pneg %p54
      %p178 = pneg %p78
      %p179 = pneg %p75
      %p180 = pneg %p99
      %p181 = pneg %p96
      %p182 = pneg %p125
      %p183 = pneg %p122
      %s184 = smul.u32 256, %s15
      %p185 = scmp.lt.s32.totalorder %s184, 511
      %s186 = scalar_select %p185, %s184, 511
      %s187 = smul.addr %s186, 8
      %s188 = scalar_lea.vmem %s4, %s187
      %s189 = smul.u32 256, %s15
      %p190 = scmp.lt.s32.totalorder %s189, 511
      %s191 = scalar_select %p190, %s189, 511
      %s192 = smul.addr %s191, 8
      %s193 = scalar_lea.vmem %s0, %s192
      %s194 = smul.u32 256, %s15
      %s195 = smul.u32 256, %s15
      %p196 = scmp.lt.s32.totalorder %s195, 511
      %s197 = scalar_select %p196, %s195, 511
      %s198 = smul.addr %s197, 8
      %s199 = scalar_lea.vmem %s4, %s198
      %s200 = smul.u32 256, %s15
      %v202 = vlaneseq
      %v203 = vand.u32 %v202, 127
      %v204 = vadd.s32 %v203, 128
      %v205 = vand.u32 %v203, 127
      %v206 = vand.u32 %v204, 127
      %v207 = vld [vmem:[%s193] sm:$0xff]
      %v208 = vld [vmem:[%s193 + $0x8] sm:$0xff]
      %v209 = vld [vmem:[%s193 + $0x10] sm:$0xff]
      %v210 = vld [vmem:[%s193 + $0x18] sm:$0xff]
      %v211 = vld [vmem:[%s193 + $0x20] sm:$0xff]
      %v212 = vld [vmem:[%s193 + $0x28] sm:$0xff]
      %v213 = vld [vmem:[%s193 + $0x30] sm:$0xff]
      %v214 = vld [vmem:[%s193 + $0x38] sm:$0xff]
      %v215 = vld [vmem:[%s193 + $0x40] sm:$0xff]
      %v216 = vld [vmem:[%s193 + $0x48] sm:$0xff]
      %v217 = vld [vmem:[%s193 + $0x50] sm:$0xff]
      %v218 = vld [vmem:[%s193 + $0x58] sm:$0xff]
      %v219 = vld [vmem:[%s193 + $0x60] sm:$0xff]
      %v220 = vld [vmem:[%s193 + $0x68] sm:$0xff]
      %v221 = vld [vmem:[%s193 + $0x70] sm:$0xff]
      %v222 = vld [vmem:[%s193 + $0x78] sm:$0xff]
      %v223 = vld [vmem:[%s193 + $0x80] sm:$0xff]
      %v224 = vld [vmem:[%s193 + $0x88] sm:$0xff]
      %v225 = vld [vmem:[%s193 + $0x90] sm:$0xff]
      %v226 = vld [vmem:[%s193 + $0x98] sm:$0xff]
      %v227 = vld [vmem:[%s193 + $0xa0] sm:$0xff]
      %v228 = vld [vmem:[%s193 + $0xa8] sm:$0xff]
      %v229 = vld [vmem:[%s193 + $0xb0] sm:$0xff]
      %v230 = vld [vmem:[%s193 + $0xb8] sm:$0xff]
      %v231 = vld [vmem:[%s193 + $0xc0] sm:$0xff]
      %v232 = vld [vmem:[%s193 + $0xc8] sm:$0xff]
      %v233 = vld [vmem:[%s193 + $0xd0] sm:$0xff]
      %v234 = vld [vmem:[%s193 + $0xd8] sm:$0xff]
      %v235 = vld [vmem:[%s193 + $0xe0] sm:$0xff]
      %v236 = vld [vmem:[%s193 + $0xe8] sm:$0xff]
      %v237 = vld [vmem:[%s193 + $0xf0] sm:$0xff]
      %v238 = vld [vmem:[%s193 + $0xf8] sm:$0xff]
      %v239 = vld [vmem:[%s193 + $0x100] sm:$0xff]
      %v240 = vld [vmem:[%s193 + $0x108] sm:$0xff]
      %v241 = vld [vmem:[%s193 + $0x110] sm:$0xff]
      %v242 = vld [vmem:[%s193 + $0x118] sm:$0xff]
      %v243 = vld [vmem:[%s193 + $0x120] sm:$0xff]
      %v244 = vld [vmem:[%s193 + $0x128] sm:$0xff]
      %v245 = vld [vmem:[%s193 + $0x130] sm:$0xff]
      %v246 = vld [vmem:[%s193 + $0x138] sm:$0xff]
      %v247 = vld [vmem:[%s193 + $0x140] sm:$0xff]
      %v248 = vld [vmem:[%s193 + $0x148] sm:$0xff]
      %v249 = vld [vmem:[%s193 + $0x150] sm:$0xff]
      %v250 = vld [vmem:[%s193 + $0x158] sm:$0xff]
      %v251 = vld [vmem:[%s193 + $0x160] sm:$0xff]
      %v252 = vld [vmem:[%s193 + $0x168] sm:$0xff]
      %v253 = vld [vmem:[%s193 + $0x170] sm:$0xff]
      %v254 = vld [vmem:[%s193 + $0x178] sm:$0xff]
      %v255 = vld [vmem:[%s193 + $0x180] sm:$0xff]
      %v256 = vld [vmem:[%s193 + $0x188] sm:$0xff]
      %v257 = vld [vmem:[%s193 + $0x190] sm:$0xff]
      %v258 = vld [vmem:[%s193 + $0x198] sm:$0xff]
      %v259 = vld [vmem:[%s193 + $0x1a0] sm:$0xff]
      %v260 = vld [vmem:[%s193 + $0x1a8] sm:$0xff]
      %v261 = vld [vmem:[%s193 + $0x1b0] sm:$0xff]
      %v262 = vld [vmem:[%s193 + $0x1b8] sm:$0xff]
      %v263 = vld [vmem:[%s193 + $0x1c0] sm:$0xff]
      %v264 = vld [vmem:[%s193 + $0x1c8] sm:$0xff]
      %v265 = vld [vmem:[%s193 + $0x1d0] sm:$0xff]
      %v266 = vld [vmem:[%s193 + $0x1d8] sm:$0xff]
      %v267 = vld [vmem:[%s193 + $0x1e0] sm:$0xff]
      %v268 = vld [vmem:[%s193 + $0x1e8] sm:$0xff]
      %v269 = vld [vmem:[%s193 + $0x1f0] sm:$0xff]
      %v270 = vld [vmem:[%s193 + $0x1f8] sm:$0xff]
      %v271 = vld [vmem:[%s193 + $0x200] sm:$0xff]
      %v272 = vld [vmem:[%s193 + $0x208] sm:$0xff]
      %v273 = vld [vmem:[%s193 + $0x210] sm:$0xff]
      %v274 = vld [vmem:[%s193 + $0x218] sm:$0xff]
      %v275 = vld [vmem:[%s193 + $0x220] sm:$0xff]
      %v276 = vld [vmem:[%s193 + $0x228] sm:$0xff]
      %v277 = vld [vmem:[%s193 + $0x230] sm:$0xff]
      %v278 = vld [vmem:[%s193 + $0x238] sm:$0xff]
      %v279 = vld [vmem:[%s193 + $0x240] sm:$0xff]
      %v280 = vld [vmem:[%s193 + $0x248] sm:$0xff]
      %v281 = vld [vmem:[%s193 + $0x250] sm:$0xff]
      %v282 = vld [vmem:[%s193 + $0x258] sm:$0xff]
      %v283 = vld [vmem:[%s193 + $0x260] sm:$0xff]
      %v284 = vld [vmem:[%s193 + $0x268] sm:$0xff]
      %v285 = vld [vmem:[%s193 + $0x270] sm:$0xff]
      %v286 = vld [vmem:[%s193 + $0x278] sm:$0xff]
      %v287 = vld [vmem:[%s193 + $0x280] sm:$0xff]
      %v288 = vld [vmem:[%s193 + $0x288] sm:$0xff]
      %v289 = vld [vmem:[%s193 + $0x290] sm:$0xff]
      %v290 = vld [vmem:[%s193 + $0x298] sm:$0xff]
      %v291 = vld [vmem:[%s193 + $0x2a0] sm:$0xff]
      %v292 = vld [vmem:[%s193 + $0x2a8] sm:$0xff]
      %v293 = vld [vmem:[%s193 + $0x2b0] sm:$0xff]
      %v294 = vld [vmem:[%s193 + $0x2b8] sm:$0xff]
      %v295 = vld [vmem:[%s193 + $0x2c0] sm:$0xff]
      %v296 = vld [vmem:[%s193 + $0x2c8] sm:$0xff]
      %v297 = vld [vmem:[%s193 + $0x2d0] sm:$0xff]
      %v298 = vld [vmem:[%s193 + $0x2d8] sm:$0xff]
      %v299 = vld [vmem:[%s193 + $0x2e0] sm:$0xff]
      %v300 = vld [vmem:[%s193 + $0x2e8] sm:$0xff]
      %v301 = vld [vmem:[%s193 + $0x2f0] sm:$0xff]
      %v302 = vld [vmem:[%s193 + $0x2f8] sm:$0xff]
      %v303 = vld [vmem:[%s193 + $0x300] sm:$0xff]
      %v304 = vld [vmem:[%s193 + $0x308] sm:$0xff]
      %v305 = vld [vmem:[%s193 + $0x310] sm:$0xff]
      %v306 = vld [vmem:[%s193 + $0x318] sm:$0xff]
      %v307 = vld [vmem:[%s193 + $0x320] sm:$0xff]
      %v308 = vld [vmem:[%s193 + $0x328] sm:$0xff]
      %v309 = vld [vmem:[%s193 + $0x330] sm:$0xff]
      %v310 = vld [vmem:[%s193 + $0x338] sm:$0xff]
      %v311 = vld [vmem:[%s193 + $0x340] sm:$0xff]
      %v312 = vld [vmem:[%s193 + $0x348] sm:$0xff]
      %v313 = vld [vmem:[%s193 + $0x350] sm:$0xff]
      %v314 = vld [vmem:[%s193 + $0x358] sm:$0xff]
      %v315 = vld [vmem:[%s193 + $0x360] sm:$0xff]
      %v316 = vld [vmem:[%s193 + $0x368] sm:$0xff]
      %v317 = vld [vmem:[%s193 + $0x370] sm:$0xff]
      %v318 = vld [vmem:[%s193 + $0x378] sm:$0xff]
      %v319 = vld [vmem:[%s193 + $0x380] sm:$0xff]
      %v320 = vld [vmem:[%s193 + $0x388] sm:$0xff]
      %v321 = vld [vmem:[%s193 + $0x390] sm:$0xff]
      %v322 = vld [vmem:[%s193 + $0x398] sm:$0xff]
      %v323 = vld [vmem:[%s193 + $0x3a0] sm:$0xff]
      %v324 = vld [vmem:[%s193 + $0x3a8] sm:$0xff]
      %v325 = vld [vmem:[%s193 + $0x3b0] sm:$0xff]
      %v326 = vld [vmem:[%s193 + $0x3b8] sm:$0xff]
      %v327 = vld [vmem:[%s193 + $0x3c0] sm:$0xff]
      %v328 = vld [vmem:[%s193 + $0x3c8] sm:$0xff]
      %v329 = vld [vmem:[%s193 + $0x3d0] sm:$0xff]
      %v330 = vld [vmem:[%s193 + $0x3d8] sm:$0xff]
      %v331 = vld [vmem:[%s193 + $0x3e0] sm:$0xff]
      %v332 = vld [vmem:[%s193 + $0x3e8] sm:$0xff]
      %v333 = vld [vmem:[%s193 + $0x3f0] sm:$0xff]
      %v334 = vld [vmem:[%s193 + $0x3f8] sm:$0xff]
      %v335 = vld [vmem:[%s193 + $0x400] sm:$0xff]
      %v336 = vld [vmem:[%s193 + $0x408] sm:$0xff]
      %v337 = vld [vmem:[%s193 + $0x410] sm:$0xff]
      %v338 = vld [vmem:[%s193 + $0x418] sm:$0xff]
      %v339 = vld [vmem:[%s193 + $0x420] sm:$0xff]
      %v340 = vld [vmem:[%s193 + $0x428] sm:$0xff]
      %v341 = vld [vmem:[%s193 + $0x430] sm:$0xff]
      %v342 = vld [vmem:[%s193 + $0x438] sm:$0xff]
      %v343 = vld [vmem:[%s193 + $0x440] sm:$0xff]
      %v344 = vld [vmem:[%s193 + $0x448] sm:$0xff]
      %v345 = vld [vmem:[%s193 + $0x450] sm:$0xff]
      %v346 = vld [vmem:[%s193 + $0x458] sm:$0xff]
      %v347 = vld [vmem:[%s193 + $0x460] sm:$0xff]
      %v348 = vld [vmem:[%s193 + $0x468] sm:$0xff]
      %v349 = vld [vmem:[%s193 + $0x470] sm:$0xff]
      %v350 = vld [vmem:[%s193 + $0x478] sm:$0xff]
      %v351 = vld [vmem:[%s193 + $0x480] sm:$0xff]
      %v352 = vld [vmem:[%s193 + $0x488] sm:$0xff]
      %v353 = vld [vmem:[%s193 + $0x490] sm:$0xff]
      %v354 = vld [vmem:[%s193 + $0x498] sm:$0xff]
      %v355 = vld [vmem:[%s193 + $0x4a0] sm:$0xff]
      %v356 = vld [vmem:[%s193 + $0x4a8] sm:$0xff]
      %v357 = vld [vmem:[%s193 + $0x4b0] sm:$0xff]
      %v358 = vld [vmem:[%s193 + $0x4b8] sm:$0xff]
      %v359 = vld [vmem:[%s193 + $0x4c0] sm:$0xff]
      %v360 = vld [vmem:[%s193 + $0x4c8] sm:$0xff]
      %v361 = vld [vmem:[%s193 + $0x4d0] sm:$0xff]
      %v362 = vld [vmem:[%s193 + $0x4d8] sm:$0xff]
      %v363 = vld [vmem:[%s193 + $0x4e0] sm:$0xff]
      %v364 = vld [vmem:[%s193 + $0x4e8] sm:$0xff]
      %v365 = vld [vmem:[%s193 + $0x4f0] sm:$0xff]
      %v366 = vld [vmem:[%s193 + $0x4f8] sm:$0xff]
      %v367 = vld [vmem:[%s193 + $0x500] sm:$0xff]
      %v368 = vld [vmem:[%s193 + $0x508] sm:$0xff]
      %v369 = vld [vmem:[%s193 + $0x510] sm:$0xff]
      %v370 = vld [vmem:[%s193 + $0x518] sm:$0xff]
      %v371 = vld [vmem:[%s193 + $0x520] sm:$0xff]
      %v372 = vld [vmem:[%s193 + $0x528] sm:$0xff]
      %v373 = vld [vmem:[%s193 + $0x530] sm:$0xff]
      %v374 = vld [vmem:[%s193 + $0x538] sm:$0xff]
      %v375 = vld [vmem:[%s193 + $0x540] sm:$0xff]
      %v376 = vld [vmem:[%s193 + $0x548] sm:$0xff]
      %v377 = vld [vmem:[%s193 + $0x550] sm:$0xff]
      %v378 = vld [vmem:[%s193 + $0x558] sm:$0xff]
      %v379 = vld [vmem:[%s193 + $0x560] sm:$0xff]
      %v380 = vld [vmem:[%s193 + $0x568] sm:$0xff]
      %v381 = vld [vmem:[%s193 + $0x570] sm:$0xff]
      %v382 = vld [vmem:[%s193 + $0x578] sm:$0xff]
      %v383 = vld [vmem:[%s193 + $0x580] sm:$0xff]
      %v384 = vld [vmem:[%s193 + $0x588] sm:$0xff]
      %v385 = vld [vmem:[%s193 + $0x590] sm:$0xff]
      %v386 = vld [vmem:[%s193 + $0x598] sm:$0xff]
      %v387 = vld [vmem:[%s193 + $0x5a0] sm:$0xff]
      %v388 = vld [vmem:[%s193 + $0x5a8] sm:$0xff]
      %v389 = vld [vmem:[%s193 + $0x5b0] sm:$0xff]
      %v390 = vld [vmem:[%s193 + $0x5b8] sm:$0xff]
      %v391 = vld [vmem:[%s193 + $0x5c0] sm:$0xff]
      %v392 = vld [vmem:[%s193 + $0x5c8] sm:$0xff]
      %v393 = vld [vmem:[%s193 + $0x5d0] sm:$0xff]
      %v394 = vld [vmem:[%s193 + $0x5d8] sm:$0xff]
      %v395 = vld [vmem:[%s193 + $0x5e0] sm:$0xff]
      %v396 = vld [vmem:[%s193 + $0x5e8] sm:$0xff]
      %v397 = vld [vmem:[%s193 + $0x5f0] sm:$0xff]
      %v398 = vld [vmem:[%s193 + $0x5f8] sm:$0xff]
      %v399 = vld [vmem:[%s193 + $0x600] sm:$0xff]
      %v400 = vld [vmem:[%s193 + $0x608] sm:$0xff]
      %v401 = vld [vmem:[%s193 + $0x610] sm:$0xff]
      %v402 = vld [vmem:[%s193 + $0x618] sm:$0xff]
      %v403 = vld [vmem:[%s193 + $0x620] sm:$0xff]
      %v404 = vld [vmem:[%s193 + $0x628] sm:$0xff]
      %v405 = vld [vmem:[%s193 + $0x630] sm:$0xff]
      %v406 = vld [vmem:[%s193 + $0x638] sm:$0xff]
      %v407 = vld [vmem:[%s193 + $0x640] sm:$0xff]
      %v408 = vld [vmem:[%s193 + $0x648] sm:$0xff]
      %v409 = vld [vmem:[%s193 + $0x650] sm:$0xff]
      %v410 = vld [vmem:[%s193 + $0x658] sm:$0xff]
      %v411 = vld [vmem:[%s193 + $0x660] sm:$0xff]
      %v412 = vld [vmem:[%s193 + $0x668] sm:$0xff]
      %v413 = vld [vmem:[%s193 + $0x670] sm:$0xff]
      %v414 = vld [vmem:[%s193 + $0x678] sm:$0xff]
      %v415 = vld [vmem:[%s193 + $0x680] sm:$0xff]
      %v416 = vld [vmem:[%s193 + $0x688] sm:$0xff]
      %v417 = vld [vmem:[%s193 + $0x690] sm:$0xff]
      %v418 = vld [vmem:[%s193 + $0x698] sm:$0xff]
      %v419 = vld [vmem:[%s193 + $0x6a0] sm:$0xff]
      %v420 = vld [vmem:[%s193 + $0x6a8] sm:$0xff]
      %v421 = vld [vmem:[%s193 + $0x6b0] sm:$0xff]
      %v422 = vld [vmem:[%s193 + $0x6b8] sm:$0xff]
      %v423 = vld [vmem:[%s193 + $0x6c0] sm:$0xff]
      %v424 = vld [vmem:[%s193 + $0x6c8] sm:$0xff]
      %v425 = vld [vmem:[%s193 + $0x6d0] sm:$0xff]
      %v426 = vld [vmem:[%s193 + $0x6d8] sm:$0xff]
      %v427 = vld [vmem:[%s193 + $0x6e0] sm:$0xff]
      %v428 = vld [vmem:[%s193 + $0x6e8] sm:$0xff]
      %v429 = vld [vmem:[%s193 + $0x6f0] sm:$0xff]
      %v430 = vld [vmem:[%s193 + $0x6f8] sm:$0xff]
      %v431 = vld [vmem:[%s193 + $0x700] sm:$0xff]
      %v432 = vld [vmem:[%s193 + $0x708] sm:$0xff]
      %v433 = vld [vmem:[%s193 + $0x710] sm:$0xff]
      %v434 = vld [vmem:[%s193 + $0x718] sm:$0xff]
      %v435 = vld [vmem:[%s193 + $0x720] sm:$0xff]
      %v436 = vld [vmem:[%s193 + $0x728] sm:$0xff]
      %v437 = vld [vmem:[%s193 + $0x730] sm:$0xff]
      %v438 = vld [vmem:[%s193 + $0x738] sm:$0xff]
      %v439 = vld [vmem:[%s193 + $0x740] sm:$0xff]
      %v440 = vld [vmem:[%s193 + $0x748] sm:$0xff]
      %v441 = vld [vmem:[%s193 + $0x750] sm:$0xff]
      %v442 = vld [vmem:[%s193 + $0x758] sm:$0xff]
      %v443 = vld [vmem:[%s193 + $0x760] sm:$0xff]
      %v444 = vld [vmem:[%s193 + $0x768] sm:$0xff]
      %v445 = vld [vmem:[%s193 + $0x770] sm:$0xff]
      %v446 = vld [vmem:[%s193 + $0x778] sm:$0xff]
      %v447 = vld [vmem:[%s193 + $0x780] sm:$0xff]
      %v448 = vld [vmem:[%s193 + $0x788] sm:$0xff]
      %v449 = vld [vmem:[%s193 + $0x790] sm:$0xff]
      %v450 = vld [vmem:[%s193 + $0x798] sm:$0xff]
      %v451 = vld [vmem:[%s193 + $0x7a0] sm:$0xff]
      %v452 = vld [vmem:[%s193 + $0x7a8] sm:$0xff]
      %v453 = vld [vmem:[%s193 + $0x7b0] sm:$0xff]
      %v454 = vld [vmem:[%s193 + $0x7b8] sm:$0xff]
      %v455 = vld [vmem:[%s193 + $0x7c0] sm:$0xff]
      %v456 = vld [vmem:[%s193 + $0x7c8] sm:$0xff]
      %v457 = vld [vmem:[%s193 + $0x7d0] sm:$0xff]
      %v458 = vld [vmem:[%s193 + $0x7d8] sm:$0xff]
      %v459 = vld [vmem:[%s193 + $0x7e0] sm:$0xff]
      %v460 = vld [vmem:[%s193 + $0x7e8] sm:$0xff]
      %v461 = vld [vmem:[%s193 + $0x7f0] sm:$0xff]
      %v462 = vld [vmem:[%s193 + $0x7f8] sm:$0xff]
      %vm463 = vcmp.ge.s32.totalorder %v203, 128
      %vm464 = vcmp.ge.s32.totalorder %v204, 128
      %465 = vset.pattern.permute.xlu0 1
      %466 = vperm.xlu0 %465, %v207
      %v467 = vpop.permute.xlu0 %466
      %468 = vset.pattern.permute.xlu0 1
      %469 = vperm.xlu0 %468, %v208
      %v470 = vpop.permute.xlu0 %469
      %471 = vset.pattern.permute.xlu0 1
      %472 = vperm.xlu0 %471, %v209
      %v473 = vpop.permute.xlu0 %472
      %474 = vset.pattern.permute.xlu0 1
      %475 = vperm.xlu0 %474, %v210
      %v476 = vpop.permute.xlu0 %475
      %477 = vset.pattern.permute.xlu0 1
      %478 = vperm.xlu0 %477, %v211
      %v479 = vpop.permute.xlu0 %478
      %480 = vset.pattern.permute.xlu0 1
      %481 = vperm.xlu0 %480, %v212
      %v482 = vpop.permute.xlu0 %481
      %483 = vset.pattern.permute.xlu0 1
      %484 = vperm.xlu0 %483, %v213
      %v485 = vpop.permute.xlu0 %484
      %486 = vset.pattern.permute.xlu0 1
      %487 = vperm.xlu0 %486, %v214
      %v488 = vpop.permute.xlu0 %487
      %489 = vset.pattern.permute.xlu0 1
      %490 = vperm.xlu0 %489, %v215
      %v491 = vpop.permute.xlu0 %490
      %492 = vset.pattern.permute.xlu0 1
      %493 = vperm.xlu0 %492, %v216
      %v494 = vpop.permute.xlu0 %493
      %495 = vset.pattern.permute.xlu0 1
      %496 = vperm.xlu0 %495, %v217
      %v497 = vpop.permute.xlu0 %496
      %498 = vset.pattern.permute.xlu0 1
      %499 = vperm.xlu0 %498, %v218
      %v500 = vpop.permute.xlu0 %499
      %501 = vset.pattern.permute.xlu0 1
      %502 = vperm.xlu0 %501, %v219
      %v503 = vpop.permute.xlu0 %502
      %504 = vset.pattern.permute.xlu0 1
      %505 = vperm.xlu0 %504, %v220
      %v506 = vpop.permute.xlu0 %505
      %507 = vset.pattern.permute.xlu0 1
      %508 = vperm.xlu0 %507, %v221
      %v509 = vpop.permute.xlu0 %508
      %510 = vset.pattern.permute.xlu0 1
      %511 = vperm.xlu0 %510, %v222
      %v512 = vpop.permute.xlu0 %511
      %513 = vset.pattern.permute.xlu0 1
      %514 = vperm.xlu0 %513, %v223
      %v515 = vpop.permute.xlu0 %514
      %516 = vset.pattern.permute.xlu0 1
      %517 = vperm.xlu0 %516, %v224
      %v518 = vpop.permute.xlu0 %517
      %519 = vset.pattern.permute.xlu0 1
      %520 = vperm.xlu0 %519, %v225
      %v521 = vpop.permute.xlu0 %520
      %522 = vset.pattern.permute.xlu0 1
      %523 = vperm.xlu0 %522, %v226
      %v524 = vpop.permute.xlu0 %523
      %525 = vset.pattern.permute.xlu0 1
      %526 = vperm.xlu0 %525, %v227
      %v527 = vpop.permute.xlu0 %526
      %528 = vset.pattern.permute.xlu0 1
      %529 = vperm.xlu0 %528, %v228
      %v530 = vpop.permute.xlu0 %529
      %531 = vset.pattern.permute.xlu0 1
      %532 = vperm.xlu0 %531, %v229
      %v533 = vpop.permute.xlu0 %532
      %534 = vset.pattern.permute.xlu0 1
      %535 = vperm.xlu0 %534, %v230
      %v536 = vpop.permute.xlu0 %535
      %537 = vset.pattern.permute.xlu0 1
      %538 = vperm.xlu0 %537, %v231
      %v539 = vpop.permute.xlu0 %538
      %540 = vset.pattern.permute.xlu0 1
      %541 = vperm.xlu0 %540, %v232
      %v542 = vpop.permute.xlu0 %541
      %543 = vset.pattern.permute.xlu0 1
      %544 = vperm.xlu0 %543, %v233
      %v545 = vpop.permute.xlu0 %544
      %546 = vset.pattern.permute.xlu0 1
      %547 = vperm.xlu0 %546, %v234
      %v548 = vpop.permute.xlu0 %547
      %549 = vset.pattern.permute.xlu0 1
      %550 = vperm.xlu0 %549, %v235
      %v551 = vpop.permute.xlu0 %550
      %552 = vset.pattern.permute.xlu0 1
      %553 = vperm.xlu0 %552, %v236
      %v554 = vpop.permute.xlu0 %553
      %555 = vset.pattern.permute.xlu0 1
      %556 = vperm.xlu0 %555, %v237
      %v557 = vpop.permute.xlu0 %556
      %558 = vset.pattern.permute.xlu0 1
      %559 = vperm.xlu0 %558, %v238
      %v560 = vpop.permute.xlu0 %559
      %561 = vset.pattern.permute.xlu0 1
      %562 = vperm.xlu0 %561, %v239
      %v563 = vpop.permute.xlu0 %562
      %564 = vset.pattern.permute.xlu0 1
      %565 = vperm.xlu0 %564, %v240
      %v566 = vpop.permute.xlu0 %565
      %567 = vset.pattern.permute.xlu0 1
      %568 = vperm.xlu0 %567, %v241
      %v569 = vpop.permute.xlu0 %568
      %570 = vset.pattern.permute.xlu0 1
      %571 = vperm.xlu0 %570, %v242
      %v572 = vpop.permute.xlu0 %571
      %573 = vset.pattern.permute.xlu0 1
      %574 = vperm.xlu0 %573, %v243
      %v575 = vpop.permute.xlu0 %574
      %576 = vset.pattern.permute.xlu0 1
      %577 = vperm.xlu0 %576, %v244
      %v578 = vpop.permute.xlu0 %577
      %579 = vset.pattern.permute.xlu0 1
      %580 = vperm.xlu0 %579, %v245
      %v581 = vpop.permute.xlu0 %580
      %582 = vset.pattern.permute.xlu0 1
      %583 = vperm.xlu0 %582, %v246
      %v584 = vpop.permute.xlu0 %583
      %585 = vset.pattern.permute.xlu0 1
      %586 = vperm.xlu0 %585, %v247
      %v587 = vpop.permute.xlu0 %586
      %588 = vset.pattern.permute.xlu0 1
      %589 = vperm.xlu0 %588, %v248
      %v590 = vpop.permute.xlu0 %589
      %591 = vset.pattern.permute.xlu0 1
      %592 = vperm.xlu0 %591, %v249
      %v593 = vpop.permute.xlu0 %592
      %594 = vset.pattern.permute.xlu0 1
      %595 = vperm.xlu0 %594, %v250
      %v596 = vpop.permute.xlu0 %595
      %597 = vset.pattern.permute.xlu0 1
      %598 = vperm.xlu0 %597, %v251
      %v599 = vpop.permute.xlu0 %598
      %600 = vset.pattern.permute.xlu0 1
      %601 = vperm.xlu0 %600, %v252
      %v602 = vpop.permute.xlu0 %601
      %603 = vset.pattern.permute.xlu0 1
      %604 = vperm.xlu0 %603, %v253
      %v605 = vpop.permute.xlu0 %604
      %606 = vset.pattern.permute.xlu0 1
      %607 = vperm.xlu0 %606, %v254
      %v608 = vpop.permute.xlu0 %607
      %609 = vset.pattern.permute.xlu0 1
      %610 = vperm.xlu0 %609, %v255
      %v611 = vpop.permute.xlu0 %610
      %612 = vset.pattern.permute.xlu0 1
      %613 = vperm.xlu0 %612, %v256
      %v614 = vpop.permute.xlu0 %613
      %615 = vset.pattern.permute.xlu0 1
      %616 = vperm.xlu0 %615, %v257
      %v617 = vpop.permute.xlu0 %616
      %618 = vset.pattern.permute.xlu0 1
      %619 = vperm.xlu0 %618, %v258
      %v620 = vpop.permute.xlu0 %619
      %621 = vset.pattern.permute.xlu0 1
      %622 = vperm.xlu0 %621, %v259
      %v623 = vpop.permute.xlu0 %622
      %624 = vset.pattern.permute.xlu0 1
      %625 = vperm.xlu0 %624, %v260
      %v626 = vpop.permute.xlu0 %625
      %627 = vset.pattern.permute.xlu0 1
      %628 = vperm.xlu0 %627, %v261
      %v629 = vpop.permute.xlu0 %628
      %630 = vset.pattern.permute.xlu0 1
      %631 = vperm.xlu0 %630, %v262
      %v632 = vpop.permute.xlu0 %631
      %633 = vset.pattern.permute.xlu0 1
      %634 = vperm.xlu0 %633, %v263
      %v635 = vpop.permute.xlu0 %634
      %636 = vset.pattern.permute.xlu0 1
      %637 = vperm.xlu0 %636, %v264
      %v638 = vpop.permute.xlu0 %637
      %639 = vset.pattern.permute.xlu0 1
      %640 = vperm.xlu0 %639, %v265
      %v641 = vpop.permute.xlu0 %640
      %642 = vset.pattern.permute.xlu0 1
      %643 = vperm.xlu0 %642, %v266
      %v644 = vpop.permute.xlu0 %643
      %645 = vset.pattern.permute.xlu0 1
      %646 = vperm.xlu0 %645, %v267
      %v647 = vpop.permute.xlu0 %646
      %648 = vset.pattern.permute.xlu0 1
      %649 = vperm.xlu0 %648, %v268
      %v650 = vpop.permute.xlu0 %649
      %651 = vset.pattern.permute.xlu0 1
      %652 = vperm.xlu0 %651, %v269
      %v653 = vpop.permute.xlu0 %652
      %654 = vset.pattern.permute.xlu0 1
      %655 = vperm.xlu0 %654, %v270
      %v656 = vpop.permute.xlu0 %655
      %657 = vset.pattern.permute.xlu0 1
      %658 = vperm.xlu0 %657, %v271
      %v659 = vpop.permute.xlu0 %658
      %660 = vset.pattern.permute.xlu0 1
      %661 = vperm.xlu0 %660, %v272
      %v662 = vpop.permute.xlu0 %661
      %663 = vset.pattern.permute.xlu0 1
      %664 = vperm.xlu0 %663, %v273
      %v665 = vpop.permute.xlu0 %664
      %666 = vset.pattern.permute.xlu0 1
      %667 = vperm.xlu0 %666, %v274
      %v668 = vpop.permute.xlu0 %667
      %669 = vset.pattern.permute.xlu0 1
      %670 = vperm.xlu0 %669, %v275
      %v671 = vpop.permute.xlu0 %670
      %672 = vset.pattern.permute.xlu0 1
      %673 = vperm.xlu0 %672, %v276
      %v674 = vpop.permute.xlu0 %673
      %675 = vset.pattern.permute.xlu0 1
      %676 = vperm.xlu0 %675, %v277
      %v677 = vpop.permute.xlu0 %676
      %678 = vset.pattern.permute.xlu0 1
      %679 = vperm.xlu0 %678, %v278
      %v680 = vpop.permute.xlu0 %679
      %681 = vset.pattern.permute.xlu0 1
      %682 = vperm.xlu0 %681, %v279
      %v683 = vpop.permute.xlu0 %682
      %684 = vset.pattern.permute.xlu0 1
      %685 = vperm.xlu0 %684, %v280
      %v686 = vpop.permute.xlu0 %685
      %687 = vset.pattern.permute.xlu0 1
      %688 = vperm.xlu0 %687, %v281
      %v689 = vpop.permute.xlu0 %688
      %690 = vset.pattern.permute.xlu0 1
      %691 = vperm.xlu0 %690, %v282
      %v692 = vpop.permute.xlu0 %691
      %693 = vset.pattern.permute.xlu0 1
      %694 = vperm.xlu0 %693, %v283
      %v695 = vpop.permute.xlu0 %694
      %696 = vset.pattern.permute.xlu0 1
      %697 = vperm.xlu0 %696, %v284
      %v698 = vpop.permute.xlu0 %697
      %699 = vset.pattern.permute.xlu0 1
      %700 = vperm.xlu0 %699, %v285
      %v701 = vpop.permute.xlu0 %700
      %702 = vset.pattern.permute.xlu0 1
      %703 = vperm.xlu0 %702, %v286
      %v704 = vpop.permute.xlu0 %703
      %705 = vset.pattern.permute.xlu0 1
      %706 = vperm.xlu0 %705, %v287
      %v707 = vpop.permute.xlu0 %706
      %708 = vset.pattern.permute.xlu0 1
      %709 = vperm.xlu0 %708, %v288
      %v710 = vpop.permute.xlu0 %709
      %711 = vset.pattern.permute.xlu0 1
      %712 = vperm.xlu0 %711, %v289
      %v713 = vpop.permute.xlu0 %712
      %714 = vset.pattern.permute.xlu0 1
      %715 = vperm.xlu0 %714, %v290
      %v716 = vpop.permute.xlu0 %715
      %717 = vset.pattern.permute.xlu0 1
      %718 = vperm.xlu0 %717, %v291
      %v719 = vpop.permute.xlu0 %718
      %720 = vset.pattern.permute.xlu0 1
      %721 = vperm.xlu0 %720, %v292
      %v722 = vpop.permute.xlu0 %721
      %723 = vset.pattern.permute.xlu0 1
      %724 = vperm.xlu0 %723, %v293
      %v725 = vpop.permute.xlu0 %724
      %726 = vset.pattern.permute.xlu0 1
      %727 = vperm.xlu0 %726, %v294
      %v728 = vpop.permute.xlu0 %727
      %729 = vset.pattern.permute.xlu0 1
      %730 = vperm.xlu0 %729, %v295
      %v731 = vpop.permute.xlu0 %730
      %732 = vset.pattern.permute.xlu0 1
      %733 = vperm.xlu0 %732, %v296
      %v734 = vpop.permute.xlu0 %733
      %735 = vset.pattern.permute.xlu0 1
      %736 = vperm.xlu0 %735, %v297
      %v737 = vpop.permute.xlu0 %736
      %738 = vset.pattern.permute.xlu0 1
      %739 = vperm.xlu0 %738, %v298
      %v740 = vpop.permute.xlu0 %739
      %741 = vset.pattern.permute.xlu0 1
      %742 = vperm.xlu0 %741, %v299
      %v743 = vpop.permute.xlu0 %742
      %744 = vset.pattern.permute.xlu0 1
      %745 = vperm.xlu0 %744, %v300
      %v746 = vpop.permute.xlu0 %745
      %747 = vset.pattern.permute.xlu0 1
      %748 = vperm.xlu0 %747, %v301
      %v749 = vpop.permute.xlu0 %748
      %750 = vset.pattern.permute.xlu0 1
      %751 = vperm.xlu0 %750, %v302
      %v752 = vpop.permute.xlu0 %751
      %753 = vset.pattern.permute.xlu0 1
      %754 = vperm.xlu0 %753, %v303
      %v755 = vpop.permute.xlu0 %754
      %756 = vset.pattern.permute.xlu0 1
      %757 = vperm.xlu0 %756, %v304
      %v758 = vpop.permute.xlu0 %757
      %759 = vset.pattern.permute.xlu0 1
      %760 = vperm.xlu0 %759, %v305
      %v761 = vpop.permute.xlu0 %760
      %762 = vset.pattern.permute.xlu0 1
      %763 = vperm.xlu0 %762, %v306
      %v764 = vpop.permute.xlu0 %763
      %765 = vset.pattern.permute.xlu0 1
      %766 = vperm.xlu0 %765, %v307
      %v767 = vpop.permute.xlu0 %766
      %768 = vset.pattern.permute.xlu0 1
      %769 = vperm.xlu0 %768, %v308
      %v770 = vpop.permute.xlu0 %769
      %771 = vset.pattern.permute.xlu0 1
      %772 = vperm.xlu0 %771, %v309
      %v773 = vpop.permute.xlu0 %772
      %774 = vset.pattern.permute.xlu0 1
      %775 = vperm.xlu0 %774, %v310
      %v776 = vpop.permute.xlu0 %775
      %777 = vset.pattern.permute.xlu0 1
      %778 = vperm.xlu0 %777, %v311
      %v779 = vpop.permute.xlu0 %778
      %780 = vset.pattern.permute.xlu0 1
      %781 = vperm.xlu0 %780, %v312
      %v782 = vpop.permute.xlu0 %781
      %783 = vset.pattern.permute.xlu0 1
      %784 = vperm.xlu0 %783, %v313
      %v785 = vpop.permute.xlu0 %784
      %786 = vset.pattern.permute.xlu0 1
      %787 = vperm.xlu0 %786, %v314
      %v788 = vpop.permute.xlu0 %787
      %789 = vset.pattern.permute.xlu0 1
      %790 = vperm.xlu0 %789, %v315
      %v791 = vpop.permute.xlu0 %790
      %792 = vset.pattern.permute.xlu0 1
      %793 = vperm.xlu0 %792, %v316
      %v794 = vpop.permute.xlu0 %793
      %795 = vset.pattern.permute.xlu0 1
      %796 = vperm.xlu0 %795, %v317
      %v797 = vpop.permute.xlu0 %796
      %798 = vset.pattern.permute.xlu0 1
      %799 = vperm.xlu0 %798, %v318
      %v800 = vpop.permute.xlu0 %799
      %801 = vset.pattern.permute.xlu0 1
      %802 = vperm.xlu0 %801, %v319
      %v803 = vpop.permute.xlu0 %802
      %804 = vset.pattern.permute.xlu0 1
      %805 = vperm.xlu0 %804, %v320
      %v806 = vpop.permute.xlu0 %805
      %807 = vset.pattern.permute.xlu0 1
      %808 = vperm.xlu0 %807, %v321
      %v809 = vpop.permute.xlu0 %808
      %810 = vset.pattern.permute.xlu0 1
      %811 = vperm.xlu0 %810, %v322
      %v812 = vpop.permute.xlu0 %811
      %813 = vset.pattern.permute.xlu0 1
      %814 = vperm.xlu0 %813, %v323
      %v815 = vpop.permute.xlu0 %814
      %816 = vset.pattern.permute.xlu0 1
      %817 = vperm.xlu0 %816, %v324
      %v818 = vpop.permute.xlu0 %817
      %819 = vset.pattern.permute.xlu0 1
      %820 = vperm.xlu0 %819, %v325
      %v821 = vpop.permute.xlu0 %820
      %822 = vset.pattern.permute.xlu0 1
      %823 = vperm.xlu0 %822, %v326
      %v824 = vpop.permute.xlu0 %823
      %825 = vset.pattern.permute.xlu0 1
      %826 = vperm.xlu0 %825, %v327
      %v827 = vpop.permute.xlu0 %826
      %828 = vset.pattern.permute.xlu0 1
      %829 = vperm.xlu0 %828, %v328
      %v830 = vpop.permute.xlu0 %829
      %831 = vset.pattern.permute.xlu0 1
      %832 = vperm.xlu0 %831, %v329
      %v833 = vpop.permute.xlu0 %832
      %834 = vset.pattern.permute.xlu0 1
      %835 = vperm.xlu0 %834, %v330
      %v836 = vpop.permute.xlu0 %835
      %837 = vset.pattern.permute.xlu0 1
      %838 = vperm.xlu0 %837, %v331
      %v839 = vpop.permute.xlu0 %838
      %840 = vset.pattern.permute.xlu0 1
      %841 = vperm.xlu0 %840, %v332
      %v842 = vpop.permute.xlu0 %841
      %843 = vset.pattern.permute.xlu0 1
      %844 = vperm.xlu0 %843, %v333
      %v845 = vpop.permute.xlu0 %844
      %846 = vset.pattern.permute.xlu0 1
      %847 = vperm.xlu0 %846, %v334
      %v848 = vpop.permute.xlu0 %847
      %849 = vset.pattern.permute.xlu0 1
      %850 = vperm.xlu0 %849, %v335
      %v851 = vpop.permute.xlu0 %850
      %852 = vset.pattern.permute.xlu0 1
      %853 = vperm.xlu0 %852, %v336
      %v854 = vpop.permute.xlu0 %853
      %855 = vset.pattern.permute.xlu0 1
      %856 = vperm.xlu0 %855, %v337
      %v857 = vpop.permute.xlu0 %856
      %858 = vset.pattern.permute.xlu0 1
      %859 = vperm.xlu0 %858, %v338
      %v860 = vpop.permute.xlu0 %859
      %861 = vset.pattern.permute.xlu0 1
      %862 = vperm.xlu0 %861, %v339
      %v863 = vpop.permute.xlu0 %862
      %864 = vset.pattern.permute.xlu0 1
      %865 = vperm.xlu0 %864, %v340
      %v866 = vpop.permute.xlu0 %865
      %867 = vset.pattern.permute.xlu0 1
      %868 = vperm.xlu0 %867, %v341
      %v869 = vpop.permute.xlu0 %868
      %870 = vset.pattern.permute.xlu0 1
      %871 = vperm.xlu0 %870, %v342
      %v872 = vpop.permute.xlu0 %871
      %873 = vset.pattern.permute.xlu0 1
      %874 = vperm.xlu0 %873, %v343
      %v875 = vpop.permute.xlu0 %874
      %876 = vset.pattern.permute.xlu0 1
      %877 = vperm.xlu0 %876, %v344
      %v878 = vpop.permute.xlu0 %877
      %879 = vset.pattern.permute.xlu0 1
      %880 = vperm.xlu0 %879, %v345
      %v881 = vpop.permute.xlu0 %880
      %882 = vset.pattern.permute.xlu0 1
      %883 = vperm.xlu0 %882, %v346
      %v884 = vpop.permute.xlu0 %883
      %885 = vset.pattern.permute.xlu0 1
      %886 = vperm.xlu0 %885, %v347
      %v887 = vpop.permute.xlu0 %886
      %888 = vset.pattern.permute.xlu0 1
      %889 = vperm.xlu0 %888, %v348
      %v890 = vpop.permute.xlu0 %889
      %891 = vset.pattern.permute.xlu0 1
      %892 = vperm.xlu0 %891, %v349
      %v893 = vpop.permute.xlu0 %892
      %894 = vset.pattern.permute.xlu0 1
      %895 = vperm.xlu0 %894, %v350
      %v896 = vpop.permute.xlu0 %895
      %897 = vset.pattern.permute.xlu0 1
      %898 = vperm.xlu0 %897, %v351
      %v899 = vpop.permute.xlu0 %898
      %900 = vset.pattern.permute.xlu0 1
      %901 = vperm.xlu0 %900, %v352
      %v902 = vpop.permute.xlu0 %901
      %903 = vset.pattern.permute.xlu0 1
      %904 = vperm.xlu0 %903, %v353
      %v905 = vpop.permute.xlu0 %904
      %906 = vset.pattern.permute.xlu0 1
      %907 = vperm.xlu0 %906, %v354
      %v908 = vpop.permute.xlu0 %907
      %909 = vset.pattern.permute.xlu0 1
      %910 = vperm.xlu0 %909, %v355
      %v911 = vpop.permute.xlu0 %910
      %912 = vset.pattern.permute.xlu0 1
      %913 = vperm.xlu0 %912, %v356
      %v914 = vpop.permute.xlu0 %913
      %915 = vset.pattern.permute.xlu0 1
      %916 = vperm.xlu0 %915, %v357
      %v917 = vpop.permute.xlu0 %916
      %918 = vset.pattern.permute.xlu0 1
      %919 = vperm.xlu0 %918, %v358
      %v920 = vpop.permute.xlu0 %919
      %921 = vset.pattern.permute.xlu0 1
      %922 = vperm.xlu0 %921, %v359
      %v923 = vpop.permute.xlu0 %922
      %924 = vset.pattern.permute.xlu0 1
      %925 = vperm.xlu0 %924, %v360
      %v926 = vpop.permute.xlu0 %925
      %927 = vset.pattern.permute.xlu0 1
      %928 = vperm.xlu0 %927, %v361
      %v929 = vpop.permute.xlu0 %928
      %930 = vset.pattern.permute.xlu0 1
      %931 = vperm.xlu0 %930, %v362
      %v932 = vpop.permute.xlu0 %931
      %933 = vset.pattern.permute.xlu0 1
      %934 = vperm.xlu0 %933, %v363
      %v935 = vpop.permute.xlu0 %934
      %936 = vset.pattern.permute.xlu0 1
      %937 = vperm.xlu0 %936, %v364
      %v938 = vpop.permute.xlu0 %937
      %939 = vset.pattern.permute.xlu0 1
      %940 = vperm.xlu0 %939, %v365
      %v941 = vpop.permute.xlu0 %940
      %942 = vset.pattern.permute.xlu0 1
      %943 = vperm.xlu0 %942, %v366
      %v944 = vpop.permute.xlu0 %943
      %945 = vset.pattern.permute.xlu0 1
      %946 = vperm.xlu0 %945, %v367
      %v947 = vpop.permute.xlu0 %946
      %948 = vset.pattern.permute.xlu0 1
      %949 = vperm.xlu0 %948, %v368
      %v950 = vpop.permute.xlu0 %949
      %951 = vset.pattern.permute.xlu0 1
      %952 = vperm.xlu0 %951, %v369
      %v953 = vpop.permute.xlu0 %952
      %954 = vset.pattern.permute.xlu0 1
      %955 = vperm.xlu0 %954, %v370
      %v956 = vpop.permute.xlu0 %955
      %957 = vset.pattern.permute.xlu0 1
      %958 = vperm.xlu0 %957, %v371
      %v959 = vpop.permute.xlu0 %958
      %960 = vset.pattern.permute.xlu0 1
      %961 = vperm.xlu0 %960, %v372
      %v962 = vpop.permute.xlu0 %961
      %963 = vset.pattern.permute.xlu0 1
      %964 = vperm.xlu0 %963, %v373
      %v965 = vpop.permute.xlu0 %964
      %966 = vset.pattern.permute.xlu0 1
      %967 = vperm.xlu0 %966, %v374
      %v968 = vpop.permute.xlu0 %967
      %969 = vset.pattern.permute.xlu0 1
      %970 = vperm.xlu0 %969, %v375
      %v971 = vpop.permute.xlu0 %970
      %972 = vset.pattern.permute.xlu0 1
      %973 = vperm.xlu0 %972, %v376
      %v974 = vpop.permute.xlu0 %973
      %975 = vset.pattern.permute.xlu0 1
      %976 = vperm.xlu0 %975, %v377
      %v977 = vpop.permute.xlu0 %976
      %978 = vset.pattern.permute.xlu0 1
      %979 = vperm.xlu0 %978, %v378
      %v980 = vpop.permute.xlu0 %979
      %981 = vset.pattern.permute.xlu0 1
      %982 = vperm.xlu0 %981, %v379
      %v983 = vpop.permute.xlu0 %982
      %984 = vset.pattern.permute.xlu0 1
      %985 = vperm.xlu0 %984, %v380
      %v986 = vpop.permute.xlu0 %985
      %987 = vset.pattern.permute.xlu0 1
      %988 = vperm.xlu0 %987, %v381
      %v989 = vpop.permute.xlu0 %988
      %990 = vset.pattern.permute.xlu0 1
      %991 = vperm.xlu0 %990, %v382
      %v992 = vpop.permute.xlu0 %991
      %993 = vset.pattern.permute.xlu0 1
      %994 = vperm.xlu0 %993, %v383
      %v995 = vpop.permute.xlu0 %994
      %996 = vset.pattern.permute.xlu0 1
      %997 = vperm.xlu0 %996, %v384
      %v998 = vpop.permute.xlu0 %997
      %999 = vset.pattern.permute.xlu0 1
      %1000 = vperm.xlu0 %999, %v385
      %v1001 = vpop.permute.xlu0 %1000
      %1002 = vset.pattern.permute.xlu0 1
      %1003 = vperm.xlu0 %1002, %v386
      %v1004 = vpop.permute.xlu0 %1003
      %1005 = vset.pattern.permute.xlu0 1
      %1006 = vperm.xlu0 %1005, %v387
      %v1007 = vpop.permute.xlu0 %1006
      %1008 = vset.pattern.permute.xlu0 1
      %1009 = vperm.xlu0 %1008, %v388
      %v1010 = vpop.permute.xlu0 %1009
      %1011 = vset.pattern.permute.xlu0 1
      %1012 = vperm.xlu0 %1011, %v389
      %v1013 = vpop.permute.xlu0 %1012
      %1014 = vset.pattern.permute.xlu0 1
      %1015 = vperm.xlu0 %1014, %v390
      %v1016 = vpop.permute.xlu0 %1015
      %1017 = vset.pattern.permute.xlu0 1
      %1018 = vperm.xlu0 %1017, %v391
      %v1019 = vpop.permute.xlu0 %1018
      %1020 = vset.pattern.permute.xlu0 1
      %1021 = vperm.xlu0 %1020, %v392
      %v1022 = vpop.permute.xlu0 %1021
      %1023 = vset.pattern.permute.xlu0 1
      %1024 = vperm.xlu0 %1023, %v393
      %v1025 = vpop.permute.xlu0 %1024
      %1026 = vset.pattern.permute.xlu0 1
      %1027 = vperm.xlu0 %1026, %v394
      %v1028 = vpop.permute.xlu0 %1027
      %1029 = vset.pattern.permute.xlu0 1
      %1030 = vperm.xlu0 %1029, %v395
      %v1031 = vpop.permute.xlu0 %1030
      %1032 = vset.pattern.permute.xlu0 1
      %1033 = vperm.xlu0 %1032, %v396
      %v1034 = vpop.permute.xlu0 %1033
      %1035 = vset.pattern.permute.xlu0 1
      %1036 = vperm.xlu0 %1035, %v397
      %v1037 = vpop.permute.xlu0 %1036
      %1038 = vset.pattern.permute.xlu0 1
      %1039 = vperm.xlu0 %1038, %v398
      %v1040 = vpop.permute.xlu0 %1039
      %1041 = vset.pattern.permute.xlu0 1
      %1042 = vperm.xlu0 %1041, %v399
      %v1043 = vpop.permute.xlu0 %1042
      %1044 = vset.pattern.permute.xlu0 1
      %1045 = vperm.xlu0 %1044, %v400
      %v1046 = vpop.permute.xlu0 %1045
      %1047 = vset.pattern.permute.xlu0 1
      %1048 = vperm.xlu0 %1047, %v401
      %v1049 = vpop.permute.xlu0 %1048
      %1050 = vset.pattern.permute.xlu0 1
      %1051 = vperm.xlu0 %1050, %v402
      %v1052 = vpop.permute.xlu0 %1051
      %1053 = vset.pattern.permute.xlu0 1
      %1054 = vperm.xlu0 %1053, %v403
      %v1055 = vpop.permute.xlu0 %1054
      %1056 = vset.pattern.permute.xlu0 1
      %1057 = vperm.xlu0 %1056, %v404
      %v1058 = vpop.permute.xlu0 %1057
      %1059 = vset.pattern.permute.xlu0 1
      %1060 = vperm.xlu0 %1059, %v405
      %v1061 = vpop.permute.xlu0 %1060
      %1062 = vset.pattern.permute.xlu0 1
      %1063 = vperm.xlu0 %1062, %v406
      %v1064 = vpop.permute.xlu0 %1063
      %1065 = vset.pattern.permute.xlu0 1
      %1066 = vperm.xlu0 %1065, %v407
      %v1067 = vpop.permute.xlu0 %1066
      %1068 = vset.pattern.permute.xlu0 1
      %1069 = vperm.xlu0 %1068, %v408
      %v1070 = vpop.permute.xlu0 %1069
      %1071 = vset.pattern.permute.xlu0 1
      %1072 = vperm.xlu0 %1071, %v409
      %v1073 = vpop.permute.xlu0 %1072
      %1074 = vset.pattern.permute.xlu0 1
      %1075 = vperm.xlu0 %1074, %v410
      %v1076 = vpop.permute.xlu0 %1075
      %1077 = vset.pattern.permute.xlu0 1
      %1078 = vperm.xlu0 %1077, %v411
      %v1079 = vpop.permute.xlu0 %1078
      %1080 = vset.pattern.permute.xlu0 1
      %1081 = vperm.xlu0 %1080, %v412
      %v1082 = vpop.permute.xlu0 %1081
      %1083 = vset.pattern.permute.xlu0 1
      %1084 = vperm.xlu0 %1083, %v413
      %v1085 = vpop.permute.xlu0 %1084
      %1086 = vset.pattern.permute.xlu0 1
      %1087 = vperm.xlu0 %1086, %v414
      %v1088 = vpop.permute.xlu0 %1087
      %1089 = vset.pattern.permute.xlu0 1
      %1090 = vperm.xlu0 %1089, %v415
      %v1091 = vpop.permute.xlu0 %1090
      %1092 = vset.pattern.permute.xlu0 1
      %1093 = vperm.xlu0 %1092, %v416
      %v1094 = vpop.permute.xlu0 %1093
      %1095 = vset.pattern.permute.xlu0 1
      %1096 = vperm.xlu0 %1095, %v417
      %v1097 = vpop.permute.xlu0 %1096
      %1098 = vset.pattern.permute.xlu0 1
      %1099 = vperm.xlu0 %1098, %v418
      %v1100 = vpop.permute.xlu0 %1099
      %1101 = vset.pattern.permute.xlu0 1
      %1102 = vperm.xlu0 %1101, %v419
      %v1103 = vpop.permute.xlu0 %1102
      %1104 = vset.pattern.permute.xlu0 1
      %1105 = vperm.xlu0 %1104, %v420
      %v1106 = vpop.permute.xlu0 %1105
      %1107 = vset.pattern.permute.xlu0 1
      %1108 = vperm.xlu0 %1107, %v421
      %v1109 = vpop.permute.xlu0 %1108
      %1110 = vset.pattern.permute.xlu0 1
      %1111 = vperm.xlu0 %1110, %v422
      %v1112 = vpop.permute.xlu0 %1111
      %1113 = vset.pattern.permute.xlu0 1
      %1114 = vperm.xlu0 %1113, %v423
      %v1115 = vpop.permute.xlu0 %1114
      %1116 = vset.pattern.permute.xlu0 1
      %1117 = vperm.xlu0 %1116, %v424
      %v1118 = vpop.permute.xlu0 %1117
      %1119 = vset.pattern.permute.xlu0 1
      %1120 = vperm.xlu0 %1119, %v425
      %v1121 = vpop.permute.xlu0 %1120
      %1122 = vset.pattern.permute.xlu0 1
      %1123 = vperm.xlu0 %1122, %v426
      %v1124 = vpop.permute.xlu0 %1123
      %1125 = vset.pattern.permute.xlu0 1
      %1126 = vperm.xlu0 %1125, %v427
      %v1127 = vpop.permute.xlu0 %1126
      %1128 = vset.pattern.permute.xlu0 1
      %1129 = vperm.xlu0 %1128, %v428
      %v1130 = vpop.permute.xlu0 %1129
      %1131 = vset.pattern.permute.xlu0 1
      %1132 = vperm.xlu0 %1131, %v429
      %v1133 = vpop.permute.xlu0 %1132
      %1134 = vset.pattern.permute.xlu0 1
      %1135 = vperm.xlu0 %1134, %v430
      %v1136 = vpop.permute.xlu0 %1135
      %1137 = vset.pattern.permute.xlu0 1
      %1138 = vperm.xlu0 %1137, %v431
      %v1139 = vpop.permute.xlu0 %1138
      %1140 = vset.pattern.permute.xlu0 1
      %1141 = vperm.xlu0 %1140, %v432
      %v1142 = vpop.permute.xlu0 %1141
      %1143 = vset.pattern.permute.xlu0 1
      %1144 = vperm.xlu0 %1143, %v433
      %v1145 = vpop.permute.xlu0 %1144
      %1146 = vset.pattern.permute.xlu0 1
      %1147 = vperm.xlu0 %1146, %v434
      %v1148 = vpop.permute.xlu0 %1147
      %1149 = vset.pattern.permute.xlu0 1
      %1150 = vperm.xlu0 %1149, %v435
      %v1151 = vpop.permute.xlu0 %1150
      %1152 = vset.pattern.permute.xlu0 1
      %1153 = vperm.xlu0 %1152, %v436
      %v1154 = vpop.permute.xlu0 %1153
      %1155 = vset.pattern.permute.xlu0 1
      %1156 = vperm.xlu0 %1155, %v437
      %v1157 = vpop.permute.xlu0 %1156
      %1158 = vset.pattern.permute.xlu0 1
      %1159 = vperm.xlu0 %1158, %v438
      %v1160 = vpop.permute.xlu0 %1159
      %1161 = vset.pattern.permute.xlu0 1
      %1162 = vperm.xlu0 %1161, %v439
      %v1163 = vpop.permute.xlu0 %1162
      %1164 = vset.pattern.permute.xlu0 1
      %1165 = vperm.xlu0 %1164, %v440
      %v1166 = vpop.permute.xlu0 %1165
      %1167 = vset.pattern.permute.xlu0 1
      %1168 = vperm.xlu0 %1167, %v441
      %v1169 = vpop.permute.xlu0 %1168
      %1170 = vset.pattern.permute.xlu0 1
      %1171 = vperm.xlu0 %1170, %v442
      %v1172 = vpop.permute.xlu0 %1171
      %1173 = vset.pattern.permute.xlu0 1
      %1174 = vperm.xlu0 %1173, %v443
      %v1175 = vpop.permute.xlu0 %1174
      %1176 = vset.pattern.permute.xlu0 1
      %1177 = vperm.xlu0 %1176, %v444
      %v1178 = vpop.permute.xlu0 %1177
      %1179 = vset.pattern.permute.xlu0 1
      %1180 = vperm.xlu0 %1179, %v445
      %v1181 = vpop.permute.xlu0 %1180
      %1182 = vset.pattern.permute.xlu0 1
      %1183 = vperm.xlu0 %1182, %v446
      %v1184 = vpop.permute.xlu0 %1183
      %1185 = vset.pattern.permute.xlu0 1
      %1186 = vperm.xlu0 %1185, %v447
      %v1187 = vpop.permute.xlu0 %1186
      %1188 = vset.pattern.permute.xlu0 1
      %1189 = vperm.xlu0 %1188, %v448
      %v1190 = vpop.permute.xlu0 %1189
      %1191 = vset.pattern.permute.xlu0 1
      %1192 = vperm.xlu0 %1191, %v449
      %v1193 = vpop.permute.xlu0 %1192
      %1194 = vset.pattern.permute.xlu0 1
      %1195 = vperm.xlu0 %1194, %v450
      %v1196 = vpop.permute.xlu0 %1195
      %1197 = vset.pattern.permute.xlu0 1
      %1198 = vperm.xlu0 %1197, %v451
      %v1199 = vpop.permute.xlu0 %1198
      %1200 = vset.pattern.permute.xlu0 1
      %1201 = vperm.xlu0 %1200, %v452
      %v1202 = vpop.permute.xlu0 %1201
      %1203 = vset.pattern.permute.xlu0 1
      %1204 = vperm.xlu0 %1203, %v453
      %v1205 = vpop.permute.xlu0 %1204
      %1206 = vset.pattern.permute.xlu0 1
      %1207 = vperm.xlu0 %1206, %v454
      %v1208 = vpop.permute.xlu0 %1207
      %1209 = vset.pattern.permute.xlu0 1
      %1210 = vperm.xlu0 %1209, %v455
      %v1211 = vpop.permute.xlu0 %1210
      %1212 = vset.pattern.permute.xlu0 1
      %1213 = vperm.xlu0 %1212, %v456
      %v1214 = vpop.permute.xlu0 %1213
      %1215 = vset.pattern.permute.xlu0 1
      %1216 = vperm.xlu0 %1215, %v457
      %v1217 = vpop.permute.xlu0 %1216
      %1218 = vset.pattern.permute.xlu0 1
      %1219 = vperm.xlu0 %1218, %v458
      %v1220 = vpop.permute.xlu0 %1219
      %1221 = vset.pattern.permute.xlu0 1
      %1222 = vperm.xlu0 %1221, %v459
      %v1223 = vpop.permute.xlu0 %1222
      %1224 = vset.pattern.permute.xlu0 1
      %1225 = vperm.xlu0 %1224, %v460
      %v1226 = vpop.permute.xlu0 %1225
      %1227 = vset.pattern.permute.xlu0 1
      %1228 = vperm.xlu0 %1227, %v461
      %v1229 = vpop.permute.xlu0 %1228
      %1230 = vset.pattern.permute.xlu0 1
      %1231 = vperm.xlu0 %1230, %v462
      %v1232 = vpop.permute.xlu0 %1231
      %1233 = vset.pattern.permute.xlu0 0
      %1234 = vperm.xlu0 %1233, %v207
      %v1235 = vpop.permute.xlu0 %1234
      %1236 = vset.pattern.permute.xlu0 0
      %1237 = vperm.xlu0 %1236, %v208
      %v1238 = vpop.permute.xlu0 %1237
      %1239 = vset.pattern.permute.xlu0 0
      %1240 = vperm.xlu0 %1239, %v209
      %v1241 = vpop.permute.xlu0 %1240
      %1242 = vset.pattern.permute.xlu0 0
      %1243 = vperm.xlu0 %1242, %v210
      %v1244 = vpop.permute.xlu0 %1243
      %1245 = vset.pattern.permute.xlu0 0
      %1246 = vperm.xlu0 %1245, %v211
      %v1247 = vpop.permute.xlu0 %1246
      %1248 = vset.pattern.permute.xlu0 0
      %1249 = vperm.xlu0 %1248, %v212
      %v1250 = vpop.permute.xlu0 %1249
      %1251 = vset.pattern.permute.xlu0 0
      %1252 = vperm.xlu0 %1251, %v213
      %v1253 = vpop.permute.xlu0 %1252
      %1254 = vset.pattern.permute.xlu0 0
      %1255 = vperm.xlu0 %1254, %v214
      %v1256 = vpop.permute.xlu0 %1255
      %1257 = vset.pattern.permute.xlu0 0
      %1258 = vperm.xlu0 %1257, %v215
      %v1259 = vpop.permute.xlu0 %1258
      %1260 = vset.pattern.permute.xlu0 0
      %1261 = vperm.xlu0 %1260, %v216
      %v1262 = vpop.permute.xlu0 %1261
      %1263 = vset.pattern.permute.xlu0 0
      %1264 = vperm.xlu0 %1263, %v217
      %v1265 = vpop.permute.xlu0 %1264
      %1266 = vset.pattern.permute.xlu0 0
      %1267 = vperm.xlu0 %1266, %v218
      %v1268 = vpop.permute.xlu0 %1267
      %1269 = vset.pattern.permute.xlu0 0
      %1270 = vperm.xlu0 %1269, %v219
      %v1271 = vpop.permute.xlu0 %1270
      %1272 = vset.pattern.permute.xlu0 0
      %1273 = vperm.xlu0 %1272, %v220
      %v1274 = vpop.permute.xlu0 %1273
      %1275 = vset.pattern.permute.xlu0 0
      %1276 = vperm.xlu0 %1275, %v221
      %v1277 = vpop.permute.xlu0 %1276
      %1278 = vset.pattern.permute.xlu0 0
      %1279 = vperm.xlu0 %1278, %v222
      %v1280 = vpop.permute.xlu0 %1279
      %1281 = vset.pattern.permute.xlu0 0
      %1282 = vperm.xlu0 %1281, %v223
      %v1283 = vpop.permute.xlu0 %1282
      %1284 = vset.pattern.permute.xlu0 0
      %1285 = vperm.xlu0 %1284, %v224
      %v1286 = vpop.permute.xlu0 %1285
      %1287 = vset.pattern.permute.xlu0 0
      %1288 = vperm.xlu0 %1287, %v225
      %v1289 = vpop.permute.xlu0 %1288
      %1290 = vset.pattern.permute.xlu0 0
      %1291 = vperm.xlu0 %1290, %v226
      %v1292 = vpop.permute.xlu0 %1291
      %1293 = vset.pattern.permute.xlu0 0
      %1294 = vperm.xlu0 %1293, %v227
      %v1295 = vpop.permute.xlu0 %1294
      %1296 = vset.pattern.permute.xlu0 0
      %1297 = vperm.xlu0 %1296, %v228
      %v1298 = vpop.permute.xlu0 %1297
      %1299 = vset.pattern.permute.xlu0 0
      %1300 = vperm.xlu0 %1299, %v229
      %v1301 = vpop.permute.xlu0 %1300
      %1302 = vset.pattern.permute.xlu0 0
      %1303 = vperm.xlu0 %1302, %v230
      %v1304 = vpop.permute.xlu0 %1303
      %1305 = vset.pattern.permute.xlu0 0
      %1306 = vperm.xlu0 %1305, %v231
      %v1307 = vpop.permute.xlu0 %1306
      %1308 = vset.pattern.permute.xlu0 0
      %1309 = vperm.xlu0 %1308, %v232
      %v1310 = vpop.permute.xlu0 %1309
      %1311 = vset.pattern.permute.xlu0 0
      %1312 = vperm.xlu0 %1311, %v233
      %v1313 = vpop.permute.xlu0 %1312
      %1314 = vset.pattern.permute.xlu0 0
      %1315 = vperm.xlu0 %1314, %v234
      %v1316 = vpop.permute.xlu0 %1315
      %1317 = vset.pattern.permute.xlu0 0
      %1318 = vperm.xlu0 %1317, %v235
      %v1319 = vpop.permute.xlu0 %1318
      %1320 = vset.pattern.permute.xlu0 0
      %1321 = vperm.xlu0 %1320, %v236
      %v1322 = vpop.permute.xlu0 %1321
      %1323 = vset.pattern.permute.xlu0 0
      %1324 = vperm.xlu0 %1323, %v237
      %v1325 = vpop.permute.xlu0 %1324
      %1326 = vset.pattern.permute.xlu0 0
      %1327 = vperm.xlu0 %1326, %v238
      %v1328 = vpop.permute.xlu0 %1327
      %1329 = vset.pattern.permute.xlu0 0
      %1330 = vperm.xlu0 %1329, %v239
      %v1331 = vpop.permute.xlu0 %1330
      %1332 = vset.pattern.permute.xlu0 0
      %1333 = vperm.xlu0 %1332, %v240
      %v1334 = vpop.permute.xlu0 %1333
      %1335 = vset.pattern.permute.xlu0 0
      %1336 = vperm.xlu0 %1335, %v241
      %v1337 = vpop.permute.xlu0 %1336
      %1338 = vset.pattern.permute.xlu0 0
      %1339 = vperm.xlu0 %1338, %v242
      %v1340 = vpop.permute.xlu0 %1339
      %1341 = vset.pattern.permute.xlu0 0
      %1342 = vperm.xlu0 %1341, %v243
      %v1343 = vpop.permute.xlu0 %1342
      %1344 = vset.pattern.permute.xlu0 0
      %1345 = vperm.xlu0 %1344, %v244
      %v1346 = vpop.permute.xlu0 %1345
      %1347 = vset.pattern.permute.xlu0 0
      %1348 = vperm.xlu0 %1347, %v245
      %v1349 = vpop.permute.xlu0 %1348
      %1350 = vset.pattern.permute.xlu0 0
      %1351 = vperm.xlu0 %1350, %v246
      %v1352 = vpop.permute.xlu0 %1351
      %1353 = vset.pattern.permute.xlu0 0
      %1354 = vperm.xlu0 %1353, %v247
      %v1355 = vpop.permute.xlu0 %1354
      %1356 = vset.pattern.permute.xlu0 0
      %1357 = vperm.xlu0 %1356, %v248
      %v1358 = vpop.permute.xlu0 %1357
      %1359 = vset.pattern.permute.xlu0 0
      %1360 = vperm.xlu0 %1359, %v249
      %v1361 = vpop.permute.xlu0 %1360
      %1362 = vset.pattern.permute.xlu0 0
      %1363 = vperm.xlu0 %1362, %v250
      %v1364 = vpop.permute.xlu0 %1363
      %1365 = vset.pattern.permute.xlu0 0
      %1366 = vperm.xlu0 %1365, %v251
      %v1367 = vpop.permute.xlu0 %1366
      %1368 = vset.pattern.permute.xlu0 0
      %1369 = vperm.xlu0 %1368, %v252
      %v1370 = vpop.permute.xlu0 %1369
      %1371 = vset.pattern.permute.xlu0 0
      %1372 = vperm.xlu0 %1371, %v253
      %v1373 = vpop.permute.xlu0 %1372
      %1374 = vset.pattern.permute.xlu0 0
      %1375 = vperm.xlu0 %1374, %v254
      %v1376 = vpop.permute.xlu0 %1375
      %1377 = vset.pattern.permute.xlu0 0
      %1378 = vperm.xlu0 %1377, %v255
      %v1379 = vpop.permute.xlu0 %1378
      %1380 = vset.pattern.permute.xlu0 0
      %1381 = vperm.xlu0 %1380, %v256
      %v1382 = vpop.permute.xlu0 %1381
      %1383 = vset.pattern.permute.xlu0 0
      %1384 = vperm.xlu0 %1383, %v257
      %v1385 = vpop.permute.xlu0 %1384
      %1386 = vset.pattern.permute.xlu0 0
      %1387 = vperm.xlu0 %1386, %v258
      %v1388 = vpop.permute.xlu0 %1387
      %1389 = vset.pattern.permute.xlu0 0
      %1390 = vperm.xlu0 %1389, %v259
      %v1391 = vpop.permute.xlu0 %1390
      %1392 = vset.pattern.permute.xlu0 0
      %1393 = vperm.xlu0 %1392, %v260
      %v1394 = vpop.permute.xlu0 %1393
      %1395 = vset.pattern.permute.xlu0 0
      %1396 = vperm.xlu0 %1395, %v261
      %v1397 = vpop.permute.xlu0 %1396
      %1398 = vset.pattern.permute.xlu0 0
      %1399 = vperm.xlu0 %1398, %v262
      %v1400 = vpop.permute.xlu0 %1399
      %1401 = vset.pattern.permute.xlu0 0
      %1402 = vperm.xlu0 %1401, %v263
      %v1403 = vpop.permute.xlu0 %1402
      %1404 = vset.pattern.permute.xlu0 0
      %1405 = vperm.xlu0 %1404, %v264
      %v1406 = vpop.permute.xlu0 %1405
      %1407 = vset.pattern.permute.xlu0 0
      %1408 = vperm.xlu0 %1407, %v265
      %v1409 = vpop.permute.xlu0 %1408
      %1410 = vset.pattern.permute.xlu0 0
      %1411 = vperm.xlu0 %1410, %v266
      %v1412 = vpop.permute.xlu0 %1411
      %1413 = vset.pattern.permute.xlu0 0
      %1414 = vperm.xlu0 %1413, %v267
      %v1415 = vpop.permute.xlu0 %1414
      %1416 = vset.pattern.permute.xlu0 0
      %1417 = vperm.xlu0 %1416, %v268
      %v1418 = vpop.permute.xlu0 %1417
      %1419 = vset.pattern.permute.xlu0 0
      %1420 = vperm.xlu0 %1419, %v269
      %v1421 = vpop.permute.xlu0 %1420
      %1422 = vset.pattern.permute.xlu0 0
      %1423 = vperm.xlu0 %1422, %v270
      %v1424 = vpop.permute.xlu0 %1423
      %1425 = vset.pattern.permute.xlu0 0
      %1426 = vperm.xlu0 %1425, %v271
      %v1427 = vpop.permute.xlu0 %1426
      %1428 = vset.pattern.permute.xlu0 0
      %1429 = vperm.xlu0 %1428, %v272
      %v1430 = vpop.permute.xlu0 %1429
      %1431 = vset.pattern.permute.xlu0 0
      %1432 = vperm.xlu0 %1431, %v273
      %v1433 = vpop.permute.xlu0 %1432
      %1434 = vset.pattern.permute.xlu0 0
      %1435 = vperm.xlu0 %1434, %v274
      %v1436 = vpop.permute.xlu0 %1435
      %1437 = vset.pattern.permute.xlu0 0
      %1438 = vperm.xlu0 %1437, %v275
      %v1439 = vpop.permute.xlu0 %1438
      %1440 = vset.pattern.permute.xlu0 0
      %1441 = vperm.xlu0 %1440, %v276
      %v1442 = vpop.permute.xlu0 %1441
      %1443 = vset.pattern.permute.xlu0 0
      %1444 = vperm.xlu0 %1443, %v277
      %v1445 = vpop.permute.xlu0 %1444
      %1446 = vset.pattern.permute.xlu0 0
      %1447 = vperm.xlu0 %1446, %v278
      %v1448 = vpop.permute.xlu0 %1447
      %1449 = vset.pattern.permute.xlu0 0
      %1450 = vperm.xlu0 %1449, %v279
      %v1451 = vpop.permute.xlu0 %1450
      %1452 = vset.pattern.permute.xlu0 0
      %1453 = vperm.xlu0 %1452, %v280
      %v1454 = vpop.permute.xlu0 %1453
      %1455 = vset.pattern.permute.xlu0 0
      %1456 = vperm.xlu0 %1455, %v281
      %v1457 = vpop.permute.xlu0 %1456
      %1458 = vset.pattern.permute.xlu0 0
      %1459 = vperm.xlu0 %1458, %v282
      %v1460 = vpop.permute.xlu0 %1459
      %1461 = vset.pattern.permute.xlu0 0
      %1462 = vperm.xlu0 %1461, %v283
      %v1463 = vpop.permute.xlu0 %1462
      %1464 = vset.pattern.permute.xlu0 0
      %1465 = vperm.xlu0 %1464, %v284
      %v1466 = vpop.permute.xlu0 %1465
      %1467 = vset.pattern.permute.xlu0 0
      %1468 = vperm.xlu0 %1467, %v285
      %v1469 = vpop.permute.xlu0 %1468
      %1470 = vset.pattern.permute.xlu0 0
      %1471 = vperm.xlu0 %1470, %v286
      %v1472 = vpop.permute.xlu0 %1471
      %1473 = vset.pattern.permute.xlu0 0
      %1474 = vperm.xlu0 %1473, %v287
      %v1475 = vpop.permute.xlu0 %1474
      %1476 = vset.pattern.permute.xlu0 0
      %1477 = vperm.xlu0 %1476, %v288
      %v1478 = vpop.permute.xlu0 %1477
      %1479 = vset.pattern.permute.xlu0 0
      %1480 = vperm.xlu0 %1479, %v289
      %v1481 = vpop.permute.xlu0 %1480
      %1482 = vset.pattern.permute.xlu0 0
      %1483 = vperm.xlu0 %1482, %v290
      %v1484 = vpop.permute.xlu0 %1483
      %1485 = vset.pattern.permute.xlu0 0
      %1486 = vperm.xlu0 %1485, %v291
      %v1487 = vpop.permute.xlu0 %1486
      %1488 = vset.pattern.permute.xlu0 0
      %1489 = vperm.xlu0 %1488, %v292
      %v1490 = vpop.permute.xlu0 %1489
      %1491 = vset.pattern.permute.xlu0 0
      %1492 = vperm.xlu0 %1491, %v293
      %v1493 = vpop.permute.xlu0 %1492
      %1494 = vset.pattern.permute.xlu0 0
      %1495 = vperm.xlu0 %1494, %v294
      %v1496 = vpop.permute.xlu0 %1495
      %1497 = vset.pattern.permute.xlu0 0
      %1498 = vperm.xlu0 %1497, %v295
      %v1499 = vpop.permute.xlu0 %1498
      %1500 = vset.pattern.permute.xlu0 0
      %1501 = vperm.xlu0 %1500, %v296
      %v1502 = vpop.permute.xlu0 %1501
      %1503 = vset.pattern.permute.xlu0 0
      %1504 = vperm.xlu0 %1503, %v297
      %v1505 = vpop.permute.xlu0 %1504
      %1506 = vset.pattern.permute.xlu0 0
      %1507 = vperm.xlu0 %1506, %v298
      %v1508 = vpop.permute.xlu0 %1507
      %1509 = vset.pattern.permute.xlu0 0
      %1510 = vperm.xlu0 %1509, %v299
      %v1511 = vpop.permute.xlu0 %1510
      %1512 = vset.pattern.permute.xlu0 0
      %1513 = vperm.xlu0 %1512, %v300
      %v1514 = vpop.permute.xlu0 %1513
      %1515 = vset.pattern.permute.xlu0 0
      %1516 = vperm.xlu0 %1515, %v301
      %v1517 = vpop.permute.xlu0 %1516
      %1518 = vset.pattern.permute.xlu0 0
      %1519 = vperm.xlu0 %1518, %v302
      %v1520 = vpop.permute.xlu0 %1519
      %1521 = vset.pattern.permute.xlu0 0
      %1522 = vperm.xlu0 %1521, %v303
      %v1523 = vpop.permute.xlu0 %1522
      %1524 = vset.pattern.permute.xlu0 0
      %1525 = vperm.xlu0 %1524, %v304
      %v1526 = vpop.permute.xlu0 %1525
      %1527 = vset.pattern.permute.xlu0 0
      %1528 = vperm.xlu0 %1527, %v305
      %v1529 = vpop.permute.xlu0 %1528
      %1530 = vset.pattern.permute.xlu0 0
      %1531 = vperm.xlu0 %1530, %v306
      %v1532 = vpop.permute.xlu0 %1531
      %1533 = vset.pattern.permute.xlu0 0
      %1534 = vperm.xlu0 %1533, %v307
      %v1535 = vpop.permute.xlu0 %1534
      %1536 = vset.pattern.permute.xlu0 0
      %1537 = vperm.xlu0 %1536, %v308
      %v1538 = vpop.permute.xlu0 %1537
      %1539 = vset.pattern.permute.xlu0 0
      %1540 = vperm.xlu0 %1539, %v309
      %v1541 = vpop.permute.xlu0 %1540
      %1542 = vset.pattern.permute.xlu0 0
      %1543 = vperm.xlu0 %1542, %v310
      %v1544 = vpop.permute.xlu0 %1543
      %1545 = vset.pattern.permute.xlu0 0
      %1546 = vperm.xlu0 %1545, %v311
      %v1547 = vpop.permute.xlu0 %1546
      %1548 = vset.pattern.permute.xlu0 0
      %1549 = vperm.xlu0 %1548, %v312
      %v1550 = vpop.permute.xlu0 %1549
      %1551 = vset.pattern.permute.xlu0 0
      %1552 = vperm.xlu0 %1551, %v313
      %v1553 = vpop.permute.xlu0 %1552
      %1554 = vset.pattern.permute.xlu0 0
      %1555 = vperm.xlu0 %1554, %v314
      %v1556 = vpop.permute.xlu0 %1555
      %1557 = vset.pattern.permute.xlu0 0
      %1558 = vperm.xlu0 %1557, %v315
      %v1559 = vpop.permute.xlu0 %1558
      %1560 = vset.pattern.permute.xlu0 0
      %1561 = vperm.xlu0 %1560, %v316
      %v1562 = vpop.permute.xlu0 %1561
      %1563 = vset.pattern.permute.xlu0 0
      %1564 = vperm.xlu0 %1563, %v317
      %v1565 = vpop.permute.xlu0 %1564
      %1566 = vset.pattern.permute.xlu0 0
      %1567 = vperm.xlu0 %1566, %v318
      %v1568 = vpop.permute.xlu0 %1567
      %1569 = vset.pattern.permute.xlu0 0
      %1570 = vperm.xlu0 %1569, %v319
      %v1571 = vpop.permute.xlu0 %1570
      %1572 = vset.pattern.permute.xlu0 0
      %1573 = vperm.xlu0 %1572, %v320
      %v1574 = vpop.permute.xlu0 %1573
      %1575 = vset.pattern.permute.xlu0 0
      %1576 = vperm.xlu0 %1575, %v321
      %v1577 = vpop.permute.xlu0 %1576
      %1578 = vset.pattern.permute.xlu0 0
      %1579 = vperm.xlu0 %1578, %v322
      %v1580 = vpop.permute.xlu0 %1579
      %1581 = vset.pattern.permute.xlu0 0
      %1582 = vperm.xlu0 %1581, %v323
      %v1583 = vpop.permute.xlu0 %1582
      %1584 = vset.pattern.permute.xlu0 0
      %1585 = vperm.xlu0 %1584, %v324
      %v1586 = vpop.permute.xlu0 %1585
      %1587 = vset.pattern.permute.xlu0 0
      %1588 = vperm.xlu0 %1587, %v325
      %v1589 = vpop.permute.xlu0 %1588
      %1590 = vset.pattern.permute.xlu0 0
      %1591 = vperm.xlu0 %1590, %v326
      %v1592 = vpop.permute.xlu0 %1591
      %1593 = vset.pattern.permute.xlu0 0
      %1594 = vperm.xlu0 %1593, %v327
      %v1595 = vpop.permute.xlu0 %1594
      %1596 = vset.pattern.permute.xlu0 0
      %1597 = vperm.xlu0 %1596, %v328
      %v1598 = vpop.permute.xlu0 %1597
      %1599 = vset.pattern.permute.xlu0 0
      %1600 = vperm.xlu0 %1599, %v329
      %v1601 = vpop.permute.xlu0 %1600
      %1602 = vset.pattern.permute.xlu0 0
      %1603 = vperm.xlu0 %1602, %v330
      %v1604 = vpop.permute.xlu0 %1603
      %1605 = vset.pattern.permute.xlu0 0
      %1606 = vperm.xlu0 %1605, %v331
      %v1607 = vpop.permute.xlu0 %1606
      %1608 = vset.pattern.permute.xlu0 0
      %1609 = vperm.xlu0 %1608, %v332
      %v1610 = vpop.permute.xlu0 %1609
      %1611 = vset.pattern.permute.xlu0 0
      %1612 = vperm.xlu0 %1611, %v333
      %v1613 = vpop.permute.xlu0 %1612
      %1614 = vset.pattern.permute.xlu0 0
      %1615 = vperm.xlu0 %1614, %v334
      %v1616 = vpop.permute.xlu0 %1615
      %1617 = vset.pattern.permute.xlu0 0
      %1618 = vperm.xlu0 %1617, %v335
      %v1619 = vpop.permute.xlu0 %1618
      %1620 = vset.pattern.permute.xlu0 0
      %1621 = vperm.xlu0 %1620, %v336
      %v1622 = vpop.permute.xlu0 %1621
      %1623 = vset.pattern.permute.xlu0 0
      %1624 = vperm.xlu0 %1623, %v337
      %v1625 = vpop.permute.xlu0 %1624
      %1626 = vset.pattern.permute.xlu0 0
      %1627 = vperm.xlu0 %1626, %v338
      %v1628 = vpop.permute.xlu0 %1627
      %1629 = vset.pattern.permute.xlu0 0
      %1630 = vperm.xlu0 %1629, %v339
      %v1631 = vpop.permute.xlu0 %1630
      %1632 = vset.pattern.permute.xlu0 0
      %1633 = vperm.xlu0 %1632, %v340
      %v1634 = vpop.permute.xlu0 %1633
      %1635 = vset.pattern.permute.xlu0 0
      %1636 = vperm.xlu0 %1635, %v341
      %v1637 = vpop.permute.xlu0 %1636
      %1638 = vset.pattern.permute.xlu0 0
      %1639 = vperm.xlu0 %1638, %v342
      %v1640 = vpop.permute.xlu0 %1639
      %1641 = vset.pattern.permute.xlu0 0
      %1642 = vperm.xlu0 %1641, %v343
      %v1643 = vpop.permute.xlu0 %1642
      %1644 = vset.pattern.permute.xlu0 0
      %1645 = vperm.xlu0 %1644, %v344
      %v1646 = vpop.permute.xlu0 %1645
      %1647 = vset.pattern.permute.xlu0 0
      %1648 = vperm.xlu0 %1647, %v345
      %v1649 = vpop.permute.xlu0 %1648
      %1650 = vset.pattern.permute.xlu0 0
      %1651 = vperm.xlu0 %1650, %v346
      %v1652 = vpop.permute.xlu0 %1651
      %1653 = vset.pattern.permute.xlu0 0
      %1654 = vperm.xlu0 %1653, %v347
      %v1655 = vpop.permute.xlu0 %1654
      %1656 = vset.pattern.permute.xlu0 0
      %1657 = vperm.xlu0 %1656, %v348
      %v1658 = vpop.permute.xlu0 %1657
      %1659 = vset.pattern.permute.xlu0 0
      %1660 = vperm.xlu0 %1659, %v349
      %v1661 = vpop.permute.xlu0 %1660
      %1662 = vset.pattern.permute.xlu0 0
      %1663 = vperm.xlu0 %1662, %v350
      %v1664 = vpop.permute.xlu0 %1663
      %1665 = vset.pattern.permute.xlu0 0
      %1666 = vperm.xlu0 %1665, %v351
      %v1667 = vpop.permute.xlu0 %1666
      %1668 = vset.pattern.permute.xlu0 0
      %1669 = vperm.xlu0 %1668, %v352
      %v1670 = vpop.permute.xlu0 %1669
      %1671 = vset.pattern.permute.xlu0 0
      %1672 = vperm.xlu0 %1671, %v353
      %v1673 = vpop.permute.xlu0 %1672
      %1674 = vset.pattern.permute.xlu0 0
      %1675 = vperm.xlu0 %1674, %v354
      %v1676 = vpop.permute.xlu0 %1675
      %1677 = vset.pattern.permute.xlu0 0
      %1678 = vperm.xlu0 %1677, %v355
      %v1679 = vpop.permute.xlu0 %1678
      %1680 = vset.pattern.permute.xlu0 0
      %1681 = vperm.xlu0 %1680, %v356
      %v1682 = vpop.permute.xlu0 %1681
      %1683 = vset.pattern.permute.xlu0 0
      %1684 = vperm.xlu0 %1683, %v357
      %v1685 = vpop.permute.xlu0 %1684
      %1686 = vset.pattern.permute.xlu0 0
      %1687 = vperm.xlu0 %1686, %v358
      %v1688 = vpop.permute.xlu0 %1687
      %1689 = vset.pattern.permute.xlu0 0
      %1690 = vperm.xlu0 %1689, %v359
      %v1691 = vpop.permute.xlu0 %1690
      %1692 = vset.pattern.permute.xlu0 0
      %1693 = vperm.xlu0 %1692, %v360
      %v1694 = vpop.permute.xlu0 %1693
      %1695 = vset.pattern.permute.xlu0 0
      %1696 = vperm.xlu0 %1695, %v361
      %v1697 = vpop.permute.xlu0 %1696
      %1698 = vset.pattern.permute.xlu0 0
      %1699 = vperm.xlu0 %1698, %v362
      %v1700 = vpop.permute.xlu0 %1699
      %1701 = vset.pattern.permute.xlu0 0
      %1702 = vperm.xlu0 %1701, %v363
      %v1703 = vpop.permute.xlu0 %1702
      %1704 = vset.pattern.permute.xlu0 0
      %1705 = vperm.xlu0 %1704, %v364
      %v1706 = vpop.permute.xlu0 %1705
      %1707 = vset.pattern.permute.xlu0 0
      %1708 = vperm.xlu0 %1707, %v365
      %v1709 = vpop.permute.xlu0 %1708
      %1710 = vset.pattern.permute.xlu0 0
      %1711 = vperm.xlu0 %1710, %v366
      %v1712 = vpop.permute.xlu0 %1711
      %1713 = vset.pattern.permute.xlu0 0
      %1714 = vperm.xlu0 %1713, %v367
      %v1715 = vpop.permute.xlu0 %1714
      %1716 = vset.pattern.permute.xlu0 0
      %1717 = vperm.xlu0 %1716, %v368
      %v1718 = vpop.permute.xlu0 %1717
      %1719 = vset.pattern.permute.xlu0 0
      %1720 = vperm.xlu0 %1719, %v369
      %v1721 = vpop.permute.xlu0 %1720
      %1722 = vset.pattern.permute.xlu0 0
      %1723 = vperm.xlu0 %1722, %v370
      %v1724 = vpop.permute.xlu0 %1723
      %1725 = vset.pattern.permute.xlu0 0
      %1726 = vperm.xlu0 %1725, %v371
      %v1727 = vpop.permute.xlu0 %1726
      %1728 = vset.pattern.permute.xlu0 0
      %1729 = vperm.xlu0 %1728, %v372
      %v1730 = vpop.permute.xlu0 %1729
      %1731 = vset.pattern.permute.xlu0 0
      %1732 = vperm.xlu0 %1731, %v373
      %v1733 = vpop.permute.xlu0 %1732
      %1734 = vset.pattern.permute.xlu0 0
      %1735 = vperm.xlu0 %1734, %v374
      %v1736 = vpop.permute.xlu0 %1735
      %1737 = vset.pattern.permute.xlu0 0
      %1738 = vperm.xlu0 %1737, %v375
      %v1739 = vpop.permute.xlu0 %1738
      %1740 = vset.pattern.permute.xlu0 0
      %1741 = vperm.xlu0 %1740, %v376
      %v1742 = vpop.permute.xlu0 %1741
      %1743 = vset.pattern.permute.xlu0 0
      %1744 = vperm.xlu0 %1743, %v377
      %v1745 = vpop.permute.xlu0 %1744
      %1746 = vset.pattern.permute.xlu0 0
      %1747 = vperm.xlu0 %1746, %v378
      %v1748 = vpop.permute.xlu0 %1747
      %1749 = vset.pattern.permute.xlu0 0
      %1750 = vperm.xlu0 %1749, %v379
      %v1751 = vpop.permute.xlu0 %1750
      %1752 = vset.pattern.permute.xlu0 0
      %1753 = vperm.xlu0 %1752, %v380
      %v1754 = vpop.permute.xlu0 %1753
      %1755 = vset.pattern.permute.xlu0 0
      %1756 = vperm.xlu0 %1755, %v381
      %v1757 = vpop.permute.xlu0 %1756
      %1758 = vset.pattern.permute.xlu0 0
      %1759 = vperm.xlu0 %1758, %v382
      %v1760 = vpop.permute.xlu0 %1759
      %1761 = vset.pattern.permute.xlu0 0
      %1762 = vperm.xlu0 %1761, %v383
      %v1763 = vpop.permute.xlu0 %1762
      %1764 = vset.pattern.permute.xlu0 0
      %1765 = vperm.xlu0 %1764, %v384
      %v1766 = vpop.permute.xlu0 %1765
      %1767 = vset.pattern.permute.xlu0 0
      %1768 = vperm.xlu0 %1767, %v385
      %v1769 = vpop.permute.xlu0 %1768
      %1770 = vset.pattern.permute.xlu0 0
      %1771 = vperm.xlu0 %1770, %v386
      %v1772 = vpop.permute.xlu0 %1771
      %1773 = vset.pattern.permute.xlu0 0
      %1774 = vperm.xlu0 %1773, %v387
      %v1775 = vpop.permute.xlu0 %1774
      %1776 = vset.pattern.permute.xlu0 0
      %1777 = vperm.xlu0 %1776, %v388
      %v1778 = vpop.permute.xlu0 %1777
      %1779 = vset.pattern.permute.xlu0 0
      %1780 = vperm.xlu0 %1779, %v389
      %v1781 = vpop.permute.xlu0 %1780
      %1782 = vset.pattern.permute.xlu0 0
      %1783 = vperm.xlu0 %1782, %v390
      %v1784 = vpop.permute.xlu0 %1783
      %1785 = vset.pattern.permute.xlu0 0
      %1786 = vperm.xlu0 %1785, %v391
      %v1787 = vpop.permute.xlu0 %1786
      %1788 = vset.pattern.permute.xlu0 0
      %1789 = vperm.xlu0 %1788, %v392
      %v1790 = vpop.permute.xlu0 %1789
      %1791 = vset.pattern.permute.xlu0 0
      %1792 = vperm.xlu0 %1791, %v393
      %v1793 = vpop.permute.xlu0 %1792
      %1794 = vset.pattern.permute.xlu0 0
      %1795 = vperm.xlu0 %1794, %v394
      %v1796 = vpop.permute.xlu0 %1795
      %1797 = vset.pattern.permute.xlu0 0
      %1798 = vperm.xlu0 %1797, %v395
      %v1799 = vpop.permute.xlu0 %1798
      %1800 = vset.pattern.permute.xlu0 0
      %1801 = vperm.xlu0 %1800, %v396
      %v1802 = vpop.permute.xlu0 %1801
      %1803 = vset.pattern.permute.xlu0 0
      %1804 = vperm.xlu0 %1803, %v397
      %v1805 = vpop.permute.xlu0 %1804
      %1806 = vset.pattern.permute.xlu0 0
      %1807 = vperm.xlu0 %1806, %v398
      %v1808 = vpop.permute.xlu0 %1807
      %1809 = vset.pattern.permute.xlu0 0
      %1810 = vperm.xlu0 %1809, %v399
      %v1811 = vpop.permute.xlu0 %1810
      %1812 = vset.pattern.permute.xlu0 0
      %1813 = vperm.xlu0 %1812, %v400
      %v1814 = vpop.permute.xlu0 %1813
      %1815 = vset.pattern.permute.xlu0 0
      %1816 = vperm.xlu0 %1815, %v401
      %v1817 = vpop.permute.xlu0 %1816
      %1818 = vset.pattern.permute.xlu0 0
      %1819 = vperm.xlu0 %1818, %v402
      %v1820 = vpop.permute.xlu0 %1819
      %1821 = vset.pattern.permute.xlu0 0
      %1822 = vperm.xlu0 %1821, %v403
      %v1823 = vpop.permute.xlu0 %1822
      %1824 = vset.pattern.permute.xlu0 0
      %1825 = vperm.xlu0 %1824, %v404
      %v1826 = vpop.permute.xlu0 %1825
      %1827 = vset.pattern.permute.xlu0 0
      %1828 = vperm.xlu0 %1827, %v405
      %v1829 = vpop.permute.xlu0 %1828
      %1830 = vset.pattern.permute.xlu0 0
      %1831 = vperm.xlu0 %1830, %v406
      %v1832 = vpop.permute.xlu0 %1831
      %1833 = vset.pattern.permute.xlu0 0
      %1834 = vperm.xlu0 %1833, %v407
      %v1835 = vpop.permute.xlu0 %1834
      %1836 = vset.pattern.permute.xlu0 0
      %1837 = vperm.xlu0 %1836, %v408
      %v1838 = vpop.permute.xlu0 %1837
      %1839 = vset.pattern.permute.xlu0 0
      %1840 = vperm.xlu0 %1839, %v409
      %v1841 = vpop.permute.xlu0 %1840
      %1842 = vset.pattern.permute.xlu0 0
      %1843 = vperm.xlu0 %1842, %v410
      %v1844 = vpop.permute.xlu0 %1843
      %1845 = vset.pattern.permute.xlu0 0
      %1846 = vperm.xlu0 %1845, %v411
      %v1847 = vpop.permute.xlu0 %1846
      %1848 = vset.pattern.permute.xlu0 0
      %1849 = vperm.xlu0 %1848, %v412
      %v1850 = vpop.permute.xlu0 %1849
      %1851 = vset.pattern.permute.xlu0 0
      %1852 = vperm.xlu0 %1851, %v413
      %v1853 = vpop.permute.xlu0 %1852
      %1854 = vset.pattern.permute.xlu0 0
      %1855 = vperm.xlu0 %1854, %v414
      %v1856 = vpop.permute.xlu0 %1855
      %1857 = vset.pattern.permute.xlu0 0
      %1858 = vperm.xlu0 %1857, %v415
      %v1859 = vpop.permute.xlu0 %1858
      %1860 = vset.pattern.permute.xlu0 0
      %1861 = vperm.xlu0 %1860, %v416
      %v1862 = vpop.permute.xlu0 %1861
      %1863 = vset.pattern.permute.xlu0 0
      %1864 = vperm.xlu0 %1863, %v417
      %v1865 = vpop.permute.xlu0 %1864
      %1866 = vset.pattern.permute.xlu0 0
      %1867 = vperm.xlu0 %1866, %v418
      %v1868 = vpop.permute.xlu0 %1867
      %1869 = vset.pattern.permute.xlu0 0
      %1870 = vperm.xlu0 %1869, %v419
      %v1871 = vpop.permute.xlu0 %1870
      %1872 = vset.pattern.permute.xlu0 0
      %1873 = vperm.xlu0 %1872, %v420
      %v1874 = vpop.permute.xlu0 %1873
      %1875 = vset.pattern.permute.xlu0 0
      %1876 = vperm.xlu0 %1875, %v421
      %v1877 = vpop.permute.xlu0 %1876
      %1878 = vset.pattern.permute.xlu0 0
      %1879 = vperm.xlu0 %1878, %v422
      %v1880 = vpop.permute.xlu0 %1879
      %1881 = vset.pattern.permute.xlu0 0
      %1882 = vperm.xlu0 %1881, %v423
      %v1883 = vpop.permute.xlu0 %1882
      %1884 = vset.pattern.permute.xlu0 0
      %1885 = vperm.xlu0 %1884, %v424
      %v1886 = vpop.permute.xlu0 %1885
      %1887 = vset.pattern.permute.xlu0 0
      %1888 = vperm.xlu0 %1887, %v425
      %v1889 = vpop.permute.xlu0 %1888
      %1890 = vset.pattern.permute.xlu0 0
      %1891 = vperm.xlu0 %1890, %v426
      %v1892 = vpop.permute.xlu0 %1891
      %1893 = vset.pattern.permute.xlu0 0
      %1894 = vperm.xlu0 %1893, %v427
      %v1895 = vpop.permute.xlu0 %1894
      %1896 = vset.pattern.permute.xlu0 0
      %1897 = vperm.xlu0 %1896, %v428
      %v1898 = vpop.permute.xlu0 %1897
      %1899 = vset.pattern.permute.xlu0 0
      %1900 = vperm.xlu0 %1899, %v429
      %v1901 = vpop.permute.xlu0 %1900
      %1902 = vset.pattern.permute.xlu0 0
      %1903 = vperm.xlu0 %1902, %v430
      %v1904 = vpop.permute.xlu0 %1903
      %1905 = vset.pattern.permute.xlu0 0
      %1906 = vperm.xlu0 %1905, %v431
      %v1907 = vpop.permute.xlu0 %1906
      %1908 = vset.pattern.permute.xlu0 0
      %1909 = vperm.xlu0 %1908, %v432
      %v1910 = vpop.permute.xlu0 %1909
      %1911 = vset.pattern.permute.xlu0 0
      %1912 = vperm.xlu0 %1911, %v433
      %v1913 = vpop.permute.xlu0 %1912
      %1914 = vset.pattern.permute.xlu0 0
      %1915 = vperm.xlu0 %1914, %v434
      %v1916 = vpop.permute.xlu0 %1915
      %1917 = vset.pattern.permute.xlu0 0
      %1918 = vperm.xlu0 %1917, %v435
      %v1919 = vpop.permute.xlu0 %1918
      %1920 = vset.pattern.permute.xlu0 0
      %1921 = vperm.xlu0 %1920, %v436
      %v1922 = vpop.permute.xlu0 %1921
      %1923 = vset.pattern.permute.xlu0 0
      %1924 = vperm.xlu0 %1923, %v437
      %v1925 = vpop.permute.xlu0 %1924
      %1926 = vset.pattern.permute.xlu0 0
      %1927 = vperm.xlu0 %1926, %v438
      %v1928 = vpop.permute.xlu0 %1927
      %1929 = vset.pattern.permute.xlu0 0
      %1930 = vperm.xlu0 %1929, %v439
      %v1931 = vpop.permute.xlu0 %1930
      %1932 = vset.pattern.permute.xlu0 0
      %1933 = vperm.xlu0 %1932, %v440
      %v1934 = vpop.permute.xlu0 %1933
      %1935 = vset.pattern.permute.xlu0 0
      %1936 = vperm.xlu0 %1935, %v441
      %v1937 = vpop.permute.xlu0 %1936
      %1938 = vset.pattern.permute.xlu0 0
      %1939 = vperm.xlu0 %1938, %v442
      %v1940 = vpop.permute.xlu0 %1939
      %1941 = vset.pattern.permute.xlu0 0
      %1942 = vperm.xlu0 %1941, %v443
      %v1943 = vpop.permute.xlu0 %1942
      %1944 = vset.pattern.permute.xlu0 0
      %1945 = vperm.xlu0 %1944, %v444
      %v1946 = vpop.permute.xlu0 %1945
      %1947 = vset.pattern.permute.xlu0 0
      %1948 = vperm.xlu0 %1947, %v445
      %v1949 = vpop.permute.xlu0 %1948
      %1950 = vset.pattern.permute.xlu0 0
      %1951 = vperm.xlu0 %1950, %v446
      %v1952 = vpop.permute.xlu0 %1951
      %1953 = vset.pattern.permute.xlu0 0
      %1954 = vperm.xlu0 %1953, %v447
      %v1955 = vpop.permute.xlu0 %1954
      %1956 = vset.pattern.permute.xlu0 0
      %1957 = vperm.xlu0 %1956, %v448
      %v1958 = vpop.permute.xlu0 %1957
      %1959 = vset.pattern.permute.xlu0 0
      %1960 = vperm.xlu0 %1959, %v449
      %v1961 = vpop.permute.xlu0 %1960
      %1962 = vset.pattern.permute.xlu0 0
      %1963 = vperm.xlu0 %1962, %v450
      %v1964 = vpop.permute.xlu0 %1963
      %1965 = vset.pattern.permute.xlu0 0
      %1966 = vperm.xlu0 %1965, %v451
      %v1967 = vpop.permute.xlu0 %1966
      %1968 = vset.pattern.permute.xlu0 0
      %1969 = vperm.xlu0 %1968, %v452
      %v1970 = vpop.permute.xlu0 %1969
      %1971 = vset.pattern.permute.xlu0 0
      %1972 = vperm.xlu0 %1971, %v453
      %v1973 = vpop.permute.xlu0 %1972
      %1974 = vset.pattern.permute.xlu0 0
      %1975 = vperm.xlu0 %1974, %v454
      %v1976 = vpop.permute.xlu0 %1975
      %1977 = vset.pattern.permute.xlu0 0
      %1978 = vperm.xlu0 %1977, %v455
      %v1979 = vpop.permute.xlu0 %1978
      %1980 = vset.pattern.permute.xlu0 0
      %1981 = vperm.xlu0 %1980, %v456
      %v1982 = vpop.permute.xlu0 %1981
      %1983 = vset.pattern.permute.xlu0 0
      %1984 = vperm.xlu0 %1983, %v457
      %v1985 = vpop.permute.xlu0 %1984
      %1986 = vset.pattern.permute.xlu0 0
      %1987 = vperm.xlu0 %1986, %v458
      %v1988 = vpop.permute.xlu0 %1987
      %1989 = vset.pattern.permute.xlu0 0
      %1990 = vperm.xlu0 %1989, %v459
      %v1991 = vpop.permute.xlu0 %1990
      %1992 = vset.pattern.permute.xlu0 0
      %1993 = vperm.xlu0 %1992, %v460
      %v1994 = vpop.permute.xlu0 %1993
      %1995 = vset.pattern.permute.xlu0 0
      %1996 = vperm.xlu0 %1995, %v461
      %v1997 = vpop.permute.xlu0 %1996
      %1998 = vset.pattern.permute.xlu0 0
      %1999 = vperm.xlu0 %1998, %v462
      %v2000 = vpop.permute.xlu0 %1999
      %v2001 = vsel %vm463, %v467, %v1235
      %v2002 = vsel %vm464, %v467, %v1235
      %v2003 = vsel %vm463, %v470, %v1238
      %v2004 = vsel %vm464, %v470, %v1238
      %v2005 = vsel %vm463, %v473, %v1241
      %v2006 = vsel %vm464, %v473, %v1241
      %v2007 = vsel %vm463, %v476, %v1244
      %v2008 = vsel %vm464, %v476, %v1244
      %v2009 = vsel %vm463, %v479, %v1247
      %v2010 = vsel %vm464, %v479, %v1247
      %v2011 = vsel %vm463, %v482, %v1250
      %v2012 = vsel %vm464, %v482, %v1250
      %v2013 = vsel %vm463, %v485, %v1253
      %v2014 = vsel %vm464, %v485, %v1253
      %v2015 = vsel %vm463, %v488, %v1256
      %v2016 = vsel %vm464, %v488, %v1256
      %v2017 = vsel %vm463, %v491, %v1259
      %v2018 = vsel %vm464, %v491, %v1259
      %v2019 = vsel %vm463, %v494, %v1262
      %v2020 = vsel %vm464, %v494, %v1262
      %v2021 = vsel %vm463, %v497, %v1265
      %v2022 = vsel %vm464, %v497, %v1265
      %v2023 = vsel %vm463, %v500, %v1268
      %v2024 = vsel %vm464, %v500, %v1268
      %v2025 = vsel %vm463, %v503, %v1271
      %v2026 = vsel %vm464, %v503, %v1271
      %v2027 = vsel %vm463, %v506, %v1274
      %v2028 = vsel %vm464, %v506, %v1274
      %v2029 = vsel %vm463, %v509, %v1277
      %v2030 = vsel %vm464, %v509, %v1277
      %v2031 = vsel %vm463, %v512, %v1280
      %v2032 = vsel %vm464, %v512, %v1280
      %v2033 = vsel %vm463, %v515, %v1283
      %v2034 = vsel %vm464, %v515, %v1283
      %v2035 = vsel %vm463, %v518, %v1286
      %v2036 = vsel %vm464, %v518, %v1286
      %v2037 = vsel %vm463, %v521, %v1289
      %v2038 = vsel %vm464, %v521, %v1289
      %v2039 = vsel %vm463, %v524, %v1292
      %v2040 = vsel %vm464, %v524, %v1292
      %v2041 = vsel %vm463, %v527, %v1295
      %v2042 = vsel %vm464, %v527, %v1295
      %v2043 = vsel %vm463, %v530, %v1298
      %v2044 = vsel %vm464, %v530, %v1298
      %v2045 = vsel %vm463, %v533, %v1301
      %v2046 = vsel %vm464, %v533, %v1301
      %v2047 = vsel %vm463, %v536, %v1304
      %v2048 = vsel %vm464, %v536, %v1304
      %v2049 = vsel %vm463, %v539, %v1307
      %v2050 = vsel %vm464, %v539, %v1307
      %v2051 = vsel %vm463, %v542, %v1310
      %v2052 = vsel %vm464, %v542, %v1310
      %v2053 = vsel %vm463, %v545, %v1313
      %v2054 = vsel %vm464, %v545, %v1313
      %v2055 = vsel %vm463, %v548, %v1316
      %v2056 = vsel %vm464, %v548, %v1316
      %v2057 = vsel %vm463, %v551, %v1319
      %v2058 = vsel %vm464, %v551, %v1319
      %v2059 = vsel %vm463, %v554, %v1322
      %v2060 = vsel %vm464, %v554, %v1322
      %v2061 = vsel %vm463, %v557, %v1325
      %v2062 = vsel %vm464, %v557, %v1325
      %v2063 = vsel %vm463, %v560, %v1328
      %v2064 = vsel %vm464, %v560, %v1328
      %v2065 = vsel %vm463, %v563, %v1331
      %v2066 = vsel %vm464, %v563, %v1331
      %v2067 = vsel %vm463, %v566, %v1334
      %v2068 = vsel %vm464, %v566, %v1334
      %v2069 = vsel %vm463, %v569, %v1337
      %v2070 = vsel %vm464, %v569, %v1337
      %v2071 = vsel %vm463, %v572, %v1340
      %v2072 = vsel %vm464, %v572, %v1340
      %v2073 = vsel %vm463, %v575, %v1343
      %v2074 = vsel %vm464, %v575, %v1343
      %v2075 = vsel %vm463, %v578, %v1346
      %v2076 = vsel %vm464, %v578, %v1346
      %v2077 = vsel %vm463, %v581, %v1349
      %v2078 = vsel %vm464, %v581, %v1349
      %v2079 = vsel %vm463, %v584, %v1352
      %v2080 = vsel %vm464, %v584, %v1352
      %v2081 = vsel %vm463, %v587, %v1355
      %v2082 = vsel %vm464, %v587, %v1355
      %v2083 = vsel %vm463, %v590, %v1358
      %v2084 = vsel %vm464, %v590, %v1358
      %v2085 = vsel %vm463, %v593, %v1361
      %v2086 = vsel %vm464, %v593, %v1361
      %v2087 = vsel %vm463, %v596, %v1364
      %v2088 = vsel %vm464, %v596, %v1364
      %v2089 = vsel %vm463, %v599, %v1367
      %v2090 = vsel %vm464, %v599, %v1367
      %v2091 = vsel %vm463, %v602, %v1370
      %v2092 = vsel %vm464, %v602, %v1370
      %v2093 = vsel %vm463, %v605, %v1373
      %v2094 = vsel %vm464, %v605, %v1373
      %v2095 = vsel %vm463, %v608, %v1376
      %v2096 = vsel %vm464, %v608, %v1376
      %v2097 = vsel %vm463, %v611, %v1379
      %v2098 = vsel %vm464, %v611, %v1379
      %v2099 = vsel %vm463, %v614, %v1382
      %v2100 = vsel %vm464, %v614, %v1382
      %v2101 = vsel %vm463, %v617, %v1385
      %v2102 = vsel %vm464, %v617, %v1385
      %v2103 = vsel %vm463, %v620, %v1388
      %v2104 = vsel %vm464, %v620, %v1388
      %v2105 = vsel %vm463, %v623, %v1391
      %v2106 = vsel %vm464, %v623, %v1391
      %v2107 = vsel %vm463, %v626, %v1394
      %v2108 = vsel %vm464, %v626, %v1394
      %v2109 = vsel %vm463, %v629, %v1397
      %v2110 = vsel %vm464, %v629, %v1397
      %v2111 = vsel %vm463, %v632, %v1400
      %v2112 = vsel %vm464, %v632, %v1400
      %v2113 = vsel %vm463, %v635, %v1403
      %v2114 = vsel %vm464, %v635, %v1403
      %v2115 = vsel %vm463, %v638, %v1406
      %v2116 = vsel %vm464, %v638, %v1406
      %v2117 = vsel %vm463, %v641, %v1409
      %v2118 = vsel %vm464, %v641, %v1409
      %v2119 = vsel %vm463, %v644, %v1412
      %v2120 = vsel %vm464, %v644, %v1412
      %v2121 = vsel %vm463, %v647, %v1415
      %v2122 = vsel %vm464, %v647, %v1415
      %v2123 = vsel %vm463, %v650, %v1418
      %v2124 = vsel %vm464, %v650, %v1418
      %v2125 = vsel %vm463, %v653, %v1421
      %v2126 = vsel %vm464, %v653, %v1421
      %v2127 = vsel %vm463, %v656, %v1424
      %v2128 = vsel %vm464, %v656, %v1424
      %v2129 = vsel %vm463, %v659, %v1427
      %v2130 = vsel %vm464, %v659, %v1427
      %v2131 = vsel %vm463, %v662, %v1430
      %v2132 = vsel %vm464, %v662, %v1430
      %v2133 = vsel %vm463, %v665, %v1433
      %v2134 = vsel %vm464, %v665, %v1433
      %v2135 = vsel %vm463, %v668, %v1436
      %v2136 = vsel %vm464, %v668, %v1436
      %v2137 = vsel %vm463, %v671, %v1439
      %v2138 = vsel %vm464, %v671, %v1439
      %v2139 = vsel %vm463, %v674, %v1442
      %v2140 = vsel %vm464, %v674, %v1442
      %v2141 = vsel %vm463, %v677, %v1445
      %v2142 = vsel %vm464, %v677, %v1445
      %v2143 = vsel %vm463, %v680, %v1448
      %v2144 = vsel %vm464, %v680, %v1448
      %v2145 = vsel %vm463, %v683, %v1451
      %v2146 = vsel %vm464, %v683, %v1451
      %v2147 = vsel %vm463, %v686, %v1454
      %v2148 = vsel %vm464, %v686, %v1454
      %v2149 = vsel %vm463, %v689, %v1457
      %v2150 = vsel %vm464, %v689, %v1457
      %v2151 = vsel %vm463, %v692, %v1460
      %v2152 = vsel %vm464, %v692, %v1460
      %v2153 = vsel %vm463, %v695, %v1463
      %v2154 = vsel %vm464, %v695, %v1463
      %v2155 = vsel %vm463, %v698, %v1466
      %v2156 = vsel %vm464, %v698, %v1466
      %v2157 = vsel %vm463, %v701, %v1469
      %v2158 = vsel %vm464, %v701, %v1469
      %v2159 = vsel %vm463, %v704, %v1472
      %v2160 = vsel %vm464, %v704, %v1472
      %v2161 = vsel %vm463, %v707, %v1475
      %v2162 = vsel %vm464, %v707, %v1475
      %v2163 = vsel %vm463, %v710, %v1478
      %v2164 = vsel %vm464, %v710, %v1478
      %v2165 = vsel %vm463, %v713, %v1481
      %v2166 = vsel %vm464, %v713, %v1481
      %v2167 = vsel %vm463, %v716, %v1484
      %v2168 = vsel %vm464, %v716, %v1484
      %v2169 = vsel %vm463, %v719, %v1487
      %v2170 = vsel %vm464, %v719, %v1487
      %v2171 = vsel %vm463, %v722, %v1490
      %v2172 = vsel %vm464, %v722, %v1490
      %v2173 = vsel %vm463, %v725, %v1493
      %v2174 = vsel %vm464, %v725, %v1493
      %v2175 = vsel %vm463, %v728, %v1496
      %v2176 = vsel %vm464, %v728, %v1496
      %v2177 = vsel %vm463, %v731, %v1499
      %v2178 = vsel %vm464, %v731, %v1499
      %v2179 = vsel %vm463, %v734, %v1502
      %v2180 = vsel %vm464, %v734, %v1502
      %v2181 = vsel %vm463, %v737, %v1505
      %v2182 = vsel %vm464, %v737, %v1505
      %v2183 = vsel %vm463, %v740, %v1508
      %v2184 = vsel %vm464, %v740, %v1508
      %v2185 = vsel %vm463, %v743, %v1511
      %v2186 = vsel %vm464, %v743, %v1511
      %v2187 = vsel %vm463, %v746, %v1514
      %v2188 = vsel %vm464, %v746, %v1514
      %v2189 = vsel %vm463, %v749, %v1517
      %v2190 = vsel %vm464, %v749, %v1517
      %v2191 = vsel %vm463, %v752, %v1520
      %v2192 = vsel %vm464, %v752, %v1520
      %v2193 = vsel %vm463, %v755, %v1523
      %v2194 = vsel %vm464, %v755, %v1523
      %v2195 = vsel %vm463, %v758, %v1526
      %v2196 = vsel %vm464, %v758, %v1526
      %v2197 = vsel %vm463, %v761, %v1529
      %v2198 = vsel %vm464, %v761, %v1529
      %v2199 = vsel %vm463, %v764, %v1532
      %v2200 = vsel %vm464, %v764, %v1532
      %v2201 = vsel %vm463, %v767, %v1535
      %v2202 = vsel %vm464, %v767, %v1535
      %v2203 = vsel %vm463, %v770, %v1538
      %v2204 = vsel %vm464, %v770, %v1538
      %v2205 = vsel %vm463, %v773, %v1541
      %v2206 = vsel %vm464, %v773, %v1541
      %v2207 = vsel %vm463, %v776, %v1544
      %v2208 = vsel %vm464, %v776, %v1544
      %v2209 = vsel %vm463, %v779, %v1547
      %v2210 = vsel %vm464, %v779, %v1547
      %v2211 = vsel %vm463, %v782, %v1550
      %v2212 = vsel %vm464, %v782, %v1550
      %v2213 = vsel %vm463, %v785, %v1553
      %v2214 = vsel %vm464, %v785, %v1553
      %v2215 = vsel %vm463, %v788, %v1556
      %v2216 = vsel %vm464, %v788, %v1556
      %v2217 = vsel %vm463, %v791, %v1559
      %v2218 = vsel %vm464, %v791, %v1559
      %v2219 = vsel %vm463, %v794, %v1562
      %v2220 = vsel %vm464, %v794, %v1562
      %v2221 = vsel %vm463, %v797, %v1565
      %v2222 = vsel %vm464, %v797, %v1565
      %v2223 = vsel %vm463, %v800, %v1568
      %v2224 = vsel %vm464, %v800, %v1568
      %v2225 = vsel %vm463, %v803, %v1571
      %v2226 = vsel %vm464, %v803, %v1571
      %v2227 = vsel %vm463, %v806, %v1574
      %v2228 = vsel %vm464, %v806, %v1574
      %v2229 = vsel %vm463, %v809, %v1577
      %v2230 = vsel %vm464, %v809, %v1577
      %v2231 = vsel %vm463, %v812, %v1580
      %v2232 = vsel %vm464, %v812, %v1580
      %v2233 = vsel %vm463, %v815, %v1583
      %v2234 = vsel %vm464, %v815, %v1583
      %v2235 = vsel %vm463, %v818, %v1586
      %v2236 = vsel %vm464, %v818, %v1586
      %v2237 = vsel %vm463, %v821, %v1589
      %v2238 = vsel %vm464, %v821, %v1589
      %v2239 = vsel %vm463, %v824, %v1592
      %v2240 = vsel %vm464, %v824, %v1592
      %v2241 = vsel %vm463, %v827, %v1595
      %v2242 = vsel %vm464, %v827, %v1595
      %v2243 = vsel %vm463, %v830, %v1598
      %v2244 = vsel %vm464, %v830, %v1598
      %v2245 = vsel %vm463, %v833, %v1601
      %v2246 = vsel %vm464, %v833, %v1601
      %v2247 = vsel %vm463, %v836, %v1604
      %v2248 = vsel %vm464, %v836, %v1604
      %v2249 = vsel %vm463, %v839, %v1607
      %v2250 = vsel %vm464, %v839, %v1607
      %v2251 = vsel %vm463, %v842, %v1610
      %v2252 = vsel %vm464, %v842, %v1610
      %v2253 = vsel %vm463, %v845, %v1613
      %v2254 = vsel %vm464, %v845, %v1613
      %v2255 = vsel %vm463, %v848, %v1616
      %v2256 = vsel %vm464, %v848, %v1616
      %v2257 = vsel %vm463, %v851, %v1619
      %v2258 = vsel %vm464, %v851, %v1619
      %v2259 = vsel %vm463, %v854, %v1622
      %v2260 = vsel %vm464, %v854, %v1622
      %v2261 = vsel %vm463, %v857, %v1625
      %v2262 = vsel %vm464, %v857, %v1625
      %v2263 = vsel %vm463, %v860, %v1628
      %v2264 = vsel %vm464, %v860, %v1628
      %v2265 = vsel %vm463, %v863, %v1631
      %v2266 = vsel %vm464, %v863, %v1631
      %v2267 = vsel %vm463, %v866, %v1634
      %v2268 = vsel %vm464, %v866, %v1634
      %v2269 = vsel %vm463, %v869, %v1637
      %v2270 = vsel %vm464, %v869, %v1637
      %v2271 = vsel %vm463, %v872, %v1640
      %v2272 = vsel %vm464, %v872, %v1640
      %v2273 = vsel %vm463, %v875, %v1643
      %v2274 = vsel %vm464, %v875, %v1643
      %v2275 = vsel %vm463, %v878, %v1646
      %v2276 = vsel %vm464, %v878, %v1646
      %v2277 = vsel %vm463, %v881, %v1649
      %v2278 = vsel %vm464, %v881, %v1649
      %v2279 = vsel %vm463, %v884, %v1652
      %v2280 = vsel %vm464, %v884, %v1652
      %v2281 = vsel %vm463, %v887, %v1655
      %v2282 = vsel %vm464, %v887, %v1655
      %v2283 = vsel %vm463, %v890, %v1658
      %v2284 = vsel %vm464, %v890, %v1658
      %v2285 = vsel %vm463, %v893, %v1661
      %v2286 = vsel %vm464, %v893, %v1661
      %v2287 = vsel %vm463, %v896, %v1664
      %v2288 = vsel %vm464, %v896, %v1664
      %v2289 = vsel %vm463, %v899, %v1667
      %v2290 = vsel %vm464, %v899, %v1667
      %v2291 = vsel %vm463, %v902, %v1670
      %v2292 = vsel %vm464, %v902, %v1670
      %v2293 = vsel %vm463, %v905, %v1673
      %v2294 = vsel %vm464, %v905, %v1673
      %v2295 = vsel %vm463, %v908, %v1676
      %v2296 = vsel %vm464, %v908, %v1676
      %v2297 = vsel %vm463, %v911, %v1679
      %v2298 = vsel %vm464, %v911, %v1679
      %v2299 = vsel %vm463, %v914, %v1682
      %v2300 = vsel %vm464, %v914, %v1682
      %v2301 = vsel %vm463, %v917, %v1685
      %v2302 = vsel %vm464, %v917, %v1685
      %v2303 = vsel %vm463, %v920, %v1688
      %v2304 = vsel %vm464, %v920, %v1688
      %v2305 = vsel %vm463, %v923, %v1691
      %v2306 = vsel %vm464, %v923, %v1691
      %v2307 = vsel %vm463, %v926, %v1694
      %v2308 = vsel %vm464, %v926, %v1694
      %v2309 = vsel %vm463, %v929, %v1697
      %v2310 = vsel %vm464, %v929, %v1697
      %v2311 = vsel %vm463, %v932, %v1700
      %v2312 = vsel %vm464, %v932, %v1700
      %v2313 = vsel %vm463, %v935, %v1703
      %v2314 = vsel %vm464, %v935, %v1703
      %v2315 = vsel %vm463, %v938, %v1706
      %v2316 = vsel %vm464, %v938, %v1706
      %v2317 = vsel %vm463, %v941, %v1709
      %v2318 = vsel %vm464, %v941, %v1709
      %v2319 = vsel %vm463, %v944, %v1712
      %v2320 = vsel %vm464, %v944, %v1712
      %v2321 = vsel %vm463, %v947, %v1715
      %v2322 = vsel %vm464, %v947, %v1715
      %v2323 = vsel %vm463, %v950, %v1718
      %v2324 = vsel %vm464, %v950, %v1718
      %v2325 = vsel %vm463, %v953, %v1721
      %v2326 = vsel %vm464, %v953, %v1721
      %v2327 = vsel %vm463, %v956, %v1724
      %v2328 = vsel %vm464, %v956, %v1724
      %v2329 = vsel %vm463, %v959, %v1727
      %v2330 = vsel %vm464, %v959, %v1727
      %v2331 = vsel %vm463, %v962, %v1730
      %v2332 = vsel %vm464, %v962, %v1730
      %v2333 = vsel %vm463, %v965, %v1733
      %v2334 = vsel %vm464, %v965, %v1733
      %v2335 = vsel %vm463, %v968, %v1736
      %v2336 = vsel %vm464, %v968, %v1736
      %v2337 = vsel %vm463, %v971, %v1739
      %v2338 = vsel %vm464, %v971, %v1739
      %v2339 = vsel %vm463, %v974, %v1742
      %v2340 = vsel %vm464, %v974, %v1742
      %v2341 = vsel %vm463, %v977, %v1745
      %v2342 = vsel %vm464, %v977, %v1745
      %v2343 = vsel %vm463, %v980, %v1748
      %v2344 = vsel %vm464, %v980, %v1748
      %v2345 = vsel %vm463, %v983, %v1751
      %v2346 = vsel %vm464, %v983, %v1751
      %v2347 = vsel %vm463, %v986, %v1754
      %v2348 = vsel %vm464, %v986, %v1754
      %v2349 = vsel %vm463, %v989, %v1757
      %v2350 = vsel %vm464, %v989, %v1757
      %v2351 = vsel %vm463, %v992, %v1760
      %v2352 = vsel %vm464, %v992, %v1760
      %v2353 = vsel %vm463, %v995, %v1763
      %v2354 = vsel %vm464, %v995, %v1763
      %v2355 = vsel %vm463, %v998, %v1766
      %v2356 = vsel %vm464, %v998, %v1766
      %v2357 = vsel %vm463, %v1001, %v1769
      %v2358 = vsel %vm464, %v1001, %v1769
      %v2359 = vsel %vm463, %v1004, %v1772
      %v2360 = vsel %vm464, %v1004, %v1772
      %v2361 = vsel %vm463, %v1007, %v1775
      %v2362 = vsel %vm464, %v1007, %v1775
      %v2363 = vsel %vm463, %v1010, %v1778
      %v2364 = vsel %vm464, %v1010, %v1778
      %v2365 = vsel %vm463, %v1013, %v1781
      %v2366 = vsel %vm464, %v1013, %v1781
      %v2367 = vsel %vm463, %v1016, %v1784
      %v2368 = vsel %vm464, %v1016, %v1784
      %v2369 = vsel %vm463, %v1019, %v1787
      %v2370 = vsel %vm464, %v1019, %v1787
      %v2371 = vsel %vm463, %v1022, %v1790
      %v2372 = vsel %vm464, %v1022, %v1790
      %v2373 = vsel %vm463, %v1025, %v1793
      %v2374 = vsel %vm464, %v1025, %v1793
      %v2375 = vsel %vm463, %v1028, %v1796
      %v2376 = vsel %vm464, %v1028, %v1796
      %v2377 = vsel %vm463, %v1031, %v1799
      %v2378 = vsel %vm464, %v1031, %v1799
      %v2379 = vsel %vm463, %v1034, %v1802
      %v2380 = vsel %vm464, %v1034, %v1802
      %v2381 = vsel %vm463, %v1037, %v1805
      %v2382 = vsel %vm464, %v1037, %v1805
      %v2383 = vsel %vm463, %v1040, %v1808
      %v2384 = vsel %vm464, %v1040, %v1808
      %v2385 = vsel %vm463, %v1043, %v1811
      %v2386 = vsel %vm464, %v1043, %v1811
      %v2387 = vsel %vm463, %v1046, %v1814
      %v2388 = vsel %vm464, %v1046, %v1814
      %v2389 = vsel %vm463, %v1049, %v1817
      %v2390 = vsel %vm464, %v1049, %v1817
      %v2391 = vsel %vm463, %v1052, %v1820
      %v2392 = vsel %vm464, %v1052, %v1820
      %v2393 = vsel %vm463, %v1055, %v1823
      %v2394 = vsel %vm464, %v1055, %v1823
      %v2395 = vsel %vm463, %v1058, %v1826
      %v2396 = vsel %vm464, %v1058, %v1826
      %v2397 = vsel %vm463, %v1061, %v1829
      %v2398 = vsel %vm464, %v1061, %v1829
      %v2399 = vsel %vm463, %v1064, %v1832
      %v2400 = vsel %vm464, %v1064, %v1832
      %v2401 = vsel %vm463, %v1067, %v1835
      %v2402 = vsel %vm464, %v1067, %v1835
      %v2403 = vsel %vm463, %v1070, %v1838
      %v2404 = vsel %vm464, %v1070, %v1838
      %v2405 = vsel %vm463, %v1073, %v1841
      %v2406 = vsel %vm464, %v1073, %v1841
      %v2407 = vsel %vm463, %v1076, %v1844
      %v2408 = vsel %vm464, %v1076, %v1844
      %v2409 = vsel %vm463, %v1079, %v1847
      %v2410 = vsel %vm464, %v1079, %v1847
      %v2411 = vsel %vm463, %v1082, %v1850
      %v2412 = vsel %vm464, %v1082, %v1850
      %v2413 = vsel %vm463, %v1085, %v1853
      %v2414 = vsel %vm464, %v1085, %v1853
      %v2415 = vsel %vm463, %v1088, %v1856
      %v2416 = vsel %vm464, %v1088, %v1856
      %v2417 = vsel %vm463, %v1091, %v1859
      %v2418 = vsel %vm464, %v1091, %v1859
      %v2419 = vsel %vm463, %v1094, %v1862
      %v2420 = vsel %vm464, %v1094, %v1862
      %v2421 = vsel %vm463, %v1097, %v1865
      %v2422 = vsel %vm464, %v1097, %v1865
      %v2423 = vsel %vm463, %v1100, %v1868
      %v2424 = vsel %vm464, %v1100, %v1868
      %v2425 = vsel %vm463, %v1103, %v1871
      %v2426 = vsel %vm464, %v1103, %v1871
      %v2427 = vsel %vm463, %v1106, %v1874
      %v2428 = vsel %vm464, %v1106, %v1874
      %v2429 = vsel %vm463, %v1109, %v1877
      %v2430 = vsel %vm464, %v1109, %v1877
      %v2431 = vsel %vm463, %v1112, %v1880
      %v2432 = vsel %vm464, %v1112, %v1880
      %v2433 = vsel %vm463, %v1115, %v1883
      %v2434 = vsel %vm464, %v1115, %v1883
      %v2435 = vsel %vm463, %v1118, %v1886
      %v2436 = vsel %vm464, %v1118, %v1886
      %v2437 = vsel %vm463, %v1121, %v1889
      %v2438 = vsel %vm464, %v1121, %v1889
      %v2439 = vsel %vm463, %v1124, %v1892
      %v2440 = vsel %vm464, %v1124, %v1892
      %v2441 = vsel %vm463, %v1127, %v1895
      %v2442 = vsel %vm464, %v1127, %v1895
      %v2443 = vsel %vm463, %v1130, %v1898
      %v2444 = vsel %vm464, %v1130, %v1898
      %v2445 = vsel %vm463, %v1133, %v1901
      %v2446 = vsel %vm464, %v1133, %v1901
      %v2447 = vsel %vm463, %v1136, %v1904
      %v2448 = vsel %vm464, %v1136, %v1904
      %v2449 = vsel %vm463, %v1139, %v1907
      %v2450 = vsel %vm464, %v1139, %v1907
      %v2451 = vsel %vm463, %v1142, %v1910
      %v2452 = vsel %vm464, %v1142, %v1910
      %v2453 = vsel %vm463, %v1145, %v1913
      %v2454 = vsel %vm464, %v1145, %v1913
      %v2455 = vsel %vm463, %v1148, %v1916
      %v2456 = vsel %vm464, %v1148, %v1916
      %v2457 = vsel %vm463, %v1151, %v1919
      %v2458 = vsel %vm464, %v1151, %v1919
      %v2459 = vsel %vm463, %v1154, %v1922
      %v2460 = vsel %vm464, %v1154, %v1922
      %v2461 = vsel %vm463, %v1157, %v1925
      %v2462 = vsel %vm464, %v1157, %v1925
      %v2463 = vsel %vm463, %v1160, %v1928
      %v2464 = vsel %vm464, %v1160, %v1928
      %v2465 = vsel %vm463, %v1163, %v1931
      %v2466 = vsel %vm464, %v1163, %v1931
      %v2467 = vsel %vm463, %v1166, %v1934
      %v2468 = vsel %vm464, %v1166, %v1934
      %v2469 = vsel %vm463, %v1169, %v1937
      %v2470 = vsel %vm464, %v1169, %v1937
      %v2471 = vsel %vm463, %v1172, %v1940
      %v2472 = vsel %vm464, %v1172, %v1940
      %v2473 = vsel %vm463, %v1175, %v1943
      %v2474 = vsel %vm464, %v1175, %v1943
      %v2475 = vsel %vm463, %v1178, %v1946
      %v2476 = vsel %vm464, %v1178, %v1946
      %v2477 = vsel %vm463, %v1181, %v1949
      %v2478 = vsel %vm464, %v1181, %v1949
      %v2479 = vsel %vm463, %v1184, %v1952
      %v2480 = vsel %vm464, %v1184, %v1952
      %v2481 = vsel %vm463, %v1187, %v1955
      %v2482 = vsel %vm464, %v1187, %v1955
      %v2483 = vsel %vm463, %v1190, %v1958
      %v2484 = vsel %vm464, %v1190, %v1958
      %v2485 = vsel %vm463, %v1193, %v1961
      %v2486 = vsel %vm464, %v1193, %v1961
      %v2487 = vsel %vm463, %v1196, %v1964
      %v2488 = vsel %vm464, %v1196, %v1964
      %v2489 = vsel %vm463, %v1199, %v1967
      %v2490 = vsel %vm464, %v1199, %v1967
      %v2491 = vsel %vm463, %v1202, %v1970
      %v2492 = vsel %vm464, %v1202, %v1970
      %v2493 = vsel %vm463, %v1205, %v1973
      %v2494 = vsel %vm464, %v1205, %v1973
      %v2495 = vsel %vm463, %v1208, %v1976
      %v2496 = vsel %vm464, %v1208, %v1976
      %v2497 = vsel %vm463, %v1211, %v1979
      %v2498 = vsel %vm464, %v1211, %v1979
      %v2499 = vsel %vm463, %v1214, %v1982
      %v2500 = vsel %vm464, %v1214, %v1982
      %v2501 = vsel %vm463, %v1217, %v1985
      %v2502 = vsel %vm464, %v1217, %v1985
      %v2503 = vsel %vm463, %v1220, %v1988
      %v2504 = vsel %vm464, %v1220, %v1988
      %v2505 = vsel %vm463, %v1223, %v1991
      %v2506 = vsel %vm464, %v1223, %v1991
      %v2507 = vsel %vm463, %v1226, %v1994
      %v2508 = vsel %vm464, %v1226, %v1994
      %v2509 = vsel %vm463, %v1229, %v1997
      %v2510 = vsel %vm464, %v1229, %v1997
      %v2511 = vsel %vm463, %v1232, %v2000
      %v2512 = vsel %vm464, %v1232, %v2000
      %vm2513 = vcmp.eq.s32.totalorder %v205, %v2001
      %vm2514 = vcmp.eq.s32.totalorder %v206, %v2002
      %vm2515 = vcmp.eq.s32.totalorder %v205, %v2003
      %vm2516 = vcmp.eq.s32.totalorder %v206, %v2004
      %vm2517 = vcmp.eq.s32.totalorder %v205, %v2005
      %vm2518 = vcmp.eq.s32.totalorder %v206, %v2006
      %vm2519 = vcmp.eq.s32.totalorder %v205, %v2007
      %vm2520 = vcmp.eq.s32.totalorder %v206, %v2008
      %vm2521 = vcmp.eq.s32.totalorder %v205, %v2009
      %vm2522 = vcmp.eq.s32.totalorder %v206, %v2010
      %vm2523 = vcmp.eq.s32.totalorder %v205, %v2011
      %vm2524 = vcmp.eq.s32.totalorder %v206, %v2012
      %vm2525 = vcmp.eq.s32.totalorder %v205, %v2013
      %vm2526 = vcmp.eq.s32.totalorder %v206, %v2014
      %vm2527 = vcmp.eq.s32.totalorder %v205, %v2015
      %vm2528 = vcmp.eq.s32.totalorder %v206, %v2016
      %vm2529 = vcmp.eq.s32.totalorder %v205, %v2017
      %vm2530 = vcmp.eq.s32.totalorder %v206, %v2018
      %vm2531 = vcmp.eq.s32.totalorder %v205, %v2019
      %vm2532 = vcmp.eq.s32.totalorder %v206, %v2020
      %vm2533 = vcmp.eq.s32.totalorder %v205, %v2021
      %vm2534 = vcmp.eq.s32.totalorder %v206, %v2022
      %vm2535 = vcmp.eq.s32.totalorder %v205, %v2023
      %vm2536 = vcmp.eq.s32.totalorder %v206, %v2024
      %vm2537 = vcmp.eq.s32.totalorder %v205, %v2025
      %vm2538 = vcmp.eq.s32.totalorder %v206, %v2026
      %vm2539 = vcmp.eq.s32.totalorder %v205, %v2027
      %vm2540 = vcmp.eq.s32.totalorder %v206, %v2028
      %vm2541 = vcmp.eq.s32.totalorder %v205, %v2029
      %vm2542 = vcmp.eq.s32.totalorder %v206, %v2030
      %vm2543 = vcmp.eq.s32.totalorder %v205, %v2031
      %vm2544 = vcmp.eq.s32.totalorder %v206, %v2032
      %vm2545 = vcmp.eq.s32.totalorder %v205, %v2033
      %vm2546 = vcmp.eq.s32.totalorder %v206, %v2034
      %vm2547 = vcmp.eq.s32.totalorder %v205, %v2035
      %vm2548 = vcmp.eq.s32.totalorder %v206, %v2036
      %vm2549 = vcmp.eq.s32.totalorder %v205, %v2037
      %vm2550 = vcmp.eq.s32.totalorder %v206, %v2038
      %vm2551 = vcmp.eq.s32.totalorder %v205, %v2039
      %vm2552 = vcmp.eq.s32.totalorder %v206, %v2040
      %vm2553 = vcmp.eq.s32.totalorder %v205, %v2041
      %vm2554 = vcmp.eq.s32.totalorder %v206, %v2042
      %vm2555 = vcmp.eq.s32.totalorder %v205, %v2043
      %vm2556 = vcmp.eq.s32.totalorder %v206, %v2044
      %vm2557 = vcmp.eq.s32.totalorder %v205, %v2045
      %vm2558 = vcmp.eq.s32.totalorder %v206, %v2046
      %vm2559 = vcmp.eq.s32.totalorder %v205, %v2047
      %vm2560 = vcmp.eq.s32.totalorder %v206, %v2048
      %vm2561 = vcmp.eq.s32.totalorder %v205, %v2049
      %vm2562 = vcmp.eq.s32.totalorder %v206, %v2050
      %vm2563 = vcmp.eq.s32.totalorder %v205, %v2051
      %vm2564 = vcmp.eq.s32.totalorder %v206, %v2052
      %vm2565 = vcmp.eq.s32.totalorder %v205, %v2053
      %vm2566 = vcmp.eq.s32.totalorder %v206, %v2054
      %vm2567 = vcmp.eq.s32.totalorder %v205, %v2055
      %vm2568 = vcmp.eq.s32.totalorder %v206, %v2056
      %vm2569 = vcmp.eq.s32.totalorder %v205, %v2057
      %vm2570 = vcmp.eq.s32.totalorder %v206, %v2058
      %vm2571 = vcmp.eq.s32.totalorder %v205, %v2059
      %vm2572 = vcmp.eq.s32.totalorder %v206, %v2060
      %vm2573 = vcmp.eq.s32.totalorder %v205, %v2061
      %vm2574 = vcmp.eq.s32.totalorder %v206, %v2062
      %vm2575 = vcmp.eq.s32.totalorder %v205, %v2063
      %vm2576 = vcmp.eq.s32.totalorder %v206, %v2064
      %vm2577 = vcmp.eq.s32.totalorder %v205, %v2065
      %vm2578 = vcmp.eq.s32.totalorder %v206, %v2066
      %vm2579 = vcmp.eq.s32.totalorder %v205, %v2067
      %vm2580 = vcmp.eq.s32.totalorder %v206, %v2068
      %vm2581 = vcmp.eq.s32.totalorder %v205, %v2069
      %vm2582 = vcmp.eq.s32.totalorder %v206, %v2070
      %vm2583 = vcmp.eq.s32.totalorder %v205, %v2071
      %vm2584 = vcmp.eq.s32.totalorder %v206, %v2072
      %vm2585 = vcmp.eq.s32.totalorder %v205, %v2073
      %vm2586 = vcmp.eq.s32.totalorder %v206, %v2074
      %vm2587 = vcmp.eq.s32.totalorder %v205, %v2075
      %vm2588 = vcmp.eq.s32.totalorder %v206, %v2076
      %vm2589 = vcmp.eq.s32.totalorder %v205, %v2077
      %vm2590 = vcmp.eq.s32.totalorder %v206, %v2078
      %vm2591 = vcmp.eq.s32.totalorder %v205, %v2079
      %vm2592 = vcmp.eq.s32.totalorder %v206, %v2080
      %vm2593 = vcmp.eq.s32.totalorder %v205, %v2081
      %vm2594 = vcmp.eq.s32.totalorder %v206, %v2082
      %vm2595 = vcmp.eq.s32.totalorder %v205, %v2083
      %vm2596 = vcmp.eq.s32.totalorder %v206, %v2084
      %vm2597 = vcmp.eq.s32.totalorder %v205, %v2085
      %vm2598 = vcmp.eq.s32.totalorder %v206, %v2086
      %vm2599 = vcmp.eq.s32.totalorder %v205, %v2087
      %vm2600 = vcmp.eq.s32.totalorder %v206, %v2088
      %vm2601 = vcmp.eq.s32.totalorder %v205, %v2089
      %vm2602 = vcmp.eq.s32.totalorder %v206, %v2090
      %vm2603 = vcmp.eq.s32.totalorder %v205, %v2091
      %vm2604 = vcmp.eq.s32.totalorder %v206, %v2092
      %vm2605 = vcmp.eq.s32.totalorder %v205, %v2093
      %vm2606 = vcmp.eq.s32.totalorder %v206, %v2094
      %vm2607 = vcmp.eq.s32.totalorder %v205, %v2095
      %vm2608 = vcmp.eq.s32.totalorder %v206, %v2096
      %vm2609 = vcmp.eq.s32.totalorder %v205, %v2097
      %vm2610 = vcmp.eq.s32.totalorder %v206, %v2098
      %vm2611 = vcmp.eq.s32.totalorder %v205, %v2099
      %vm2612 = vcmp.eq.s32.totalorder %v206, %v2100
      %vm2613 = vcmp.eq.s32.totalorder %v205, %v2101
      %vm2614 = vcmp.eq.s32.totalorder %v206, %v2102
      %vm2615 = vcmp.eq.s32.totalorder %v205, %v2103
      %vm2616 = vcmp.eq.s32.totalorder %v206, %v2104
      %vm2617 = vcmp.eq.s32.totalorder %v205, %v2105
      %vm2618 = vcmp.eq.s32.totalorder %v206, %v2106
      %vm2619 = vcmp.eq.s32.totalorder %v205, %v2107
      %vm2620 = vcmp.eq.s32.totalorder %v206, %v2108
      %vm2621 = vcmp.eq.s32.totalorder %v205, %v2109
      %vm2622 = vcmp.eq.s32.totalorder %v206, %v2110
      %vm2623 = vcmp.eq.s32.totalorder %v205, %v2111
      %vm2624 = vcmp.eq.s32.totalorder %v206, %v2112
      %vm2625 = vcmp.eq.s32.totalorder %v205, %v2113
      %vm2626 = vcmp.eq.s32.totalorder %v206, %v2114
      %vm2627 = vcmp.eq.s32.totalorder %v205, %v2115
      %vm2628 = vcmp.eq.s32.totalorder %v206, %v2116
      %vm2629 = vcmp.eq.s32.totalorder %v205, %v2117
      %vm2630 = vcmp.eq.s32.totalorder %v206, %v2118
      %vm2631 = vcmp.eq.s32.totalorder %v205, %v2119
      %vm2632 = vcmp.eq.s32.totalorder %v206, %v2120
      %vm2633 = vcmp.eq.s32.totalorder %v205, %v2121
      %vm2634 = vcmp.eq.s32.totalorder %v206, %v2122
      %vm2635 = vcmp.eq.s32.totalorder %v205, %v2123
      %vm2636 = vcmp.eq.s32.totalorder %v206, %v2124
      %vm2637 = vcmp.eq.s32.totalorder %v205, %v2125
      %vm2638 = vcmp.eq.s32.totalorder %v206, %v2126
      %vm2639 = vcmp.eq.s32.totalorder %v205, %v2127
      %vm2640 = vcmp.eq.s32.totalorder %v206, %v2128
      %vm2641 = vcmp.eq.s32.totalorder %v205, %v2129
      %vm2642 = vcmp.eq.s32.totalorder %v206, %v2130
      %vm2643 = vcmp.eq.s32.totalorder %v205, %v2131
      %vm2644 = vcmp.eq.s32.totalorder %v206, %v2132
      %vm2645 = vcmp.eq.s32.totalorder %v205, %v2133
      %vm2646 = vcmp.eq.s32.totalorder %v206, %v2134
      %vm2647 = vcmp.eq.s32.totalorder %v205, %v2135
      %vm2648 = vcmp.eq.s32.totalorder %v206, %v2136
      %vm2649 = vcmp.eq.s32.totalorder %v205, %v2137
      %vm2650 = vcmp.eq.s32.totalorder %v206, %v2138
      %vm2651 = vcmp.eq.s32.totalorder %v205, %v2139
      %vm2652 = vcmp.eq.s32.totalorder %v206, %v2140
      %vm2653 = vcmp.eq.s32.totalorder %v205, %v2141
      %vm2654 = vcmp.eq.s32.totalorder %v206, %v2142
      %vm2655 = vcmp.eq.s32.totalorder %v205, %v2143
      %vm2656 = vcmp.eq.s32.totalorder %v206, %v2144
      %vm2657 = vcmp.eq.s32.totalorder %v205, %v2145
      %vm2658 = vcmp.eq.s32.totalorder %v206, %v2146
      %vm2659 = vcmp.eq.s32.totalorder %v205, %v2147
      %vm2660 = vcmp.eq.s32.totalorder %v206, %v2148
      %vm2661 = vcmp.eq.s32.totalorder %v205, %v2149
      %vm2662 = vcmp.eq.s32.totalorder %v206, %v2150
      %vm2663 = vcmp.eq.s32.totalorder %v205, %v2151
      %vm2664 = vcmp.eq.s32.totalorder %v206, %v2152
      %vm2665 = vcmp.eq.s32.totalorder %v205, %v2153
      %vm2666 = vcmp.eq.s32.totalorder %v206, %v2154
      %vm2667 = vcmp.eq.s32.totalorder %v205, %v2155
      %vm2668 = vcmp.eq.s32.totalorder %v206, %v2156
      %vm2669 = vcmp.eq.s32.totalorder %v205, %v2157
      %vm2670 = vcmp.eq.s32.totalorder %v206, %v2158
      %vm2671 = vcmp.eq.s32.totalorder %v205, %v2159
      %vm2672 = vcmp.eq.s32.totalorder %v206, %v2160
      %vm2673 = vcmp.eq.s32.totalorder %v205, %v2161
      %vm2674 = vcmp.eq.s32.totalorder %v206, %v2162
      %vm2675 = vcmp.eq.s32.totalorder %v205, %v2163
      %vm2676 = vcmp.eq.s32.totalorder %v206, %v2164
      %vm2677 = vcmp.eq.s32.totalorder %v205, %v2165
      %vm2678 = vcmp.eq.s32.totalorder %v206, %v2166
      %vm2679 = vcmp.eq.s32.totalorder %v205, %v2167
      %vm2680 = vcmp.eq.s32.totalorder %v206, %v2168
      %vm2681 = vcmp.eq.s32.totalorder %v205, %v2169
      %vm2682 = vcmp.eq.s32.totalorder %v206, %v2170
      %vm2683 = vcmp.eq.s32.totalorder %v205, %v2171
      %vm2684 = vcmp.eq.s32.totalorder %v206, %v2172
      %vm2685 = vcmp.eq.s32.totalorder %v205, %v2173
      %vm2686 = vcmp.eq.s32.totalorder %v206, %v2174
      %vm2687 = vcmp.eq.s32.totalorder %v205, %v2175
      %vm2688 = vcmp.eq.s32.totalorder %v206, %v2176
      %vm2689 = vcmp.eq.s32.totalorder %v205, %v2177
      %vm2690 = vcmp.eq.s32.totalorder %v206, %v2178
      %vm2691 = vcmp.eq.s32.totalorder %v205, %v2179
      %vm2692 = vcmp.eq.s32.totalorder %v206, %v2180
      %vm2693 = vcmp.eq.s32.totalorder %v205, %v2181
      %vm2694 = vcmp.eq.s32.totalorder %v206, %v2182
      %vm2695 = vcmp.eq.s32.totalorder %v205, %v2183
      %vm2696 = vcmp.eq.s32.totalorder %v206, %v2184
      %vm2697 = vcmp.eq.s32.totalorder %v205, %v2185
      %vm2698 = vcmp.eq.s32.totalorder %v206, %v2186
      %vm2699 = vcmp.eq.s32.totalorder %v205, %v2187
      %vm2700 = vcmp.eq.s32.totalorder %v206, %v2188
      %vm2701 = vcmp.eq.s32.totalorder %v205, %v2189
      %vm2702 = vcmp.eq.s32.totalorder %v206, %v2190
      %vm2703 = vcmp.eq.s32.totalorder %v205, %v2191
      %vm2704 = vcmp.eq.s32.totalorder %v206, %v2192
      %vm2705 = vcmp.eq.s32.totalorder %v205, %v2193
      %vm2706 = vcmp.eq.s32.totalorder %v206, %v2194
      %vm2707 = vcmp.eq.s32.totalorder %v205, %v2195
      %vm2708 = vcmp.eq.s32.totalorder %v206, %v2196
      %vm2709 = vcmp.eq.s32.totalorder %v205, %v2197
      %vm2710 = vcmp.eq.s32.totalorder %v206, %v2198
      %vm2711 = vcmp.eq.s32.totalorder %v205, %v2199
      %vm2712 = vcmp.eq.s32.totalorder %v206, %v2200
      %vm2713 = vcmp.eq.s32.totalorder %v205, %v2201
      %vm2714 = vcmp.eq.s32.totalorder %v206, %v2202
      %vm2715 = vcmp.eq.s32.totalorder %v205, %v2203
      %vm2716 = vcmp.eq.s32.totalorder %v206, %v2204
      %vm2717 = vcmp.eq.s32.totalorder %v205, %v2205
      %vm2718 = vcmp.eq.s32.totalorder %v206, %v2206
      %vm2719 = vcmp.eq.s32.totalorder %v205, %v2207
      %vm2720 = vcmp.eq.s32.totalorder %v206, %v2208
      %vm2721 = vcmp.eq.s32.totalorder %v205, %v2209
      %vm2722 = vcmp.eq.s32.totalorder %v206, %v2210
      %vm2723 = vcmp.eq.s32.totalorder %v205, %v2211
      %vm2724 = vcmp.eq.s32.totalorder %v206, %v2212
      %vm2725 = vcmp.eq.s32.totalorder %v205, %v2213
      %vm2726 = vcmp.eq.s32.totalorder %v206, %v2214
      %vm2727 = vcmp.eq.s32.totalorder %v205, %v2215
      %vm2728 = vcmp.eq.s32.totalorder %v206, %v2216
      %vm2729 = vcmp.eq.s32.totalorder %v205, %v2217
      %vm2730 = vcmp.eq.s32.totalorder %v206, %v2218
      %vm2731 = vcmp.eq.s32.totalorder %v205, %v2219
      %vm2732 = vcmp.eq.s32.totalorder %v206, %v2220
      %vm2733 = vcmp.eq.s32.totalorder %v205, %v2221
      %vm2734 = vcmp.eq.s32.totalorder %v206, %v2222
      %vm2735 = vcmp.eq.s32.totalorder %v205, %v2223
      %vm2736 = vcmp.eq.s32.totalorder %v206, %v2224
      %vm2737 = vcmp.eq.s32.totalorder %v205, %v2225
      %vm2738 = vcmp.eq.s32.totalorder %v206, %v2226
      %vm2739 = vcmp.eq.s32.totalorder %v205, %v2227
      %vm2740 = vcmp.eq.s32.totalorder %v206, %v2228
      %vm2741 = vcmp.eq.s32.totalorder %v205, %v2229
      %vm2742 = vcmp.eq.s32.totalorder %v206, %v2230
      %vm2743 = vcmp.eq.s32.totalorder %v205, %v2231
      %vm2744 = vcmp.eq.s32.totalorder %v206, %v2232
      %vm2745 = vcmp.eq.s32.totalorder %v205, %v2233
      %vm2746 = vcmp.eq.s32.totalorder %v206, %v2234
      %vm2747 = vcmp.eq.s32.totalorder %v205, %v2235
      %vm2748 = vcmp.eq.s32.totalorder %v206, %v2236
      %vm2749 = vcmp.eq.s32.totalorder %v205, %v2237
      %vm2750 = vcmp.eq.s32.totalorder %v206, %v2238
      %vm2751 = vcmp.eq.s32.totalorder %v205, %v2239
      %vm2752 = vcmp.eq.s32.totalorder %v206, %v2240
      %vm2753 = vcmp.eq.s32.totalorder %v205, %v2241
      %vm2754 = vcmp.eq.s32.totalorder %v206, %v2242
      %vm2755 = vcmp.eq.s32.totalorder %v205, %v2243
      %vm2756 = vcmp.eq.s32.totalorder %v206, %v2244
      %vm2757 = vcmp.eq.s32.totalorder %v205, %v2245
      %vm2758 = vcmp.eq.s32.totalorder %v206, %v2246
      %vm2759 = vcmp.eq.s32.totalorder %v205, %v2247
      %vm2760 = vcmp.eq.s32.totalorder %v206, %v2248
      %vm2761 = vcmp.eq.s32.totalorder %v205, %v2249
      %vm2762 = vcmp.eq.s32.totalorder %v206, %v2250
      %vm2763 = vcmp.eq.s32.totalorder %v205, %v2251
      %vm2764 = vcmp.eq.s32.totalorder %v206, %v2252
      %vm2765 = vcmp.eq.s32.totalorder %v205, %v2253
      %vm2766 = vcmp.eq.s32.totalorder %v206, %v2254
      %vm2767 = vcmp.eq.s32.totalorder %v205, %v2255
      %vm2768 = vcmp.eq.s32.totalorder %v206, %v2256
      %vm2769 = vcmp.eq.s32.totalorder %v205, %v2257
      %vm2770 = vcmp.eq.s32.totalorder %v206, %v2258
      %vm2771 = vcmp.eq.s32.totalorder %v205, %v2259
      %vm2772 = vcmp.eq.s32.totalorder %v206, %v2260
      %vm2773 = vcmp.eq.s32.totalorder %v205, %v2261
      %vm2774 = vcmp.eq.s32.totalorder %v206, %v2262
      %vm2775 = vcmp.eq.s32.totalorder %v205, %v2263
      %vm2776 = vcmp.eq.s32.totalorder %v206, %v2264
      %vm2777 = vcmp.eq.s32.totalorder %v205, %v2265
      %vm2778 = vcmp.eq.s32.totalorder %v206, %v2266
      %vm2779 = vcmp.eq.s32.totalorder %v205, %v2267
      %vm2780 = vcmp.eq.s32.totalorder %v206, %v2268
      %vm2781 = vcmp.eq.s32.totalorder %v205, %v2269
      %vm2782 = vcmp.eq.s32.totalorder %v206, %v2270
      %vm2783 = vcmp.eq.s32.totalorder %v205, %v2271
      %vm2784 = vcmp.eq.s32.totalorder %v206, %v2272
      %vm2785 = vcmp.eq.s32.totalorder %v205, %v2273
      %vm2786 = vcmp.eq.s32.totalorder %v206, %v2274
      %vm2787 = vcmp.eq.s32.totalorder %v205, %v2275
      %vm2788 = vcmp.eq.s32.totalorder %v206, %v2276
      %vm2789 = vcmp.eq.s32.totalorder %v205, %v2277
      %vm2790 = vcmp.eq.s32.totalorder %v206, %v2278
      %vm2791 = vcmp.eq.s32.totalorder %v205, %v2279
      %vm2792 = vcmp.eq.s32.totalorder %v206, %v2280
      %vm2793 = vcmp.eq.s32.totalorder %v205, %v2281
      %vm2794 = vcmp.eq.s32.totalorder %v206, %v2282
      %vm2795 = vcmp.eq.s32.totalorder %v205, %v2283
      %vm2796 = vcmp.eq.s32.totalorder %v206, %v2284
      %vm2797 = vcmp.eq.s32.totalorder %v205, %v2285
      %vm2798 = vcmp.eq.s32.totalorder %v206, %v2286
      %vm2799 = vcmp.eq.s32.totalorder %v205, %v2287
      %vm2800 = vcmp.eq.s32.totalorder %v206, %v2288
      %vm2801 = vcmp.eq.s32.totalorder %v205, %v2289
      %vm2802 = vcmp.eq.s32.totalorder %v206, %v2290
      %vm2803 = vcmp.eq.s32.totalorder %v205, %v2291
      %vm2804 = vcmp.eq.s32.totalorder %v206, %v2292
      %vm2805 = vcmp.eq.s32.totalorder %v205, %v2293
      %vm2806 = vcmp.eq.s32.totalorder %v206, %v2294
      %vm2807 = vcmp.eq.s32.totalorder %v205, %v2295
      %vm2808 = vcmp.eq.s32.totalorder %v206, %v2296
      %vm2809 = vcmp.eq.s32.totalorder %v205, %v2297
      %vm2810 = vcmp.eq.s32.totalorder %v206, %v2298
      %vm2811 = vcmp.eq.s32.totalorder %v205, %v2299
      %vm2812 = vcmp.eq.s32.totalorder %v206, %v2300
      %vm2813 = vcmp.eq.s32.totalorder %v205, %v2301
      %vm2814 = vcmp.eq.s32.totalorder %v206, %v2302
      %vm2815 = vcmp.eq.s32.totalorder %v205, %v2303
      %vm2816 = vcmp.eq.s32.totalorder %v206, %v2304
      %vm2817 = vcmp.eq.s32.totalorder %v205, %v2305
      %vm2818 = vcmp.eq.s32.totalorder %v206, %v2306
      %vm2819 = vcmp.eq.s32.totalorder %v205, %v2307
      %vm2820 = vcmp.eq.s32.totalorder %v206, %v2308
      %vm2821 = vcmp.eq.s32.totalorder %v205, %v2309
      %vm2822 = vcmp.eq.s32.totalorder %v206, %v2310
      %vm2823 = vcmp.eq.s32.totalorder %v205, %v2311
      %vm2824 = vcmp.eq.s32.totalorder %v206, %v2312
      %vm2825 = vcmp.eq.s32.totalorder %v205, %v2313
      %vm2826 = vcmp.eq.s32.totalorder %v206, %v2314
      %vm2827 = vcmp.eq.s32.totalorder %v205, %v2315
      %vm2828 = vcmp.eq.s32.totalorder %v206, %v2316
      %vm2829 = vcmp.eq.s32.totalorder %v205, %v2317
      %vm2830 = vcmp.eq.s32.totalorder %v206, %v2318
      %vm2831 = vcmp.eq.s32.totalorder %v205, %v2319
      %vm2832 = vcmp.eq.s32.totalorder %v206, %v2320
      %vm2833 = vcmp.eq.s32.totalorder %v205, %v2321
      %vm2834 = vcmp.eq.s32.totalorder %v206, %v2322
      %vm2835 = vcmp.eq.s32.totalorder %v205, %v2323
      %vm2836 = vcmp.eq.s32.totalorder %v206, %v2324
      %vm2837 = vcmp.eq.s32.totalorder %v205, %v2325
      %vm2838 = vcmp.eq.s32.totalorder %v206, %v2326
      %vm2839 = vcmp.eq.s32.totalorder %v205, %v2327
      %vm2840 = vcmp.eq.s32.totalorder %v206, %v2328
      %vm2841 = vcmp.eq.s32.totalorder %v205, %v2329
      %vm2842 = vcmp.eq.s32.totalorder %v206, %v2330
      %vm2843 = vcmp.eq.s32.totalorder %v205, %v2331
      %vm2844 = vcmp.eq.s32.totalorder %v206, %v2332
      %vm2845 = vcmp.eq.s32.totalorder %v205, %v2333
      %vm2846 = vcmp.eq.s32.totalorder %v206, %v2334
      %vm2847 = vcmp.eq.s32.totalorder %v205, %v2335
      %vm2848 = vcmp.eq.s32.totalorder %v206, %v2336
      %vm2849 = vcmp.eq.s32.totalorder %v205, %v2337
      %vm2850 = vcmp.eq.s32.totalorder %v206, %v2338
      %vm2851 = vcmp.eq.s32.totalorder %v205, %v2339
      %vm2852 = vcmp.eq.s32.totalorder %v206, %v2340
      %vm2853 = vcmp.eq.s32.totalorder %v205, %v2341
      %vm2854 = vcmp.eq.s32.totalorder %v206, %v2342
      %vm2855 = vcmp.eq.s32.totalorder %v205, %v2343
      %vm2856 = vcmp.eq.s32.totalorder %v206, %v2344
      %vm2857 = vcmp.eq.s32.totalorder %v205, %v2345
      %vm2858 = vcmp.eq.s32.totalorder %v206, %v2346
      %vm2859 = vcmp.eq.s32.totalorder %v205, %v2347
      %vm2860 = vcmp.eq.s32.totalorder %v206, %v2348
      %vm2861 = vcmp.eq.s32.totalorder %v205, %v2349
      %vm2862 = vcmp.eq.s32.totalorder %v206, %v2350
      %vm2863 = vcmp.eq.s32.totalorder %v205, %v2351
      %vm2864 = vcmp.eq.s32.totalorder %v206, %v2352
      %vm2865 = vcmp.eq.s32.totalorder %v205, %v2353
      %vm2866 = vcmp.eq.s32.totalorder %v206, %v2354
      %vm2867 = vcmp.eq.s32.totalorder %v205, %v2355
      %vm2868 = vcmp.eq.s32.totalorder %v206, %v2356
      %vm2869 = vcmp.eq.s32.totalorder %v205, %v2357
      %vm2870 = vcmp.eq.s32.totalorder %v206, %v2358
      %vm2871 = vcmp.eq.s32.totalorder %v205, %v2359
      %vm2872 = vcmp.eq.s32.totalorder %v206, %v2360
      %vm2873 = vcmp.eq.s32.totalorder %v205, %v2361
      %vm2874 = vcmp.eq.s32.totalorder %v206, %v2362
      %vm2875 = vcmp.eq.s32.totalorder %v205, %v2363
      %vm2876 = vcmp.eq.s32.totalorder %v206, %v2364
      %vm2877 = vcmp.eq.s32.totalorder %v205, %v2365
      %vm2878 = vcmp.eq.s32.totalorder %v206, %v2366
      %vm2879 = vcmp.eq.s32.totalorder %v205, %v2367
      %vm2880 = vcmp.eq.s32.totalorder %v206, %v2368
      %vm2881 = vcmp.eq.s32.totalorder %v205, %v2369
      %vm2882 = vcmp.eq.s32.totalorder %v206, %v2370
      %vm2883 = vcmp.eq.s32.totalorder %v205, %v2371
      %vm2884 = vcmp.eq.s32.totalorder %v206, %v2372
      %vm2885 = vcmp.eq.s32.totalorder %v205, %v2373
      %vm2886 = vcmp.eq.s32.totalorder %v206, %v2374
      %vm2887 = vcmp.eq.s32.totalorder %v205, %v2375
      %vm2888 = vcmp.eq.s32.totalorder %v206, %v2376
      %vm2889 = vcmp.eq.s32.totalorder %v205, %v2377
      %vm2890 = vcmp.eq.s32.totalorder %v206, %v2378
      %vm2891 = vcmp.eq.s32.totalorder %v205, %v2379
      %vm2892 = vcmp.eq.s32.totalorder %v206, %v2380
      %vm2893 = vcmp.eq.s32.totalorder %v205, %v2381
      %vm2894 = vcmp.eq.s32.totalorder %v206, %v2382
      %vm2895 = vcmp.eq.s32.totalorder %v205, %v2383
      %vm2896 = vcmp.eq.s32.totalorder %v206, %v2384
      %vm2897 = vcmp.eq.s32.totalorder %v205, %v2385
      %vm2898 = vcmp.eq.s32.totalorder %v206, %v2386
      %vm2899 = vcmp.eq.s32.totalorder %v205, %v2387
      %vm2900 = vcmp.eq.s32.totalorder %v206, %v2388
      %vm2901 = vcmp.eq.s32.totalorder %v205, %v2389
      %vm2902 = vcmp.eq.s32.totalorder %v206, %v2390
      %vm2903 = vcmp.eq.s32.totalorder %v205, %v2391
      %vm2904 = vcmp.eq.s32.totalorder %v206, %v2392
      %vm2905 = vcmp.eq.s32.totalorder %v205, %v2393
      %vm2906 = vcmp.eq.s32.totalorder %v206, %v2394
      %vm2907 = vcmp.eq.s32.totalorder %v205, %v2395
      %vm2908 = vcmp.eq.s32.totalorder %v206, %v2396
      %vm2909 = vcmp.eq.s32.totalorder %v205, %v2397
      %vm2910 = vcmp.eq.s32.totalorder %v206, %v2398
      %vm2911 = vcmp.eq.s32.totalorder %v205, %v2399
      %vm2912 = vcmp.eq.s32.totalorder %v206, %v2400
      %vm2913 = vcmp.eq.s32.totalorder %v205, %v2401
      %vm2914 = vcmp.eq.s32.totalorder %v206, %v2402
      %vm2915 = vcmp.eq.s32.totalorder %v205, %v2403
      %vm2916 = vcmp.eq.s32.totalorder %v206, %v2404
      %vm2917 = vcmp.eq.s32.totalorder %v205, %v2405
      %vm2918 = vcmp.eq.s32.totalorder %v206, %v2406
      %vm2919 = vcmp.eq.s32.totalorder %v205, %v2407
      %vm2920 = vcmp.eq.s32.totalorder %v206, %v2408
      %vm2921 = vcmp.eq.s32.totalorder %v205, %v2409
      %vm2922 = vcmp.eq.s32.totalorder %v206, %v2410
      %vm2923 = vcmp.eq.s32.totalorder %v205, %v2411
      %vm2924 = vcmp.eq.s32.totalorder %v206, %v2412
      %vm2925 = vcmp.eq.s32.totalorder %v205, %v2413
      %vm2926 = vcmp.eq.s32.totalorder %v206, %v2414
      %vm2927 = vcmp.eq.s32.totalorder %v205, %v2415
      %vm2928 = vcmp.eq.s32.totalorder %v206, %v2416
      %vm2929 = vcmp.eq.s32.totalorder %v205, %v2417
      %vm2930 = vcmp.eq.s32.totalorder %v206, %v2418
      %vm2931 = vcmp.eq.s32.totalorder %v205, %v2419
      %vm2932 = vcmp.eq.s32.totalorder %v206, %v2420
      %vm2933 = vcmp.eq.s32.totalorder %v205, %v2421
      %vm2934 = vcmp.eq.s32.totalorder %v206, %v2422
      %vm2935 = vcmp.eq.s32.totalorder %v205, %v2423
      %vm2936 = vcmp.eq.s32.totalorder %v206, %v2424
      %vm2937 = vcmp.eq.s32.totalorder %v205, %v2425
      %vm2938 = vcmp.eq.s32.totalorder %v206, %v2426
      %vm2939 = vcmp.eq.s32.totalorder %v205, %v2427
      %vm2940 = vcmp.eq.s32.totalorder %v206, %v2428
      %vm2941 = vcmp.eq.s32.totalorder %v205, %v2429
      %vm2942 = vcmp.eq.s32.totalorder %v206, %v2430
      %vm2943 = vcmp.eq.s32.totalorder %v205, %v2431
      %vm2944 = vcmp.eq.s32.totalorder %v206, %v2432
      %vm2945 = vcmp.eq.s32.totalorder %v205, %v2433
      %vm2946 = vcmp.eq.s32.totalorder %v206, %v2434
      %vm2947 = vcmp.eq.s32.totalorder %v205, %v2435
      %vm2948 = vcmp.eq.s32.totalorder %v206, %v2436
      %vm2949 = vcmp.eq.s32.totalorder %v205, %v2437
      %vm2950 = vcmp.eq.s32.totalorder %v206, %v2438
      %vm2951 = vcmp.eq.s32.totalorder %v205, %v2439
      %vm2952 = vcmp.eq.s32.totalorder %v206, %v2440
      %vm2953 = vcmp.eq.s32.totalorder %v205, %v2441
      %vm2954 = vcmp.eq.s32.totalorder %v206, %v2442
      %vm2955 = vcmp.eq.s32.totalorder %v205, %v2443
      %vm2956 = vcmp.eq.s32.totalorder %v206, %v2444
      %vm2957 = vcmp.eq.s32.totalorder %v205, %v2445
      %vm2958 = vcmp.eq.s32.totalorder %v206, %v2446
      %vm2959 = vcmp.eq.s32.totalorder %v205, %v2447
      %vm2960 = vcmp.eq.s32.totalorder %v206, %v2448
      %vm2961 = vcmp.eq.s32.totalorder %v205, %v2449
      %vm2962 = vcmp.eq.s32.totalorder %v206, %v2450
      %vm2963 = vcmp.eq.s32.totalorder %v205, %v2451
      %vm2964 = vcmp.eq.s32.totalorder %v206, %v2452
      %vm2965 = vcmp.eq.s32.totalorder %v205, %v2453
      %vm2966 = vcmp.eq.s32.totalorder %v206, %v2454
      %vm2967 = vcmp.eq.s32.totalorder %v205, %v2455
      %vm2968 = vcmp.eq.s32.totalorder %v206, %v2456
      %vm2969 = vcmp.eq.s32.totalorder %v205, %v2457
      %vm2970 = vcmp.eq.s32.totalorder %v206, %v2458
      %vm2971 = vcmp.eq.s32.totalorder %v205, %v2459
      %vm2972 = vcmp.eq.s32.totalorder %v206, %v2460
      %vm2973 = vcmp.eq.s32.totalorder %v205, %v2461
      %vm2974 = vcmp.eq.s32.totalorder %v206, %v2462
      %vm2975 = vcmp.eq.s32.totalorder %v205, %v2463
      %vm2976 = vcmp.eq.s32.totalorder %v206, %v2464
      %vm2977 = vcmp.eq.s32.totalorder %v205, %v2465
      %vm2978 = vcmp.eq.s32.totalorder %v206, %v2466
      %vm2979 = vcmp.eq.s32.totalorder %v205, %v2467
      %vm2980 = vcmp.eq.s32.totalorder %v206, %v2468
      %vm2981 = vcmp.eq.s32.totalorder %v205, %v2469
      %vm2982 = vcmp.eq.s32.totalorder %v206, %v2470
      %vm2983 = vcmp.eq.s32.totalorder %v205, %v2471
      %vm2984 = vcmp.eq.s32.totalorder %v206, %v2472
      %vm2985 = vcmp.eq.s32.totalorder %v205, %v2473
      %vm2986 = vcmp.eq.s32.totalorder %v206, %v2474
      %vm2987 = vcmp.eq.s32.totalorder %v205, %v2475
      %vm2988 = vcmp.eq.s32.totalorder %v206, %v2476
      %vm2989 = vcmp.eq.s32.totalorder %v205, %v2477
      %vm2990 = vcmp.eq.s32.totalorder %v206, %v2478
      %vm2991 = vcmp.eq.s32.totalorder %v205, %v2479
      %vm2992 = vcmp.eq.s32.totalorder %v206, %v2480
      %vm2993 = vcmp.eq.s32.totalorder %v205, %v2481
      %vm2994 = vcmp.eq.s32.totalorder %v206, %v2482
      %vm2995 = vcmp.eq.s32.totalorder %v205, %v2483
      %vm2996 = vcmp.eq.s32.totalorder %v206, %v2484
      %vm2997 = vcmp.eq.s32.totalorder %v205, %v2485
      %vm2998 = vcmp.eq.s32.totalorder %v206, %v2486
      %vm2999 = vcmp.eq.s32.totalorder %v205, %v2487
      %vm3000 = vcmp.eq.s32.totalorder %v206, %v2488
      %vm3001 = vcmp.eq.s32.totalorder %v205, %v2489
      %vm3002 = vcmp.eq.s32.totalorder %v206, %v2490
      %vm3003 = vcmp.eq.s32.totalorder %v205, %v2491
      %vm3004 = vcmp.eq.s32.totalorder %v206, %v2492
      %vm3005 = vcmp.eq.s32.totalorder %v205, %v2493
      %vm3006 = vcmp.eq.s32.totalorder %v206, %v2494
      %vm3007 = vcmp.eq.s32.totalorder %v205, %v2495
      %vm3008 = vcmp.eq.s32.totalorder %v206, %v2496
      %vm3009 = vcmp.eq.s32.totalorder %v205, %v2497
      %vm3010 = vcmp.eq.s32.totalorder %v206, %v2498
      %vm3011 = vcmp.eq.s32.totalorder %v205, %v2499
      %vm3012 = vcmp.eq.s32.totalorder %v206, %v2500
      %vm3013 = vcmp.eq.s32.totalorder %v205, %v2501
      %vm3014 = vcmp.eq.s32.totalorder %v206, %v2502
      %vm3015 = vcmp.eq.s32.totalorder %v205, %v2503
      %vm3016 = vcmp.eq.s32.totalorder %v206, %v2504
      %vm3017 = vcmp.eq.s32.totalorder %v205, %v2505
      %vm3018 = vcmp.eq.s32.totalorder %v206, %v2506
      %vm3019 = vcmp.eq.s32.totalorder %v205, %v2507
      %vm3020 = vcmp.eq.s32.totalorder %v206, %v2508
      %vm3021 = vcmp.eq.s32.totalorder %v205, %v2509
      %vm3022 = vcmp.eq.s32.totalorder %v206, %v2510
      %vm3023 = vcmp.eq.s32.totalorder %v205, %v2511
      %vm3024 = vcmp.eq.s32.totalorder %v206, %v2512
      %v3025 = vsel %vm2513, 1, 0
      %v3026 = vsel %vm2514, 1, 0
      %v3027 = vsel %vm2515, 1, 0
      %v3028 = vsel %vm2516, 1, 0
      %v3029 = vsel %vm2517, 1, 0
      %v3030 = vsel %vm2518, 1, 0
      %v3031 = vsel %vm2519, 1, 0
      %v3032 = vsel %vm2520, 1, 0
      %v3033 = vsel %vm2521, 1, 0
      %v3034 = vsel %vm2522, 1, 0
      %v3035 = vsel %vm2523, 1, 0
      %v3036 = vsel %vm2524, 1, 0
      %v3037 = vsel %vm2525, 1, 0
      %v3038 = vsel %vm2526, 1, 0
      %v3039 = vsel %vm2527, 1, 0
      %v3040 = vsel %vm2528, 1, 0
      %v3041 = vsel %vm2529, 1, 0
      %v3042 = vsel %vm2530, 1, 0
      %v3043 = vsel %vm2531, 1, 0
      %v3044 = vsel %vm2532, 1, 0
      %v3045 = vsel %vm2533, 1, 0
      %v3046 = vsel %vm2534, 1, 0
      %v3047 = vsel %vm2535, 1, 0
      %v3048 = vsel %vm2536, 1, 0
      %v3049 = vsel %vm2537, 1, 0
      %v3050 = vsel %vm2538, 1, 0
      %v3051 = vsel %vm2539, 1, 0
      %v3052 = vsel %vm2540, 1, 0
      %v3053 = vsel %vm2541, 1, 0
      %v3054 = vsel %vm2542, 1, 0
      %v3055 = vsel %vm2543, 1, 0
      %v3056 = vsel %vm2544, 1, 0
      %v3057 = vsel %vm2545, 1, 0
      %v3058 = vsel %vm2546, 1, 0
      %v3059 = vsel %vm2547, 1, 0
      %v3060 = vsel %vm2548, 1, 0
      %v3061 = vsel %vm2549, 1, 0
      %v3062 = vsel %vm2550, 1, 0
      %v3063 = vsel %vm2551, 1, 0
      %v3064 = vsel %vm2552, 1, 0
      %v3065 = vsel %vm2553, 1, 0
      %v3066 = vsel %vm2554, 1, 0
      %v3067 = vsel %vm2555, 1, 0
      %v3068 = vsel %vm2556, 1, 0
      %v3069 = vsel %vm2557, 1, 0
      %v3070 = vsel %vm2558, 1, 0
      %v3071 = vsel %vm2559, 1, 0
      %v3072 = vsel %vm2560, 1, 0
      %v3073 = vsel %vm2561, 1, 0
      %v3074 = vsel %vm2562, 1, 0
      %v3075 = vsel %vm2563, 1, 0
      %v3076 = vsel %vm2564, 1, 0
      %v3077 = vsel %vm2565, 1, 0
      %v3078 = vsel %vm2566, 1, 0
      %v3079 = vsel %vm2567, 1, 0
      %v3080 = vsel %vm2568, 1, 0
      %v3081 = vsel %vm2569, 1, 0
      %v3082 = vsel %vm2570, 1, 0
      %v3083 = vsel %vm2571, 1, 0
      %v3084 = vsel %vm2572, 1, 0
      %v3085 = vsel %vm2573, 1, 0
      %v3086 = vsel %vm2574, 1, 0
      %v3087 = vsel %vm2575, 1, 0
      %v3088 = vsel %vm2576, 1, 0
      %v3089 = vsel %vm2577, 1, 0
      %v3090 = vsel %vm2578, 1, 0
      %v3091 = vsel %vm2579, 1, 0
      %v3092 = vsel %vm2580, 1, 0
      %v3093 = vsel %vm2581, 1, 0
      %v3094 = vsel %vm2582, 1, 0
      %v3095 = vsel %vm2583, 1, 0
      %v3096 = vsel %vm2584, 1, 0
      %v3097 = vsel %vm2585, 1, 0
      %v3098 = vsel %vm2586, 1, 0
      %v3099 = vsel %vm2587, 1, 0
      %v3100 = vsel %vm2588, 1, 0
      %v3101 = vsel %vm2589, 1, 0
      %v3102 = vsel %vm2590, 1, 0
      %v3103 = vsel %vm2591, 1, 0
      %v3104 = vsel %vm2592, 1, 0
      %v3105 = vsel %vm2593, 1, 0
      %v3106 = vsel %vm2594, 1, 0
      %v3107 = vsel %vm2595, 1, 0
      %v3108 = vsel %vm2596, 1, 0
      %v3109 = vsel %vm2597, 1, 0
      %v3110 = vsel %vm2598, 1, 0
      %v3111 = vsel %vm2599, 1, 0
      %v3112 = vsel %vm2600, 1, 0
      %v3113 = vsel %vm2601, 1, 0
      %v3114 = vsel %vm2602, 1, 0
      %v3115 = vsel %vm2603, 1, 0
      %v3116 = vsel %vm2604, 1, 0
      %v3117 = vsel %vm2605, 1, 0
      %v3118 = vsel %vm2606, 1, 0
      %v3119 = vsel %vm2607, 1, 0
      %v3120 = vsel %vm2608, 1, 0
      %v3121 = vsel %vm2609, 1, 0
      %v3122 = vsel %vm2610, 1, 0
      %v3123 = vsel %vm2611, 1, 0
      %v3124 = vsel %vm2612, 1, 0
      %v3125 = vsel %vm2613, 1, 0
      %v3126 = vsel %vm2614, 1, 0
      %v3127 = vsel %vm2615, 1, 0
      %v3128 = vsel %vm2616, 1, 0
      %v3129 = vsel %vm2617, 1, 0
      %v3130 = vsel %vm2618, 1, 0
      %v3131 = vsel %vm2619, 1, 0
      %v3132 = vsel %vm2620, 1, 0
      %v3133 = vsel %vm2621, 1, 0
      %v3134 = vsel %vm2622, 1, 0
      %v3135 = vsel %vm2623, 1, 0
      %v3136 = vsel %vm2624, 1, 0
      %v3137 = vsel %vm2625, 1, 0
      %v3138 = vsel %vm2626, 1, 0
      %v3139 = vsel %vm2627, 1, 0
      %v3140 = vsel %vm2628, 1, 0
      %v3141 = vsel %vm2629, 1, 0
      %v3142 = vsel %vm2630, 1, 0
      %v3143 = vsel %vm2631, 1, 0
      %v3144 = vsel %vm2632, 1, 0
      %v3145 = vsel %vm2633, 1, 0
      %v3146 = vsel %vm2634, 1, 0
      %v3147 = vsel %vm2635, 1, 0
      %v3148 = vsel %vm2636, 1, 0
      %v3149 = vsel %vm2637, 1, 0
      %v3150 = vsel %vm2638, 1, 0
      %v3151 = vsel %vm2639, 1, 0
      %v3152 = vsel %vm2640, 1, 0
      %v3153 = vsel %vm2641, 1, 0
      %v3154 = vsel %vm2642, 1, 0
      %v3155 = vsel %vm2643, 1, 0
      %v3156 = vsel %vm2644, 1, 0
      %v3157 = vsel %vm2645, 1, 0
      %v3158 = vsel %vm2646, 1, 0
      %v3159 = vsel %vm2647, 1, 0
      %v3160 = vsel %vm2648, 1, 0
      %v3161 = vsel %vm2649, 1, 0
      %v3162 = vsel %vm2650, 1, 0
      %v3163 = vsel %vm2651, 1, 0
      %v3164 = vsel %vm2652, 1, 0
      %v3165 = vsel %vm2653, 1, 0
      %v3166 = vsel %vm2654, 1, 0
      %v3167 = vsel %vm2655, 1, 0
      %v3168 = vsel %vm2656, 1, 0
      %v3169 = vsel %vm2657, 1, 0
      %v3170 = vsel %vm2658, 1, 0
      %v3171 = vsel %vm2659, 1, 0
      %v3172 = vsel %vm2660, 1, 0
      %v3173 = vsel %vm2661, 1, 0
      %v3174 = vsel %vm2662, 1, 0
      %v3175 = vsel %vm2663, 1, 0
      %v3176 = vsel %vm2664, 1, 0
      %v3177 = vsel %vm2665, 1, 0
      %v3178 = vsel %vm2666, 1, 0
      %v3179 = vsel %vm2667, 1, 0
      %v3180 = vsel %vm2668, 1, 0
      %v3181 = vsel %vm2669, 1, 0
      %v3182 = vsel %vm2670, 1, 0
      %v3183 = vsel %vm2671, 1, 0
      %v3184 = vsel %vm2672, 1, 0
      %v3185 = vsel %vm2673, 1, 0
      %v3186 = vsel %vm2674, 1, 0
      %v3187 = vsel %vm2675, 1, 0
      %v3188 = vsel %vm2676, 1, 0
      %v3189 = vsel %vm2677, 1, 0
      %v3190 = vsel %vm2678, 1, 0
      %v3191 = vsel %vm2679, 1, 0
      %v3192 = vsel %vm2680, 1, 0
      %v3193 = vsel %vm2681, 1, 0
      %v3194 = vsel %vm2682, 1, 0
      %v3195 = vsel %vm2683, 1, 0
      %v3196 = vsel %vm2684, 1, 0
      %v3197 = vsel %vm2685, 1, 0
      %v3198 = vsel %vm2686, 1, 0
      %v3199 = vsel %vm2687, 1, 0
      %v3200 = vsel %vm2688, 1, 0
      %v3201 = vsel %vm2689, 1, 0
      %v3202 = vsel %vm2690, 1, 0
      %v3203 = vsel %vm2691, 1, 0
      %v3204 = vsel %vm2692, 1, 0
      %v3205 = vsel %vm2693, 1, 0
      %v3206 = vsel %vm2694, 1, 0
      %v3207 = vsel %vm2695, 1, 0
      %v3208 = vsel %vm2696, 1, 0
      %v3209 = vsel %vm2697, 1, 0
      %v3210 = vsel %vm2698, 1, 0
      %v3211 = vsel %vm2699, 1, 0
      %v3212 = vsel %vm2700, 1, 0
      %v3213 = vsel %vm2701, 1, 0
      %v3214 = vsel %vm2702, 1, 0
      %v3215 = vsel %vm2703, 1, 0
      %v3216 = vsel %vm2704, 1, 0
      %v3217 = vsel %vm2705, 1, 0
      %v3218 = vsel %vm2706, 1, 0
      %v3219 = vsel %vm2707, 1, 0
      %v3220 = vsel %vm2708, 1, 0
      %v3221 = vsel %vm2709, 1, 0
      %v3222 = vsel %vm2710, 1, 0
      %v3223 = vsel %vm2711, 1, 0
      %v3224 = vsel %vm2712, 1, 0
      %v3225 = vsel %vm2713, 1, 0
      %v3226 = vsel %vm2714, 1, 0
      %v3227 = vsel %vm2715, 1, 0
      %v3228 = vsel %vm2716, 1, 0
      %v3229 = vsel %vm2717, 1, 0
      %v3230 = vsel %vm2718, 1, 0
      %v3231 = vsel %vm2719, 1, 0
      %v3232 = vsel %vm2720, 1, 0
      %v3233 = vsel %vm2721, 1, 0
      %v3234 = vsel %vm2722, 1, 0
      %v3235 = vsel %vm2723, 1, 0
      %v3236 = vsel %vm2724, 1, 0
      %v3237 = vsel %vm2725, 1, 0
      %v3238 = vsel %vm2726, 1, 0
      %v3239 = vsel %vm2727, 1, 0
      %v3240 = vsel %vm2728, 1, 0
      %v3241 = vsel %vm2729, 1, 0
      %v3242 = vsel %vm2730, 1, 0
      %v3243 = vsel %vm2731, 1, 0
      %v3244 = vsel %vm2732, 1, 0
      %v3245 = vsel %vm2733, 1, 0
      %v3246 = vsel %vm2734, 1, 0
      %v3247 = vsel %vm2735, 1, 0
      %v3248 = vsel %vm2736, 1, 0
      %v3249 = vsel %vm2737, 1, 0
      %v3250 = vsel %vm2738, 1, 0
      %v3251 = vsel %vm2739, 1, 0
      %v3252 = vsel %vm2740, 1, 0
      %v3253 = vsel %vm2741, 1, 0
      %v3254 = vsel %vm2742, 1, 0
      %v3255 = vsel %vm2743, 1, 0
      %v3256 = vsel %vm2744, 1, 0
      %v3257 = vsel %vm2745, 1, 0
      %v3258 = vsel %vm2746, 1, 0
      %v3259 = vsel %vm2747, 1, 0
      %v3260 = vsel %vm2748, 1, 0
      %v3261 = vsel %vm2749, 1, 0
      %v3262 = vsel %vm2750, 1, 0
      %v3263 = vsel %vm2751, 1, 0
      %v3264 = vsel %vm2752, 1, 0
      %v3265 = vsel %vm2753, 1, 0
      %v3266 = vsel %vm2754, 1, 0
      %v3267 = vsel %vm2755, 1, 0
      %v3268 = vsel %vm2756, 1, 0
      %v3269 = vsel %vm2757, 1, 0
      %v3270 = vsel %vm2758, 1, 0
      %v3271 = vsel %vm2759, 1, 0
      %v3272 = vsel %vm2760, 1, 0
      %v3273 = vsel %vm2761, 1, 0
      %v3274 = vsel %vm2762, 1, 0
      %v3275 = vsel %vm2763, 1, 0
      %v3276 = vsel %vm2764, 1, 0
      %v3277 = vsel %vm2765, 1, 0
      %v3278 = vsel %vm2766, 1, 0
      %v3279 = vsel %vm2767, 1, 0
      %v3280 = vsel %vm2768, 1, 0
      %v3281 = vsel %vm2769, 1, 0
      %v3282 = vsel %vm2770, 1, 0
      %v3283 = vsel %vm2771, 1, 0
      %v3284 = vsel %vm2772, 1, 0
      %v3285 = vsel %vm2773, 1, 0
      %v3286 = vsel %vm2774, 1, 0
      %v3287 = vsel %vm2775, 1, 0
      %v3288 = vsel %vm2776, 1, 0
      %v3289 = vsel %vm2777, 1, 0
      %v3290 = vsel %vm2778, 1, 0
      %v3291 = vsel %vm2779, 1, 0
      %v3292 = vsel %vm2780, 1, 0
      %v3293 = vsel %vm2781, 1, 0
      %v3294 = vsel %vm2782, 1, 0
      %v3295 = vsel %vm2783, 1, 0
      %v3296 = vsel %vm2784, 1, 0
      %v3297 = vsel %vm2785, 1, 0
      %v3298 = vsel %vm2786, 1, 0
      %v3299 = vsel %vm2787, 1, 0
      %v3300 = vsel %vm2788, 1, 0
      %v3301 = vsel %vm2789, 1, 0
      %v3302 = vsel %vm2790, 1, 0
      %v3303 = vsel %vm2791, 1, 0
      %v3304 = vsel %vm2792, 1, 0
      %v3305 = vsel %vm2793, 1, 0
      %v3306 = vsel %vm2794, 1, 0
      %v3307 = vsel %vm2795, 1, 0
      %v3308 = vsel %vm2796, 1, 0
      %v3309 = vsel %vm2797, 1, 0
      %v3310 = vsel %vm2798, 1, 0
      %v3311 = vsel %vm2799, 1, 0
      %v3312 = vsel %vm2800, 1, 0
      %v3313 = vsel %vm2801, 1, 0
      %v3314 = vsel %vm2802, 1, 0
      %v3315 = vsel %vm2803, 1, 0
      %v3316 = vsel %vm2804, 1, 0
      %v3317 = vsel %vm2805, 1, 0
      %v3318 = vsel %vm2806, 1, 0
      %v3319 = vsel %vm2807, 1, 0
      %v3320 = vsel %vm2808, 1, 0
      %v3321 = vsel %vm2809, 1, 0
      %v3322 = vsel %vm2810, 1, 0
      %v3323 = vsel %vm2811, 1, 0
      %v3324 = vsel %vm2812, 1, 0
      %v3325 = vsel %vm2813, 1, 0
      %v3326 = vsel %vm2814, 1, 0
      %v3327 = vsel %vm2815, 1, 0
      %v3328 = vsel %vm2816, 1, 0
      %v3329 = vsel %vm2817, 1, 0
      %v3330 = vsel %vm2818, 1, 0
      %v3331 = vsel %vm2819, 1, 0
      %v3332 = vsel %vm2820, 1, 0
      %v3333 = vsel %vm2821, 1, 0
      %v3334 = vsel %vm2822, 1, 0
      %v3335 = vsel %vm2823, 1, 0
      %v3336 = vsel %vm2824, 1, 0
      %v3337 = vsel %vm2825, 1, 0
      %v3338 = vsel %vm2826, 1, 0
      %v3339 = vsel %vm2827, 1, 0
      %v3340 = vsel %vm2828, 1, 0
      %v3341 = vsel %vm2829, 1, 0
      %v3342 = vsel %vm2830, 1, 0
      %v3343 = vsel %vm2831, 1, 0
      %v3344 = vsel %vm2832, 1, 0
      %v3345 = vsel %vm2833, 1, 0
      %v3346 = vsel %vm2834, 1, 0
      %v3347 = vsel %vm2835, 1, 0
      %v3348 = vsel %vm2836, 1, 0
      %v3349 = vsel %vm2837, 1, 0
      %v3350 = vsel %vm2838, 1, 0
      %v3351 = vsel %vm2839, 1, 0
      %v3352 = vsel %vm2840, 1, 0
      %v3353 = vsel %vm2841, 1, 0
      %v3354 = vsel %vm2842, 1, 0
      %v3355 = vsel %vm2843, 1, 0
      %v3356 = vsel %vm2844, 1, 0
      %v3357 = vsel %vm2845, 1, 0
      %v3358 = vsel %vm2846, 1, 0
      %v3359 = vsel %vm2847, 1, 0
      %v3360 = vsel %vm2848, 1, 0
      %v3361 = vsel %vm2849, 1, 0
      %v3362 = vsel %vm2850, 1, 0
      %v3363 = vsel %vm2851, 1, 0
      %v3364 = vsel %vm2852, 1, 0
      %v3365 = vsel %vm2853, 1, 0
      %v3366 = vsel %vm2854, 1, 0
      %v3367 = vsel %vm2855, 1, 0
      %v3368 = vsel %vm2856, 1, 0
      %v3369 = vsel %vm2857, 1, 0
      %v3370 = vsel %vm2858, 1, 0
      %v3371 = vsel %vm2859, 1, 0
      %v3372 = vsel %vm2860, 1, 0
      %v3373 = vsel %vm2861, 1, 0
      %v3374 = vsel %vm2862, 1, 0
      %v3375 = vsel %vm2863, 1, 0
      %v3376 = vsel %vm2864, 1, 0
      %v3377 = vsel %vm2865, 1, 0
      %v3378 = vsel %vm2866, 1, 0
      %v3379 = vsel %vm2867, 1, 0
      %v3380 = vsel %vm2868, 1, 0
      %v3381 = vsel %vm2869, 1, 0
      %v3382 = vsel %vm2870, 1, 0
      %v3383 = vsel %vm2871, 1, 0
      %v3384 = vsel %vm2872, 1, 0
      %v3385 = vsel %vm2873, 1, 0
      %v3386 = vsel %vm2874, 1, 0
      %v3387 = vsel %vm2875, 1, 0
      %v3388 = vsel %vm2876, 1, 0
      %v3389 = vsel %vm2877, 1, 0
      %v3390 = vsel %vm2878, 1, 0
      %v3391 = vsel %vm2879, 1, 0
      %v3392 = vsel %vm2880, 1, 0
      %v3393 = vsel %vm2881, 1, 0
      %v3394 = vsel %vm2882, 1, 0
      %v3395 = vsel %vm2883, 1, 0
      %v3396 = vsel %vm2884, 1, 0
      %v3397 = vsel %vm2885, 1, 0
      %v3398 = vsel %vm2886, 1, 0
      %v3399 = vsel %vm2887, 1, 0
      %v3400 = vsel %vm2888, 1, 0
      %v3401 = vsel %vm2889, 1, 0
      %v3402 = vsel %vm2890, 1, 0
      %v3403 = vsel %vm2891, 1, 0
      %v3404 = vsel %vm2892, 1, 0
      %v3405 = vsel %vm2893, 1, 0
      %v3406 = vsel %vm2894, 1, 0
      %v3407 = vsel %vm2895, 1, 0
      %v3408 = vsel %vm2896, 1, 0
      %v3409 = vsel %vm2897, 1, 0
      %v3410 = vsel %vm2898, 1, 0
      %v3411 = vsel %vm2899, 1, 0
      %v3412 = vsel %vm2900, 1, 0
      %v3413 = vsel %vm2901, 1, 0
      %v3414 = vsel %vm2902, 1, 0
      %v3415 = vsel %vm2903, 1, 0
      %v3416 = vsel %vm2904, 1, 0
      %v3417 = vsel %vm2905, 1, 0
      %v3418 = vsel %vm2906, 1, 0
      %v3419 = vsel %vm2907, 1, 0
      %v3420 = vsel %vm2908, 1, 0
      %v3421 = vsel %vm2909, 1, 0
      %v3422 = vsel %vm2910, 1, 0
      %v3423 = vsel %vm2911, 1, 0
      %v3424 = vsel %vm2912, 1, 0
      %v3425 = vsel %vm2913, 1, 0
      %v3426 = vsel %vm2914, 1, 0
      %v3427 = vsel %vm2915, 1, 0
      %v3428 = vsel %vm2916, 1, 0
      %v3429 = vsel %vm2917, 1, 0
      %v3430 = vsel %vm2918, 1, 0
      %v3431 = vsel %vm2919, 1, 0
      %v3432 = vsel %vm2920, 1, 0
      %v3433 = vsel %vm2921, 1, 0
      %v3434 = vsel %vm2922, 1, 0
      %v3435 = vsel %vm2923, 1, 0
      %v3436 = vsel %vm2924, 1, 0
      %v3437 = vsel %vm2925, 1, 0
      %v3438 = vsel %vm2926, 1, 0
      %v3439 = vsel %vm2927, 1, 0
      %v3440 = vsel %vm2928, 1, 0
      %v3441 = vsel %vm2929, 1, 0
      %v3442 = vsel %vm2930, 1, 0
      %v3443 = vsel %vm2931, 1, 0
      %v3444 = vsel %vm2932, 1, 0
      %v3445 = vsel %vm2933, 1, 0
      %v3446 = vsel %vm2934, 1, 0
      %v3447 = vsel %vm2935, 1, 0
      %v3448 = vsel %vm2936, 1, 0
      %v3449 = vsel %vm2937, 1, 0
      %v3450 = vsel %vm2938, 1, 0
      %v3451 = vsel %vm2939, 1, 0
      %v3452 = vsel %vm2940, 1, 0
      %v3453 = vsel %vm2941, 1, 0
      %v3454 = vsel %vm2942, 1, 0
      %v3455 = vsel %vm2943, 1, 0
      %v3456 = vsel %vm2944, 1, 0
      %v3457 = vsel %vm2945, 1, 0
      %v3458 = vsel %vm2946, 1, 0
      %v3459 = vsel %vm2947, 1, 0
      %v3460 = vsel %vm2948, 1, 0
      %v3461 = vsel %vm2949, 1, 0
      %v3462 = vsel %vm2950, 1, 0
      %v3463 = vsel %vm2951, 1, 0
      %v3464 = vsel %vm2952, 1, 0
      %v3465 = vsel %vm2953, 1, 0
      %v3466 = vsel %vm2954, 1, 0
      %v3467 = vsel %vm2955, 1, 0
      %v3468 = vsel %vm2956, 1, 0
      %v3469 = vsel %vm2957, 1, 0
      %v3470 = vsel %vm2958, 1, 0
      %v3471 = vsel %vm2959, 1, 0
      %v3472 = vsel %vm2960, 1, 0
      %v3473 = vsel %vm2961, 1, 0
      %v3474 = vsel %vm2962, 1, 0
      %v3475 = vsel %vm2963, 1, 0
      %v3476 = vsel %vm2964, 1, 0
      %v3477 = vsel %vm2965, 1, 0
      %v3478 = vsel %vm2966, 1, 0
      %v3479 = vsel %vm2967, 1, 0
      %v3480 = vsel %vm2968, 1, 0
      %v3481 = vsel %vm2969, 1, 0
      %v3482 = vsel %vm2970, 1, 0
      %v3483 = vsel %vm2971, 1, 0
      %v3484 = vsel %vm2972, 1, 0
      %v3485 = vsel %vm2973, 1, 0
      %v3486 = vsel %vm2974, 1, 0
      %v3487 = vsel %vm2975, 1, 0
      %v3488 = vsel %vm2976, 1, 0
      %v3489 = vsel %vm2977, 1, 0
      %v3490 = vsel %vm2978, 1, 0
      %v3491 = vsel %vm2979, 1, 0
      %v3492 = vsel %vm2980, 1, 0
      %v3493 = vsel %vm2981, 1, 0
      %v3494 = vsel %vm2982, 1, 0
      %v3495 = vsel %vm2983, 1, 0
      %v3496 = vsel %vm2984, 1, 0
      %v3497 = vsel %vm2985, 1, 0
      %v3498 = vsel %vm2986, 1, 0
      %v3499 = vsel %vm2987, 1, 0
      %v3500 = vsel %vm2988, 1, 0
      %v3501 = vsel %vm2989, 1, 0
      %v3502 = vsel %vm2990, 1, 0
      %v3503 = vsel %vm2991, 1, 0
      %v3504 = vsel %vm2992, 1, 0
      %v3505 = vsel %vm2993, 1, 0
      %v3506 = vsel %vm2994, 1, 0
      %v3507 = vsel %vm2995, 1, 0
      %v3508 = vsel %vm2996, 1, 0
      %v3509 = vsel %vm2997, 1, 0
      %v3510 = vsel %vm2998, 1, 0
      %v3511 = vsel %vm2999, 1, 0
      %v3512 = vsel %vm3000, 1, 0
      %v3513 = vsel %vm3001, 1, 0
      %v3514 = vsel %vm3002, 1, 0
      %v3515 = vsel %vm3003, 1, 0
      %v3516 = vsel %vm3004, 1, 0
      %v3517 = vsel %vm3005, 1, 0
      %v3518 = vsel %vm3006, 1, 0
      %v3519 = vsel %vm3007, 1, 0
      %v3520 = vsel %vm3008, 1, 0
      %v3521 = vsel %vm3009, 1, 0
      %v3522 = vsel %vm3010, 1, 0
      %v3523 = vsel %vm3011, 1, 0
      %v3524 = vsel %vm3012, 1, 0
      %v3525 = vsel %vm3013, 1, 0
      %v3526 = vsel %vm3014, 1, 0
      %v3527 = vsel %vm3015, 1, 0
      %v3528 = vsel %vm3016, 1, 0
      %v3529 = vsel %vm3017, 1, 0
      %v3530 = vsel %vm3018, 1, 0
      %v3531 = vsel %vm3019, 1, 0
      %v3532 = vsel %vm3020, 1, 0
      %v3533 = vsel %vm3021, 1, 0
      %v3534 = vsel %vm3022, 1, 0
      %v3535 = vsel %vm3023, 1, 0
      %v3536 = vsel %vm3024, 1, 0
      %v3537 = vcvt.s32.f32 %v3025
      %v3538 = vcvt.s32.f32 %v3026
      %v3539 = vcvt.s32.f32 %v3027
      %v3540 = vcvt.s32.f32 %v3028
      %v3541 = vcvt.s32.f32 %v3029
      %v3542 = vcvt.s32.f32 %v3030
      %v3543 = vcvt.s32.f32 %v3031
      %v3544 = vcvt.s32.f32 %v3032
      %v3545 = vcvt.s32.f32 %v3033
      %v3546 = vcvt.s32.f32 %v3034
      %v3547 = vcvt.s32.f32 %v3035
      %v3548 = vcvt.s32.f32 %v3036
      %v3549 = vcvt.s32.f32 %v3037
      %v3550 = vcvt.s32.f32 %v3038
      %v3551 = vcvt.s32.f32 %v3039
      %v3552 = vcvt.s32.f32 %v3040
      %v3553 = vcvt.s32.f32 %v3041
      %v3554 = vcvt.s32.f32 %v3042
      %v3555 = vcvt.s32.f32 %v3043
      %v3556 = vcvt.s32.f32 %v3044
      %v3557 = vcvt.s32.f32 %v3045
      %v3558 = vcvt.s32.f32 %v3046
      %v3559 = vcvt.s32.f32 %v3047
      %v3560 = vcvt.s32.f32 %v3048
      %v3561 = vcvt.s32.f32 %v3049
      %v3562 = vcvt.s32.f32 %v3050
      %v3563 = vcvt.s32.f32 %v3051
      %v3564 = vcvt.s32.f32 %v3052
      %v3565 = vcvt.s32.f32 %v3053
      %v3566 = vcvt.s32.f32 %v3054
      %v3567 = vcvt.s32.f32 %v3055
      %v3568 = vcvt.s32.f32 %v3056
      %v3569 = vcvt.s32.f32 %v3057
      %v3570 = vcvt.s32.f32 %v3058
      %v3571 = vcvt.s32.f32 %v3059
      %v3572 = vcvt.s32.f32 %v3060
      %v3573 = vcvt.s32.f32 %v3061
      %v3574 = vcvt.s32.f32 %v3062
      %v3575 = vcvt.s32.f32 %v3063
      %v3576 = vcvt.s32.f32 %v3064
      %v3577 = vcvt.s32.f32 %v3065
      %v3578 = vcvt.s32.f32 %v3066
      %v3579 = vcvt.s32.f32 %v3067
      %v3580 = vcvt.s32.f32 %v3068
      %v3581 = vcvt.s32.f32 %v3069
      %v3582 = vcvt.s32.f32 %v3070
      %v3583 = vcvt.s32.f32 %v3071
      %v3584 = vcvt.s32.f32 %v3072
      %v3585 = vcvt.s32.f32 %v3073
      %v3586 = vcvt.s32.f32 %v3074
      %v3587 = vcvt.s32.f32 %v3075
      %v3588 = vcvt.s32.f32 %v3076
      %v3589 = vcvt.s32.f32 %v3077
      %v3590 = vcvt.s32.f32 %v3078
      %v3591 = vcvt.s32.f32 %v3079
      %v3592 = vcvt.s32.f32 %v3080
      %v3593 = vcvt.s32.f32 %v3081
      %v3594 = vcvt.s32.f32 %v3082
      %v3595 = vcvt.s32.f32 %v3083
      %v3596 = vcvt.s32.f32 %v3084
      %v3597 = vcvt.s32.f32 %v3085
      %v3598 = vcvt.s32.f32 %v3086
      %v3599 = vcvt.s32.f32 %v3087
      %v3600 = vcvt.s32.f32 %v3088
      %v3601 = vcvt.s32.f32 %v3089
      %v3602 = vcvt.s32.f32 %v3090
      %v3603 = vcvt.s32.f32 %v3091
      %v3604 = vcvt.s32.f32 %v3092
      %v3605 = vcvt.s32.f32 %v3093
      %v3606 = vcvt.s32.f32 %v3094
      %v3607 = vcvt.s32.f32 %v3095
      %v3608 = vcvt.s32.f32 %v3096
      %v3609 = vcvt.s32.f32 %v3097
      %v3610 = vcvt.s32.f32 %v3098
      %v3611 = vcvt.s32.f32 %v3099
      %v3612 = vcvt.s32.f32 %v3100
      %v3613 = vcvt.s32.f32 %v3101
      %v3614 = vcvt.s32.f32 %v3102
      %v3615 = vcvt.s32.f32 %v3103
      %v3616 = vcvt.s32.f32 %v3104
      %v3617 = vcvt.s32.f32 %v3105
      %v3618 = vcvt.s32.f32 %v3106
      %v3619 = vcvt.s32.f32 %v3107
      %v3620 = vcvt.s32.f32 %v3108
      %v3621 = vcvt.s32.f32 %v3109
      %v3622 = vcvt.s32.f32 %v3110
      %v3623 = vcvt.s32.f32 %v3111
      %v3624 = vcvt.s32.f32 %v3112
      %v3625 = vcvt.s32.f32 %v3113
      %v3626 = vcvt.s32.f32 %v3114
      %v3627 = vcvt.s32.f32 %v3115
      %v3628 = vcvt.s32.f32 %v3116
      %v3629 = vcvt.s32.f32 %v3117
      %v3630 = vcvt.s32.f32 %v3118
      %v3631 = vcvt.s32.f32 %v3119
      %v3632 = vcvt.s32.f32 %v3120
      %v3633 = vcvt.s32.f32 %v3121
      %v3634 = vcvt.s32.f32 %v3122
      %v3635 = vcvt.s32.f32 %v3123
      %v3636 = vcvt.s32.f32 %v3124
      %v3637 = vcvt.s32.f32 %v3125
      %v3638 = vcvt.s32.f32 %v3126
      %v3639 = vcvt.s32.f32 %v3127
      %v3640 = vcvt.s32.f32 %v3128
      %v3641 = vcvt.s32.f32 %v3129
      %v3642 = vcvt.s32.f32 %v3130
      %v3643 = vcvt.s32.f32 %v3131
      %v3644 = vcvt.s32.f32 %v3132
      %v3645 = vcvt.s32.f32 %v3133
      %v3646 = vcvt.s32.f32 %v3134
      %v3647 = vcvt.s32.f32 %v3135
      %v3648 = vcvt.s32.f32 %v3136
      %v3649 = vcvt.s32.f32 %v3137
      %v3650 = vcvt.s32.f32 %v3138
      %v3651 = vcvt.s32.f32 %v3139
      %v3652 = vcvt.s32.f32 %v3140
      %v3653 = vcvt.s32.f32 %v3141
      %v3654 = vcvt.s32.f32 %v3142
      %v3655 = vcvt.s32.f32 %v3143
      %v3656 = vcvt.s32.f32 %v3144
      %v3657 = vcvt.s32.f32 %v3145
      %v3658 = vcvt.s32.f32 %v3146
      %v3659 = vcvt.s32.f32 %v3147
      %v3660 = vcvt.s32.f32 %v3148
      %v3661 = vcvt.s32.f32 %v3149
      %v3662 = vcvt.s32.f32 %v3150
      %v3663 = vcvt.s32.f32 %v3151
      %v3664 = vcvt.s32.f32 %v3152
      %v3665 = vcvt.s32.f32 %v3153
      %v3666 = vcvt.s32.f32 %v3154
      %v3667 = vcvt.s32.f32 %v3155
      %v3668 = vcvt.s32.f32 %v3156
      %v3669 = vcvt.s32.f32 %v3157
      %v3670 = vcvt.s32.f32 %v3158
      %v3671 = vcvt.s32.f32 %v3159
      %v3672 = vcvt.s32.f32 %v3160
      %v3673 = vcvt.s32.f32 %v3161
      %v3674 = vcvt.s32.f32 %v3162
      %v3675 = vcvt.s32.f32 %v3163
      %v3676 = vcvt.s32.f32 %v3164
      %v3677 = vcvt.s32.f32 %v3165
      %v3678 = vcvt.s32.f32 %v3166
      %v3679 = vcvt.s32.f32 %v3167
      %v3680 = vcvt.s32.f32 %v3168
      %v3681 = vcvt.s32.f32 %v3169
      %v3682 = vcvt.s32.f32 %v3170
      %v3683 = vcvt.s32.f32 %v3171
      %v3684 = vcvt.s32.f32 %v3172
      %v3685 = vcvt.s32.f32 %v3173
      %v3686 = vcvt.s32.f32 %v3174
      %v3687 = vcvt.s32.f32 %v3175
      %v3688 = vcvt.s32.f32 %v3176
      %v3689 = vcvt.s32.f32 %v3177
      %v3690 = vcvt.s32.f32 %v3178
      %v3691 = vcvt.s32.f32 %v3179
      %v3692 = vcvt.s32.f32 %v3180
      %v3693 = vcvt.s32.f32 %v3181
      %v3694 = vcvt.s32.f32 %v3182
      %v3695 = vcvt.s32.f32 %v3183
      %v3696 = vcvt.s32.f32 %v3184
      %v3697 = vcvt.s32.f32 %v3185
      %v3698 = vcvt.s32.f32 %v3186
      %v3699 = vcvt.s32.f32 %v3187
      %v3700 = vcvt.s32.f32 %v3188
      %v3701 = vcvt.s32.f32 %v3189
      %v3702 = vcvt.s32.f32 %v3190
      %v3703 = vcvt.s32.f32 %v3191
      %v3704 = vcvt.s32.f32 %v3192
      %v3705 = vcvt.s32.f32 %v3193
      %v3706 = vcvt.s32.f32 %v3194
      %v3707 = vcvt.s32.f32 %v3195
      %v3708 = vcvt.s32.f32 %v3196
      %v3709 = vcvt.s32.f32 %v3197
      %v3710 = vcvt.s32.f32 %v3198
      %v3711 = vcvt.s32.f32 %v3199
      %v3712 = vcvt.s32.f32 %v3200
      %v3713 = vcvt.s32.f32 %v3201
      %v3714 = vcvt.s32.f32 %v3202
      %v3715 = vcvt.s32.f32 %v3203
      %v3716 = vcvt.s32.f32 %v3204
      %v3717 = vcvt.s32.f32 %v3205
      %v3718 = vcvt.s32.f32 %v3206
      %v3719 = vcvt.s32.f32 %v3207
      %v3720 = vcvt.s32.f32 %v3208
      %v3721 = vcvt.s32.f32 %v3209
      %v3722 = vcvt.s32.f32 %v3210
      %v3723 = vcvt.s32.f32 %v3211
      %v3724 = vcvt.s32.f32 %v3212
      %v3725 = vcvt.s32.f32 %v3213
      %v3726 = vcvt.s32.f32 %v3214
      %v3727 = vcvt.s32.f32 %v3215
      %v3728 = vcvt.s32.f32 %v3216
      %v3729 = vcvt.s32.f32 %v3217
      %v3730 = vcvt.s32.f32 %v3218
      %v3731 = vcvt.s32.f32 %v3219
      %v3732 = vcvt.s32.f32 %v3220
      %v3733 = vcvt.s32.f32 %v3221
      %v3734 = vcvt.s32.f32 %v3222
      %v3735 = vcvt.s32.f32 %v3223
      %v3736 = vcvt.s32.f32 %v3224
      %v3737 = vcvt.s32.f32 %v3225
      %v3738 = vcvt.s32.f32 %v3226
      %v3739 = vcvt.s32.f32 %v3227
      %v3740 = vcvt.s32.f32 %v3228
      %v3741 = vcvt.s32.f32 %v3229
      %v3742 = vcvt.s32.f32 %v3230
      %v3743 = vcvt.s32.f32 %v3231
      %v3744 = vcvt.s32.f32 %v3232
      %v3745 = vcvt.s32.f32 %v3233
      %v3746 = vcvt.s32.f32 %v3234
      %v3747 = vcvt.s32.f32 %v3235
      %v3748 = vcvt.s32.f32 %v3236
      %v3749 = vcvt.s32.f32 %v3237
      %v3750 = vcvt.s32.f32 %v3238
      %v3751 = vcvt.s32.f32 %v3239
      %v3752 = vcvt.s32.f32 %v3240
      %v3753 = vcvt.s32.f32 %v3241
      %v3754 = vcvt.s32.f32 %v3242
      %v3755 = vcvt.s32.f32 %v3243
      %v3756 = vcvt.s32.f32 %v3244
      %v3757 = vcvt.s32.f32 %v3245
      %v3758 = vcvt.s32.f32 %v3246
      %v3759 = vcvt.s32.f32 %v3247
      %v3760 = vcvt.s32.f32 %v3248
      %v3761 = vcvt.s32.f32 %v3249
      %v3762 = vcvt.s32.f32 %v3250
      %v3763 = vcvt.s32.f32 %v3251
      %v3764 = vcvt.s32.f32 %v3252
      %v3765 = vcvt.s32.f32 %v3253
      %v3766 = vcvt.s32.f32 %v3254
      %v3767 = vcvt.s32.f32 %v3255
      %v3768 = vcvt.s32.f32 %v3256
      %v3769 = vcvt.s32.f32 %v3257
      %v3770 = vcvt.s32.f32 %v3258
      %v3771 = vcvt.s32.f32 %v3259
      %v3772 = vcvt.s32.f32 %v3260
      %v3773 = vcvt.s32.f32 %v3261
      %v3774 = vcvt.s32.f32 %v3262
      %v3775 = vcvt.s32.f32 %v3263
      %v3776 = vcvt.s32.f32 %v3264
      %v3777 = vcvt.s32.f32 %v3265
      %v3778 = vcvt.s32.f32 %v3266
      %v3779 = vcvt.s32.f32 %v3267
      %v3780 = vcvt.s32.f32 %v3268
      %v3781 = vcvt.s32.f32 %v3269
      %v3782 = vcvt.s32.f32 %v3270
      %v3783 = vcvt.s32.f32 %v3271
      %v3784 = vcvt.s32.f32 %v3272
      %v3785 = vcvt.s32.f32 %v3273
      %v3786 = vcvt.s32.f32 %v3274
      %v3787 = vcvt.s32.f32 %v3275
      %v3788 = vcvt.s32.f32 %v3276
      %v3789 = vcvt.s32.f32 %v3277
      %v3790 = vcvt.s32.f32 %v3278
      %v3791 = vcvt.s32.f32 %v3279
      %v3792 = vcvt.s32.f32 %v3280
      %v3793 = vcvt.s32.f32 %v3281
      %v3794 = vcvt.s32.f32 %v3282
      %v3795 = vcvt.s32.f32 %v3283
      %v3796 = vcvt.s32.f32 %v3284
      %v3797 = vcvt.s32.f32 %v3285
      %v3798 = vcvt.s32.f32 %v3286
      %v3799 = vcvt.s32.f32 %v3287
      %v3800 = vcvt.s32.f32 %v3288
      %v3801 = vcvt.s32.f32 %v3289
      %v3802 = vcvt.s32.f32 %v3290
      %v3803 = vcvt.s32.f32 %v3291
      %v3804 = vcvt.s32.f32 %v3292
      %v3805 = vcvt.s32.f32 %v3293
      %v3806 = vcvt.s32.f32 %v3294
      %v3807 = vcvt.s32.f32 %v3295
      %v3808 = vcvt.s32.f32 %v3296
      %v3809 = vcvt.s32.f32 %v3297
      %v3810 = vcvt.s32.f32 %v3298
      %v3811 = vcvt.s32.f32 %v3299
      %v3812 = vcvt.s32.f32 %v3300
      %v3813 = vcvt.s32.f32 %v3301
      %v3814 = vcvt.s32.f32 %v3302
      %v3815 = vcvt.s32.f32 %v3303
      %v3816 = vcvt.s32.f32 %v3304
      %v3817 = vcvt.s32.f32 %v3305
      %v3818 = vcvt.s32.f32 %v3306
      %v3819 = vcvt.s32.f32 %v3307
      %v3820 = vcvt.s32.f32 %v3308
      %v3821 = vcvt.s32.f32 %v3309
      %v3822 = vcvt.s32.f32 %v3310
      %v3823 = vcvt.s32.f32 %v3311
      %v3824 = vcvt.s32.f32 %v3312
      %v3825 = vcvt.s32.f32 %v3313
      %v3826 = vcvt.s32.f32 %v3314
      %v3827 = vcvt.s32.f32 %v3315
      %v3828 = vcvt.s32.f32 %v3316
      %v3829 = vcvt.s32.f32 %v3317
      %v3830 = vcvt.s32.f32 %v3318
      %v3831 = vcvt.s32.f32 %v3319
      %v3832 = vcvt.s32.f32 %v3320
      %v3833 = vcvt.s32.f32 %v3321
      %v3834 = vcvt.s32.f32 %v3322
      %v3835 = vcvt.s32.f32 %v3323
      %v3836 = vcvt.s32.f32 %v3324
      %v3837 = vcvt.s32.f32 %v3325
      %v3838 = vcvt.s32.f32 %v3326
      %v3839 = vcvt.s32.f32 %v3327
      %v3840 = vcvt.s32.f32 %v3328
      %v3841 = vcvt.s32.f32 %v3329
      %v3842 = vcvt.s32.f32 %v3330
      %v3843 = vcvt.s32.f32 %v3331
      %v3844 = vcvt.s32.f32 %v3332
      %v3845 = vcvt.s32.f32 %v3333
      %v3846 = vcvt.s32.f32 %v3334
      %v3847 = vcvt.s32.f32 %v3335
      %v3848 = vcvt.s32.f32 %v3336
      %v3849 = vcvt.s32.f32 %v3337
      %v3850 = vcvt.s32.f32 %v3338
      %v3851 = vcvt.s32.f32 %v3339
      %v3852 = vcvt.s32.f32 %v3340
      %v3853 = vcvt.s32.f32 %v3341
      %v3854 = vcvt.s32.f32 %v3342
      %v3855 = vcvt.s32.f32 %v3343
      %v3856 = vcvt.s32.f32 %v3344
      %v3857 = vcvt.s32.f32 %v3345
      %v3858 = vcvt.s32.f32 %v3346
      %v3859 = vcvt.s32.f32 %v3347
      %v3860 = vcvt.s32.f32 %v3348
      %v3861 = vcvt.s32.f32 %v3349
      %v3862 = vcvt.s32.f32 %v3350
      %v3863 = vcvt.s32.f32 %v3351
      %v3864 = vcvt.s32.f32 %v3352
      %v3865 = vcvt.s32.f32 %v3353
      %v3866 = vcvt.s32.f32 %v3354
      %v3867 = vcvt.s32.f32 %v3355
      %v3868 = vcvt.s32.f32 %v3356
      %v3869 = vcvt.s32.f32 %v3357
      %v3870 = vcvt.s32.f32 %v3358
      %v3871 = vcvt.s32.f32 %v3359
      %v3872 = vcvt.s32.f32 %v3360
      %v3873 = vcvt.s32.f32 %v3361
      %v3874 = vcvt.s32.f32 %v3362
      %v3875 = vcvt.s32.f32 %v3363
      %v3876 = vcvt.s32.f32 %v3364
      %v3877 = vcvt.s32.f32 %v3365
      %v3878 = vcvt.s32.f32 %v3366
      %v3879 = vcvt.s32.f32 %v3367
      %v3880 = vcvt.s32.f32 %v3368
      %v3881 = vcvt.s32.f32 %v3369
      %v3882 = vcvt.s32.f32 %v3370
      %v3883 = vcvt.s32.f32 %v3371
      %v3884 = vcvt.s32.f32 %v3372
      %v3885 = vcvt.s32.f32 %v3373
      %v3886 = vcvt.s32.f32 %v3374
      %v3887 = vcvt.s32.f32 %v3375
      %v3888 = vcvt.s32.f32 %v3376
      %v3889 = vcvt.s32.f32 %v3377
      %v3890 = vcvt.s32.f32 %v3378
      %v3891 = vcvt.s32.f32 %v3379
      %v3892 = vcvt.s32.f32 %v3380
      %v3893 = vcvt.s32.f32 %v3381
      %v3894 = vcvt.s32.f32 %v3382
      %v3895 = vcvt.s32.f32 %v3383
      %v3896 = vcvt.s32.f32 %v3384
      %v3897 = vcvt.s32.f32 %v3385
      %v3898 = vcvt.s32.f32 %v3386
      %v3899 = vcvt.s32.f32 %v3387
      %v3900 = vcvt.s32.f32 %v3388
      %v3901 = vcvt.s32.f32 %v3389
      %v3902 = vcvt.s32.f32 %v3390
      %v3903 = vcvt.s32.f32 %v3391
      %v3904 = vcvt.s32.f32 %v3392
      %v3905 = vcvt.s32.f32 %v3393
      %v3906 = vcvt.s32.f32 %v3394
      %v3907 = vcvt.s32.f32 %v3395
      %v3908 = vcvt.s32.f32 %v3396
      %v3909 = vcvt.s32.f32 %v3397
      %v3910 = vcvt.s32.f32 %v3398
      %v3911 = vcvt.s32.f32 %v3399
      %v3912 = vcvt.s32.f32 %v3400
      %v3913 = vcvt.s32.f32 %v3401
      %v3914 = vcvt.s32.f32 %v3402
      %v3915 = vcvt.s32.f32 %v3403
      %v3916 = vcvt.s32.f32 %v3404
      %v3917 = vcvt.s32.f32 %v3405
      %v3918 = vcvt.s32.f32 %v3406
      %v3919 = vcvt.s32.f32 %v3407
      %v3920 = vcvt.s32.f32 %v3408
      %v3921 = vcvt.s32.f32 %v3409
      %v3922 = vcvt.s32.f32 %v3410
      %v3923 = vcvt.s32.f32 %v3411
      %v3924 = vcvt.s32.f32 %v3412
      %v3925 = vcvt.s32.f32 %v3413
      %v3926 = vcvt.s32.f32 %v3414
      %v3927 = vcvt.s32.f32 %v3415
      %v3928 = vcvt.s32.f32 %v3416
      %v3929 = vcvt.s32.f32 %v3417
      %v3930 = vcvt.s32.f32 %v3418
      %v3931 = vcvt.s32.f32 %v3419
      %v3932 = vcvt.s32.f32 %v3420
      %v3933 = vcvt.s32.f32 %v3421
      %v3934 = vcvt.s32.f32 %v3422
      %v3935 = vcvt.s32.f32 %v3423
      %v3936 = vcvt.s32.f32 %v3424
      %v3937 = vcvt.s32.f32 %v3425
      %v3938 = vcvt.s32.f32 %v3426
      %v3939 = vcvt.s32.f32 %v3427
      %v3940 = vcvt.s32.f32 %v3428
      %v3941 = vcvt.s32.f32 %v3429
      %v3942 = vcvt.s32.f32 %v3430
      %v3943 = vcvt.s32.f32 %v3431
      %v3944 = vcvt.s32.f32 %v3432
      %v3945 = vcvt.s32.f32 %v3433
      %v3946 = vcvt.s32.f32 %v3434
      %v3947 = vcvt.s32.f32 %v3435
      %v3948 = vcvt.s32.f32 %v3436
      %v3949 = vcvt.s32.f32 %v3437
      %v3950 = vcvt.s32.f32 %v3438
      %v3951 = vcvt.s32.f32 %v3439
      %v3952 = vcvt.s32.f32 %v3440
      %v3953 = vcvt.s32.f32 %v3441
      %v3954 = vcvt.s32.f32 %v3442
      %v3955 = vcvt.s32.f32 %v3443
      %v3956 = vcvt.s32.f32 %v3444
      %v3957 = vcvt.s32.f32 %v3445
      %v3958 = vcvt.s32.f32 %v3446
      %v3959 = vcvt.s32.f32 %v3447
      %v3960 = vcvt.s32.f32 %v3448
      %v3961 = vcvt.s32.f32 %v3449
      %v3962 = vcvt.s32.f32 %v3450
      %v3963 = vcvt.s32.f32 %v3451
      %v3964 = vcvt.s32.f32 %v3452
      %v3965 = vcvt.s32.f32 %v3453
      %v3966 = vcvt.s32.f32 %v3454
      %v3967 = vcvt.s32.f32 %v3455
      %v3968 = vcvt.s32.f32 %v3456
      %v3969 = vcvt.s32.f32 %v3457
      %v3970 = vcvt.s32.f32 %v3458
      %v3971 = vcvt.s32.f32 %v3459
      %v3972 = vcvt.s32.f32 %v3460
      %v3973 = vcvt.s32.f32 %v3461
      %v3974 = vcvt.s32.f32 %v3462
      %v3975 = vcvt.s32.f32 %v3463
      %v3976 = vcvt.s32.f32 %v3464
      %v3977 = vcvt.s32.f32 %v3465
      %v3978 = vcvt.s32.f32 %v3466
      %v3979 = vcvt.s32.f32 %v3467
      %v3980 = vcvt.s32.f32 %v3468
      %v3981 = vcvt.s32.f32 %v3469
      %v3982 = vcvt.s32.f32 %v3470
      %v3983 = vcvt.s32.f32 %v3471
      %v3984 = vcvt.s32.f32 %v3472
      %v3985 = vcvt.s32.f32 %v3473
      %v3986 = vcvt.s32.f32 %v3474
      %v3987 = vcvt.s32.f32 %v3475
      %v3988 = vcvt.s32.f32 %v3476
      %v3989 = vcvt.s32.f32 %v3477
      %v3990 = vcvt.s32.f32 %v3478
      %v3991 = vcvt.s32.f32 %v3479
      %v3992 = vcvt.s32.f32 %v3480
      %v3993 = vcvt.s32.f32 %v3481
      %v3994 = vcvt.s32.f32 %v3482
      %v3995 = vcvt.s32.f32 %v3483
      %v3996 = vcvt.s32.f32 %v3484
      %v3997 = vcvt.s32.f32 %v3485
      %v3998 = vcvt.s32.f32 %v3486
      %v3999 = vcvt.s32.f32 %v3487
      %v4000 = vcvt.s32.f32 %v3488
      %v4001 = vcvt.s32.f32 %v3489
      %v4002 = vcvt.s32.f32 %v3490
      %v4003 = vcvt.s32.f32 %v3491
      %v4004 = vcvt.s32.f32 %v3492
      %v4005 = vcvt.s32.f32 %v3493
      %v4006 = vcvt.s32.f32 %v3494
      %v4007 = vcvt.s32.f32 %v3495
      %v4008 = vcvt.s32.f32 %v3496
      %v4009 = vcvt.s32.f32 %v3497
      %v4010 = vcvt.s32.f32 %v3498
      %v4011 = vcvt.s32.f32 %v3499
      %v4012 = vcvt.s32.f32 %v3500
      %v4013 = vcvt.s32.f32 %v3501
      %v4014 = vcvt.s32.f32 %v3502
      %v4015 = vcvt.s32.f32 %v3503
      %v4016 = vcvt.s32.f32 %v3504
      %v4017 = vcvt.s32.f32 %v3505
      %v4018 = vcvt.s32.f32 %v3506
      %v4019 = vcvt.s32.f32 %v3507
      %v4020 = vcvt.s32.f32 %v3508
      %v4021 = vcvt.s32.f32 %v3509
      %v4022 = vcvt.s32.f32 %v3510
      %v4023 = vcvt.s32.f32 %v3511
      %v4024 = vcvt.s32.f32 %v3512
      %v4025 = vcvt.s32.f32 %v3513
      %v4026 = vcvt.s32.f32 %v3514
      %v4027 = vcvt.s32.f32 %v3515
      %v4028 = vcvt.s32.f32 %v3516
      %v4029 = vcvt.s32.f32 %v3517
      %v4030 = vcvt.s32.f32 %v3518
      %v4031 = vcvt.s32.f32 %v3519
      %v4032 = vcvt.s32.f32 %v3520
      %v4033 = vcvt.s32.f32 %v3521
      %v4034 = vcvt.s32.f32 %v3522
      %v4035 = vcvt.s32.f32 %v3523
      %v4036 = vcvt.s32.f32 %v3524
      %v4037 = vcvt.s32.f32 %v3525
      %v4038 = vcvt.s32.f32 %v3526
      %v4039 = vcvt.s32.f32 %v3527
      %v4040 = vcvt.s32.f32 %v3528
      %v4041 = vcvt.s32.f32 %v3529
      %v4042 = vcvt.s32.f32 %v3530
      %v4043 = vcvt.s32.f32 %v3531
      %v4044 = vcvt.s32.f32 %v3532
      %v4045 = vcvt.s32.f32 %v3533
      %v4046 = vcvt.s32.f32 %v3534
      %v4047 = vcvt.s32.f32 %v3535
      %v4048 = vcvt.s32.f32 %v3536
      %v4049 = vpack.c.bf16 %v3539, %v3537
      %v4050 = vpack.c.bf16 %v3540, %v3538
      %v4051 = vpack.c.bf16 %v3543, %v3541
      %v4052 = vpack.c.bf16 %v3544, %v3542
      %v4053 = vpack.c.bf16 %v3547, %v3545
      %v4054 = vpack.c.bf16 %v3548, %v3546
      %v4055 = vpack.c.bf16 %v3551, %v3549
      %v4056 = vpack.c.bf16 %v3552, %v3550
      %v4057 = vpack.c.bf16 %v3555, %v3553
      %v4058 = vpack.c.bf16 %v3556, %v3554
      %v4059 = vpack.c.bf16 %v3559, %v3557
      %v4060 = vpack.c.bf16 %v3560, %v3558
      %v4061 = vpack.c.bf16 %v3563, %v3561
      %v4062 = vpack.c.bf16 %v3564, %v3562
      %v4063 = vpack.c.bf16 %v3567, %v3565
      %v4064 = vpack.c.bf16 %v3568, %v3566
      %v4065 = vpack.c.bf16 %v3571, %v3569
      %v4066 = vpack.c.bf16 %v3572, %v3570
      %v4067 = vpack.c.bf16 %v3575, %v3573
      %v4068 = vpack.c.bf16 %v3576, %v3574
      %v4069 = vpack.c.bf16 %v3579, %v3577
      %v4070 = vpack.c.bf16 %v3580, %v3578
      %v4071 = vpack.c.bf16 %v3583, %v3581
      %v4072 = vpack.c.bf16 %v3584, %v3582
      %v4073 = vpack.c.bf16 %v3587, %v3585
      %v4074 = vpack.c.bf16 %v3588, %v3586
      %v4075 = vpack.c.bf16 %v3591, %v3589
      %v4076 = vpack.c.bf16 %v3592, %v3590
      %v4077 = vpack.c.bf16 %v3595, %v3593
      %v4078 = vpack.c.bf16 %v3596, %v3594
      %v4079 = vpack.c.bf16 %v3599, %v3597
      %v4080 = vpack.c.bf16 %v3600, %v3598
      %v4081 = vpack.c.bf16 %v3603, %v3601
      %v4082 = vpack.c.bf16 %v3604, %v3602
      %v4083 = vpack.c.bf16 %v3607, %v3605
      %v4084 = vpack.c.bf16 %v3608, %v3606
      %v4085 = vpack.c.bf16 %v3611, %v3609
      %v4086 = vpack.c.bf16 %v3612, %v3610
      %v4087 = vpack.c.bf16 %v3615, %v3613
      %v4088 = vpack.c.bf16 %v3616, %v3614
      %v4089 = vpack.c.bf16 %v3619, %v3617
      %v4090 = vpack.c.bf16 %v3620, %v3618
      %v4091 = vpack.c.bf16 %v3623, %v3621
      %v4092 = vpack.c.bf16 %v3624, %v3622
      %v4093 = vpack.c.bf16 %v3627, %v3625
      %v4094 = vpack.c.bf16 %v3628, %v3626
      %v4095 = vpack.c.bf16 %v3631, %v3629
      %v4096 = vpack.c.bf16 %v3632, %v3630
      %v4097 = vpack.c.bf16 %v3635, %v3633
      %v4098 = vpack.c.bf16 %v3636, %v3634
      %v4099 = vpack.c.bf16 %v3639, %v3637
      %v4100 = vpack.c.bf16 %v3640, %v3638
      %v4101 = vpack.c.bf16 %v3643, %v3641
      %v4102 = vpack.c.bf16 %v3644, %v3642
      %v4103 = vpack.c.bf16 %v3647, %v3645
      %v4104 = vpack.c.bf16 %v3648, %v3646
      %v4105 = vpack.c.bf16 %v3651, %v3649
      %v4106 = vpack.c.bf16 %v3652, %v3650
      %v4107 = vpack.c.bf16 %v3655, %v3653
      %v4108 = vpack.c.bf16 %v3656, %v3654
      %v4109 = vpack.c.bf16 %v3659, %v3657
      %v4110 = vpack.c.bf16 %v3660, %v3658
      %v4111 = vpack.c.bf16 %v3663, %v3661
      %v4112 = vpack.c.bf16 %v3664, %v3662
      %v4113 = vpack.c.bf16 %v3667, %v3665
      %v4114 = vpack.c.bf16 %v3668, %v3666
      %v4115 = vpack.c.bf16 %v3671, %v3669
      %v4116 = vpack.c.bf16 %v3672, %v3670
      %v4117 = vpack.c.bf16 %v3675, %v3673
      %v4118 = vpack.c.bf16 %v3676, %v3674
      %v4119 = vpack.c.bf16 %v3679, %v3677
      %v4120 = vpack.c.bf16 %v3680, %v3678
      %v4121 = vpack.c.bf16 %v3683, %v3681
      %v4122 = vpack.c.bf16 %v3684, %v3682
      %v4123 = vpack.c.bf16 %v3687, %v3685
      %v4124 = vpack.c.bf16 %v3688, %v3686
      %v4125 = vpack.c.bf16 %v3691, %v3689
      %v4126 = vpack.c.bf16 %v3692, %v3690
      %v4127 = vpack.c.bf16 %v3695, %v3693
      %v4128 = vpack.c.bf16 %v3696, %v3694
      %v4129 = vpack.c.bf16 %v3699, %v3697
      %v4130 = vpack.c.bf16 %v3700, %v3698
      %v4131 = vpack.c.bf16 %v3703, %v3701
      %v4132 = vpack.c.bf16 %v3704, %v3702
      %v4133 = vpack.c.bf16 %v3707, %v3705
      %v4134 = vpack.c.bf16 %v3708, %v3706
      %v4135 = vpack.c.bf16 %v3711, %v3709
      %v4136 = vpack.c.bf16 %v3712, %v3710
      %v4137 = vpack.c.bf16 %v3715, %v3713
      %v4138 = vpack.c.bf16 %v3716, %v3714
      %v4139 = vpack.c.bf16 %v3719, %v3717
      %v4140 = vpack.c.bf16 %v3720, %v3718
      %v4141 = vpack.c.bf16 %v3723, %v3721
      %v4142 = vpack.c.bf16 %v3724, %v3722
      %v4143 = vpack.c.bf16 %v3727, %v3725
      %v4144 = vpack.c.bf16 %v3728, %v3726
      %v4145 = vpack.c.bf16 %v3731, %v3729
      %v4146 = vpack.c.bf16 %v3732, %v3730
      %v4147 = vpack.c.bf16 %v3735, %v3733
      %v4148 = vpack.c.bf16 %v3736, %v3734
      %v4149 = vpack.c.bf16 %v3739, %v3737
      %v4150 = vpack.c.bf16 %v3740, %v3738
      %v4151 = vpack.c.bf16 %v3743, %v3741
      %v4152 = vpack.c.bf16 %v3744, %v3742
      %v4153 = vpack.c.bf16 %v3747, %v3745
      %v4154 = vpack.c.bf16 %v3748, %v3746
      %v4155 = vpack.c.bf16 %v3751, %v3749
      %v4156 = vpack.c.bf16 %v3752, %v3750
      %v4157 = vpack.c.bf16 %v3755, %v3753
      %v4158 = vpack.c.bf16 %v3756, %v3754
      %v4159 = vpack.c.bf16 %v3759, %v3757
      %v4160 = vpack.c.bf16 %v3760, %v3758
      %v4161 = vpack.c.bf16 %v3763, %v3761
      %v4162 = vpack.c.bf16 %v3764, %v3762
      %v4163 = vpack.c.bf16 %v3767, %v3765
      %v4164 = vpack.c.bf16 %v3768, %v3766
      %v4165 = vpack.c.bf16 %v3771, %v3769
      %v4166 = vpack.c.bf16 %v3772, %v3770
      %v4167 = vpack.c.bf16 %v3775, %v3773
      %v4168 = vpack.c.bf16 %v3776, %v3774
      %v4169 = vpack.c.bf16 %v3779, %v3777
      %v4170 = vpack.c.bf16 %v3780, %v3778
      %v4171 = vpack.c.bf16 %v3783, %v3781
      %v4172 = vpack.c.bf16 %v3784, %v3782
      %v4173 = vpack.c.bf16 %v3787, %v3785
      %v4174 = vpack.c.bf16 %v3788, %v3786
      %v4175 = vpack.c.bf16 %v3791, %v3789
      %v4176 = vpack.c.bf16 %v3792, %v3790
      %v4177 = vpack.c.bf16 %v3795, %v3793
      %v4178 = vpack.c.bf16 %v3796, %v3794
      %v4179 = vpack.c.bf16 %v3799, %v3797
      %v4180 = vpack.c.bf16 %v3800, %v3798
      %v4181 = vpack.c.bf16 %v3803, %v3801
      %v4182 = vpack.c.bf16 %v3804, %v3802
      %v4183 = vpack.c.bf16 %v3807, %v3805
      %v4184 = vpack.c.bf16 %v3808, %v3806
      %v4185 = vpack.c.bf16 %v3811, %v3809
      %v4186 = vpack.c.bf16 %v3812, %v3810
      %v4187 = vpack.c.bf16 %v3815, %v3813
      %v4188 = vpack.c.bf16 %v3816, %v3814
      %v4189 = vpack.c.bf16 %v3819, %v3817
      %v4190 = vpack.c.bf16 %v3820, %v3818
      %v4191 = vpack.c.bf16 %v3823, %v3821
      %v4192 = vpack.c.bf16 %v3824, %v3822
      %v4193 = vpack.c.bf16 %v3827, %v3825
      %v4194 = vpack.c.bf16 %v3828, %v3826
      %v4195 = vpack.c.bf16 %v3831, %v3829
      %v4196 = vpack.c.bf16 %v3832, %v3830
      %v4197 = vpack.c.bf16 %v3835, %v3833
      %v4198 = vpack.c.bf16 %v3836, %v3834
      %v4199 = vpack.c.bf16 %v3839, %v3837
      %v4200 = vpack.c.bf16 %v3840, %v3838
      %v4201 = vpack.c.bf16 %v3843, %v3841
      %v4202 = vpack.c.bf16 %v3844, %v3842
      %v4203 = vpack.c.bf16 %v3847, %v3845
      %v4204 = vpack.c.bf16 %v3848, %v3846
      %v4205 = vpack.c.bf16 %v3851, %v3849
      %v4206 = vpack.c.bf16 %v3852, %v3850
      %v4207 = vpack.c.bf16 %v3855, %v3853
      %v4208 = vpack.c.bf16 %v3856, %v3854
      %v4209 = vpack.c.bf16 %v3859, %v3857
      %v4210 = vpack.c.bf16 %v3860, %v3858
      %v4211 = vpack.c.bf16 %v3863, %v3861
      %v4212 = vpack.c.bf16 %v3864, %v3862
      %v4213 = vpack.c.bf16 %v3867, %v3865
      %v4214 = vpack.c.bf16 %v3868, %v3866
      %v4215 = vpack.c.bf16 %v3871, %v3869
      %v4216 = vpack.c.bf16 %v3872, %v3870
      %v4217 = vpack.c.bf16 %v3875, %v3873
      %v4218 = vpack.c.bf16 %v3876, %v3874
      %v4219 = vpack.c.bf16 %v3879, %v3877
      %v4220 = vpack.c.bf16 %v3880, %v3878
      %v4221 = vpack.c.bf16 %v3883, %v3881
      %v4222 = vpack.c.bf16 %v3884, %v3882
      %v4223 = vpack.c.bf16 %v3887, %v3885
      %v4224 = vpack.c.bf16 %v3888, %v3886
      %v4225 = vpack.c.bf16 %v3891, %v3889
      %v4226 = vpack.c.bf16 %v3892, %v3890
      %v4227 = vpack.c.bf16 %v3895, %v3893
      %v4228 = vpack.c.bf16 %v3896, %v3894
      %v4229 = vpack.c.bf16 %v3899, %v3897
      %v4230 = vpack.c.bf16 %v3900, %v3898
      %v4231 = vpack.c.bf16 %v3903, %v3901
      %v4232 = vpack.c.bf16 %v3904, %v3902
      %v4233 = vpack.c.bf16 %v3907, %v3905
      %v4234 = vpack.c.bf16 %v3908, %v3906
      %v4235 = vpack.c.bf16 %v3911, %v3909
      %v4236 = vpack.c.bf16 %v3912, %v3910
      %v4237 = vpack.c.bf16 %v3915, %v3913
      %v4238 = vpack.c.bf16 %v3916, %v3914
      %v4239 = vpack.c.bf16 %v3919, %v3917
      %v4240 = vpack.c.bf16 %v3920, %v3918
      %v4241 = vpack.c.bf16 %v3923, %v3921
      %v4242 = vpack.c.bf16 %v3924, %v3922
      %v4243 = vpack.c.bf16 %v3927, %v3925
      %v4244 = vpack.c.bf16 %v3928, %v3926
      %v4245 = vpack.c.bf16 %v3931, %v3929
      %v4246 = vpack.c.bf16 %v3932, %v3930
      %v4247 = vpack.c.bf16 %v3935, %v3933
      %v4248 = vpack.c.bf16 %v3936, %v3934
      %v4249 = vpack.c.bf16 %v3939, %v3937
      %v4250 = vpack.c.bf16 %v3940, %v3938
      %v4251 = vpack.c.bf16 %v3943, %v3941
      %v4252 = vpack.c.bf16 %v3944, %v3942
      %v4253 = vpack.c.bf16 %v3947, %v3945
      %v4254 = vpack.c.bf16 %v3948, %v3946
      %v4255 = vpack.c.bf16 %v3951, %v3949
      %v4256 = vpack.c.bf16 %v3952, %v3950
      %v4257 = vpack.c.bf16 %v3955, %v3953
      %v4258 = vpack.c.bf16 %v3956, %v3954
      %v4259 = vpack.c.bf16 %v3959, %v3957
      %v4260 = vpack.c.bf16 %v3960, %v3958
      %v4261 = vpack.c.bf16 %v3963, %v3961
      %v4262 = vpack.c.bf16 %v3964, %v3962
      %v4263 = vpack.c.bf16 %v3967, %v3965
      %v4264 = vpack.c.bf16 %v3968, %v3966
      %v4265 = vpack.c.bf16 %v3971, %v3969
      %v4266 = vpack.c.bf16 %v3972, %v3970
      %v4267 = vpack.c.bf16 %v3975, %v3973
      %v4268 = vpack.c.bf16 %v3976, %v3974
      %v4269 = vpack.c.bf16 %v3979, %v3977
      %v4270 = vpack.c.bf16 %v3980, %v3978
      %v4271 = vpack.c.bf16 %v3983, %v3981
      %v4272 = vpack.c.bf16 %v3984, %v3982
      %v4273 = vpack.c.bf16 %v3987, %v3985
      %v4274 = vpack.c.bf16 %v3988, %v3986
      %v4275 = vpack.c.bf16 %v3991, %v3989
      %v4276 = vpack.c.bf16 %v3992, %v3990
      %v4277 = vpack.c.bf16 %v3995, %v3993
      %v4278 = vpack.c.bf16 %v3996, %v3994
      %v4279 = vpack.c.bf16 %v3999, %v3997
      %v4280 = vpack.c.bf16 %v4000, %v3998
      %v4281 = vpack.c.bf16 %v4003, %v4001
      %v4282 = vpack.c.bf16 %v4004, %v4002
      %v4283 = vpack.c.bf16 %v4007, %v4005
      %v4284 = vpack.c.bf16 %v4008, %v4006
      %v4285 = vpack.c.bf16 %v4011, %v4009
      %v4286 = vpack.c.bf16 %v4012, %v4010
      %v4287 = vpack.c.bf16 %v4015, %v4013
      %v4288 = vpack.c.bf16 %v4016, %v4014
      %v4289 = vpack.c.bf16 %v4019, %v4017
      %v4290 = vpack.c.bf16 %v4020, %v4018
      %v4291 = vpack.c.bf16 %v4023, %v4021
      %v4292 = vpack.c.bf16 %v4024, %v4022
      %v4293 = vpack.c.bf16 %v4027, %v4025
      %v4294 = vpack.c.bf16 %v4028, %v4026
      %v4295 = vpack.c.bf16 %v4031, %v4029
      %v4296 = vpack.c.bf16 %v4032, %v4030
      %v4297 = vpack.c.bf16 %v4035, %v4033
      %v4298 = vpack.c.bf16 %v4036, %v4034
      %v4299 = vpack.c.bf16 %v4039, %v4037
      %v4300 = vpack.c.bf16 %v4040, %v4038
      %v4301 = vpack.c.bf16 %v4043, %v4041
      %v4302 = vpack.c.bf16 %v4044, %v4042
      %v4303 = vpack.c.bf16 %v4047, %v4045
      %v4304 = vpack.c.bf16 %v4048, %v4046
      %v4305 = vld [vmem:[%s1] sm:$0xf]
      %v4306 = vld [vmem:[%s1 + $0x4] sm:$0xf]
      %v4307 = vld [vmem:[%s1 + $0x8] sm:$0xf]
      %v4308 = vld [vmem:[%s1 + $0xc] sm:$0xf]
      %v4309 = vld [vmem:[%s1 + $0x10] sm:$0xf]
      %v4310 = vld [vmem:[%s1 + $0x14] sm:$0xf]
      %v4311 = vld [vmem:[%s1 + $0x18] sm:$0xf]
      %v4312 = vld [vmem:[%s1 + $0x1c] sm:$0xf]
      %v4313 = vld [vmem:[%s1 + $0x20] sm:$0xf]
      %v4314 = vld [vmem:[%s1 + $0x24] sm:$0xf]
      %v4315 = vld [vmem:[%s1 + $0x28] sm:$0xf]
      %v4316 = vld [vmem:[%s1 + $0x2c] sm:$0xf]
      %v4317 = vld [vmem:[%s1 + $0x30] sm:$0xf]
      %v4318 = vld [vmem:[%s1 + $0x34] sm:$0xf]
      %v4319 = vld [vmem:[%s1 + $0x38] sm:$0xf]
      %v4320 = vld [vmem:[%s1 + $0x3c] sm:$0xf]
      %v4321 = vld [vmem:[%s1 + $0x40] sm:$0xf]
      %v4322 = vld [vmem:[%s1 + $0x44] sm:$0xf]
      %v4323 = vld [vmem:[%s1 + $0x48] sm:$0xf]
      %v4324 = vld [vmem:[%s1 + $0x4c] sm:$0xf]
      %v4325 = vld [vmem:[%s1 + $0x50] sm:$0xf]
      %v4326 = vld [vmem:[%s1 + $0x54] sm:$0xf]
      %v4327 = vld [vmem:[%s1 + $0x58] sm:$0xf]
      %v4328 = vld [vmem:[%s1 + $0x5c] sm:$0xf]
      %v4329 = vld [vmem:[%s1 + $0x60] sm:$0xf]
      %v4330 = vld [vmem:[%s1 + $0x64] sm:$0xf]
      %v4331 = vld [vmem:[%s1 + $0x68] sm:$0xf]
      %v4332 = vld [vmem:[%s1 + $0x6c] sm:$0xf]
      %v4333 = vld [vmem:[%s1 + $0x70] sm:$0xf]
      %v4334 = vld [vmem:[%s1 + $0x74] sm:$0xf]
      %v4335 = vld [vmem:[%s1 + $0x78] sm:$0xf]
      %v4336 = vld [vmem:[%s1 + $0x7c] sm:$0xf]
      %v4369 = vunpack.c.l.b16 %v4305
      %v4370 = vunpack.c.l.b16 %v4306
      %v4371 = vunpack.c.l.b16 %v4307
      %v4372 = vunpack.c.l.b16 %v4308
      %v4373 = vunpack.c.l.b16 %v4309
      %v4374 = vunpack.c.l.b16 %v4310
      %v4375 = vunpack.c.l.b16 %v4311
      %v4376 = vunpack.c.l.b16 %v4312
      %v4377 = vunpack.c.l.b16 %v4313
      %v4378 = vunpack.c.l.b16 %v4314
      %v4379 = vunpack.c.l.b16 %v4315
      %v4380 = vunpack.c.l.b16 %v4316
      %v4381 = vunpack.c.l.b16 %v4317
      %v4382 = vunpack.c.l.b16 %v4318
      %v4383 = vunpack.c.l.b16 %v4319
      %v4384 = vunpack.c.l.b16 %v4320
      %v4385 = vunpack.c.l.b16 %v4321
      %v4386 = vunpack.c.l.b16 %v4322
      %v4387 = vunpack.c.l.b16 %v4323
      %v4388 = vunpack.c.l.b16 %v4324
      %v4389 = vunpack.c.l.b16 %v4325
      %v4390 = vunpack.c.l.b16 %v4326
      %v4391 = vunpack.c.l.b16 %v4327
      %v4392 = vunpack.c.l.b16 %v4328
      %v4393 = vunpack.c.l.b16 %v4329
      %v4394 = vunpack.c.l.b16 %v4330
      %v4395 = vunpack.c.l.b16 %v4331
      %v4396 = vunpack.c.l.b16 %v4332
      %v4397 = vunpack.c.l.b16 %v4333
      %v4398 = vunpack.c.l.b16 %v4334
      %v4399 = vunpack.c.l.b16 %v4335
      %v4400 = vunpack.c.l.b16 %v4336
      %v4401 = vpack.c.b16 %v4370, %v4369
      %v4402 = vpack.c.b16 %v4372, %v4371
      %v4403 = vpack.c.b16 %v4374, %v4373
      %v4404 = vpack.c.b16 %v4376, %v4375
      %v4405 = vpack.c.b16 %v4378, %v4377
      %v4406 = vpack.c.b16 %v4380, %v4379
      %v4407 = vpack.c.b16 %v4382, %v4381
      %v4408 = vpack.c.b16 %v4384, %v4383
      %v4409 = vpack.c.b16 %v4386, %v4385
      %v4410 = vpack.c.b16 %v4388, %v4387
      %v4411 = vpack.c.b16 %v4390, %v4389
      %v4412 = vpack.c.b16 %v4392, %v4391
      %v4413 = vpack.c.b16 %v4394, %v4393
      %v4414 = vpack.c.b16 %v4396, %v4395
      %v4415 = vpack.c.b16 %v4398, %v4397
      %v4416 = vpack.c.b16 %v4400, %v4399
      %4433 = vmatprep.subr.bf16.mxu0 0
      %4434 = vmatpush1.bf16.msra.mxu0 %v4401
      %4435 = vmatprep.subr.bf16.mxu0 0
      %4436 = vmatpush1.bf16.msra.mxu0 %v4402
      %4437 = vmatprep.subr.bf16.mxu0 0
      %4438 = vmatpush1.bf16.msra.mxu0 %v4403
      %4439 = vmatprep.subr.bf16.mxu0 0
      %4440 = vmatpush1.bf16.msra.mxu0 %v4404
      %4441 = vmatprep.subr.bf16.mxu0 0
      %4442 = vmatpush1.bf16.msra.mxu0 %v4405
      %4443 = vmatprep.subr.bf16.mxu0 0
      %4444 = vmatpush1.bf16.msra.mxu0 %v4406
      %4445 = vmatprep.subr.bf16.mxu0 0
      %4446 = vmatpush1.bf16.msra.mxu0 %v4407
      %4447 = vmatprep.subr.bf16.mxu0 0
      %4448 = vmatpush1.bf16.msra.mxu0 %v4408
      %4449 = vmatprep.subr.bf16.mxu0 0
      %4450 = vmatpush1.bf16.msra.mxu0 %v4409
      %4451 = vmatprep.subr.bf16.mxu0 0
      %4452 = vmatpush1.bf16.msra.mxu0 %v4410
      %4453 = vmatprep.subr.bf16.mxu0 0
      %4454 = vmatpush1.bf16.msra.mxu0 %v4411
      %4455 = vmatprep.subr.bf16.mxu0 0
      %4456 = vmatpush1.bf16.msra.mxu0 %v4412
      %4457 = vmatprep.subr.bf16.mxu0 0
      %4458 = vmatpush1.bf16.msra.mxu0 %v4413
      %4459 = vmatprep.subr.bf16.mxu0 0
      %4460 = vmatpush1.bf16.msra.mxu0 %v4414
      %4461 = vmatprep.subr.bf16.mxu0 0
      %4462 = vmatpush1.bf16.msra.mxu0 %v4415
      %4463 = vmatprep.subr.bf16.mxu0 0
      %4464 = vmatpush1.bf16.msra.mxu0 %v4416
      %4465 = vmatprep.mubr.bf16.mxu0 %v4050
      %4466 = vmatmul.mubr.bf16.gmra.mrb[0].mxu0 %v4049
      %v4467 = vpop.f32.mrb[0].mxu0
      %v4468 = vadd.f32 0.0, %v4467
      %v4469 = vpop.f32.mrb[0].mxu0
      %v4470 = vpop.f32.mrb[0].mxu0
      %v4471 = vadd.f32 0.0, %v4470
      %v4472 = vpop.f32.mrb[0].mxu0
      %4473 = vmatprep.mubr.bf16.mxu0 %v4052
      %4474 = vmatmul.mubr.bf16.gmra.mrb[0].mxu0 %v4051
      %v4475 = vpop.f32.mrb[0].mxu0
      %v4476 = vadd.f32 0.0, %v4475
      %v4477 = vpop.f32.mrb[0].mxu0
      %v4478 = vpop.f32.mrb[0].mxu0
      %v4479 = vadd.f32 0.0, %v4478
      %v4480 = vpop.f32.mrb[0].mxu0
      %4481 = vmatprep.mubr.bf16.mxu0 %v4054
      %4482 = vmatmul.mubr.bf16.gmra.mrb[0].mxu0 %v4053
      %v4483 = vpop.f32.mrb[0].mxu0
      %v4484 = vadd.f32 0.0, %v4483
      %v4485 = vpop.f32.mrb[0].mxu0
      %v4486 = vpop.f32.mrb[0].mxu0
      %v4487 = vadd.f32 0.0, %v4486
      %v4488 = vpop.f32.mrb[0].mxu0
      %4489 = vmatprep.mubr.bf16.mxu0 %v4056
      %4490 = vmatmul.mubr.bf16.gmra.mrb[0].mxu0 %v4055
      %v4491 = vpop.f32.mrb[0].mxu0
      %v4492 = vadd.f32 0.0, %v4491
      %v4493 = vpop.f32.mrb[0].mxu0
      %v4494 = vpop.f32.mrb[0].mxu0
      %v4495 = vadd.f32 0.0, %v4494
      %v4496 = vpop.f32.mrb[0].mxu0
      %4497 = vmatprep.mubr.bf16.mxu0 %v4058
      %4498 = vmatmul.mubr.bf16.gmra.mrb[0].mxu0 %v4057
      %v4499 = vpop.f32.mrb[0].mxu0
      %v4500 = vadd.f32 0.0, %v4499
      %v4501 = vpop.f32.mrb[0].mxu0
      %v4502 = vpop.f32.mrb[0].mxu0
      %v4503 = vadd.f32 0.0, %v4502
      %v4504 = vpop.f32.mrb[0].mxu0
      %4505 = vmatprep.mubr.bf16.mxu0 %v4060
      %4506 = vmatmul.mubr.bf16.gmra.mrb[0].mxu0 %v4059
      %v4507 = vpop.f32.mrb[0].mxu0
      %v4508 = vadd.f32 0.0, %v4507
      %v4509 = vpop.f32.mrb[0].mxu0
      %v4510 = vpop.f32.mrb[0].mxu0
      %v4511 = vadd.f32 0.0, %v4510
      %v4512 = vpop.f32.mrb[0].mxu0
      %4513 = vmatprep.mubr.bf16.mxu0 %v4062
      %4514 = vmatmul.mubr.bf16.gmra.mrb[0].mxu0 %v4061
      %v4515 = vpop.f32.mrb[0].mxu0
      %v4516 = vadd.f32 0.0, %v4515
      %v4517 = vpop.f32.mrb[0].mxu0
      %v4518 = vpop.f32.mrb[0].mxu0
      %v4519 = vadd.f32 0.0, %v4518
      %v4520 = vpop.f32.mrb[0].mxu0
      %4521 = vmatprep.mubr.bf16.mxu0 %v4064
      %4522 = vmatmul.mubr.bf16.gmra.mrb[0].mxu0 %v4063
      %v4523 = vpop.f32.mrb[0].mxu0
      %v4524 = vadd.f32 0.0, %v4523
      %v4525 = vpop.f32.mrb[0].mxu0
      %v4526 = vpop.f32.mrb[0].mxu0
      %v4527 = vadd.f32 0.0, %v4526
      %v4528 = vpop.f32.mrb[0].mxu0
      %4529 = vmatprep.mubr.bf16.mxu0 %v4066
      %4530 = vmatmul.mubr.bf16.gmra.mrb[0].mxu0 %v4065
      %v4531 = vpop.f32.mrb[0].mxu0
      %v4532 = vadd.f32 0.0, %v4531
      %v4533 = vpop.f32.mrb[0].mxu0
      %v4534 = vpop.f32.mrb[0].mxu0
      %v4535 = vadd.f32 0.0, %v4534
      %v4536 = vpop.f32.mrb[0].mxu0
      %4537 = vmatprep.mubr.bf16.mxu0 %v4068
      %4538 = vmatmul.mubr.bf16.gmra.mrb[0].mxu0 %v4067
      %v4539 = vpop.f32.mrb[0].mxu0
      %v4540 = vadd.f32 0.0, %v4539
      %v4541 = vpop.f32.mrb[0].mxu0
      %v4542 = vpop.f32.mrb[0].mxu0
      %v4543 = vadd.f32 0.0, %v4542
      %v4544 = vpop.f32.mrb[0].mxu0
      %4545 = vmatprep.mubr.bf16.mxu0 %v4070
      %4546 = vmatmul.mubr.bf16.gmra.mrb[0].mxu0 %v4069
      %v4547 = vpop.f32.mrb[0].mxu0
      %v4548 = vadd.f32 0.0, %v4547
      %v4549 = vpop.f32.mrb[0].mxu0
      %v4550 = vpop.f32.mrb[0].mxu0
      %v4551 = vadd.f32 0.0, %v4550
      %v4552 = vpop.f32.mrb[0].mxu0
      %4553 = vmatprep.mubr.bf16.mxu0 %v4072
      %4554 = vmatmul.mubr.bf16.gmra.mrb[0].mxu0 %v4071
      %v4555 = vpop.f32.mrb[0].mxu0
      %v4556 = vadd.f32 0.0, %v4555
      %v4557 = vpop.f32.mrb[0].mxu0
      %v4558 = vpop.f32.mrb[0].mxu0
      %v4559 = vadd.f32 0.0, %v4558
      %v4560 = vpop.f32.mrb[0].mxu0
      %4561 = vmatprep.mubr.bf16.mxu0 %v4074
      %4562 = vmatmul.mubr.bf16.gmra.mrb[0].mxu0 %v4073
      %v4563 = vpop.f32.mrb[0].mxu0
      %v4564 = vadd.f32 0.0, %v4563
      %v4565 = vpop.f32.mrb[0].mxu0
      %v4566 = vpop.f32.mrb[0].mxu0
      %v4567 = vadd.f32 0.0, %v4566
      %v4568 = vpop.f32.mrb[0].mxu0
      %4569 = vmatprep.mubr.bf16.mxu0 %v4076
      %4570 = vmatmul.mubr.bf16.gmra.mrb[0].mxu0 %v4075
      %v4571 = vpop.f32.mrb[0].mxu0
      %v4572 = vadd.f32 0.0, %v4571
      %v4573 = vpop.f32.mrb[0].mxu0
      %v4574 = vpop.f32.mrb[0].mxu0
      %v4575 = vadd.f32 0.0, %v4574
      %v4576 = vpop.f32.mrb[0].mxu0
      %4577 = vmatprep.mubr.bf16.mxu0 %v4078
      %4578 = vmatmul.mubr.bf16.gmra.mrb[0].mxu0 %v4077
      %v4579 = vpop.f32.mrb[0].mxu0
      %v4580 = vadd.f32 0.0, %v4579
      %v4581 = vpop.f32.mrb[0].mxu0
      %v4582 = vpop.f32.mrb[0].mxu0
      %v4583 = vadd.f32 0.0, %v4582
      %v4584 = vpop.f32.mrb[0].mxu0
      %4585 = vmatprep.mubr.bf16.mxu0 %v4080
      %4586 = vmatmul.mubr.bf16.gmra.mrb[0].mxu0 %v4079
      %v4587 = vpop.f32.mrb[0].mxu0
      %v4588 = vadd.f32 0.0, %v4587
      %v4589 = vpop.f32.mrb[0].mxu0
      %v4590 = vpop.f32.mrb[0].mxu0
      %v4591 = vadd.f32 0.0, %v4590
      %v4592 = vpop.f32.mrb[0].mxu0
      %4593 = vmatprep.mubr.bf16.mxu0 %v4082
      %4594 = vmatmul.mubr.bf16.gmra.mrb[0].mxu0 %v4081
      %v4595 = vpop.f32.mrb[0].mxu0
      %v4596 = vadd.f32 0.0, %v4595
      %v4597 = vpop.f32.mrb[0].mxu0
      %v4598 = vpop.f32.mrb[0].mxu0
      %v4599 = vadd.f32 0.0, %v4598
      %v4600 = vpop.f32.mrb[0].mxu0
      %4601 = vmatprep.mubr.bf16.mxu0 %v4084
      %4602 = vmatmul.mubr.bf16.gmra.mrb[0].mxu0 %v4083
      %v4603 = vpop.f32.mrb[0].mxu0
      %v4604 = vadd.f32 0.0, %v4603
      %v4605 = vpop.f32.mrb[0].mxu0
      %v4606 = vpop.f32.mrb[0].mxu0
      %v4607 = vadd.f32 0.0, %v4606
      %v4608 = vpop.f32.mrb[0].mxu0
      %4609 = vmatprep.mubr.bf16.mxu0 %v4086
      %4610 = vmatmul.mubr.bf16.gmra.mrb[0].mxu0 %v4085
      %v4611 = vpop.f32.mrb[0].mxu0
      %v4612 = vadd.f32 0.0, %v4611
      %v4613 = vpop.f32.mrb[0].mxu0
      %v4614 = vpop.f32.mrb[0].mxu0
      %v4615 = vadd.f32 0.0, %v4614
      %v4616 = vpop.f32.mrb[0].mxu0
      %4617 = vmatprep.mubr.bf16.mxu0 %v4088
      %4618 = vmatmul.mubr.bf16.gmra.mrb[0].mxu0 %v4087
      %v4619 = vpop.f32.mrb[0].mxu0
      %v4620 = vadd.f32 0.0, %v4619
      %v4621 = vpop.f32.mrb[0].mxu0
      %v4622 = vpop.f32.mrb[0].mxu0
      %v4623 = vadd.f32 0.0, %v4622
      %v4624 = vpop.f32.mrb[0].mxu0
      %4625 = vmatprep.mubr.bf16.mxu0 %v4090
      %4626 = vmatmul.mubr.bf16.gmra.mrb[0].mxu0 %v4089
      %v4627 = vpop.f32.mrb[0].mxu0
      %v4628 = vadd.f32 0.0, %v4627
      %v4629 = vpop.f32.mrb[0].mxu0
      %v4630 = vpop.f32.mrb[0].mxu0
      %v4631 = vadd.f32 0.0, %v4630
      %v4632 = vpop.f32.mrb[0].mxu0
      %4633 = vmatprep.mubr.bf16.mxu0 %v4092
      %4634 = vmatmul.mubr.bf16.gmra.mrb[0].mxu0 %v4091
      %v4635 = vpop.f32.mrb[0].mxu0
      %v4636 = vadd.f32 0.0, %v4635
      %v4637 = vpop.f32.mrb[0].mxu0
      %v4638 = vpop.f32.mrb[0].mxu0
      %v4639 = vadd.f32 0.0, %v4638
      %v4640 = vpop.f32.mrb[0].mxu0
      %4641 = vmatprep.mubr.bf16.mxu0 %v4094
      %4642 = vmatmul.mubr.bf16.gmra.mrb[0].mxu0 %v4093
      %v4643 = vpop.f32.mrb[0].mxu0
      %v4644 = vadd.f32 0.0, %v4643
      %v4645 = vpop.f32.mrb[0].mxu0
      %v4646 = vpop.f32.mrb[0].mxu0
      %v4647 = vadd.f32 0.0, %v4646
      %v4648 = vpop.f32.mrb[0].mxu0
      %4649 = vmatprep.mubr.bf16.mxu0 %v4096
      %4650 = vmatmul.mubr.bf16.gmra.mrb[0].mxu0 %v4095
      %v4651 = vpop.f32.mrb[0].mxu0
      %v4652 = vadd.f32 0.0, %v4651
      %v4653 = vpop.f32.mrb[0].mxu0
      %v4654 = vpop.f32.mrb[0].mxu0
      %v4655 = vadd.f32 0.0, %v4654
      %v4656 = vpop.f32.mrb[0].mxu0
      %4657 = vmatprep.mubr.bf16.mxu0 %v4098
      %4658 = vmatmul.mubr.bf16.gmra.mrb[0].mxu0 %v4097
      %v4659 = vpop.f32.mrb[0].mxu0
      %v4660 = vadd.f32 0.0, %v4659
      %v4661 = vpop.f32.mrb[0].mxu0
      %v4662 = vpop.f32.mrb[0].mxu0
      %v4663 = vadd.f32 0.0, %v4662
      %v4664 = vpop.f32.mrb[0].mxu0
      %4665 = vmatprep.mubr.bf16.mxu0 %v4100
      %4666 = vmatmul.mubr.bf16.gmra.mrb[0].mxu0 %v4099
      %v4667 = vpop.f32.mrb[0].mxu0
      %v4668 = vadd.f32 0.0, %v4667
      %v4669 = vpop.f32.mrb[0].mxu0
      %v4670 = vpop.f32.mrb[0].mxu0
      %v4671 = vadd.f32 0.0, %v4670
      %v4672 = vpop.f32.mrb[0].mxu0
      %4673 = vmatprep.mubr.bf16.mxu0 %v4102
      %4674 = vmatmul.mubr.bf16.gmra.mrb[0].mxu0 %v4101
      %v4675 = vpop.f32.mrb[0].mxu0
      %v4676 = vadd.f32 0.0, %v4675
      %v4677 = vpop.f32.mrb[0].mxu0
      %v4678 = vpop.f32.mrb[0].mxu0
      %v4679 = vadd.f32 0.0, %v4678
      %v4680 = vpop.f32.mrb[0].mxu0
      %4681 = vmatprep.mubr.bf16.mxu0 %v4104
      %4682 = vmatmul.mubr.bf16.gmra.mrb[0].mxu0 %v4103
      %v4683 = vpop.f32.mrb[0].mxu0
      %v4684 = vadd.f32 0.0, %v4683
      %v4685 = vpop.f32.mrb[0].mxu0
      %v4686 = vpop.f32.mrb[0].mxu0
      %v4687 = vadd.f32 0.0, %v4686
      %v4688 = vpop.f32.mrb[0].mxu0
      %4689 = vmatprep.mubr.bf16.mxu0 %v4106
      %4690 = vmatmul.mubr.bf16.gmra.mrb[0].mxu0 %v4105
      %v4691 = vpop.f32.mrb[0].mxu0
      %v4692 = vadd.f32 0.0, %v4691
      %v4693 = vpop.f32.mrb[0].mxu0
      %v4694 = vpop.f32.mrb[0].mxu0
      %v4695 = vadd.f32 0.0, %v4694
      %v4696 = vpop.f32.mrb[0].mxu0
      %4697 = vmatprep.mubr.bf16.mxu0 %v4108
      %4698 = vmatmul.mubr.bf16.gmra.mrb[0].mxu0 %v4107
      %v4699 = vpop.f32.mrb[0].mxu0
      %v4700 = vadd.f32 0.0, %v4699
      %v4701 = vpop.f32.mrb[0].mxu0
      %v4702 = vpop.f32.mrb[0].mxu0
      %v4703 = vadd.f32 0.0, %v4702
      %v4704 = vpop.f32.mrb[0].mxu0
      %4705 = vmatprep.mubr.bf16.mxu0 %v4110
      %4706 = vmatmul.mubr.bf16.gmra.mrb[0].mxu0 %v4109
      %v4707 = vpop.f32.mrb[0].mxu0
      %v4708 = vadd.f32 0.0, %v4707
      %v4709 = vpop.f32.mrb[0].mxu0
      %v4710 = vpop.f32.mrb[0].mxu0
      %v4711 = vadd.f32 0.0, %v4710
      %v4712 = vpop.f32.mrb[0].mxu0
      %4713 = vmatprep.mubr.bf16.mxu0 %v4112
      %4714 = vmatmul.mubr.bf16.gmra.mrb[0].mxu0 %v4111
      %v4715 = vpop.f32.mrb[0].mxu0
      %v4716 = vadd.f32 0.0, %v4715
      %v4717 = vpop.f32.mrb[0].mxu0
      %v4718 = vpop.f32.mrb[0].mxu0
      %v4719 = vadd.f32 0.0, %v4718
      %v4720 = vpop.f32.mrb[0].mxu0
      %4721 = vmatprep.mubr.bf16.mxu0 %v4114
      %4722 = vmatmul.mubr.bf16.gmra.mrb[0].mxu0 %v4113
      %v4723 = vpop.f32.mrb[0].mxu0
      %v4724 = vadd.f32 0.0, %v4723
      %v4725 = vpop.f32.mrb[0].mxu0
      %v4726 = vpop.f32.mrb[0].mxu0
      %v4727 = vadd.f32 0.0, %v4726
      %v4728 = vpop.f32.mrb[0].mxu0
      %4729 = vmatprep.mubr.bf16.mxu0 %v4116
      %4730 = vmatmul.mubr.bf16.gmra.mrb[0].mxu0 %v4115
      %v4731 = vpop.f32.mrb[0].mxu0
      %v4732 = vadd.f32 0.0, %v4731
      %v4733 = vpop.f32.mrb[0].mxu0
      %v4734 = vpop.f32.mrb[0].mxu0
      %v4735 = vadd.f32 0.0, %v4734
      %v4736 = vpop.f32.mrb[0].mxu0
      %4737 = vmatprep.mubr.bf16.mxu0 %v4118
      %4738 = vmatmul.mubr.bf16.gmra.mrb[0].mxu0 %v4117
      %v4739 = vpop.f32.mrb[0].mxu0
      %v4740 = vadd.f32 0.0, %v4739
      %v4741 = vpop.f32.mrb[0].mxu0
      %v4742 = vpop.f32.mrb[0].mxu0
      %v4743 = vadd.f32 0.0, %v4742
      %v4744 = vpop.f32.mrb[0].mxu0
      %4745 = vmatprep.mubr.bf16.mxu0 %v4120
      %4746 = vmatmul.mubr.bf16.gmra.mrb[0].mxu0 %v4119
      %v4747 = vpop.f32.mrb[0].mxu0
      %v4748 = vadd.f32 0.0, %v4747
      %v4749 = vpop.f32.mrb[0].mxu0
      %v4750 = vpop.f32.mrb[0].mxu0
      %v4751 = vadd.f32 0.0, %v4750
      %v4752 = vpop.f32.mrb[0].mxu0
      %4753 = vmatprep.mubr.bf16.mxu0 %v4122
      %4754 = vmatmul.mubr.bf16.gmra.mrb[0].mxu0 %v4121
      %v4755 = vpop.f32.mrb[0].mxu0
      %v4756 = vadd.f32 0.0, %v4755
      %v4757 = vpop.f32.mrb[0].mxu0
      %v4758 = vpop.f32.mrb[0].mxu0
      %v4759 = vadd.f32 0.0, %v4758
      %v4760 = vpop.f32.mrb[0].mxu0
      %4761 = vmatprep.mubr.bf16.mxu0 %v4124
      %4762 = vmatmul.mubr.bf16.gmra.mrb[0].mxu0 %v4123
      %v4763 = vpop.f32.mrb[0].mxu0
      %v4764 = vadd.f32 0.0, %v4763
      %v4765 = vpop.f32.mrb[0].mxu0
      %v4766 = vpop.f32.mrb[0].mxu0
      %v4767 = vadd.f32 0.0, %v4766
      %v4768 = vpop.f32.mrb[0].mxu0
      %4769 = vmatprep.mubr.bf16.mxu0 %v4126
      %4770 = vmatmul.mubr.bf16.gmra.mrb[0].mxu0 %v4125
      %v4771 = vpop.f32.mrb[0].mxu0
      %v4772 = vadd.f32 0.0, %v4771
      %v4773 = vpop.f32.mrb[0].mxu0
      %v4774 = vpop.f32.mrb[0].mxu0
      %v4775 = vadd.f32 0.0, %v4774
      %v4776 = vpop.f32.mrb[0].mxu0
      %4777 = vmatprep.mubr.bf16.mxu0 %v4128
      %4778 = vmatmul.mubr.bf16.gmra.mrb[0].mxu0 %v4127
      %v4779 = vpop.f32.mrb[0].mxu0
      %v4780 = vadd.f32 0.0, %v4779
      %v4781 = vpop.f32.mrb[0].mxu0
      %v4782 = vpop.f32.mrb[0].mxu0
      %v4783 = vadd.f32 0.0, %v4782
      %v4784 = vpop.f32.mrb[0].mxu0
      %4785 = vmatprep.mubr.bf16.mxu0 %v4130
      %4786 = vmatmul.mubr.bf16.gmra.mrb[0].mxu0 %v4129
      %v4787 = vpop.f32.mrb[0].mxu0
      %v4788 = vadd.f32 0.0, %v4787
      %v4789 = vpop.f32.mrb[0].mxu0
      %v4790 = vpop.f32.mrb[0].mxu0
      %v4791 = vadd.f32 0.0, %v4790
      %v4792 = vpop.f32.mrb[0].mxu0
      %4793 = vmatprep.mubr.bf16.mxu0 %v4132
      %4794 = vmatmul.mubr.bf16.gmra.mrb[0].mxu0 %v4131
      %v4795 = vpop.f32.mrb[0].mxu0
      %v4796 = vadd.f32 0.0, %v4795
      %v4797 = vpop.f32.mrb[0].mxu0
      %v4798 = vpop.f32.mrb[0].mxu0
      %v4799 = vadd.f32 0.0, %v4798
      %v4800 = vpop.f32.mrb[0].mxu0
      %4801 = vmatprep.mubr.bf16.mxu0 %v4134
      %4802 = vmatmul.mubr.bf16.gmra.mrb[0].mxu0 %v4133
      %v4803 = vpop.f32.mrb[0].mxu0
      %v4804 = vadd.f32 0.0, %v4803
      %v4805 = vpop.f32.mrb[0].mxu0
      %v4806 = vpop.f32.mrb[0].mxu0
      %v4807 = vadd.f32 0.0, %v4806
      %v4808 = vpop.f32.mrb[0].mxu0
      %4809 = vmatprep.mubr.bf16.mxu0 %v4136
      %4810 = vmatmul.mubr.bf16.gmra.mrb[0].mxu0 %v4135
      %v4811 = vpop.f32.mrb[0].mxu0
      %v4812 = vadd.f32 0.0, %v4811
      %v4813 = vpop.f32.mrb[0].mxu0
      %v4814 = vpop.f32.mrb[0].mxu0
      %v4815 = vadd.f32 0.0, %v4814
      %v4816 = vpop.f32.mrb[0].mxu0
      %4817 = vmatprep.mubr.bf16.mxu0 %v4138
      %4818 = vmatmul.mubr.bf16.gmra.mrb[0].mxu0 %v4137
      %v4819 = vpop.f32.mrb[0].mxu0
      %v4820 = vadd.f32 0.0, %v4819
      %v4821 = vpop.f32.mrb[0].mxu0
      %v4822 = vpop.f32.mrb[0].mxu0
      %v4823 = vadd.f32 0.0, %v4822
      %v4824 = vpop.f32.mrb[0].mxu0
      %4825 = vmatprep.mubr.bf16.mxu0 %v4140
      %4826 = vmatmul.mubr.bf16.gmra.mrb[0].mxu0 %v4139
      %v4827 = vpop.f32.mrb[0].mxu0
      %v4828 = vadd.f32 0.0, %v4827
      %v4829 = vpop.f32.mrb[0].mxu0
      %v4830 = vpop.f32.mrb[0].mxu0
      %v4831 = vadd.f32 0.0, %v4830
      %v4832 = vpop.f32.mrb[0].mxu0
      %4833 = vmatprep.mubr.bf16.mxu0 %v4142
      %4834 = vmatmul.mubr.bf16.gmra.mrb[0].mxu0 %v4141
      %v4835 = vpop.f32.mrb[0].mxu0
      %v4836 = vadd.f32 0.0, %v4835
      %v4837 = vpop.f32.mrb[0].mxu0
      %v4838 = vpop.f32.mrb[0].mxu0
      %v4839 = vadd.f32 0.0, %v4838
      %v4840 = vpop.f32.mrb[0].mxu0
      %4841 = vmatprep.mubr.bf16.mxu0 %v4144
      %4842 = vmatmul.mubr.bf16.gmra.mrb[0].mxu0 %v4143
      %v4843 = vpop.f32.mrb[0].mxu0
      %v4844 = vadd.f32 0.0, %v4843
      %v4845 = vpop.f32.mrb[0].mxu0
      %v4846 = vpop.f32.mrb[0].mxu0
      %v4847 = vadd.f32 0.0, %v4846
      %v4848 = vpop.f32.mrb[0].mxu0
      %4849 = vmatprep.mubr.bf16.mxu0 %v4146
      %4850 = vmatmul.mubr.bf16.gmra.mrb[0].mxu0 %v4145
      %v4851 = vpop.f32.mrb[0].mxu0
      %v4852 = vadd.f32 0.0, %v4851
      %v4853 = vpop.f32.mrb[0].mxu0
      %v4854 = vpop.f32.mrb[0].mxu0
      %v4855 = vadd.f32 0.0, %v4854
      %v4856 = vpop.f32.mrb[0].mxu0
      %4857 = vmatprep.mubr.bf16.mxu0 %v4148
      %4858 = vmatmul.mubr.bf16.gmra.mrb[0].mxu0 %v4147
      %v4859 = vpop.f32.mrb[0].mxu0
      %v4860 = vadd.f32 0.0, %v4859
      %v4861 = vpop.f32.mrb[0].mxu0
      %v4862 = vpop.f32.mrb[0].mxu0
      %v4863 = vadd.f32 0.0, %v4862
      %v4864 = vpop.f32.mrb[0].mxu0
      %4865 = vmatprep.mubr.bf16.mxu0 %v4150
      %4866 = vmatmul.mubr.bf16.gmra.mrb[0].mxu0 %v4149
      %v4867 = vpop.f32.mrb[0].mxu0
      %v4868 = vadd.f32 0.0, %v4867
      %v4869 = vpop.f32.mrb[0].mxu0
      %v4870 = vpop.f32.mrb[0].mxu0
      %v4871 = vadd.f32 0.0, %v4870
      %v4872 = vpop.f32.mrb[0].mxu0
      %4873 = vmatprep.mubr.bf16.mxu0 %v4152
      %4874 = vmatmul.mubr.bf16.gmra.mrb[0].mxu0 %v4151
      %v4875 = vpop.f32.mrb[0].mxu0
      %v4876 = vadd.f32 0.0, %v4875
      %v4877 = vpop.f32.mrb[0].mxu0
      %v4878 = vpop.f32.mrb[0].mxu0
      %v4879 = vadd.f32 0.0, %v4878
      %v4880 = vpop.f32.mrb[0].mxu0
      %4881 = vmatprep.mubr.bf16.mxu0 %v4154
      %4882 = vmatmul.mubr.bf16.gmra.mrb[0].mxu0 %v4153
      %v4883 = vpop.f32.mrb[0].mxu0
      %v4884 = vadd.f32 0.0, %v4883
      %v4885 = vpop.f32.mrb[0].mxu0
      %v4886 = vpop.f32.mrb[0].mxu0
      %v4887 = vadd.f32 0.0, %v4886
      %v4888 = vpop.f32.mrb[0].mxu0
      %4889 = vmatprep.mubr.bf16.mxu0 %v4156
      %4890 = vmatmul.mubr.bf16.gmra.mrb[0].mxu0 %v4155
      %v4891 = vpop.f32.mrb[0].mxu0
      %v4892 = vadd.f32 0.0, %v4891
      %v4893 = vpop.f32.mrb[0].mxu0
      %v4894 = vpop.f32.mrb[0].mxu0
      %v4895 = vadd.f32 0.0, %v4894
      %v4896 = vpop.f32.mrb[0].mxu0
      %4897 = vmatprep.mubr.bf16.mxu0 %v4158
      %4898 = vmatmul.mubr.bf16.gmra.mrb[0].mxu0 %v4157
      %v4899 = vpop.f32.mrb[0].mxu0
      %v4900 = vadd.f32 0.0, %v4899
      %v4901 = vpop.f32.mrb[0].mxu0
      %v4902 = vpop.f32.mrb[0].mxu0
      %v4903 = vadd.f32 0.0, %v4902
      %v4904 = vpop.f32.mrb[0].mxu0
      %4905 = vmatprep.mubr.bf16.mxu0 %v4160
      %4906 = vmatmul.mubr.bf16.gmra.mrb[0].mxu0 %v4159
      %v4907 = vpop.f32.mrb[0].mxu0
      %v4908 = vadd.f32 0.0, %v4907
      %v4909 = vpop.f32.mrb[0].mxu0
      %v4910 = vpop.f32.mrb[0].mxu0
      %v4911 = vadd.f32 0.0, %v4910
      %v4912 = vpop.f32.mrb[0].mxu0
      %4913 = vmatprep.mubr.bf16.mxu0 %v4162
      %4914 = vmatmul.mubr.bf16.gmra.mrb[0].mxu0 %v4161
      %v4915 = vpop.f32.mrb[0].mxu0
      %v4916 = vadd.f32 0.0, %v4915
      %v4917 = vpop.f32.mrb[0].mxu0
      %v4918 = vpop.f32.mrb[0].mxu0
      %v4919 = vadd.f32 0.0, %v4918
      %v4920 = vpop.f32.mrb[0].mxu0
      %4921 = vmatprep.mubr.bf16.mxu0 %v4164
      %4922 = vmatmul.mubr.bf16.gmra.mrb[0].mxu0 %v4163
      %v4923 = vpop.f32.mrb[0].mxu0
      %v4924 = vadd.f32 0.0, %v4923
      %v4925 = vpop.f32.mrb[0].mxu0
      %v4926 = vpop.f32.mrb[0].mxu0
      %v4927 = vadd.f32 0.0, %v4926
      %v4928 = vpop.f32.mrb[0].mxu0
      %4929 = vmatprep.mubr.bf16.mxu0 %v4166
      %4930 = vmatmul.mubr.bf16.gmra.mrb[0].mxu0 %v4165
      %v4931 = vpop.f32.mrb[0].mxu0
      %v4932 = vadd.f32 0.0, %v4931
      %v4933 = vpop.f32.mrb[0].mxu0
      %v4934 = vpop.f32.mrb[0].mxu0
      %v4935 = vadd.f32 0.0, %v4934
      %v4936 = vpop.f32.mrb[0].mxu0
      %4937 = vmatprep.mubr.bf16.mxu0 %v4168
      %4938 = vmatmul.mubr.bf16.gmra.mrb[0].mxu0 %v4167
      %v4939 = vpop.f32.mrb[0].mxu0
      %v4940 = vadd.f32 0.0, %v4939
      %v4941 = vpop.f32.mrb[0].mxu0
      %v4942 = vpop.f32.mrb[0].mxu0
      %v4943 = vadd.f32 0.0, %v4942
      %v4944 = vpop.f32.mrb[0].mxu0
      %4945 = vmatprep.mubr.bf16.mxu0 %v4170
      %4946 = vmatmul.mubr.bf16.gmra.mrb[0].mxu0 %v4169
      %v4947 = vpop.f32.mrb[0].mxu0
      %v4948 = vadd.f32 0.0, %v4947
      %v4949 = vpop.f32.mrb[0].mxu0
      %v4950 = vpop.f32.mrb[0].mxu0
      %v4951 = vadd.f32 0.0, %v4950
      %v4952 = vpop.f32.mrb[0].mxu0
      %4953 = vmatprep.mubr.bf16.mxu0 %v4172
      %4954 = vmatmul.mubr.bf16.gmra.mrb[0].mxu0 %v4171
      %v4955 = vpop.f32.mrb[0].mxu0
      %v4956 = vadd.f32 0.0, %v4955
      %v4957 = vpop.f32.mrb[0].mxu0
      %v4958 = vpop.f32.mrb[0].mxu0
      %v4959 = vadd.f32 0.0, %v4958
      %v4960 = vpop.f32.mrb[0].mxu0
      %4961 = vmatprep.mubr.bf16.mxu0 %v4174
      %4962 = vmatmul.mubr.bf16.gmra.mrb[0].mxu0 %v4173
      %v4963 = vpop.f32.mrb[0].mxu0
      %v4964 = vadd.f32 0.0, %v4963
      %v4965 = vpop.f32.mrb[0].mxu0
      %v4966 = vpop.f32.mrb[0].mxu0
      %v4967 = vadd.f32 0.0, %v4966
      %v4968 = vpop.f32.mrb[0].mxu0
      %4969 = vmatprep.mubr.bf16.mxu0 %v4176
      %4970 = vmatmul.mubr.bf16.gmra.mrb[0].mxu0 %v4175
      %v4971 = vpop.f32.mrb[0].mxu0
      %v4972 = vadd.f32 0.0, %v4971
      %v4973 = vpop.f32.mrb[0].mxu0
      %v4974 = vpop.f32.mrb[0].mxu0
      %v4975 = vadd.f32 0.0, %v4974
      %v4976 = vpop.f32.mrb[0].mxu0
      %4977 = vmatprep.mubr.bf16.mxu0 %v4178
      %4978 = vmatmul.mubr.bf16.gmra.mrb[0].mxu0 %v4177
      %v4979 = vpop.f32.mrb[0].mxu0
      %v4980 = vadd.f32 0.0, %v4979
      %v4981 = vpop.f32.mrb[0].mxu0
      %v4982 = vpop.f32.mrb[0].mxu0
      %v4983 = vadd.f32 0.0, %v4982
      %v4984 = vpop.f32.mrb[0].mxu0
      %4985 = vmatprep.mubr.bf16.mxu0 %v4180
      %4986 = vmatmul.mubr.bf16.gmra.mrb[0].mxu0 %v4179
      %v4987 = vpop.f32.mrb[0].mxu0
      %v4988 = vadd.f32 0.0, %v4987
      %v4989 = vpop.f32.mrb[0].mxu0
      %v4990 = vpop.f32.mrb[0].mxu0
      %v4991 = vadd.f32 0.0, %v4990
      %v4992 = vpop.f32.mrb[0].mxu0
      %4993 = vmatprep.mubr.bf16.mxu0 %v4182
      %4994 = vmatmul.mubr.bf16.gmra.mrb[0].mxu0 %v4181
      %v4995 = vpop.f32.mrb[0].mxu0
      %v4996 = vadd.f32 0.0, %v4995
      %v4997 = vpop.f32.mrb[0].mxu0
      %v4998 = vpop.f32.mrb[0].mxu0
      %v4999 = vadd.f32 0.0, %v4998
      %v5000 = vpop.f32.mrb[0].mxu0
      %5001 = vmatprep.mubr.bf16.mxu0 %v4184
      %5002 = vmatmul.mubr.bf16.gmra.mrb[0].mxu0 %v4183
      %v5003 = vpop.f32.mrb[0].mxu0
      %v5004 = vadd.f32 0.0, %v5003
      %v5005 = vpop.f32.mrb[0].mxu0
      %v5006 = vpop.f32.mrb[0].mxu0
      %v5007 = vadd.f32 0.0, %v5006
      %v5008 = vpop.f32.mrb[0].mxu0
      %5009 = vmatprep.mubr.bf16.mxu0 %v4186
      %5010 = vmatmul.mubr.bf16.gmra.mrb[0].mxu0 %v4185
      %v5011 = vpop.f32.mrb[0].mxu0
      %v5012 = vadd.f32 0.0, %v5011
      %v5013 = vpop.f32.mrb[0].mxu0
      %v5014 = vpop.f32.mrb[0].mxu0
      %v5015 = vadd.f32 0.0, %v5014
      %v5016 = vpop.f32.mrb[0].mxu0
      %5017 = vmatprep.mubr.bf16.mxu0 %v4188
      %5018 = vmatmul.mubr.bf16.gmra.mrb[0].mxu0 %v4187
      %v5019 = vpop.f32.mrb[0].mxu0
      %v5020 = vadd.f32 0.0, %v5019
      %v5021 = vpop.f32.mrb[0].mxu0
      %v5022 = vpop.f32.mrb[0].mxu0
      %v5023 = vadd.f32 0.0, %v5022
      %v5024 = vpop.f32.mrb[0].mxu0
      %5025 = vmatprep.mubr.bf16.mxu0 %v4190
      %5026 = vmatmul.mubr.bf16.gmra.mrb[0].mxu0 %v4189
      %v5027 = vpop.f32.mrb[0].mxu0
      %v5028 = vadd.f32 0.0, %v5027
      %v5029 = vpop.f32.mrb[0].mxu0
      %v5030 = vpop.f32.mrb[0].mxu0
      %v5031 = vadd.f32 0.0, %v5030
      %v5032 = vpop.f32.mrb[0].mxu0
      %5033 = vmatprep.mubr.bf16.mxu0 %v4192
      %5034 = vmatmul.mubr.bf16.gmra.mrb[0].mxu0 %v4191
      %v5035 = vpop.f32.mrb[0].mxu0
      %v5036 = vadd.f32 0.0, %v5035
      %v5037 = vpop.f32.mrb[0].mxu0
      %v5038 = vpop.f32.mrb[0].mxu0
      %v5039 = vadd.f32 0.0, %v5038
      %v5040 = vpop.f32.mrb[0].mxu0
      %5041 = vmatprep.mubr.bf16.mxu0 %v4194
      %5042 = vmatmul.mubr.bf16.gmra.mrb[0].mxu0 %v4193
      %v5043 = vpop.f32.mrb[0].mxu0
      %v5044 = vadd.f32 0.0, %v5043
      %v5045 = vpop.f32.mrb[0].mxu0
      %v5046 = vpop.f32.mrb[0].mxu0
      %v5047 = vadd.f32 0.0, %v5046
      %v5048 = vpop.f32.mrb[0].mxu0
      %5049 = vmatprep.mubr.bf16.mxu0 %v4196
      %5050 = vmatmul.mubr.bf16.gmra.mrb[0].mxu0 %v4195
      %v5051 = vpop.f32.mrb[0].mxu0
      %v5052 = vadd.f32 0.0, %v5051
      %v5053 = vpop.f32.mrb[0].mxu0
      %v5054 = vpop.f32.mrb[0].mxu0
      %v5055 = vadd.f32 0.0, %v5054
      %v5056 = vpop.f32.mrb[0].mxu0
      %5057 = vmatprep.mubr.bf16.mxu0 %v4198
      %5058 = vmatmul.mubr.bf16.gmra.mrb[0].mxu0 %v4197
      %v5059 = vpop.f32.mrb[0].mxu0
      %v5060 = vadd.f32 0.0, %v5059
      %v5061 = vpop.f32.mrb[0].mxu0
      %v5062 = vpop.f32.mrb[0].mxu0
      %v5063 = vadd.f32 0.0, %v5062
      %v5064 = vpop.f32.mrb[0].mxu0
      %5065 = vmatprep.mubr.bf16.mxu0 %v4200
      %5066 = vmatmul.mubr.bf16.gmra.mrb[0].mxu0 %v4199
      %v5067 = vpop.f32.mrb[0].mxu0
      %v5068 = vadd.f32 0.0, %v5067
      %v5069 = vpop.f32.mrb[0].mxu0
      %v5070 = vpop.f32.mrb[0].mxu0
      %v5071 = vadd.f32 0.0, %v5070
      %v5072 = vpop.f32.mrb[0].mxu0
      %5073 = vmatprep.mubr.bf16.mxu0 %v4202
      %5074 = vmatmul.mubr.bf16.gmra.mrb[0].mxu0 %v4201
      %v5075 = vpop.f32.mrb[0].mxu0
      %v5076 = vadd.f32 0.0, %v5075
      %v5077 = vpop.f32.mrb[0].mxu0
      %v5078 = vpop.f32.mrb[0].mxu0
      %v5079 = vadd.f32 0.0, %v5078
      %v5080 = vpop.f32.mrb[0].mxu0
      %5081 = vmatprep.mubr.bf16.mxu0 %v4204
      %5082 = vmatmul.mubr.bf16.gmra.mrb[0].mxu0 %v4203
      %v5083 = vpop.f32.mrb[0].mxu0
      %v5084 = vadd.f32 0.0, %v5083
      %v5085 = vpop.f32.mrb[0].mxu0
      %v5086 = vpop.f32.mrb[0].mxu0
      %v5087 = vadd.f32 0.0, %v5086
      %v5088 = vpop.f32.mrb[0].mxu0
      %5089 = vmatprep.mubr.bf16.mxu0 %v4206
      %5090 = vmatmul.mubr.bf16.gmra.mrb[0].mxu0 %v4205
      %v5091 = vpop.f32.mrb[0].mxu0
      %v5092 = vadd.f32 0.0, %v5091
      %v5093 = vpop.f32.mrb[0].mxu0
      %v5094 = vpop.f32.mrb[0].mxu0
      %v5095 = vadd.f32 0.0, %v5094
      %v5096 = vpop.f32.mrb[0].mxu0
      %5097 = vmatprep.mubr.bf16.mxu0 %v4208
      %5098 = vmatmul.mubr.bf16.gmra.mrb[0].mxu0 %v4207
      %v5099 = vpop.f32.mrb[0].mxu0
      %v5100 = vadd.f32 0.0, %v5099
      %v5101 = vpop.f32.mrb[0].mxu0
      %v5102 = vpop.f32.mrb[0].mxu0
      %v5103 = vadd.f32 0.0, %v5102
      %v5104 = vpop.f32.mrb[0].mxu0
      %5105 = vmatprep.mubr.bf16.mxu0 %v4210
      %5106 = vmatmul.mubr.bf16.gmra.mrb[0].mxu0 %v4209
      %v5107 = vpop.f32.mrb[0].mxu0
      %v5108 = vadd.f32 0.0, %v5107
      %v5109 = vpop.f32.mrb[0].mxu0
      %v5110 = vpop.f32.mrb[0].mxu0
      %v5111 = vadd.f32 0.0, %v5110
      %v5112 = vpop.f32.mrb[0].mxu0
      %5113 = vmatprep.mubr.bf16.mxu0 %v4212
      %5114 = vmatmul.mubr.bf16.gmra.mrb[0].mxu0 %v4211
      %v5115 = vpop.f32.mrb[0].mxu0
      %v5116 = vadd.f32 0.0, %v5115
      %v5117 = vpop.f32.mrb[0].mxu0
      %v5118 = vpop.f32.mrb[0].mxu0
      %v5119 = vadd.f32 0.0, %v5118
      %v5120 = vpop.f32.mrb[0].mxu0
      %5121 = vmatprep.mubr.bf16.mxu0 %v4214
      %5122 = vmatmul.mubr.bf16.gmra.mrb[0].mxu0 %v4213
      %v5123 = vpop.f32.mrb[0].mxu0
      %v5124 = vadd.f32 0.0, %v5123
      %v5125 = vpop.f32.mrb[0].mxu0
      %v5126 = vpop.f32.mrb[0].mxu0
      %v5127 = vadd.f32 0.0, %v5126
      %v5128 = vpop.f32.mrb[0].mxu0
      %5129 = vmatprep.mubr.bf16.mxu0 %v4216
      %5130 = vmatmul.mubr.bf16.gmra.mrb[0].mxu0 %v4215
      %v5131 = vpop.f32.mrb[0].mxu0
      %v5132 = vadd.f32 0.0, %v5131
      %v5133 = vpop.f32.mrb[0].mxu0
      %v5134 = vpop.f32.mrb[0].mxu0
      %v5135 = vadd.f32 0.0, %v5134
      %v5136 = vpop.f32.mrb[0].mxu0
      %5137 = vmatprep.mubr.bf16.mxu0 %v4218
      %5138 = vmatmul.mubr.bf16.gmra.mrb[0].mxu0 %v4217
      %v5139 = vpop.f32.mrb[0].mxu0
      %v5140 = vadd.f32 0.0, %v5139
      %v5141 = vpop.f32.mrb[0].mxu0
      %v5142 = vpop.f32.mrb[0].mxu0
      %v5143 = vadd.f32 0.0, %v5142
      %v5144 = vpop.f32.mrb[0].mxu0
      %5145 = vmatprep.mubr.bf16.mxu0 %v4220
      %5146 = vmatmul.mubr.bf16.gmra.mrb[0].mxu0 %v4219
      %v5147 = vpop.f32.mrb[0].mxu0
      %v5148 = vadd.f32 0.0, %v5147
      %v5149 = vpop.f32.mrb[0].mxu0
      %v5150 = vpop.f32.mrb[0].mxu0
      %v5151 = vadd.f32 0.0, %v5150
      %v5152 = vpop.f32.mrb[0].mxu0
      %5153 = vmatprep.mubr.bf16.mxu0 %v4222
      %5154 = vmatmul.mubr.bf16.gmra.mrb[0].mxu0 %v4221
      %v5155 = vpop.f32.mrb[0].mxu0
      %v5156 = vadd.f32 0.0, %v5155
      %v5157 = vpop.f32.mrb[0].mxu0
      %v5158 = vpop.f32.mrb[0].mxu0
      %v5159 = vadd.f32 0.0, %v5158
      %v5160 = vpop.f32.mrb[0].mxu0
      %5161 = vmatprep.mubr.bf16.mxu0 %v4224
      %5162 = vmatmul.mubr.bf16.gmra.mrb[0].mxu0 %v4223
      %v5163 = vpop.f32.mrb[0].mxu0
      %v5164 = vadd.f32 0.0, %v5163
      %v5165 = vpop.f32.mrb[0].mxu0
      %v5166 = vpop.f32.mrb[0].mxu0
      %v5167 = vadd.f32 0.0, %v5166
      %v5168 = vpop.f32.mrb[0].mxu0
      %5169 = vmatprep.mubr.bf16.mxu0 %v4226
      %5170 = vmatmul.mubr.bf16.gmra.mrb[0].mxu0 %v4225
      %v5171 = vpop.f32.mrb[0].mxu0
      %v5172 = vadd.f32 0.0, %v5171
      %v5173 = vpop.f32.mrb[0].mxu0
      %v5174 = vpop.f32.mrb[0].mxu0
      %v5175 = vadd.f32 0.0, %v5174
      %v5176 = vpop.f32.mrb[0].mxu0
      %5177 = vmatprep.mubr.bf16.mxu0 %v4228
      %5178 = vmatmul.mubr.bf16.gmra.mrb[0].mxu0 %v4227
      %v5179 = vpop.f32.mrb[0].mxu0
      %v5180 = vadd.f32 0.0, %v5179
      %v5181 = vpop.f32.mrb[0].mxu0
      %v5182 = vpop.f32.mrb[0].mxu0
      %v5183 = vadd.f32 0.0, %v5182
      %v5184 = vpop.f32.mrb[0].mxu0
      %5185 = vmatprep.mubr.bf16.mxu0 %v4230
      %5186 = vmatmul.mubr.bf16.gmra.mrb[0].mxu0 %v4229
      %v5187 = vpop.f32.mrb[0].mxu0
      %v5188 = vadd.f32 0.0, %v5187
      %v5189 = vpop.f32.mrb[0].mxu0
      %v5190 = vpop.f32.mrb[0].mxu0
      %v5191 = vadd.f32 0.0, %v5190
      %v5192 = vpop.f32.mrb[0].mxu0
      %5193 = vmatprep.mubr.bf16.mxu0 %v4232
      %5194 = vmatmul.mubr.bf16.gmra.mrb[0].mxu0 %v4231
      %v5195 = vpop.f32.mrb[0].mxu0
      %v5196 = vadd.f32 0.0, %v5195
      %v5197 = vpop.f32.mrb[0].mxu0
      %v5198 = vpop.f32.mrb[0].mxu0
      %v5199 = vadd.f32 0.0, %v5198
      %v5200 = vpop.f32.mrb[0].mxu0
      %5201 = vmatprep.mubr.bf16.mxu0 %v4234
      %5202 = vmatmul.mubr.bf16.gmra.mrb[0].mxu0 %v4233
      %v5203 = vpop.f32.mrb[0].mxu0
      %v5204 = vadd.f32 0.0, %v5203
      %v5205 = vpop.f32.mrb[0].mxu0
      %v5206 = vpop.f32.mrb[0].mxu0
      %v5207 = vadd.f32 0.0, %v5206
      %v5208 = vpop.f32.mrb[0].mxu0
      %5209 = vmatprep.mubr.bf16.mxu0 %v4236
      %5210 = vmatmul.mubr.bf16.gmra.mrb[0].mxu0 %v4235
      %v5211 = vpop.f32.mrb[0].mxu0
      %v5212 = vadd.f32 0.0, %v5211
      %v5213 = vpop.f32.mrb[0].mxu0
      %v5214 = vpop.f32.mrb[0].mxu0
      %v5215 = vadd.f32 0.0, %v5214
      %v5216 = vpop.f32.mrb[0].mxu0
      %5217 = vmatprep.mubr.bf16.mxu0 %v4238
      %5218 = vmatmul.mubr.bf16.gmra.mrb[0].mxu0 %v4237
      %v5219 = vpop.f32.mrb[0].mxu0
      %v5220 = vadd.f32 0.0, %v5219
      %v5221 = vpop.f32.mrb[0].mxu0
      %v5222 = vpop.f32.mrb[0].mxu0
      %v5223 = vadd.f32 0.0, %v5222
      %v5224 = vpop.f32.mrb[0].mxu0
      %5225 = vmatprep.mubr.bf16.mxu0 %v4240
      %5226 = vmatmul.mubr.bf16.gmra.mrb[0].mxu0 %v4239
      %v5227 = vpop.f32.mrb[0].mxu0
      %v5228 = vadd.f32 0.0, %v5227
      %v5229 = vpop.f32.mrb[0].mxu0
      %v5230 = vpop.f32.mrb[0].mxu0
      %v5231 = vadd.f32 0.0, %v5230
      %v5232 = vpop.f32.mrb[0].mxu0
      %5233 = vmatprep.mubr.bf16.mxu0 %v4242
      %5234 = vmatmul.mubr.bf16.gmra.mrb[0].mxu0 %v4241
      %v5235 = vpop.f32.mrb[0].mxu0
      %v5236 = vadd.f32 0.0, %v5235
      %v5237 = vpop.f32.mrb[0].mxu0
      %v5238 = vpop.f32.mrb[0].mxu0
      %v5239 = vadd.f32 0.0, %v5238
      %v5240 = vpop.f32.mrb[0].mxu0
      %5241 = vmatprep.mubr.bf16.mxu0 %v4244
      %5242 = vmatmul.mubr.bf16.gmra.mrb[0].mxu0 %v4243
      %v5243 = vpop.f32.mrb[0].mxu0
      %v5244 = vadd.f32 0.0, %v5243
      %v5245 = vpop.f32.mrb[0].mxu0
      %v5246 = vpop.f32.mrb[0].mxu0
      %v5247 = vadd.f32 0.0, %v5246
      %v5248 = vpop.f32.mrb[0].mxu0
      %5249 = vmatprep.mubr.bf16.mxu0 %v4246
      %5250 = vmatmul.mubr.bf16.gmra.mrb[0].mxu0 %v4245
      %v5251 = vpop.f32.mrb[0].mxu0
      %v5252 = vadd.f32 0.0, %v5251
      %v5253 = vpop.f32.mrb[0].mxu0
      %v5254 = vpop.f32.mrb[0].mxu0
      %v5255 = vadd.f32 0.0, %v5254
      %v5256 = vpop.f32.mrb[0].mxu0
      %5257 = vmatprep.mubr.bf16.mxu0 %v4248
      %5258 = vmatmul.mubr.bf16.gmra.mrb[0].mxu0 %v4247
      %v5259 = vpop.f32.mrb[0].mxu0
      %v5260 = vadd.f32 0.0, %v5259
      %v5261 = vpop.f32.mrb[0].mxu0
      %v5262 = vpop.f32.mrb[0].mxu0
      %v5263 = vadd.f32 0.0, %v5262
      %v5264 = vpop.f32.mrb[0].mxu0
      %5265 = vmatprep.mubr.bf16.mxu0 %v4250
      %5266 = vmatmul.mubr.bf16.gmra.mrb[0].mxu0 %v4249
      %v5267 = vpop.f32.mrb[0].mxu0
      %v5268 = vadd.f32 0.0, %v5267
      %v5269 = vpop.f32.mrb[0].mxu0
      %v5270 = vpop.f32.mrb[0].mxu0
      %v5271 = vadd.f32 0.0, %v5270
      %v5272 = vpop.f32.mrb[0].mxu0
      %5273 = vmatprep.mubr.bf16.mxu0 %v4252
      %5274 = vmatmul.mubr.bf16.gmra.mrb[0].mxu0 %v4251
      %v5275 = vpop.f32.mrb[0].mxu0
      %v5276 = vadd.f32 0.0, %v5275
      %v5277 = vpop.f32.mrb[0].mxu0
      %v5278 = vpop.f32.mrb[0].mxu0
      %v5279 = vadd.f32 0.0, %v5278
      %v5280 = vpop.f32.mrb[0].mxu0
      %5281 = vmatprep.mubr.bf16.mxu0 %v4254
      %5282 = vmatmul.mubr.bf16.gmra.mrb[0].mxu0 %v4253
      %v5283 = vpop.f32.mrb[0].mxu0
      %v5284 = vadd.f32 0.0, %v5283
      %v5285 = vpop.f32.mrb[0].mxu0
      %v5286 = vpop.f32.mrb[0].mxu0
      %v5287 = vadd.f32 0.0, %v5286
      %v5288 = vpop.f32.mrb[0].mxu0
      %5289 = vmatprep.mubr.bf16.mxu0 %v4256
      %5290 = vmatmul.mubr.bf16.gmra.mrb[0].mxu0 %v4255
      %v5291 = vpop.f32.mrb[0].mxu0
      %v5292 = vadd.f32 0.0, %v5291
      %v5293 = vpop.f32.mrb[0].mxu0
      %v5294 = vpop.f32.mrb[0].mxu0
      %v5295 = vadd.f32 0.0, %v5294
      %v5296 = vpop.f32.mrb[0].mxu0
      %5297 = vmatprep.mubr.bf16.mxu0 %v4258
      %5298 = vmatmul.mubr.bf16.gmra.mrb[0].mxu0 %v4257
      %v5299 = vpop.f32.mrb[0].mxu0
      %v5300 = vadd.f32 0.0, %v5299
      %v5301 = vpop.f32.mrb[0].mxu0
      %v5302 = vpop.f32.mrb[0].mxu0
      %v5303 = vadd.f32 0.0, %v5302
      %v5304 = vpop.f32.mrb[0].mxu0
      %5305 = vmatprep.mubr.bf16.mxu0 %v4260
      %5306 = vmatmul.mubr.bf16.gmra.mrb[0].mxu0 %v4259
      %v5307 = vpop.f32.mrb[0].mxu0
      %v5308 = vadd.f32 0.0, %v5307
      %v5309 = vpop.f32.mrb[0].mxu0
      %v5310 = vpop.f32.mrb[0].mxu0
      %v5311 = vadd.f32 0.0, %v5310
      %v5312 = vpop.f32.mrb[0].mxu0
      %5313 = vmatprep.mubr.bf16.mxu0 %v4262
      %5314 = vmatmul.mubr.bf16.gmra.mrb[0].mxu0 %v4261
      %v5315 = vpop.f32.mrb[0].mxu0
      %v5316 = vadd.f32 0.0, %v5315
      %v5317 = vpop.f32.mrb[0].mxu0
      %v5318 = vpop.f32.mrb[0].mxu0
      %v5319 = vadd.f32 0.0, %v5318
      %v5320 = vpop.f32.mrb[0].mxu0
      %5321 = vmatprep.mubr.bf16.mxu0 %v4264
      %5322 = vmatmul.mubr.bf16.gmra.mrb[0].mxu0 %v4263
      %v5323 = vpop.f32.mrb[0].mxu0
      %v5324 = vadd.f32 0.0, %v5323
      %v5325 = vpop.f32.mrb[0].mxu0
      %v5326 = vpop.f32.mrb[0].mxu0
      %v5327 = vadd.f32 0.0, %v5326
      %v5328 = vpop.f32.mrb[0].mxu0
      %5329 = vmatprep.mubr.bf16.mxu0 %v4266
      %5330 = vmatmul.mubr.bf16.gmra.mrb[0].mxu0 %v4265
      %v5331 = vpop.f32.mrb[0].mxu0
      %v5332 = vadd.f32 0.0, %v5331
      %v5333 = vpop.f32.mrb[0].mxu0
      %v5334 = vpop.f32.mrb[0].mxu0
      %v5335 = vadd.f32 0.0, %v5334
      %v5336 = vpop.f32.mrb[0].mxu0
      %5337 = vmatprep.mubr.bf16.mxu0 %v4268
      %5338 = vmatmul.mubr.bf16.gmra.mrb[0].mxu0 %v4267
      %v5339 = vpop.f32.mrb[0].mxu0
      %v5340 = vadd.f32 0.0, %v5339
      %v5341 = vpop.f32.mrb[0].mxu0
      %v5342 = vpop.f32.mrb[0].mxu0
      %v5343 = vadd.f32 0.0, %v5342
      %v5344 = vpop.f32.mrb[0].mxu0
      %5345 = vmatprep.mubr.bf16.mxu0 %v4270
      %5346 = vmatmul.mubr.bf16.gmra.mrb[0].mxu0 %v4269
      %v5347 = vpop.f32.mrb[0].mxu0
      %v5348 = vadd.f32 0.0, %v5347
      %v5349 = vpop.f32.mrb[0].mxu0
      %v5350 = vpop.f32.mrb[0].mxu0
      %v5351 = vadd.f32 0.0, %v5350
      %v5352 = vpop.f32.mrb[0].mxu0
      %5353 = vmatprep.mubr.bf16.mxu0 %v4272
      %5354 = vmatmul.mubr.bf16.gmra.mrb[0].mxu0 %v4271
      %v5355 = vpop.f32.mrb[0].mxu0
      %v5356 = vadd.f32 0.0, %v5355
      %v5357 = vpop.f32.mrb[0].mxu0
      %v5358 = vpop.f32.mrb[0].mxu0
      %v5359 = vadd.f32 0.0, %v5358
      %v5360 = vpop.f32.mrb[0].mxu0
      %5361 = vmatprep.mubr.bf16.mxu0 %v4274
      %5362 = vmatmul.mubr.bf16.gmra.mrb[0].mxu0 %v4273
      %v5363 = vpop.f32.mrb[0].mxu0
      %v5364 = vadd.f32 0.0, %v5363
      %v5365 = vpop.f32.mrb[0].mxu0
      %v5366 = vpop.f32.mrb[0].mxu0
      %v5367 = vadd.f32 0.0, %v5366
      %v5368 = vpop.f32.mrb[0].mxu0
      %5369 = vmatprep.mubr.bf16.mxu0 %v4276
      %5370 = vmatmul.mubr.bf16.gmra.mrb[0].mxu0 %v4275
      %v5371 = vpop.f32.mrb[0].mxu0
      %v5372 = vadd.f32 0.0, %v5371
      %v5373 = vpop.f32.mrb[0].mxu0
      %v5374 = vpop.f32.mrb[0].mxu0
      %v5375 = vadd.f32 0.0, %v5374
      %v5376 = vpop.f32.mrb[0].mxu0
      %5377 = vmatprep.mubr.bf16.mxu0 %v4278
      %5378 = vmatmul.mubr.bf16.gmra.mrb[0].mxu0 %v4277
      %v5379 = vpop.f32.mrb[0].mxu0
      %v5380 = vadd.f32 0.0, %v5379
      %v5381 = vpop.f32.mrb[0].mxu0
      %v5382 = vpop.f32.mrb[0].mxu0
      %v5383 = vadd.f32 0.0, %v5382
      %v5384 = vpop.f32.mrb[0].mxu0
      %5385 = vmatprep.mubr.bf16.mxu0 %v4280
      %5386 = vmatmul.mubr.bf16.gmra.mrb[0].mxu0 %v4279
      %v5387 = vpop.f32.mrb[0].mxu0
      %v5388 = vadd.f32 0.0, %v5387
      %v5389 = vpop.f32.mrb[0].mxu0
      %v5390 = vpop.f32.mrb[0].mxu0
      %v5391 = vadd.f32 0.0, %v5390
      %v5392 = vpop.f32.mrb[0].mxu0
      %5393 = vmatprep.mubr.bf16.mxu0 %v4282
      %5394 = vmatmul.mubr.bf16.gmra.mrb[0].mxu0 %v4281
      %v5395 = vpop.f32.mrb[0].mxu0
      %v5396 = vadd.f32 0.0, %v5395
      %v5397 = vpop.f32.mrb[0].mxu0
      %v5398 = vpop.f32.mrb[0].mxu0
      %v5399 = vadd.f32 0.0, %v5398
      %v5400 = vpop.f32.mrb[0].mxu0
      %5401 = vmatprep.mubr.bf16.mxu0 %v4284
      %5402 = vmatmul.mubr.bf16.gmra.mrb[0].mxu0 %v4283
      %v5403 = vpop.f32.mrb[0].mxu0
      %v5404 = vadd.f32 0.0, %v5403
      %v5405 = vpop.f32.mrb[0].mxu0
      %v5406 = vpop.f32.mrb[0].mxu0
      %v5407 = vadd.f32 0.0, %v5406
      %v5408 = vpop.f32.mrb[0].mxu0
      %5409 = vmatprep.mubr.bf16.mxu0 %v4286
      %5410 = vmatmul.mubr.bf16.gmra.mrb[0].mxu0 %v4285
      %v5411 = vpop.f32.mrb[0].mxu0
      %v5412 = vadd.f32 0.0, %v5411
      %v5413 = vpop.f32.mrb[0].mxu0
      %v5414 = vpop.f32.mrb[0].mxu0
      %v5415 = vadd.f32 0.0, %v5414
      %v5416 = vpop.f32.mrb[0].mxu0
      %5417 = vmatprep.mubr.bf16.mxu0 %v4288
      %5418 = vmatmul.mubr.bf16.gmra.mrb[0].mxu0 %v4287
      %v5419 = vpop.f32.mrb[0].mxu0
      %v5420 = vadd.f32 0.0, %v5419
      %v5421 = vpop.f32.mrb[0].mxu0
      %v5422 = vpop.f32.mrb[0].mxu0
      %v5423 = vadd.f32 0.0, %v5422
      %v5424 = vpop.f32.mrb[0].mxu0
      %5425 = vmatprep.mubr.bf16.mxu0 %v4290
      %5426 = vmatmul.mubr.bf16.gmra.mrb[0].mxu0 %v4289
      %v5427 = vpop.f32.mrb[0].mxu0
      %v5428 = vadd.f32 0.0, %v5427
      %v5429 = vpop.f32.mrb[0].mxu0
      %v5430 = vpop.f32.mrb[0].mxu0
      %v5431 = vadd.f32 0.0, %v5430
      %v5432 = vpop.f32.mrb[0].mxu0
      %5433 = vmatprep.mubr.bf16.mxu0 %v4292
      %5434 = vmatmul.mubr.bf16.gmra.mrb[0].mxu0 %v4291
      %v5435 = vpop.f32.mrb[0].mxu0
      %v5436 = vadd.f32 0.0, %v5435
      %v5437 = vpop.f32.mrb[0].mxu0
      %v5438 = vpop.f32.mrb[0].mxu0
      %v5439 = vadd.f32 0.0, %v5438
      %v5440 = vpop.f32.mrb[0].mxu0
      %5441 = vmatprep.mubr.bf16.mxu0 %v4294
      %5442 = vmatmul.mubr.bf16.gmra.mrb[0].mxu0 %v4293
      %v5443 = vpop.f32.mrb[0].mxu0
      %v5444 = vadd.f32 0.0, %v5443
      %v5445 = vpop.f32.mrb[0].mxu0
      %v5446 = vpop.f32.mrb[0].mxu0
      %v5447 = vadd.f32 0.0, %v5446
      %v5448 = vpop.f32.mrb[0].mxu0
      %5449 = vmatprep.mubr.bf16.mxu0 %v4296
      %5450 = vmatmul.mubr.bf16.gmra.mrb[0].mxu0 %v4295
      %v5451 = vpop.f32.mrb[0].mxu0
      %v5452 = vadd.f32 0.0, %v5451
      %v5453 = vpop.f32.mrb[0].mxu0
      %v5454 = vpop.f32.mrb[0].mxu0
      %v5455 = vadd.f32 0.0, %v5454
      %v5456 = vpop.f32.mrb[0].mxu0
      %5457 = vmatprep.mubr.bf16.mxu0 %v4298
      %5458 = vmatmul.mubr.bf16.gmra.mrb[0].mxu0 %v4297
      %v5459 = vpop.f32.mrb[0].mxu0
      %v5460 = vadd.f32 0.0, %v5459
      %v5461 = vpop.f32.mrb[0].mxu0
      %v5462 = vpop.f32.mrb[0].mxu0
      %v5463 = vadd.f32 0.0, %v5462
      %v5464 = vpop.f32.mrb[0].mxu0
      %5465 = vmatprep.mubr.bf16.mxu0 %v4300
      %5466 = vmatmul.mubr.bf16.gmra.mrb[0].mxu0 %v4299
      %v5467 = vpop.f32.mrb[0].mxu0
      %v5468 = vadd.f32 0.0, %v5467
      %v5469 = vpop.f32.mrb[0].mxu0
      %v5470 = vpop.f32.mrb[0].mxu0
      %v5471 = vadd.f32 0.0, %v5470
      %v5472 = vpop.f32.mrb[0].mxu0
      %5473 = vmatprep.mubr.bf16.mxu0 %v4302
      %5474 = vmatmul.mubr.bf16.gmra.mrb[0].mxu0 %v4301
      %v5475 = vpop.f32.mrb[0].mxu0
      %v5476 = vadd.f32 0.0, %v5475
      %v5477 = vpop.f32.mrb[0].mxu0
      %v5478 = vpop.f32.mrb[0].mxu0
      %v5479 = vadd.f32 0.0, %v5478
      %v5480 = vpop.f32.mrb[0].mxu0
      %5481 = vmatprep.mubr.bf16.mxu0 %v4304
      %5482 = vmatmul.mubr.bf16.gmra.mrb[0].mxu0 %v4303
      %v5483 = vpop.f32.mrb[0].mxu0
      %v5484 = vadd.f32 0.0, %v5483
      %v5485 = vpop.f32.mrb[0].mxu0
      %v5486 = vpop.f32.mrb[0].mxu0
      %v5487 = vadd.f32 0.0, %v5486
      %v5488 = vpop.f32.mrb[0].mxu0
      %5489 = vdwg.mxu0
      %v5490 = vmax.f32 %v4468, 0.0
      %v5491 = vmax.f32 %v4471, 0.0
      %v5492 = vmax.f32 %v4476, 0.0
      %v5493 = vmax.f32 %v4479, 0.0
      %v5494 = vmax.f32 %v4484, 0.0
      %v5495 = vmax.f32 %v4487, 0.0
      %v5496 = vmax.f32 %v4492, 0.0
      %v5497 = vmax.f32 %v4495, 0.0
      %v5498 = vmax.f32 %v4500, 0.0
      %v5499 = vmax.f32 %v4503, 0.0
      %v5500 = vmax.f32 %v4508, 0.0
      %v5501 = vmax.f32 %v4511, 0.0
      %v5502 = vmax.f32 %v4516, 0.0
      %v5503 = vmax.f32 %v4519, 0.0
      %v5504 = vmax.f32 %v4524, 0.0
      %v5505 = vmax.f32 %v4527, 0.0
      %v5506 = vmax.f32 %v4532, 0.0
      %v5507 = vmax.f32 %v4535, 0.0
      %v5508 = vmax.f32 %v4540, 0.0
      %v5509 = vmax.f32 %v4543, 0.0
      %v5510 = vmax.f32 %v4548, 0.0
      %v5511 = vmax.f32 %v4551, 0.0
      %v5512 = vmax.f32 %v4556, 0.0
      %v5513 = vmax.f32 %v4559, 0.0
      %v5514 = vmax.f32 %v4564, 0.0
      %v5515 = vmax.f32 %v4567, 0.0
      %v5516 = vmax.f32 %v4572, 0.0
      %v5517 = vmax.f32 %v4575, 0.0
      %v5518 = vmax.f32 %v4580, 0.0
      %v5519 = vmax.f32 %v4583, 0.0
      %v5520 = vmax.f32 %v4588, 0.0
      %v5521 = vmax.f32 %v4591, 0.0
      %v5522 = vmax.f32 %v4596, 0.0
      %v5523 = vmax.f32 %v4599, 0.0
      %v5524 = vmax.f32 %v4604, 0.0
      %v5525 = vmax.f32 %v4607, 0.0
      %v5526 = vmax.f32 %v4612, 0.0
      %v5527 = vmax.f32 %v4615, 0.0
      %v5528 = vmax.f32 %v4620, 0.0
      %v5529 = vmax.f32 %v4623, 0.0
      %v5530 = vmax.f32 %v4628, 0.0
      %v5531 = vmax.f32 %v4631, 0.0
      %v5532 = vmax.f32 %v4636, 0.0
      %v5533 = vmax.f32 %v4639, 0.0
      %v5534 = vmax.f32 %v4644, 0.0
      %v5535 = vmax.f32 %v4647, 0.0
      %v5536 = vmax.f32 %v4652, 0.0
      %v5537 = vmax.f32 %v4655, 0.0
      %v5538 = vmax.f32 %v4660, 0.0
      %v5539 = vmax.f32 %v4663, 0.0
      %v5540 = vmax.f32 %v4668, 0.0
      %v5541 = vmax.f32 %v4671, 0.0
      %v5542 = vmax.f32 %v4676, 0.0
      %v5543 = vmax.f32 %v4679, 0.0
      %v5544 = vmax.f32 %v4684, 0.0
      %v5545 = vmax.f32 %v4687, 0.0
      %v5546 = vmax.f32 %v4692, 0.0
      %v5547 = vmax.f32 %v4695, 0.0
      %v5548 = vmax.f32 %v4700, 0.0
      %v5549 = vmax.f32 %v4703, 0.0
      %v5550 = vmax.f32 %v4708, 0.0
      %v5551 = vmax.f32 %v4711, 0.0
      %v5552 = vmax.f32 %v4716, 0.0
      %v5553 = vmax.f32 %v4719, 0.0
      %v5554 = vmax.f32 %v4724, 0.0
      %v5555 = vmax.f32 %v4727, 0.0
      %v5556 = vmax.f32 %v4732, 0.0
      %v5557 = vmax.f32 %v4735, 0.0
      %v5558 = vmax.f32 %v4740, 0.0
      %v5559 = vmax.f32 %v4743, 0.0
      %v5560 = vmax.f32 %v4748, 0.0
      %v5561 = vmax.f32 %v4751, 0.0
      %v5562 = vmax.f32 %v4756, 0.0
      %v5563 = vmax.f32 %v4759, 0.0
      %v5564 = vmax.f32 %v4764, 0.0
      %v5565 = vmax.f32 %v4767, 0.0
      %v5566 = vmax.f32 %v4772, 0.0
      %v5567 = vmax.f32 %v4775, 0.0
      %v5568 = vmax.f32 %v4780, 0.0
      %v5569 = vmax.f32 %v4783, 0.0
      %v5570 = vmax.f32 %v4788, 0.0
      %v5571 = vmax.f32 %v4791, 0.0
      %v5572 = vmax.f32 %v4796, 0.0
      %v5573 = vmax.f32 %v4799, 0.0
      %v5574 = vmax.f32 %v4804, 0.0
      %v5575 = vmax.f32 %v4807, 0.0
      %v5576 = vmax.f32 %v4812, 0.0
      %v5577 = vmax.f32 %v4815, 0.0
      %v5578 = vmax.f32 %v4820, 0.0
      %v5579 = vmax.f32 %v4823, 0.0
      %v5580 = vmax.f32 %v4828, 0.0
      %v5581 = vmax.f32 %v4831, 0.0
      %v5582 = vmax.f32 %v4836, 0.0
      %v5583 = vmax.f32 %v4839, 0.0
      %v5584 = vmax.f32 %v4844, 0.0
      %v5585 = vmax.f32 %v4847, 0.0
      %v5586 = vmax.f32 %v4852, 0.0
      %v5587 = vmax.f32 %v4855, 0.0
      %v5588 = vmax.f32 %v4860, 0.0
      %v5589 = vmax.f32 %v4863, 0.0
      %v5590 = vmax.f32 %v4868, 0.0
      %v5591 = vmax.f32 %v4871, 0.0
      %v5592 = vmax.f32 %v4876, 0.0
      %v5593 = vmax.f32 %v4879, 0.0
      %v5594 = vmax.f32 %v4884, 0.0
      %v5595 = vmax.f32 %v4887, 0.0
      %v5596 = vmax.f32 %v4892, 0.0
      %v5597 = vmax.f32 %v4895, 0.0
      %v5598 = vmax.f32 %v4900, 0.0
      %v5599 = vmax.f32 %v4903, 0.0
      %v5600 = vmax.f32 %v4908, 0.0
      %v5601 = vmax.f32 %v4911, 0.0
      %v5602 = vmax.f32 %v4916, 0.0
      %v5603 = vmax.f32 %v4919, 0.0
      %v5604 = vmax.f32 %v4924, 0.0
      %v5605 = vmax.f32 %v4927, 0.0
      %v5606 = vmax.f32 %v4932, 0.0
      %v5607 = vmax.f32 %v4935, 0.0
      %v5608 = vmax.f32 %v4940, 0.0
      %v5609 = vmax.f32 %v4943, 0.0
      %v5610 = vmax.f32 %v4948, 0.0
      %v5611 = vmax.f32 %v4951, 0.0
      %v5612 = vmax.f32 %v4956, 0.0
      %v5613 = vmax.f32 %v4959, 0.0
      %v5614 = vmax.f32 %v4964, 0.0
      %v5615 = vmax.f32 %v4967, 0.0
      %v5616 = vmax.f32 %v4972, 0.0
      %v5617 = vmax.f32 %v4975, 0.0
      %v5618 = vmax.f32 %v4980, 0.0
      %v5619 = vmax.f32 %v4983, 0.0
      %v5620 = vmax.f32 %v4988, 0.0
      %v5621 = vmax.f32 %v4991, 0.0
      %v5622 = vmax.f32 %v4996, 0.0
      %v5623 = vmax.f32 %v4999, 0.0
      %v5624 = vmax.f32 %v5004, 0.0
      %v5625 = vmax.f32 %v5007, 0.0
      %v5626 = vmax.f32 %v5012, 0.0
      %v5627 = vmax.f32 %v5015, 0.0
      %v5628 = vmax.f32 %v5020, 0.0
      %v5629 = vmax.f32 %v5023, 0.0
      %v5630 = vmax.f32 %v5028, 0.0
      %v5631 = vmax.f32 %v5031, 0.0
      %v5632 = vmax.f32 %v5036, 0.0
      %v5633 = vmax.f32 %v5039, 0.0
      %v5634 = vmax.f32 %v5044, 0.0
      %v5635 = vmax.f32 %v5047, 0.0
      %v5636 = vmax.f32 %v5052, 0.0
      %v5637 = vmax.f32 %v5055, 0.0
      %v5638 = vmax.f32 %v5060, 0.0
      %v5639 = vmax.f32 %v5063, 0.0
      %v5640 = vmax.f32 %v5068, 0.0
      %v5641 = vmax.f32 %v5071, 0.0
      %v5642 = vmax.f32 %v5076, 0.0
      %v5643 = vmax.f32 %v5079, 0.0
      %v5644 = vmax.f32 %v5084, 0.0
      %v5645 = vmax.f32 %v5087, 0.0
      %v5646 = vmax.f32 %v5092, 0.0
      %v5647 = vmax.f32 %v5095, 0.0
      %v5648 = vmax.f32 %v5100, 0.0
      %v5649 = vmax.f32 %v5103, 0.0
      %v5650 = vmax.f32 %v5108, 0.0
      %v5651 = vmax.f32 %v5111, 0.0
      %v5652 = vmax.f32 %v5116, 0.0
      %v5653 = vmax.f32 %v5119, 0.0
      %v5654 = vmax.f32 %v5124, 0.0
      %v5655 = vmax.f32 %v5127, 0.0
      %v5656 = vmax.f32 %v5132, 0.0
      %v5657 = vmax.f32 %v5135, 0.0
      %v5658 = vmax.f32 %v5140, 0.0
      %v5659 = vmax.f32 %v5143, 0.0
      %v5660 = vmax.f32 %v5148, 0.0
      %v5661 = vmax.f32 %v5151, 0.0
      %v5662 = vmax.f32 %v5156, 0.0
      %v5663 = vmax.f32 %v5159, 0.0
      %v5664 = vmax.f32 %v5164, 0.0
      %v5665 = vmax.f32 %v5167, 0.0
      %v5666 = vmax.f32 %v5172, 0.0
      %v5667 = vmax.f32 %v5175, 0.0
      %v5668 = vmax.f32 %v5180, 0.0
      %v5669 = vmax.f32 %v5183, 0.0
      %v5670 = vmax.f32 %v5188, 0.0
      %v5671 = vmax.f32 %v5191, 0.0
      %v5672 = vmax.f32 %v5196, 0.0
      %v5673 = vmax.f32 %v5199, 0.0
      %v5674 = vmax.f32 %v5204, 0.0
      %v5675 = vmax.f32 %v5207, 0.0
      %v5676 = vmax.f32 %v5212, 0.0
      %v5677 = vmax.f32 %v5215, 0.0
      %v5678 = vmax.f32 %v5220, 0.0
      %v5679 = vmax.f32 %v5223, 0.0
      %v5680 = vmax.f32 %v5228, 0.0
      %v5681 = vmax.f32 %v5231, 0.0
      %v5682 = vmax.f32 %v5236, 0.0
      %v5683 = vmax.f32 %v5239, 0.0
      %v5684 = vmax.f32 %v5244, 0.0
      %v5685 = vmax.f32 %v5247, 0.0
      %v5686 = vmax.f32 %v5252, 0.0
      %v5687 = vmax.f32 %v5255, 0.0
      %v5688 = vmax.f32 %v5260, 0.0
      %v5689 = vmax.f32 %v5263, 0.0
      %v5690 = vmax.f32 %v5268, 0.0
      %v5691 = vmax.f32 %v5271, 0.0
      %v5692 = vmax.f32 %v5276, 0.0
      %v5693 = vmax.f32 %v5279, 0.0
      %v5694 = vmax.f32 %v5284, 0.0
      %v5695 = vmax.f32 %v5287, 0.0
      %v5696 = vmax.f32 %v5292, 0.0
      %v5697 = vmax.f32 %v5295, 0.0
      %v5698 = vmax.f32 %v5300, 0.0
      %v5699 = vmax.f32 %v5303, 0.0
      %v5700 = vmax.f32 %v5308, 0.0
      %v5701 = vmax.f32 %v5311, 0.0
      %v5702 = vmax.f32 %v5316, 0.0
      %v5703 = vmax.f32 %v5319, 0.0
      %v5704 = vmax.f32 %v5324, 0.0
      %v5705 = vmax.f32 %v5327, 0.0
      %v5706 = vmax.f32 %v5332, 0.0
      %v5707 = vmax.f32 %v5335, 0.0
      %v5708 = vmax.f32 %v5340, 0.0
      %v5709 = vmax.f32 %v5343, 0.0
      %v5710 = vmax.f32 %v5348, 0.0
      %v5711 = vmax.f32 %v5351, 0.0
      %v5712 = vmax.f32 %v5356, 0.0
      %v5713 = vmax.f32 %v5359, 0.0
      %v5714 = vmax.f32 %v5364, 0.0
      %v5715 = vmax.f32 %v5367, 0.0
      %v5716 = vmax.f32 %v5372, 0.0
      %v5717 = vmax.f32 %v5375, 0.0
      %v5718 = vmax.f32 %v5380, 0.0
      %v5719 = vmax.f32 %v5383, 0.0
      %v5720 = vmax.f32 %v5388, 0.0
      %v5721 = vmax.f32 %v5391, 0.0
      %v5722 = vmax.f32 %v5396, 0.0
      %v5723 = vmax.f32 %v5399, 0.0
      %v5724 = vmax.f32 %v5404, 0.0
      %v5725 = vmax.f32 %v5407, 0.0
      %v5726 = vmax.f32 %v5412, 0.0
      %v5727 = vmax.f32 %v5415, 0.0
      %v5728 = vmax.f32 %v5420, 0.0
      %v5729 = vmax.f32 %v5423, 0.0
      %v5730 = vmax.f32 %v5428, 0.0
      %v5731 = vmax.f32 %v5431, 0.0
      %v5732 = vmax.f32 %v5436, 0.0
      %v5733 = vmax.f32 %v5439, 0.0
      %v5734 = vmax.f32 %v5444, 0.0
      %v5735 = vmax.f32 %v5447, 0.0
      %v5736 = vmax.f32 %v5452, 0.0
      %v5737 = vmax.f32 %v5455, 0.0
      %v5738 = vmax.f32 %v5460, 0.0
      %v5739 = vmax.f32 %v5463, 0.0
      %v5740 = vmax.f32 %v5468, 0.0
      %v5741 = vmax.f32 %v5471, 0.0
      %v5742 = vmax.f32 %v5476, 0.0
      %v5743 = vmax.f32 %v5479, 0.0
      %v5744 = vmax.f32 %v5484, 0.0
      %v5745 = vmax.f32 %v5487, 0.0
      %v5746 = vpack.c.bf16 %v5491, %v5490
      %v5747 = vpack.c.bf16 %v5493, %v5492
      %v5748 = vpack.c.bf16 %v5495, %v5494
      %v5749 = vpack.c.bf16 %v5497, %v5496
      %v5750 = vpack.c.bf16 %v5499, %v5498
      %v5751 = vpack.c.bf16 %v5501, %v5500
      %v5752 = vpack.c.bf16 %v5503, %v5502
      %v5753 = vpack.c.bf16 %v5505, %v5504
      %v5754 = vpack.c.bf16 %v5507, %v5506
      %v5755 = vpack.c.bf16 %v5509, %v5508
      %v5756 = vpack.c.bf16 %v5511, %v5510
      %v5757 = vpack.c.bf16 %v5513, %v5512
      %v5758 = vpack.c.bf16 %v5515, %v5514
      %v5759 = vpack.c.bf16 %v5517, %v5516
      %v5760 = vpack.c.bf16 %v5519, %v5518
      %v5761 = vpack.c.bf16 %v5521, %v5520
      %v5762 = vpack.c.bf16 %v5523, %v5522
      %v5763 = vpack.c.bf16 %v5525, %v5524
      %v5764 = vpack.c.bf16 %v5527, %v5526
      %v5765 = vpack.c.bf16 %v5529, %v5528
      %v5766 = vpack.c.bf16 %v5531, %v5530
      %v5767 = vpack.c.bf16 %v5533, %v5532
      %v5768 = vpack.c.bf16 %v5535, %v5534
      %v5769 = vpack.c.bf16 %v5537, %v5536
      %v5770 = vpack.c.bf16 %v5539, %v5538
      %v5771 = vpack.c.bf16 %v5541, %v5540
      %v5772 = vpack.c.bf16 %v5543, %v5542
      %v5773 = vpack.c.bf16 %v5545, %v5544
      %v5774 = vpack.c.bf16 %v5547, %v5546
      %v5775 = vpack.c.bf16 %v5549, %v5548
      %v5776 = vpack.c.bf16 %v5551, %v5550
      %v5777 = vpack.c.bf16 %v5553, %v5552
      %v5778 = vpack.c.bf16 %v5555, %v5554
      %v5779 = vpack.c.bf16 %v5557, %v5556
      %v5780 = vpack.c.bf16 %v5559, %v5558
      %v5781 = vpack.c.bf16 %v5561, %v5560
      %v5782 = vpack.c.bf16 %v5563, %v5562
      %v5783 = vpack.c.bf16 %v5565, %v5564
      %v5784 = vpack.c.bf16 %v5567, %v5566
      %v5785 = vpack.c.bf16 %v5569, %v5568
      %v5786 = vpack.c.bf16 %v5571, %v5570
      %v5787 = vpack.c.bf16 %v5573, %v5572
      %v5788 = vpack.c.bf16 %v5575, %v5574
      %v5789 = vpack.c.bf16 %v5577, %v5576
      %v5790 = vpack.c.bf16 %v5579, %v5578
      %v5791 = vpack.c.bf16 %v5581, %v5580
      %v5792 = vpack.c.bf16 %v5583, %v5582
      %v5793 = vpack.c.bf16 %v5585, %v5584
      %v5794 = vpack.c.bf16 %v5587, %v5586
      %v5795 = vpack.c.bf16 %v5589, %v5588
      %v5796 = vpack.c.bf16 %v5591, %v5590
      %v5797 = vpack.c.bf16 %v5593, %v5592
      %v5798 = vpack.c.bf16 %v5595, %v5594
      %v5799 = vpack.c.bf16 %v5597, %v5596
      %v5800 = vpack.c.bf16 %v5599, %v5598
      %v5801 = vpack.c.bf16 %v5601, %v5600
      %v5802 = vpack.c.bf16 %v5603, %v5602
      %v5803 = vpack.c.bf16 %v5605, %v5604
      %v5804 = vpack.c.bf16 %v5607, %v5606
      %v5805 = vpack.c.bf16 %v5609, %v5608
      %v5806 = vpack.c.bf16 %v5611, %v5610
      %v5807 = vpack.c.bf16 %v5613, %v5612
      %v5808 = vpack.c.bf16 %v5615, %v5614
      %v5809 = vpack.c.bf16 %v5617, %v5616
      %v5810 = vpack.c.bf16 %v5619, %v5618
      %v5811 = vpack.c.bf16 %v5621, %v5620
      %v5812 = vpack.c.bf16 %v5623, %v5622
      %v5813 = vpack.c.bf16 %v5625, %v5624
      %v5814 = vpack.c.bf16 %v5627, %v5626
      %v5815 = vpack.c.bf16 %v5629, %v5628
      %v5816 = vpack.c.bf16 %v5631, %v5630
      %v5817 = vpack.c.bf16 %v5633, %v5632
      %v5818 = vpack.c.bf16 %v5635, %v5634
      %v5819 = vpack.c.bf16 %v5637, %v5636
      %v5820 = vpack.c.bf16 %v5639, %v5638
      %v5821 = vpack.c.bf16 %v5641, %v5640
      %v5822 = vpack.c.bf16 %v5643, %v5642
      %v5823 = vpack.c.bf16 %v5645, %v5644
      %v5824 = vpack.c.bf16 %v5647, %v5646
      %v5825 = vpack.c.bf16 %v5649, %v5648
      %v5826 = vpack.c.bf16 %v5651, %v5650
      %v5827 = vpack.c.bf16 %v5653, %v5652
      %v5828 = vpack.c.bf16 %v5655, %v5654
      %v5829 = vpack.c.bf16 %v5657, %v5656
      %v5830 = vpack.c.bf16 %v5659, %v5658
      %v5831 = vpack.c.bf16 %v5661, %v5660
      %v5832 = vpack.c.bf16 %v5663, %v5662
      %v5833 = vpack.c.bf16 %v5665, %v5664
      %v5834 = vpack.c.bf16 %v5667, %v5666
      %v5835 = vpack.c.bf16 %v5669, %v5668
      %v5836 = vpack.c.bf16 %v5671, %v5670
      %v5837 = vpack.c.bf16 %v5673, %v5672
      %v5838 = vpack.c.bf16 %v5675, %v5674
      %v5839 = vpack.c.bf16 %v5677, %v5676
      %v5840 = vpack.c.bf16 %v5679, %v5678
      %v5841 = vpack.c.bf16 %v5681, %v5680
      %v5842 = vpack.c.bf16 %v5683, %v5682
      %v5843 = vpack.c.bf16 %v5685, %v5684
      %v5844 = vpack.c.bf16 %v5687, %v5686
      %v5845 = vpack.c.bf16 %v5689, %v5688
      %v5846 = vpack.c.bf16 %v5691, %v5690
      %v5847 = vpack.c.bf16 %v5693, %v5692
      %v5848 = vpack.c.bf16 %v5695, %v5694
      %v5849 = vpack.c.bf16 %v5697, %v5696
      %v5850 = vpack.c.bf16 %v5699, %v5698
      %v5851 = vpack.c.bf16 %v5701, %v5700
      %v5852 = vpack.c.bf16 %v5703, %v5702
      %v5853 = vpack.c.bf16 %v5705, %v5704
      %v5854 = vpack.c.bf16 %v5707, %v5706
      %v5855 = vpack.c.bf16 %v5709, %v5708
      %v5856 = vpack.c.bf16 %v5711, %v5710
      %v5857 = vpack.c.bf16 %v5713, %v5712
      %v5858 = vpack.c.bf16 %v5715, %v5714
      %v5859 = vpack.c.bf16 %v5717, %v5716
      %v5860 = vpack.c.bf16 %v5719, %v5718
      %v5861 = vpack.c.bf16 %v5721, %v5720
      %v5862 = vpack.c.bf16 %v5723, %v5722
      %v5863 = vpack.c.bf16 %v5725, %v5724
      %v5864 = vpack.c.bf16 %v5727, %v5726
      %v5865 = vpack.c.bf16 %v5729, %v5728
      %v5866 = vpack.c.bf16 %v5731, %v5730
      %v5867 = vpack.c.bf16 %v5733, %v5732
      %v5868 = vpack.c.bf16 %v5735, %v5734
      %v5869 = vpack.c.bf16 %v5737, %v5736
      %v5870 = vpack.c.bf16 %v5739, %v5738
      %v5871 = vpack.c.bf16 %v5741, %v5740
      %v5872 = vpack.c.bf16 %v5743, %v5742
      %v5873 = vpack.c.bf16 %v5745, %v5744
      %v5874 = vld [vmem:[%s2] sm:$0xf]
      %v5875 = vld [vmem:[%s2 + $0x4] sm:$0xf]
      %v5876 = vld [vmem:[%s2 + $0x8] sm:$0xf]
      %v5877 = vld [vmem:[%s2 + $0xc] sm:$0xf]
      %v5878 = vld [vmem:[%s2 + $0x10] sm:$0xf]
      %v5879 = vld [vmem:[%s2 + $0x14] sm:$0xf]
      %v5880 = vld [vmem:[%s2 + $0x18] sm:$0xf]
      %v5881 = vld [vmem:[%s2 + $0x1c] sm:$0xf]
      %v5882 = vld [vmem:[%s2 + $0x20] sm:$0xf]
      %v5883 = vld [vmem:[%s2 + $0x24] sm:$0xf]
      %v5884 = vld [vmem:[%s2 + $0x28] sm:$0xf]
      %v5885 = vld [vmem:[%s2 + $0x2c] sm:$0xf]
      %v5886 = vld [vmem:[%s2 + $0x30] sm:$0xf]
      %v5887 = vld [vmem:[%s2 + $0x34] sm:$0xf]
      %v5888 = vld [vmem:[%s2 + $0x38] sm:$0xf]
      %v5889 = vld [vmem:[%s2 + $0x3c] sm:$0xf]
      %v5890 = vld [vmem:[%s3] sm:$0x1]
      %v5892 = vlaneseq
      %v5893 = vshrl.u32 %v5892, 7
      %v5894 = vsub.s32 0, %v5893
      %v5895 = vrot.slane %v5890, %v5894
      %v5913 = vunpack.c.l.b16 %v5874
      %v5914 = vunpack.c.l.b16 %v5875
      %v5915 = vunpack.c.l.b16 %v5876
      %v5916 = vunpack.c.l.b16 %v5877
      %v5917 = vunpack.c.l.b16 %v5878
      %v5918 = vunpack.c.l.b16 %v5879
      %v5919 = vunpack.c.l.b16 %v5880
      %v5920 = vunpack.c.l.b16 %v5881
      %v5921 = vunpack.c.l.b16 %v5882
      %v5922 = vunpack.c.l.b16 %v5883
      %v5923 = vunpack.c.l.b16 %v5884
      %v5924 = vunpack.c.l.b16 %v5885
      %v5925 = vunpack.c.l.b16 %v5886
      %v5926 = vunpack.c.l.b16 %v5887
      %v5927 = vunpack.c.l.b16 %v5888
      %v5928 = vunpack.c.l.b16 %v5889
      %v5929 = vpack.c.b16 %v5914, %v5913
      %v5930 = vpack.c.b16 %v5916, %v5915
      %v5931 = vpack.c.b16 %v5918, %v5917
      %v5932 = vpack.c.b16 %v5920, %v5919
      %v5933 = vpack.c.b16 %v5922, %v5921
      %v5934 = vpack.c.b16 %v5924, %v5923
      %v5935 = vpack.c.b16 %v5926, %v5925
      %v5936 = vpack.c.b16 %v5928, %v5927
      %5945 = vmatprep.subr.bf16.mxu0 0
      %5946 = vmatpush1.bf16.msra.mxu0 %v5929
      %5947 = vmatprep.subr.bf16.mxu0 0
      %5948 = vmatpush1.bf16.msra.mxu0 %v5930
      %5949 = vmatprep.subr.bf16.mxu0 0
      %5950 = vmatpush1.bf16.msra.mxu0 %v5931
      %5951 = vmatprep.subr.bf16.mxu0 0
      %5952 = vmatpush1.bf16.msra.mxu0 %v5932
      %5953 = vmatprep.subr.bf16.mxu0 0
      %5954 = vmatpush1.bf16.msra.mxu0 %v5933
      %5955 = vmatprep.subr.bf16.mxu0 0
      %5956 = vmatpush1.bf16.msra.mxu0 %v5934
      %5957 = vmatprep.subr.bf16.mxu0 0
      %5958 = vmatpush1.bf16.msra.mxu0 %v5935
      %5959 = vmatprep.subr.bf16.mxu0 0
      %5960 = vmatpush1.bf16.msra.mxu0 %v5936
      %5961 = vmatprep.subr.bf16.mxu0 0
      %5962 = vmatpush1.bf16.msra.mxu0 0
      %5963 = vmatprep.subr.bf16.mxu0 0
      %5964 = vmatpush1.bf16.msra.mxu0 0
      %5965 = vmatprep.subr.bf16.mxu0 0
      %5966 = vmatpush1.bf16.msra.mxu0 0
      %5967 = vmatprep.subr.bf16.mxu0 0
      %5968 = vmatpush1.bf16.msra.mxu0 0
      %5969 = vmatprep.subr.bf16.mxu0 0
      %5970 = vmatpush1.bf16.msra.mxu0 0
      %5971 = vmatprep.subr.bf16.mxu0 0
      %5972 = vmatpush1.bf16.msra.mxu0 0
      %5973 = vmatprep.subr.bf16.mxu0 0
      %5974 = vmatpush1.bf16.msra.mxu0 0
      %5975 = vmatprep.subr.bf16.mxu0 0
      %5976 = vmatpush1.bf16.msra.mxu0 0
      %5977 = vmatprep.mubr.bf16.mxu0 0
      %5978 = vmatmul.mubr.bf16.gmra.mrb[0].mxu0 %v5746
      %v5979 = vpop.f32.mrb[0].mxu0
      %v5980 = vadd.f32 %v5895, %v5979
      %v5981 = vpop.f32.mrb[0].mxu0
      %v5982 = vpop.f32.mrb[0].mxu0
      %v5983 = vadd.f32 %v5895, %v5982
      %v5984 = vpop.f32.mrb[0].mxu0
      %5985 = vmatprep.mubr.bf16.mxu0 0
      %5986 = vmatmul.mubr.bf16.gmra.mrb[0].mxu0 %v5747
      %v5987 = vpop.f32.mrb[0].mxu0
      %v5988 = vadd.f32 %v5895, %v5987
      %v5989 = vpop.f32.mrb[0].mxu0
      %v5990 = vpop.f32.mrb[0].mxu0
      %v5991 = vadd.f32 %v5895, %v5990
      %v5992 = vpop.f32.mrb[0].mxu0
      %5993 = vmatprep.mubr.bf16.mxu0 0
      %5994 = vmatmul.mubr.bf16.gmra.mrb[0].mxu0 %v5748
      %v5995 = vpop.f32.mrb[0].mxu0
      %v5996 = vadd.f32 %v5895, %v5995
      %v5997 = vpop.f32.mrb[0].mxu0
      %v5998 = vpop.f32.mrb[0].mxu0
      %v5999 = vadd.f32 %v5895, %v5998
      %v6000 = vpop.f32.mrb[0].mxu0
      %6001 = vmatprep.mubr.bf16.mxu0 0
      %6002 = vmatmul.mubr.bf16.gmra.mrb[0].mxu0 %v5749
      %v6003 = vpop.f32.mrb[0].mxu0
      %v6004 = vadd.f32 %v5895, %v6003
      %v6005 = vpop.f32.mrb[0].mxu0
      %v6006 = vpop.f32.mrb[0].mxu0
      %v6007 = vadd.f32 %v5895, %v6006
      %v6008 = vpop.f32.mrb[0].mxu0
      %6009 = vmatprep.mubr.bf16.mxu0 0
      %6010 = vmatmul.mubr.bf16.gmra.mrb[0].mxu0 %v5750
      %v6011 = vpop.f32.mrb[0].mxu0
      %v6012 = vadd.f32 %v5895, %v6011
      %v6013 = vpop.f32.mrb[0].mxu0
      %v6014 = vpop.f32.mrb[0].mxu0
      %v6015 = vadd.f32 %v5895, %v6014
      %v6016 = vpop.f32.mrb[0].mxu0
      %6017 = vmatprep.mubr.bf16.mxu0 0
      %6018 = vmatmul.mubr.bf16.gmra.mrb[0].mxu0 %v5751
      %v6019 = vpop.f32.mrb[0].mxu0
      %v6020 = vadd.f32 %v5895, %v6019
      %v6021 = vpop.f32.mrb[0].mxu0
      %v6022 = vpop.f32.mrb[0].mxu0
      %v6023 = vadd.f32 %v5895, %v6022
      %v6024 = vpop.f32.mrb[0].mxu0
      %6025 = vmatprep.mubr.bf16.mxu0 0
      %6026 = vmatmul.mubr.bf16.gmra.mrb[0].mxu0 %v5752
      %v6027 = vpop.f32.mrb[0].mxu0
      %v6028 = vadd.f32 %v5895, %v6027
      %v6029 = vpop.f32.mrb[0].mxu0
      %v6030 = vpop.f32.mrb[0].mxu0
      %v6031 = vadd.f32 %v5895, %v6030
      %v6032 = vpop.f32.mrb[0].mxu0
      %6033 = vmatprep.mubr.bf16.mxu0 0
      %6034 = vmatmul.mubr.bf16.gmra.mrb[0].mxu0 %v5753
      %v6035 = vpop.f32.mrb[0].mxu0
      %v6036 = vadd.f32 %v5895, %v6035
      %v6037 = vpop.f32.mrb[0].mxu0
      %v6038 = vpop.f32.mrb[0].mxu0
      %v6039 = vadd.f32 %v5895, %v6038
      %v6040 = vpop.f32.mrb[0].mxu0
      %6041 = vmatprep.mubr.bf16.mxu0 0
      %6042 = vmatmul.mubr.bf16.gmra.mrb[0].mxu0 %v5754
      %v6043 = vpop.f32.mrb[0].mxu0
      %v6044 = vadd.f32 %v5895, %v6043
      %v6045 = vpop.f32.mrb[0].mxu0
      %v6046 = vpop.f32.mrb[0].mxu0
      %v6047 = vadd.f32 %v5895, %v6046
      %v6048 = vpop.f32.mrb[0].mxu0
      %6049 = vmatprep.mubr.bf16.mxu0 0
      %6050 = vmatmul.mubr.bf16.gmra.mrb[0].mxu0 %v5755
      %v6051 = vpop.f32.mrb[0].mxu0
      %v6052 = vadd.f32 %v5895, %v6051
      %v6053 = vpop.f32.mrb[0].mxu0
      %v6054 = vpop.f32.mrb[0].mxu0
      %v6055 = vadd.f32 %v5895, %v6054
      %v6056 = vpop.f32.mrb[0].mxu0
      %6057 = vmatprep.mubr.bf16.mxu0 0
      %6058 = vmatmul.mubr.bf16.gmra.mrb[0].mxu0 %v5756
      %v6059 = vpop.f32.mrb[0].mxu0
      %v6060 = vadd.f32 %v5895, %v6059
      %v6061 = vpop.f32.mrb[0].mxu0
      %v6062 = vpop.f32.mrb[0].mxu0
      %v6063 = vadd.f32 %v5895, %v6062
      %v6064 = vpop.f32.mrb[0].mxu0
      %6065 = vmatprep.mubr.bf16.mxu0 0
      %6066 = vmatmul.mubr.bf16.gmra.mrb[0].mxu0 %v5757
      %v6067 = vpop.f32.mrb[0].mxu0
      %v6068 = vadd.f32 %v5895, %v6067
      %v6069 = vpop.f32.mrb[0].mxu0
      %v6070 = vpop.f32.mrb[0].mxu0
      %v6071 = vadd.f32 %v5895, %v6070
      %v6072 = vpop.f32.mrb[0].mxu0
      %6073 = vmatprep.mubr.bf16.mxu0 0
      %6074 = vmatmul.mubr.bf16.gmra.mrb[0].mxu0 %v5758
      %v6075 = vpop.f32.mrb[0].mxu0
      %v6076 = vadd.f32 %v5895, %v6075
      %v6077 = vpop.f32.mrb[0].mxu0
      %v6078 = vpop.f32.mrb[0].mxu0
      %v6079 = vadd.f32 %v5895, %v6078
      %v6080 = vpop.f32.mrb[0].mxu0
      %6081 = vmatprep.mubr.bf16.mxu0 0
      %6082 = vmatmul.mubr.bf16.gmra.mrb[0].mxu0 %v5759
      %v6083 = vpop.f32.mrb[0].mxu0
      %v6084 = vadd.f32 %v5895, %v6083
      %v6085 = vpop.f32.mrb[0].mxu0
      %v6086 = vpop.f32.mrb[0].mxu0
      %v6087 = vadd.f32 %v5895, %v6086
      %v6088 = vpop.f32.mrb[0].mxu0
      %6089 = vmatprep.mubr.bf16.mxu0 0
      %6090 = vmatmul.mubr.bf16.gmra.mrb[0].mxu0 %v5760
      %v6091 = vpop.f32.mrb[0].mxu0
      %v6092 = vadd.f32 %v5895, %v6091
      %v6093 = vpop.f32.mrb[0].mxu0
      %v6094 = vpop.f32.mrb[0].mxu0
      %v6095 = vadd.f32 %v5895, %v6094
      %v6096 = vpop.f32.mrb[0].mxu0
      %6097 = vmatprep.mubr.bf16.mxu0 0
      %6098 = vmatmul.mubr.bf16.gmra.mrb[0].mxu0 %v5761
      %v6099 = vpop.f32.mrb[0].mxu0
      %v6100 = vadd.f32 %v5895, %v6099
      %v6101 = vpop.f32.mrb[0].mxu0
      %v6102 = vpop.f32.mrb[0].mxu0
      %v6103 = vadd.f32 %v5895, %v6102
      %v6104 = vpop.f32.mrb[0].mxu0
      %6105 = vmatprep.mubr.bf16.mxu0 0
      %6106 = vmatmul.mubr.bf16.gmra.mrb[0].mxu0 %v5762
      %v6107 = vpop.f32.mrb[0].mxu0
      %v6108 = vadd.f32 %v5895, %v6107
      %v6109 = vpop.f32.mrb[0].mxu0
      %v6110 = vpop.f32.mrb[0].mxu0
      %v6111 = vadd.f32 %v5895, %v6110
      %v6112 = vpop.f32.mrb[0].mxu0
      %6113 = vmatprep.mubr.bf16.mxu0 0
      %6114 = vmatmul.mubr.bf16.gmra.mrb[0].mxu0 %v5763
      %v6115 = vpop.f32.mrb[0].mxu0
      %v6116 = vadd.f32 %v5895, %v6115
      %v6117 = vpop.f32.mrb[0].mxu0
      %v6118 = vpop.f32.mrb[0].mxu0
      %v6119 = vadd.f32 %v5895, %v6118
      %v6120 = vpop.f32.mrb[0].mxu0
      %6121 = vmatprep.mubr.bf16.mxu0 0
      %6122 = vmatmul.mubr.bf16.gmra.mrb[0].mxu0 %v5764
      %v6123 = vpop.f32.mrb[0].mxu0
      %v6124 = vadd.f32 %v5895, %v6123
      %v6125 = vpop.f32.mrb[0].mxu0
      %v6126 = vpop.f32.mrb[0].mxu0
      %v6127 = vadd.f32 %v5895, %v6126
      %v6128 = vpop.f32.mrb[0].mxu0
      %6129 = vmatprep.mubr.bf16.mxu0 0
      %6130 = vmatmul.mubr.bf16.gmra.mrb[0].mxu0 %v5765
      %v6131 = vpop.f32.mrb[0].mxu0
      %v6132 = vadd.f32 %v5895, %v6131
      %v6133 = vpop.f32.mrb[0].mxu0
      %v6134 = vpop.f32.mrb[0].mxu0
      %v6135 = vadd.f32 %v5895, %v6134
      %v6136 = vpop.f32.mrb[0].mxu0
      %6137 = vmatprep.mubr.bf16.mxu0 0
      %6138 = vmatmul.mubr.bf16.gmra.mrb[0].mxu0 %v5766
      %v6139 = vpop.f32.mrb[0].mxu0
      %v6140 = vadd.f32 %v5895, %v6139
      %v6141 = vpop.f32.mrb[0].mxu0
      %v6142 = vpop.f32.mrb[0].mxu0
      %v6143 = vadd.f32 %v5895, %v6142
      %v6144 = vpop.f32.mrb[0].mxu0
      %6145 = vmatprep.mubr.bf16.mxu0 0
      %6146 = vmatmul.mubr.bf16.gmra.mrb[0].mxu0 %v5767
      %v6147 = vpop.f32.mrb[0].mxu0
      %v6148 = vadd.f32 %v5895, %v6147
      %v6149 = vpop.f32.mrb[0].mxu0
      %v6150 = vpop.f32.mrb[0].mxu0
      %v6151 = vadd.f32 %v5895, %v6150
      %v6152 = vpop.f32.mrb[0].mxu0
      %6153 = vmatprep.mubr.bf16.mxu0 0
      %6154 = vmatmul.mubr.bf16.gmra.mrb[0].mxu0 %v5768
      %v6155 = vpop.f32.mrb[0].mxu0
      %v6156 = vadd.f32 %v5895, %v6155
      %v6157 = vpop.f32.mrb[0].mxu0
      %v6158 = vpop.f32.mrb[0].mxu0
      %v6159 = vadd.f32 %v5895, %v6158
      %v6160 = vpop.f32.mrb[0].mxu0
      %6161 = vmatprep.mubr.bf16.mxu0 0
      %6162 = vmatmul.mubr.bf16.gmra.mrb[0].mxu0 %v5769
      %v6163 = vpop.f32.mrb[0].mxu0
      %v6164 = vadd.f32 %v5895, %v6163
      %v6165 = vpop.f32.mrb[0].mxu0
      %v6166 = vpop.f32.mrb[0].mxu0
      %v6167 = vadd.f32 %v5895, %v6166
      %v6168 = vpop.f32.mrb[0].mxu0
      %6169 = vmatprep.mubr.bf16.mxu0 0
      %6170 = vmatmul.mubr.bf16.gmra.mrb[0].mxu0 %v5770
      %v6171 = vpop.f32.mrb[0].mxu0
      %v6172 = vadd.f32 %v5895, %v6171
      %v6173 = vpop.f32.mrb[0].mxu0
      %v6174 = vpop.f32.mrb[0].mxu0
      %v6175 = vadd.f32 %v5895, %v6174
      %v6176 = vpop.f32.mrb[0].mxu0
      %6177 = vmatprep.mubr.bf16.mxu0 0
      %6178 = vmatmul.mubr.bf16.gmra.mrb[0].mxu0 %v5771
      %v6179 = vpop.f32.mrb[0].mxu0
      %v6180 = vadd.f32 %v5895, %v6179
      %v6181 = vpop.f32.mrb[0].mxu0
      %v6182 = vpop.f32.mrb[0].mxu0
      %v6183 = vadd.f32 %v5895, %v6182
      %v6184 = vpop.f32.mrb[0].mxu0
      %6185 = vmatprep.mubr.bf16.mxu0 0
      %6186 = vmatmul.mubr.bf16.gmra.mrb[0].mxu0 %v5772
      %v6187 = vpop.f32.mrb[0].mxu0
      %v6188 = vadd.f32 %v5895, %v6187
      %v6189 = vpop.f32.mrb[0].mxu0
      %v6190 = vpop.f32.mrb[0].mxu0
      %v6191 = vadd.f32 %v5895, %v6190
      %v6192 = vpop.f32.mrb[0].mxu0
      %6193 = vmatprep.mubr.bf16.mxu0 0
      %6194 = vmatmul.mubr.bf16.gmra.mrb[0].mxu0 %v5773
      %v6195 = vpop.f32.mrb[0].mxu0
      %v6196 = vadd.f32 %v5895, %v6195
      %v6197 = vpop.f32.mrb[0].mxu0
      %v6198 = vpop.f32.mrb[0].mxu0
      %v6199 = vadd.f32 %v5895, %v6198
      %v6200 = vpop.f32.mrb[0].mxu0
      %6201 = vmatprep.mubr.bf16.mxu0 0
      %6202 = vmatmul.mubr.bf16.gmra.mrb[0].mxu0 %v5774
      %v6203 = vpop.f32.mrb[0].mxu0
      %v6204 = vadd.f32 %v5895, %v6203
      %v6205 = vpop.f32.mrb[0].mxu0
      %v6206 = vpop.f32.mrb[0].mxu0
      %v6207 = vadd.f32 %v5895, %v6206
      %v6208 = vpop.f32.mrb[0].mxu0
      %6209 = vmatprep.mubr.bf16.mxu0 0
      %6210 = vmatmul.mubr.bf16.gmra.mrb[0].mxu0 %v5775
      %v6211 = vpop.f32.mrb[0].mxu0
      %v6212 = vadd.f32 %v5895, %v6211
      %v6213 = vpop.f32.mrb[0].mxu0
      %v6214 = vpop.f32.mrb[0].mxu0
      %v6215 = vadd.f32 %v5895, %v6214
      %v6216 = vpop.f32.mrb[0].mxu0
      %6217 = vmatprep.mubr.bf16.mxu0 0
      %6218 = vmatmul.mubr.bf16.gmra.mrb[0].mxu0 %v5776
      %v6219 = vpop.f32.mrb[0].mxu0
      %v6220 = vadd.f32 %v5895, %v6219
      %v6221 = vpop.f32.mrb[0].mxu0
      %v6222 = vpop.f32.mrb[0].mxu0
      %v6223 = vadd.f32 %v5895, %v6222
      %v6224 = vpop.f32.mrb[0].mxu0
      %6225 = vmatprep.mubr.bf16.mxu0 0
      %6226 = vmatmul.mubr.bf16.gmra.mrb[0].mxu0 %v5777
      %v6227 = vpop.f32.mrb[0].mxu0
      %v6228 = vadd.f32 %v5895, %v6227
      %v6229 = vpop.f32.mrb[0].mxu0
      %v6230 = vpop.f32.mrb[0].mxu0
      %v6231 = vadd.f32 %v5895, %v6230
      %v6232 = vpop.f32.mrb[0].mxu0
      %6233 = vmatprep.mubr.bf16.mxu0 0
      %6234 = vmatmul.mubr.bf16.gmra.mrb[0].mxu0 %v5778
      %v6235 = vpop.f32.mrb[0].mxu0
      %v6236 = vadd.f32 %v5895, %v6235
      %v6237 = vpop.f32.mrb[0].mxu0
      %v6238 = vpop.f32.mrb[0].mxu0
      %v6239 = vadd.f32 %v5895, %v6238
      %v6240 = vpop.f32.mrb[0].mxu0
      %6241 = vmatprep.mubr.bf16.mxu0 0
      %6242 = vmatmul.mubr.bf16.gmra.mrb[0].mxu0 %v5779
      %v6243 = vpop.f32.mrb[0].mxu0
      %v6244 = vadd.f32 %v5895, %v6243
      %v6245 = vpop.f32.mrb[0].mxu0
      %v6246 = vpop.f32.mrb[0].mxu0
      %v6247 = vadd.f32 %v5895, %v6246
      %v6248 = vpop.f32.mrb[0].mxu0
      %6249 = vmatprep.mubr.bf16.mxu0 0
      %6250 = vmatmul.mubr.bf16.gmra.mrb[0].mxu0 %v5780
      %v6251 = vpop.f32.mrb[0].mxu0
      %v6252 = vadd.f32 %v5895, %v6251
      %v6253 = vpop.f32.mrb[0].mxu0
      %v6254 = vpop.f32.mrb[0].mxu0
      %v6255 = vadd.f32 %v5895, %v6254
      %v6256 = vpop.f32.mrb[0].mxu0
      %6257 = vmatprep.mubr.bf16.mxu0 0
      %6258 = vmatmul.mubr.bf16.gmra.mrb[0].mxu0 %v5781
      %v6259 = vpop.f32.mrb[0].mxu0
      %v6260 = vadd.f32 %v5895, %v6259
      %v6261 = vpop.f32.mrb[0].mxu0
      %v6262 = vpop.f32.mrb[0].mxu0
      %v6263 = vadd.f32 %v5895, %v6262
      %v6264 = vpop.f32.mrb[0].mxu0
      %6265 = vmatprep.mubr.bf16.mxu0 0
      %6266 = vmatmul.mubr.bf16.gmra.mrb[0].mxu0 %v5782
      %v6267 = vpop.f32.mrb[0].mxu0
      %v6268 = vadd.f32 %v5895, %v6267
      %v6269 = vpop.f32.mrb[0].mxu0
      %v6270 = vpop.f32.mrb[0].mxu0
      %v6271 = vadd.f32 %v5895, %v6270
      %v6272 = vpop.f32.mrb[0].mxu0
      %6273 = vmatprep.mubr.bf16.mxu0 0
      %6274 = vmatmul.mubr.bf16.gmra.mrb[0].mxu0 %v5783
      %v6275 = vpop.f32.mrb[0].mxu0
      %v6276 = vadd.f32 %v5895, %v6275
      %v6277 = vpop.f32.mrb[0].mxu0
      %v6278 = vpop.f32.mrb[0].mxu0
      %v6279 = vadd.f32 %v5895, %v6278
      %v6280 = vpop.f32.mrb[0].mxu0
      %6281 = vmatprep.mubr.bf16.mxu0 0
      %6282 = vmatmul.mubr.bf16.gmra.mrb[0].mxu0 %v5784
      %v6283 = vpop.f32.mrb[0].mxu0
      %v6284 = vadd.f32 %v5895, %v6283
      %v6285 = vpop.f32.mrb[0].mxu0
      %v6286 = vpop.f32.mrb[0].mxu0
      %v6287 = vadd.f32 %v5895, %v6286
      %v6288 = vpop.f32.mrb[0].mxu0
      %6289 = vmatprep.mubr.bf16.mxu0 0
      %6290 = vmatmul.mubr.bf16.gmra.mrb[0].mxu0 %v5785
      %v6291 = vpop.f32.mrb[0].mxu0
      %v6292 = vadd.f32 %v5895, %v6291
      %v6293 = vpop.f32.mrb[0].mxu0
      %v6294 = vpop.f32.mrb[0].mxu0
      %v6295 = vadd.f32 %v5895, %v6294
      %v6296 = vpop.f32.mrb[0].mxu0
      %6297 = vmatprep.mubr.bf16.mxu0 0
      %6298 = vmatmul.mubr.bf16.gmra.mrb[0].mxu0 %v5786
      %v6299 = vpop.f32.mrb[0].mxu0
      %v6300 = vadd.f32 %v5895, %v6299
      %v6301 = vpop.f32.mrb[0].mxu0
      %v6302 = vpop.f32.mrb[0].mxu0
      %v6303 = vadd.f32 %v5895, %v6302
      %v6304 = vpop.f32.mrb[0].mxu0
      %6305 = vmatprep.mubr.bf16.mxu0 0
      %6306 = vmatmul.mubr.bf16.gmra.mrb[0].mxu0 %v5787
      %v6307 = vpop.f32.mrb[0].mxu0
      %v6308 = vadd.f32 %v5895, %v6307
      %v6309 = vpop.f32.mrb[0].mxu0
      %v6310 = vpop.f32.mrb[0].mxu0
      %v6311 = vadd.f32 %v5895, %v6310
      %v6312 = vpop.f32.mrb[0].mxu0
      %6313 = vmatprep.mubr.bf16.mxu0 0
      %6314 = vmatmul.mubr.bf16.gmra.mrb[0].mxu0 %v5788
      %v6315 = vpop.f32.mrb[0].mxu0
      %v6316 = vadd.f32 %v5895, %v6315
      %v6317 = vpop.f32.mrb[0].mxu0
      %v6318 = vpop.f32.mrb[0].mxu0
      %v6319 = vadd.f32 %v5895, %v6318
      %v6320 = vpop.f32.mrb[0].mxu0
      %6321 = vmatprep.mubr.bf16.mxu0 0
      %6322 = vmatmul.mubr.bf16.gmra.mrb[0].mxu0 %v5789
      %v6323 = vpop.f32.mrb[0].mxu0
      %v6324 = vadd.f32 %v5895, %v6323
      %v6325 = vpop.f32.mrb[0].mxu0
      %v6326 = vpop.f32.mrb[0].mxu0
      %v6327 = vadd.f32 %v5895, %v6326
      %v6328 = vpop.f32.mrb[0].mxu0
      %6329 = vmatprep.mubr.bf16.mxu0 0
      %6330 = vmatmul.mubr.bf16.gmra.mrb[0].mxu0 %v5790
      %v6331 = vpop.f32.mrb[0].mxu0
      %v6332 = vadd.f32 %v5895, %v6331
      %v6333 = vpop.f32.mrb[0].mxu0
      %v6334 = vpop.f32.mrb[0].mxu0
      %v6335 = vadd.f32 %v5895, %v6334
      %v6336 = vpop.f32.mrb[0].mxu0
      %6337 = vmatprep.mubr.bf16.mxu0 0
      %6338 = vmatmul.mubr.bf16.gmra.mrb[0].mxu0 %v5791
      %v6339 = vpop.f32.mrb[0].mxu0
      %v6340 = vadd.f32 %v5895, %v6339
      %v6341 = vpop.f32.mrb[0].mxu0
      %v6342 = vpop.f32.mrb[0].mxu0
      %v6343 = vadd.f32 %v5895, %v6342
      %v6344 = vpop.f32.mrb[0].mxu0
      %6345 = vmatprep.mubr.bf16.mxu0 0
      %6346 = vmatmul.mubr.bf16.gmra.mrb[0].mxu0 %v5792
      %v6347 = vpop.f32.mrb[0].mxu0
      %v6348 = vadd.f32 %v5895, %v6347
      %v6349 = vpop.f32.mrb[0].mxu0
      %v6350 = vpop.f32.mrb[0].mxu0
      %v6351 = vadd.f32 %v5895, %v6350
      %v6352 = vpop.f32.mrb[0].mxu0
      %6353 = vmatprep.mubr.bf16.mxu0 0
      %6354 = vmatmul.mubr.bf16.gmra.mrb[0].mxu0 %v5793
      %v6355 = vpop.f32.mrb[0].mxu0
      %v6356 = vadd.f32 %v5895, %v6355
      %v6357 = vpop.f32.mrb[0].mxu0
      %v6358 = vpop.f32.mrb[0].mxu0
      %v6359 = vadd.f32 %v5895, %v6358
      %v6360 = vpop.f32.mrb[0].mxu0
      %6361 = vmatprep.mubr.bf16.mxu0 0
      %6362 = vmatmul.mubr.bf16.gmra.mrb[0].mxu0 %v5794
      %v6363 = vpop.f32.mrb[0].mxu0
      %v6364 = vadd.f32 %v5895, %v6363
      %v6365 = vpop.f32.mrb[0].mxu0
      %v6366 = vpop.f32.mrb[0].mxu0
      %v6367 = vadd.f32 %v5895, %v6366
      %v6368 = vpop.f32.mrb[0].mxu0
      %6369 = vmatprep.mubr.bf16.mxu0 0
      %6370 = vmatmul.mubr.bf16.gmra.mrb[0].mxu0 %v5795
      %v6371 = vpop.f32.mrb[0].mxu0
      %v6372 = vadd.f32 %v5895, %v6371
      %v6373 = vpop.f32.mrb[0].mxu0
      %v6374 = vpop.f32.mrb[0].mxu0
      %v6375 = vadd.f32 %v5895, %v6374
      %v6376 = vpop.f32.mrb[0].mxu0
      %6377 = vmatprep.mubr.bf16.mxu0 0
      %6378 = vmatmul.mubr.bf16.gmra.mrb[0].mxu0 %v5796
      %v6379 = vpop.f32.mrb[0].mxu0
      %v6380 = vadd.f32 %v5895, %v6379
      %v6381 = vpop.f32.mrb[0].mxu0
      %v6382 = vpop.f32.mrb[0].mxu0
      %v6383 = vadd.f32 %v5895, %v6382
      %v6384 = vpop.f32.mrb[0].mxu0
      %6385 = vmatprep.mubr.bf16.mxu0 0
      %6386 = vmatmul.mubr.bf16.gmra.mrb[0].mxu0 %v5797
      %v6387 = vpop.f32.mrb[0].mxu0
      %v6388 = vadd.f32 %v5895, %v6387
      %v6389 = vpop.f32.mrb[0].mxu0
      %v6390 = vpop.f32.mrb[0].mxu0
      %v6391 = vadd.f32 %v5895, %v6390
      %v6392 = vpop.f32.mrb[0].mxu0
      %6393 = vmatprep.mubr.bf16.mxu0 0
      %6394 = vmatmul.mubr.bf16.gmra.mrb[0].mxu0 %v5798
      %v6395 = vpop.f32.mrb[0].mxu0
      %v6396 = vadd.f32 %v5895, %v6395
      %v6397 = vpop.f32.mrb[0].mxu0
      %v6398 = vpop.f32.mrb[0].mxu0
      %v6399 = vadd.f32 %v5895, %v6398
      %v6400 = vpop.f32.mrb[0].mxu0
      %6401 = vmatprep.mubr.bf16.mxu0 0
      %6402 = vmatmul.mubr.bf16.gmra.mrb[0].mxu0 %v5799
      %v6403 = vpop.f32.mrb[0].mxu0
      %v6404 = vadd.f32 %v5895, %v6403
      %v6405 = vpop.f32.mrb[0].mxu0
      %v6406 = vpop.f32.mrb[0].mxu0
      %v6407 = vadd.f32 %v5895, %v6406
      %v6408 = vpop.f32.mrb[0].mxu0
      %6409 = vmatprep.mubr.bf16.mxu0 0
      %6410 = vmatmul.mubr.bf16.gmra.mrb[0].mxu0 %v5800
      %v6411 = vpop.f32.mrb[0].mxu0
      %v6412 = vadd.f32 %v5895, %v6411
      %v6413 = vpop.f32.mrb[0].mxu0
      %v6414 = vpop.f32.mrb[0].mxu0
      %v6415 = vadd.f32 %v5895, %v6414
      %v6416 = vpop.f32.mrb[0].mxu0
      %6417 = vmatprep.mubr.bf16.mxu0 0
      %6418 = vmatmul.mubr.bf16.gmra.mrb[0].mxu0 %v5801
      %v6419 = vpop.f32.mrb[0].mxu0
      %v6420 = vadd.f32 %v5895, %v6419
      %v6421 = vpop.f32.mrb[0].mxu0
      %v6422 = vpop.f32.mrb[0].mxu0
      %v6423 = vadd.f32 %v5895, %v6422
      %v6424 = vpop.f32.mrb[0].mxu0
      %6425 = vmatprep.mubr.bf16.mxu0 0
      %6426 = vmatmul.mubr.bf16.gmra.mrb[0].mxu0 %v5802
      %v6427 = vpop.f32.mrb[0].mxu0
      %v6428 = vadd.f32 %v5895, %v6427
      %v6429 = vpop.f32.mrb[0].mxu0
      %v6430 = vpop.f32.mrb[0].mxu0
      %v6431 = vadd.f32 %v5895, %v6430
      %v6432 = vpop.f32.mrb[0].mxu0
      %6433 = vmatprep.mubr.bf16.mxu0 0
      %6434 = vmatmul.mubr.bf16.gmra.mrb[0].mxu0 %v5803
      %v6435 = vpop.f32.mrb[0].mxu0
      %v6436 = vadd.f32 %v5895, %v6435
      %v6437 = vpop.f32.mrb[0].mxu0
      %v6438 = vpop.f32.mrb[0].mxu0
      %v6439 = vadd.f32 %v5895, %v6438
      %v6440 = vpop.f32.mrb[0].mxu0
      %6441 = vmatprep.mubr.bf16.mxu0 0
      %6442 = vmatmul.mubr.bf16.gmra.mrb[0].mxu0 %v5804
      %v6443 = vpop.f32.mrb[0].mxu0
      %v6444 = vadd.f32 %v5895, %v6443
      %v6445 = vpop.f32.mrb[0].mxu0
      %v6446 = vpop.f32.mrb[0].mxu0
      %v6447 = vadd.f32 %v5895, %v6446
      %v6448 = vpop.f32.mrb[0].mxu0
      %6449 = vmatprep.mubr.bf16.mxu0 0
      %6450 = vmatmul.mubr.bf16.gmra.mrb[0].mxu0 %v5805
      %v6451 = vpop.f32.mrb[0].mxu0
      %v6452 = vadd.f32 %v5895, %v6451
      %v6453 = vpop.f32.mrb[0].mxu0
      %v6454 = vpop.f32.mrb[0].mxu0
      %v6455 = vadd.f32 %v5895, %v6454
      %v6456 = vpop.f32.mrb[0].mxu0
      %6457 = vmatprep.mubr.bf16.mxu0 0
      %6458 = vmatmul.mubr.bf16.gmra.mrb[0].mxu0 %v5806
      %v6459 = vpop.f32.mrb[0].mxu0
      %v6460 = vadd.f32 %v5895, %v6459
      %v6461 = vpop.f32.mrb[0].mxu0
      %v6462 = vpop.f32.mrb[0].mxu0
      %v6463 = vadd.f32 %v5895, %v6462
      %v6464 = vpop.f32.mrb[0].mxu0
      %6465 = vmatprep.mubr.bf16.mxu0 0
      %6466 = vmatmul.mubr.bf16.gmra.mrb[0].mxu0 %v5807
      %v6467 = vpop.f32.mrb[0].mxu0
      %v6468 = vadd.f32 %v5895, %v6467
      %v6469 = vpop.f32.mrb[0].mxu0
      %v6470 = vpop.f32.mrb[0].mxu0
      %v6471 = vadd.f32 %v5895, %v6470
      %v6472 = vpop.f32.mrb[0].mxu0
      %6473 = vmatprep.mubr.bf16.mxu0 0
      %6474 = vmatmul.mubr.bf16.gmra.mrb[0].mxu0 %v5808
      %v6475 = vpop.f32.mrb[0].mxu0
      %v6476 = vadd.f32 %v5895, %v6475
      %v6477 = vpop.f32.mrb[0].mxu0
      %v6478 = vpop.f32.mrb[0].mxu0
      %v6479 = vadd.f32 %v5895, %v6478
      %v6480 = vpop.f32.mrb[0].mxu0
      %6481 = vmatprep.mubr.bf16.mxu0 0
      %6482 = vmatmul.mubr.bf16.gmra.mrb[0].mxu0 %v5809
      %v6483 = vpop.f32.mrb[0].mxu0
      %v6484 = vadd.f32 %v5895, %v6483
      %v6485 = vpop.f32.mrb[0].mxu0
      %v6486 = vpop.f32.mrb[0].mxu0
      %v6487 = vadd.f32 %v5895, %v6486
      %v6488 = vpop.f32.mrb[0].mxu0
      %6489 = vmatprep.mubr.bf16.mxu0 0
      %6490 = vmatmul.mubr.bf16.gmra.mrb[0].mxu0 %v5810
      %v6491 = vpop.f32.mrb[0].mxu0
      %v6492 = vadd.f32 %v5895, %v6491
      %v6493 = vpop.f32.mrb[0].mxu0
      %v6494 = vpop.f32.mrb[0].mxu0
      %v6495 = vadd.f32 %v5895, %v6494
      %v6496 = vpop.f32.mrb[0].mxu0
      %6497 = vmatprep.mubr.bf16.mxu0 0
      %6498 = vmatmul.mubr.bf16.gmra.mrb[0].mxu0 %v5811
      %v6499 = vpop.f32.mrb[0].mxu0
      %v6500 = vadd.f32 %v5895, %v6499
      %v6501 = vpop.f32.mrb[0].mxu0
      %v6502 = vpop.f32.mrb[0].mxu0
      %v6503 = vadd.f32 %v5895, %v6502
      %v6504 = vpop.f32.mrb[0].mxu0
      %6505 = vmatprep.mubr.bf16.mxu0 0
      %6506 = vmatmul.mubr.bf16.gmra.mrb[0].mxu0 %v5812
      %v6507 = vpop.f32.mrb[0].mxu0
      %v6508 = vadd.f32 %v5895, %v6507
      %v6509 = vpop.f32.mrb[0].mxu0
      %v6510 = vpop.f32.mrb[0].mxu0
      %v6511 = vadd.f32 %v5895, %v6510
      %v6512 = vpop.f32.mrb[0].mxu0
      %6513 = vmatprep.mubr.bf16.mxu0 0
      %6514 = vmatmul.mubr.bf16.gmra.mrb[0].mxu0 %v5813
      %v6515 = vpop.f32.mrb[0].mxu0
      %v6516 = vadd.f32 %v5895, %v6515
      %v6517 = vpop.f32.mrb[0].mxu0
      %v6518 = vpop.f32.mrb[0].mxu0
      %v6519 = vadd.f32 %v5895, %v6518
      %v6520 = vpop.f32.mrb[0].mxu0
      %6521 = vmatprep.mubr.bf16.mxu0 0
      %6522 = vmatmul.mubr.bf16.gmra.mrb[0].mxu0 %v5814
      %v6523 = vpop.f32.mrb[0].mxu0
      %v6524 = vadd.f32 %v5895, %v6523
      %v6525 = vpop.f32.mrb[0].mxu0
      %v6526 = vpop.f32.mrb[0].mxu0
      %v6527 = vadd.f32 %v5895, %v6526
      %v6528 = vpop.f32.mrb[0].mxu0
      %6529 = vmatprep.mubr.bf16.mxu0 0
      %6530 = vmatmul.mubr.bf16.gmra.mrb[0].mxu0 %v5815
      %v6531 = vpop.f32.mrb[0].mxu0
      %v6532 = vadd.f32 %v5895, %v6531
      %v6533 = vpop.f32.mrb[0].mxu0
      %v6534 = vpop.f32.mrb[0].mxu0
      %v6535 = vadd.f32 %v5895, %v6534
      %v6536 = vpop.f32.mrb[0].mxu0
      %6537 = vmatprep.mubr.bf16.mxu0 0
      %6538 = vmatmul.mubr.bf16.gmra.mrb[0].mxu0 %v5816
      %v6539 = vpop.f32.mrb[0].mxu0
      %v6540 = vadd.f32 %v5895, %v6539
      %v6541 = vpop.f32.mrb[0].mxu0
      %v6542 = vpop.f32.mrb[0].mxu0
      %v6543 = vadd.f32 %v5895, %v6542
      %v6544 = vpop.f32.mrb[0].mxu0
      %6545 = vmatprep.mubr.bf16.mxu0 0
      %6546 = vmatmul.mubr.bf16.gmra.mrb[0].mxu0 %v5817
      %v6547 = vpop.f32.mrb[0].mxu0
      %v6548 = vadd.f32 %v5895, %v6547
      %v6549 = vpop.f32.mrb[0].mxu0
      %v6550 = vpop.f32.mrb[0].mxu0
      %v6551 = vadd.f32 %v5895, %v6550
      %v6552 = vpop.f32.mrb[0].mxu0
      %6553 = vmatprep.mubr.bf16.mxu0 0
      %6554 = vmatmul.mubr.bf16.gmra.mrb[0].mxu0 %v5818
      %v6555 = vpop.f32.mrb[0].mxu0
      %v6556 = vadd.f32 %v5895, %v6555
      %v6557 = vpop.f32.mrb[0].mxu0
      %v6558 = vpop.f32.mrb[0].mxu0
      %v6559 = vadd.f32 %v5895, %v6558
      %v6560 = vpop.f32.mrb[0].mxu0
      %6561 = vmatprep.mubr.bf16.mxu0 0
      %6562 = vmatmul.mubr.bf16.gmra.mrb[0].mxu0 %v5819
      %v6563 = vpop.f32.mrb[0].mxu0
      %v6564 = vadd.f32 %v5895, %v6563
      %v6565 = vpop.f32.mrb[0].mxu0
      %v6566 = vpop.f32.mrb[0].mxu0
      %v6567 = vadd.f32 %v5895, %v6566
      %v6568 = vpop.f32.mrb[0].mxu0
      %6569 = vmatprep.mubr.bf16.mxu0 0
      %6570 = vmatmul.mubr.bf16.gmra.mrb[0].mxu0 %v5820
      %v6571 = vpop.f32.mrb[0].mxu0
      %v6572 = vadd.f32 %v5895, %v6571
      %v6573 = vpop.f32.mrb[0].mxu0
      %v6574 = vpop.f32.mrb[0].mxu0
      %v6575 = vadd.f32 %v5895, %v6574
      %v6576 = vpop.f32.mrb[0].mxu0
      %6577 = vmatprep.mubr.bf16.mxu0 0
      %6578 = vmatmul.mubr.bf16.gmra.mrb[0].mxu0 %v5821
      %v6579 = vpop.f32.mrb[0].mxu0
      %v6580 = vadd.f32 %v5895, %v6579
      %v6581 = vpop.f32.mrb[0].mxu0
      %v6582 = vpop.f32.mrb[0].mxu0
      %v6583 = vadd.f32 %v5895, %v6582
      %v6584 = vpop.f32.mrb[0].mxu0
      %6585 = vmatprep.mubr.bf16.mxu0 0
      %6586 = vmatmul.mubr.bf16.gmra.mrb[0].mxu0 %v5822
      %v6587 = vpop.f32.mrb[0].mxu0
      %v6588 = vadd.f32 %v5895, %v6587
      %v6589 = vpop.f32.mrb[0].mxu0
      %v6590 = vpop.f32.mrb[0].mxu0
      %v6591 = vadd.f32 %v5895, %v6590
      %v6592 = vpop.f32.mrb[0].mxu0
      %6593 = vmatprep.mubr.bf16.mxu0 0
      %6594 = vmatmul.mubr.bf16.gmra.mrb[0].mxu0 %v5823
      %v6595 = vpop.f32.mrb[0].mxu0
      %v6596 = vadd.f32 %v5895, %v6595
      %v6597 = vpop.f32.mrb[0].mxu0
      %v6598 = vpop.f32.mrb[0].mxu0
      %v6599 = vadd.f32 %v5895, %v6598
      %v6600 = vpop.f32.mrb[0].mxu0
      %6601 = vmatprep.mubr.bf16.mxu0 0
      %6602 = vmatmul.mubr.bf16.gmra.mrb[0].mxu0 %v5824
      %v6603 = vpop.f32.mrb[0].mxu0
      %v6604 = vadd.f32 %v5895, %v6603
      %v6605 = vpop.f32.mrb[0].mxu0
      %v6606 = vpop.f32.mrb[0].mxu0
      %v6607 = vadd.f32 %v5895, %v6606
      %v6608 = vpop.f32.mrb[0].mxu0
      %6609 = vmatprep.mubr.bf16.mxu0 0
      %6610 = vmatmul.mubr.bf16.gmra.mrb[0].mxu0 %v5825
      %v6611 = vpop.f32.mrb[0].mxu0
      %v6612 = vadd.f32 %v5895, %v6611
      %v6613 = vpop.f32.mrb[0].mxu0
      %v6614 = vpop.f32.mrb[0].mxu0
      %v6615 = vadd.f32 %v5895, %v6614
      %v6616 = vpop.f32.mrb[0].mxu0
      %6617 = vmatprep.mubr.bf16.mxu0 0
      %6618 = vmatmul.mubr.bf16.gmra.mrb[0].mxu0 %v5826
      %v6619 = vpop.f32.mrb[0].mxu0
      %v6620 = vadd.f32 %v5895, %v6619
      %v6621 = vpop.f32.mrb[0].mxu0
      %v6622 = vpop.f32.mrb[0].mxu0
      %v6623 = vadd.f32 %v5895, %v6622
      %v6624 = vpop.f32.mrb[0].mxu0
      %6625 = vmatprep.mubr.bf16.mxu0 0
      %6626 = vmatmul.mubr.bf16.gmra.mrb[0].mxu0 %v5827
      %v6627 = vpop.f32.mrb[0].mxu0
      %v6628 = vadd.f32 %v5895, %v6627
      %v6629 = vpop.f32.mrb[0].mxu0
      %v6630 = vpop.f32.mrb[0].mxu0
      %v6631 = vadd.f32 %v5895, %v6630
      %v6632 = vpop.f32.mrb[0].mxu0
      %6633 = vmatprep.mubr.bf16.mxu0 0
      %6634 = vmatmul.mubr.bf16.gmra.mrb[0].mxu0 %v5828
      %v6635 = vpop.f32.mrb[0].mxu0
      %v6636 = vadd.f32 %v5895, %v6635
      %v6637 = vpop.f32.mrb[0].mxu0
      %v6638 = vpop.f32.mrb[0].mxu0
      %v6639 = vadd.f32 %v5895, %v6638
      %v6640 = vpop.f32.mrb[0].mxu0
      %6641 = vmatprep.mubr.bf16.mxu0 0
      %6642 = vmatmul.mubr.bf16.gmra.mrb[0].mxu0 %v5829
      %v6643 = vpop.f32.mrb[0].mxu0
      %v6644 = vadd.f32 %v5895, %v6643
      %v6645 = vpop.f32.mrb[0].mxu0
      %v6646 = vpop.f32.mrb[0].mxu0
      %v6647 = vadd.f32 %v5895, %v6646
      %v6648 = vpop.f32.mrb[0].mxu0
      %6649 = vmatprep.mubr.bf16.mxu0 0
      %6650 = vmatmul.mubr.bf16.gmra.mrb[0].mxu0 %v5830
      %v6651 = vpop.f32.mrb[0].mxu0
      %v6652 = vadd.f32 %v5895, %v6651
      %v6653 = vpop.f32.mrb[0].mxu0
      %v6654 = vpop.f32.mrb[0].mxu0
      %v6655 = vadd.f32 %v5895, %v6654
      %v6656 = vpop.f32.mrb[0].mxu0
      %6657 = vmatprep.mubr.bf16.mxu0 0
      %6658 = vmatmul.mubr.bf16.gmra.mrb[0].mxu0 %v5831
      %v6659 = vpop.f32.mrb[0].mxu0
      %v6660 = vadd.f32 %v5895, %v6659
      %v6661 = vpop.f32.mrb[0].mxu0
      %v6662 = vpop.f32.mrb[0].mxu0
      %v6663 = vadd.f32 %v5895, %v6662
      %v6664 = vpop.f32.mrb[0].mxu0
      %6665 = vmatprep.mubr.bf16.mxu0 0
      %6666 = vmatmul.mubr.bf16.gmra.mrb[0].mxu0 %v5832
      %v6667 = vpop.f32.mrb[0].mxu0
      %v6668 = vadd.f32 %v5895, %v6667
      %v6669 = vpop.f32.mrb[0].mxu0
      %v6670 = vpop.f32.mrb[0].mxu0
      %v6671 = vadd.f32 %v5895, %v6670
      %v6672 = vpop.f32.mrb[0].mxu0
      %6673 = vmatprep.mubr.bf16.mxu0 0
      %6674 = vmatmul.mubr.bf16.gmra.mrb[0].mxu0 %v5833
      %v6675 = vpop.f32.mrb[0].mxu0
      %v6676 = vadd.f32 %v5895, %v6675
      %v6677 = vpop.f32.mrb[0].mxu0
      %v6678 = vpop.f32.mrb[0].mxu0
      %v6679 = vadd.f32 %v5895, %v6678
      %v6680 = vpop.f32.mrb[0].mxu0
      %6681 = vmatprep.mubr.bf16.mxu0 0
      %6682 = vmatmul.mubr.bf16.gmra.mrb[0].mxu0 %v5834
      %v6683 = vpop.f32.mrb[0].mxu0
      %v6684 = vadd.f32 %v5895, %v6683
      %v6685 = vpop.f32.mrb[0].mxu0
      %v6686 = vpop.f32.mrb[0].mxu0
      %v6687 = vadd.f32 %v5895, %v6686
      %v6688 = vpop.f32.mrb[0].mxu0
      %6689 = vmatprep.mubr.bf16.mxu0 0
      %6690 = vmatmul.mubr.bf16.gmra.mrb[0].mxu0 %v5835
      %v6691 = vpop.f32.mrb[0].mxu0
      %v6692 = vadd.f32 %v5895, %v6691
      %v6693 = vpop.f32.mrb[0].mxu0
      %v6694 = vpop.f32.mrb[0].mxu0
      %v6695 = vadd.f32 %v5895, %v6694
      %v6696 = vpop.f32.mrb[0].mxu0
      %6697 = vmatprep.mubr.bf16.mxu0 0
      %6698 = vmatmul.mubr.bf16.gmra.mrb[0].mxu0 %v5836
      %v6699 = vpop.f32.mrb[0].mxu0
      %v6700 = vadd.f32 %v5895, %v6699
      %v6701 = vpop.f32.mrb[0].mxu0
      %v6702 = vpop.f32.mrb[0].mxu0
      %v6703 = vadd.f32 %v5895, %v6702
      %v6704 = vpop.f32.mrb[0].mxu0
      %6705 = vmatprep.mubr.bf16.mxu0 0
      %6706 = vmatmul.mubr.bf16.gmra.mrb[0].mxu0 %v5837
      %v6707 = vpop.f32.mrb[0].mxu0
      %v6708 = vadd.f32 %v5895, %v6707
      %v6709 = vpop.f32.mrb[0].mxu0
      %v6710 = vpop.f32.mrb[0].mxu0
      %v6711 = vadd.f32 %v5895, %v6710
      %v6712 = vpop.f32.mrb[0].mxu0
      %6713 = vmatprep.mubr.bf16.mxu0 0
      %6714 = vmatmul.mubr.bf16.gmra.mrb[0].mxu0 %v5838
      %v6715 = vpop.f32.mrb[0].mxu0
      %v6716 = vadd.f32 %v5895, %v6715
      %v6717 = vpop.f32.mrb[0].mxu0
      %v6718 = vpop.f32.mrb[0].mxu0
      %v6719 = vadd.f32 %v5895, %v6718
      %v6720 = vpop.f32.mrb[0].mxu0
      %6721 = vmatprep.mubr.bf16.mxu0 0
      %6722 = vmatmul.mubr.bf16.gmra.mrb[0].mxu0 %v5839
      %v6723 = vpop.f32.mrb[0].mxu0
      %v6724 = vadd.f32 %v5895, %v6723
      %v6725 = vpop.f32.mrb[0].mxu0
      %v6726 = vpop.f32.mrb[0].mxu0
      %v6727 = vadd.f32 %v5895, %v6726
      %v6728 = vpop.f32.mrb[0].mxu0
      %6729 = vmatprep.mubr.bf16.mxu0 0
      %6730 = vmatmul.mubr.bf16.gmra.mrb[0].mxu0 %v5840
      %v6731 = vpop.f32.mrb[0].mxu0
      %v6732 = vadd.f32 %v5895, %v6731
      %v6733 = vpop.f32.mrb[0].mxu0
      %v6734 = vpop.f32.mrb[0].mxu0
      %v6735 = vadd.f32 %v5895, %v6734
      %v6736 = vpop.f32.mrb[0].mxu0
      %6737 = vmatprep.mubr.bf16.mxu0 0
      %6738 = vmatmul.mubr.bf16.gmra.mrb[0].mxu0 %v5841
      %v6739 = vpop.f32.mrb[0].mxu0
      %v6740 = vadd.f32 %v5895, %v6739
      %v6741 = vpop.f32.mrb[0].mxu0
      %v6742 = vpop.f32.mrb[0].mxu0
      %v6743 = vadd.f32 %v5895, %v6742
      %v6744 = vpop.f32.mrb[0].mxu0
      %6745 = vmatprep.mubr.bf16.mxu0 0
      %6746 = vmatmul.mubr.bf16.gmra.mrb[0].mxu0 %v5842
      %v6747 = vpop.f32.mrb[0].mxu0
      %v6748 = vadd.f32 %v5895, %v6747
      %v6749 = vpop.f32.mrb[0].mxu0
      %v6750 = vpop.f32.mrb[0].mxu0
      %v6751 = vadd.f32 %v5895, %v6750
      %v6752 = vpop.f32.mrb[0].mxu0
      %6753 = vmatprep.mubr.bf16.mxu0 0
      %6754 = vmatmul.mubr.bf16.gmra.mrb[0].mxu0 %v5843
      %v6755 = vpop.f32.mrb[0].mxu0
      %v6756 = vadd.f32 %v5895, %v6755
      %v6757 = vpop.f32.mrb[0].mxu0
      %v6758 = vpop.f32.mrb[0].mxu0
      %v6759 = vadd.f32 %v5895, %v6758
      %v6760 = vpop.f32.mrb[0].mxu0
      %6761 = vmatprep.mubr.bf16.mxu0 0
      %6762 = vmatmul.mubr.bf16.gmra.mrb[0].mxu0 %v5844
      %v6763 = vpop.f32.mrb[0].mxu0
      %v6764 = vadd.f32 %v5895, %v6763
      %v6765 = vpop.f32.mrb[0].mxu0
      %v6766 = vpop.f32.mrb[0].mxu0
      %v6767 = vadd.f32 %v5895, %v6766
      %v6768 = vpop.f32.mrb[0].mxu0
      %6769 = vmatprep.mubr.bf16.mxu0 0
      %6770 = vmatmul.mubr.bf16.gmra.mrb[0].mxu0 %v5845
      %v6771 = vpop.f32.mrb[0].mxu0
      %v6772 = vadd.f32 %v5895, %v6771
      %v6773 = vpop.f32.mrb[0].mxu0
      %v6774 = vpop.f32.mrb[0].mxu0
      %v6775 = vadd.f32 %v5895, %v6774
      %v6776 = vpop.f32.mrb[0].mxu0
      %6777 = vmatprep.mubr.bf16.mxu0 0
      %6778 = vmatmul.mubr.bf16.gmra.mrb[0].mxu0 %v5846
      %v6779 = vpop.f32.mrb[0].mxu0
      %v6780 = vadd.f32 %v5895, %v6779
      %v6781 = vpop.f32.mrb[0].mxu0
      %v6782 = vpop.f32.mrb[0].mxu0
      %v6783 = vadd.f32 %v5895, %v6782
      %v6784 = vpop.f32.mrb[0].mxu0
      %6785 = vmatprep.mubr.bf16.mxu0 0
      %6786 = vmatmul.mubr.bf16.gmra.mrb[0].mxu0 %v5847
      %v6787 = vpop.f32.mrb[0].mxu0
      %v6788 = vadd.f32 %v5895, %v6787
      %v6789 = vpop.f32.mrb[0].mxu0
      %v6790 = vpop.f32.mrb[0].mxu0
      %v6791 = vadd.f32 %v5895, %v6790
      %v6792 = vpop.f32.mrb[0].mxu0
      %6793 = vmatprep.mubr.bf16.mxu0 0
      %6794 = vmatmul.mubr.bf16.gmra.mrb[0].mxu0 %v5848
      %v6795 = vpop.f32.mrb[0].mxu0
      %v6796 = vadd.f32 %v5895, %v6795
      %v6797 = vpop.f32.mrb[0].mxu0
      %v6798 = vpop.f32.mrb[0].mxu0
      %v6799 = vadd.f32 %v5895, %v6798
      %v6800 = vpop.f32.mrb[0].mxu0
      %6801 = vmatprep.mubr.bf16.mxu0 0
      %6802 = vmatmul.mubr.bf16.gmra.mrb[0].mxu0 %v5849
      %v6803 = vpop.f32.mrb[0].mxu0
      %v6804 = vadd.f32 %v5895, %v6803
      %v6805 = vpop.f32.mrb[0].mxu0
      %v6806 = vpop.f32.mrb[0].mxu0
      %v6807 = vadd.f32 %v5895, %v6806
      %v6808 = vpop.f32.mrb[0].mxu0
      %6809 = vmatprep.mubr.bf16.mxu0 0
      %6810 = vmatmul.mubr.bf16.gmra.mrb[0].mxu0 %v5850
      %v6811 = vpop.f32.mrb[0].mxu0
      %v6812 = vadd.f32 %v5895, %v6811
      %v6813 = vpop.f32.mrb[0].mxu0
      %v6814 = vpop.f32.mrb[0].mxu0
      %v6815 = vadd.f32 %v5895, %v6814
      %v6816 = vpop.f32.mrb[0].mxu0
      %6817 = vmatprep.mubr.bf16.mxu0 0
      %6818 = vmatmul.mubr.bf16.gmra.mrb[0].mxu0 %v5851
      %v6819 = vpop.f32.mrb[0].mxu0
      %v6820 = vadd.f32 %v5895, %v6819
      %v6821 = vpop.f32.mrb[0].mxu0
      %v6822 = vpop.f32.mrb[0].mxu0
      %v6823 = vadd.f32 %v5895, %v6822
      %v6824 = vpop.f32.mrb[0].mxu0
      %6825 = vmatprep.mubr.bf16.mxu0 0
      %6826 = vmatmul.mubr.bf16.gmra.mrb[0].mxu0 %v5852
      %v6827 = vpop.f32.mrb[0].mxu0
      %v6828 = vadd.f32 %v5895, %v6827
      %v6829 = vpop.f32.mrb[0].mxu0
      %v6830 = vpop.f32.mrb[0].mxu0
      %v6831 = vadd.f32 %v5895, %v6830
      %v6832 = vpop.f32.mrb[0].mxu0
      %6833 = vmatprep.mubr.bf16.mxu0 0
      %6834 = vmatmul.mubr.bf16.gmra.mrb[0].mxu0 %v5853
      %v6835 = vpop.f32.mrb[0].mxu0
      %v6836 = vadd.f32 %v5895, %v6835
      %v6837 = vpop.f32.mrb[0].mxu0
      %v6838 = vpop.f32.mrb[0].mxu0
      %v6839 = vadd.f32 %v5895, %v6838
      %v6840 = vpop.f32.mrb[0].mxu0
      %6841 = vmatprep.mubr.bf16.mxu0 0
      %6842 = vmatmul.mubr.bf16.gmra.mrb[0].mxu0 %v5854
      %v6843 = vpop.f32.mrb[0].mxu0
      %v6844 = vadd.f32 %v5895, %v6843
      %v6845 = vpop.f32.mrb[0].mxu0
      %v6846 = vpop.f32.mrb[0].mxu0
      %v6847 = vadd.f32 %v5895, %v6846
      %v6848 = vpop.f32.mrb[0].mxu0
      %6849 = vmatprep.mubr.bf16.mxu0 0
      %6850 = vmatmul.mubr.bf16.gmra.mrb[0].mxu0 %v5855
      %v6851 = vpop.f32.mrb[0].mxu0
      %v6852 = vadd.f32 %v5895, %v6851
      %v6853 = vpop.f32.mrb[0].mxu0
      %v6854 = vpop.f32.mrb[0].mxu0
      %v6855 = vadd.f32 %v5895, %v6854
      %v6856 = vpop.f32.mrb[0].mxu0
      %6857 = vmatprep.mubr.bf16.mxu0 0
      %6858 = vmatmul.mubr.bf16.gmra.mrb[0].mxu0 %v5856
      %v6859 = vpop.f32.mrb[0].mxu0
      %v6860 = vadd.f32 %v5895, %v6859
      %v6861 = vpop.f32.mrb[0].mxu0
      %v6862 = vpop.f32.mrb[0].mxu0
      %v6863 = vadd.f32 %v5895, %v6862
      %v6864 = vpop.f32.mrb[0].mxu0
      %6865 = vmatprep.mubr.bf16.mxu0 0
      %6866 = vmatmul.mubr.bf16.gmra.mrb[0].mxu0 %v5857
      %v6867 = vpop.f32.mrb[0].mxu0
      %v6868 = vadd.f32 %v5895, %v6867
      %v6869 = vpop.f32.mrb[0].mxu0
      %v6870 = vpop.f32.mrb[0].mxu0
      %v6871 = vadd.f32 %v5895, %v6870
      %v6872 = vpop.f32.mrb[0].mxu0
      %6873 = vmatprep.mubr.bf16.mxu0 0
      %6874 = vmatmul.mubr.bf16.gmra.mrb[0].mxu0 %v5858
      %v6875 = vpop.f32.mrb[0].mxu0
      %v6876 = vadd.f32 %v5895, %v6875
      %v6877 = vpop.f32.mrb[0].mxu0
      %v6878 = vpop.f32.mrb[0].mxu0
      %v6879 = vadd.f32 %v5895, %v6878
      %v6880 = vpop.f32.mrb[0].mxu0
      %6881 = vmatprep.mubr.bf16.mxu0 0
      %6882 = vmatmul.mubr.bf16.gmra.mrb[0].mxu0 %v5859
      %v6883 = vpop.f32.mrb[0].mxu0
      %v6884 = vadd.f32 %v5895, %v6883
      %v6885 = vpop.f32.mrb[0].mxu0
      %v6886 = vpop.f32.mrb[0].mxu0
      %v6887 = vadd.f32 %v5895, %v6886
      %v6888 = vpop.f32.mrb[0].mxu0
      %6889 = vmatprep.mubr.bf16.mxu0 0
      %6890 = vmatmul.mubr.bf16.gmra.mrb[0].mxu0 %v5860
      %v6891 = vpop.f32.mrb[0].mxu0
      %v6892 = vadd.f32 %v5895, %v6891
      %v6893 = vpop.f32.mrb[0].mxu0
      %v6894 = vpop.f32.mrb[0].mxu0
      %v6895 = vadd.f32 %v5895, %v6894
      %v6896 = vpop.f32.mrb[0].mxu0
      %6897 = vmatprep.mubr.bf16.mxu0 0
      %6898 = vmatmul.mubr.bf16.gmra.mrb[0].mxu0 %v5861
      %v6899 = vpop.f32.mrb[0].mxu0
      %v6900 = vadd.f32 %v5895, %v6899
      %v6901 = vpop.f32.mrb[0].mxu0
      %v6902 = vpop.f32.mrb[0].mxu0
      %v6903 = vadd.f32 %v5895, %v6902
      %v6904 = vpop.f32.mrb[0].mxu0
      %6905 = vmatprep.mubr.bf16.mxu0 0
      %6906 = vmatmul.mubr.bf16.gmra.mrb[0].mxu0 %v5862
      %v6907 = vpop.f32.mrb[0].mxu0
      %v6908 = vadd.f32 %v5895, %v6907
      %v6909 = vpop.f32.mrb[0].mxu0
      %v6910 = vpop.f32.mrb[0].mxu0
      %v6911 = vadd.f32 %v5895, %v6910
      %v6912 = vpop.f32.mrb[0].mxu0
      %6913 = vmatprep.mubr.bf16.mxu0 0
      %6914 = vmatmul.mubr.bf16.gmra.mrb[0].mxu0 %v5863
      %v6915 = vpop.f32.mrb[0].mxu0
      %v6916 = vadd.f32 %v5895, %v6915
      %v6917 = vpop.f32.mrb[0].mxu0
      %v6918 = vpop.f32.mrb[0].mxu0
      %v6919 = vadd.f32 %v5895, %v6918
      %v6920 = vpop.f32.mrb[0].mxu0
      %6921 = vmatprep.mubr.bf16.mxu0 0
      %6922 = vmatmul.mubr.bf16.gmra.mrb[0].mxu0 %v5864
      %v6923 = vpop.f32.mrb[0].mxu0
      %v6924 = vadd.f32 %v5895, %v6923
      %v6925 = vpop.f32.mrb[0].mxu0
      %v6926 = vpop.f32.mrb[0].mxu0
      %v6927 = vadd.f32 %v5895, %v6926
      %v6928 = vpop.f32.mrb[0].mxu0
      %6929 = vmatprep.mubr.bf16.mxu0 0
      %6930 = vmatmul.mubr.bf16.gmra.mrb[0].mxu0 %v5865
      %v6931 = vpop.f32.mrb[0].mxu0
      %v6932 = vadd.f32 %v5895, %v6931
      %v6933 = vpop.f32.mrb[0].mxu0
      %v6934 = vpop.f32.mrb[0].mxu0
      %v6935 = vadd.f32 %v5895, %v6934
      %v6936 = vpop.f32.mrb[0].mxu0
      %6937 = vmatprep.mubr.bf16.mxu0 0
      %6938 = vmatmul.mubr.bf16.gmra.mrb[0].mxu0 %v5866
      %v6939 = vpop.f32.mrb[0].mxu0
      %v6940 = vadd.f32 %v5895, %v6939
      %v6941 = vpop.f32.mrb[0].mxu0
      %v6942 = vpop.f32.mrb[0].mxu0
      %v6943 = vadd.f32 %v5895, %v6942
      %v6944 = vpop.f32.mrb[0].mxu0
      %6945 = vmatprep.mubr.bf16.mxu0 0
      %6946 = vmatmul.mubr.bf16.gmra.mrb[0].mxu0 %v5867
      %v6947 = vpop.f32.mrb[0].mxu0
      %v6948 = vadd.f32 %v5895, %v6947
      %v6949 = vpop.f32.mrb[0].mxu0
      %v6950 = vpop.f32.mrb[0].mxu0
      %v6951 = vadd.f32 %v5895, %v6950
      %v6952 = vpop.f32.mrb[0].mxu0
      %6953 = vmatprep.mubr.bf16.mxu0 0
      %6954 = vmatmul.mubr.bf16.gmra.mrb[0].mxu0 %v5868
      %v6955 = vpop.f32.mrb[0].mxu0
      %v6956 = vadd.f32 %v5895, %v6955
      %v6957 = vpop.f32.mrb[0].mxu0
      %v6958 = vpop.f32.mrb[0].mxu0
      %v6959 = vadd.f32 %v5895, %v6958
      %v6960 = vpop.f32.mrb[0].mxu0
      %6961 = vmatprep.mubr.bf16.mxu0 0
      %6962 = vmatmul.mubr.bf16.gmra.mrb[0].mxu0 %v5869
      %v6963 = vpop.f32.mrb[0].mxu0
      %v6964 = vadd.f32 %v5895, %v6963
      %v6965 = vpop.f32.mrb[0].mxu0
      %v6966 = vpop.f32.mrb[0].mxu0
      %v6967 = vadd.f32 %v5895, %v6966
      %v6968 = vpop.f32.mrb[0].mxu0
      %6969 = vmatprep.mubr.bf16.mxu0 0
      %6970 = vmatmul.mubr.bf16.gmra.mrb[0].mxu0 %v5870
      %v6971 = vpop.f32.mrb[0].mxu0
      %v6972 = vadd.f32 %v5895, %v6971
      %v6973 = vpop.f32.mrb[0].mxu0
      %v6974 = vpop.f32.mrb[0].mxu0
      %v6975 = vadd.f32 %v5895, %v6974
      %v6976 = vpop.f32.mrb[0].mxu0
      %6977 = vmatprep.mubr.bf16.mxu0 0
      %6978 = vmatmul.mubr.bf16.gmra.mrb[0].mxu0 %v5871
      %v6979 = vpop.f32.mrb[0].mxu0
      %v6980 = vadd.f32 %v5895, %v6979
      %v6981 = vpop.f32.mrb[0].mxu0
      %v6982 = vpop.f32.mrb[0].mxu0
      %v6983 = vadd.f32 %v5895, %v6982
      %v6984 = vpop.f32.mrb[0].mxu0
      %6985 = vmatprep.mubr.bf16.mxu0 0
      %6986 = vmatmul.mubr.bf16.gmra.mrb[0].mxu0 %v5872
      %v6987 = vpop.f32.mrb[0].mxu0
      %v6988 = vadd.f32 %v5895, %v6987
      %v6989 = vpop.f32.mrb[0].mxu0
      %v6990 = vpop.f32.mrb[0].mxu0
      %v6991 = vadd.f32 %v5895, %v6990
      %v6992 = vpop.f32.mrb[0].mxu0
      %6993 = vmatprep.mubr.bf16.mxu0 0
      %6994 = vmatmul.mubr.bf16.gmra.mrb[0].mxu0 %v5873
      %v6995 = vpop.f32.mrb[0].mxu0
      %v6996 = vadd.f32 %v5895, %v6995
      %v6997 = vpop.f32.mrb[0].mxu0
      %v6998 = vpop.f32.mrb[0].mxu0
      %v6999 = vadd.f32 %v5895, %v6998
      %v7000 = vpop.f32.mrb[0].mxu0
      %7001 = vdwg.mxu0
      %vm7002 = vcmp.lt.s32.totalorder %v203, 32
      %v7003 = vsel %vm7002, %v5980, -1e+30
      %v7004 = vsel %vm7002, %v5983, -1e+30
      %v7005 = vsel %vm7002, %v5988, -1e+30
      %v7006 = vsel %vm7002, %v5991, -1e+30
      %v7007 = vsel %vm7002, %v5996, -1e+30
      %v7008 = vsel %vm7002, %v5999, -1e+30
      %v7009 = vsel %vm7002, %v6004, -1e+30
      %v7010 = vsel %vm7002, %v6007, -1e+30
      %v7011 = vsel %vm7002, %v6012, -1e+30
      %v7012 = vsel %vm7002, %v6015, -1e+30
      %v7013 = vsel %vm7002, %v6020, -1e+30
      %v7014 = vsel %vm7002, %v6023, -1e+30
      %v7015 = vsel %vm7002, %v6028, -1e+30
      %v7016 = vsel %vm7002, %v6031, -1e+30
      %v7017 = vsel %vm7002, %v6036, -1e+30
      %v7018 = vsel %vm7002, %v6039, -1e+30
      %v7019 = vsel %vm7002, %v6044, -1e+30
      %v7020 = vsel %vm7002, %v6047, -1e+30
      %v7021 = vsel %vm7002, %v6052, -1e+30
      %v7022 = vsel %vm7002, %v6055, -1e+30
      %v7023 = vsel %vm7002, %v6060, -1e+30
      %v7024 = vsel %vm7002, %v6063, -1e+30
      %v7025 = vsel %vm7002, %v6068, -1e+30
      %v7026 = vsel %vm7002, %v6071, -1e+30
      %v7027 = vsel %vm7002, %v6076, -1e+30
      %v7028 = vsel %vm7002, %v6079, -1e+30
      %v7029 = vsel %vm7002, %v6084, -1e+30
      %v7030 = vsel %vm7002, %v6087, -1e+30
      %v7031 = vsel %vm7002, %v6092, -1e+30
      %v7032 = vsel %vm7002, %v6095, -1e+30
      %v7033 = vsel %vm7002, %v6100, -1e+30
      %v7034 = vsel %vm7002, %v6103, -1e+30
      %v7035 = vsel %vm7002, %v6108, -1e+30
      %v7036 = vsel %vm7002, %v6111, -1e+30
      %v7037 = vsel %vm7002, %v6116, -1e+30
      %v7038 = vsel %vm7002, %v6119, -1e+30
      %v7039 = vsel %vm7002, %v6124, -1e+30
      %v7040 = vsel %vm7002, %v6127, -1e+30
      %v7041 = vsel %vm7002, %v6132, -1e+30
      %v7042 = vsel %vm7002, %v6135, -1e+30
      %v7043 = vsel %vm7002, %v6140, -1e+30
      %v7044 = vsel %vm7002, %v6143, -1e+30
      %v7045 = vsel %vm7002, %v6148, -1e+30
      %v7046 = vsel %vm7002, %v6151, -1e+30
      %v7047 = vsel %vm7002, %v6156, -1e+30
      %v7048 = vsel %vm7002, %v6159, -1e+30
      %v7049 = vsel %vm7002, %v6164, -1e+30
      %v7050 = vsel %vm7002, %v6167, -1e+30
      %v7051 = vsel %vm7002, %v6172, -1e+30
      %v7052 = vsel %vm7002, %v6175, -1e+30
      %v7053 = vsel %vm7002, %v6180, -1e+30
      %v7054 = vsel %vm7002, %v6183, -1e+30
      %v7055 = vsel %vm7002, %v6188, -1e+30
      %v7056 = vsel %vm7002, %v6191, -1e+30
      %v7057 = vsel %vm7002, %v6196, -1e+30
      %v7058 = vsel %vm7002, %v6199, -1e+30
      %v7059 = vsel %vm7002, %v6204, -1e+30
      %v7060 = vsel %vm7002, %v6207, -1e+30
      %v7061 = vsel %vm7002, %v6212, -1e+30
      %v7062 = vsel %vm7002, %v6215, -1e+30
      %v7063 = vsel %vm7002, %v6220, -1e+30
      %v7064 = vsel %vm7002, %v6223, -1e+30
      %v7065 = vsel %vm7002, %v6228, -1e+30
      %v7066 = vsel %vm7002, %v6231, -1e+30
      %v7067 = vsel %vm7002, %v6236, -1e+30
      %v7068 = vsel %vm7002, %v6239, -1e+30
      %v7069 = vsel %vm7002, %v6244, -1e+30
      %v7070 = vsel %vm7002, %v6247, -1e+30
      %v7071 = vsel %vm7002, %v6252, -1e+30
      %v7072 = vsel %vm7002, %v6255, -1e+30
      %v7073 = vsel %vm7002, %v6260, -1e+30
      %v7074 = vsel %vm7002, %v6263, -1e+30
      %v7075 = vsel %vm7002, %v6268, -1e+30
      %v7076 = vsel %vm7002, %v6271, -1e+30
      %v7077 = vsel %vm7002, %v6276, -1e+30
      %v7078 = vsel %vm7002, %v6279, -1e+30
      %v7079 = vsel %vm7002, %v6284, -1e+30
      %v7080 = vsel %vm7002, %v6287, -1e+30
      %v7081 = vsel %vm7002, %v6292, -1e+30
      %v7082 = vsel %vm7002, %v6295, -1e+30
      %v7083 = vsel %vm7002, %v6300, -1e+30
      %v7084 = vsel %vm7002, %v6303, -1e+30
      %v7085 = vsel %vm7002, %v6308, -1e+30
      %v7086 = vsel %vm7002, %v6311, -1e+30
      %v7087 = vsel %vm7002, %v6316, -1e+30
      %v7088 = vsel %vm7002, %v6319, -1e+30
      %v7089 = vsel %vm7002, %v6324, -1e+30
      %v7090 = vsel %vm7002, %v6327, -1e+30
      %v7091 = vsel %vm7002, %v6332, -1e+30
      %v7092 = vsel %vm7002, %v6335, -1e+30
      %v7093 = vsel %vm7002, %v6340, -1e+30
      %v7094 = vsel %vm7002, %v6343, -1e+30
      %v7095 = vsel %vm7002, %v6348, -1e+30
      %v7096 = vsel %vm7002, %v6351, -1e+30
      %v7097 = vsel %vm7002, %v6356, -1e+30
      %v7098 = vsel %vm7002, %v6359, -1e+30
      %v7099 = vsel %vm7002, %v6364, -1e+30
      %v7100 = vsel %vm7002, %v6367, -1e+30
      %v7101 = vsel %vm7002, %v6372, -1e+30
      %v7102 = vsel %vm7002, %v6375, -1e+30
      %v7103 = vsel %vm7002, %v6380, -1e+30
      %v7104 = vsel %vm7002, %v6383, -1e+30
      %v7105 = vsel %vm7002, %v6388, -1e+30
      %v7106 = vsel %vm7002, %v6391, -1e+30
      %v7107 = vsel %vm7002, %v6396, -1e+30
      %v7108 = vsel %vm7002, %v6399, -1e+30
      %v7109 = vsel %vm7002, %v6404, -1e+30
      %v7110 = vsel %vm7002, %v6407, -1e+30
      %v7111 = vsel %vm7002, %v6412, -1e+30
      %v7112 = vsel %vm7002, %v6415, -1e+30
      %v7113 = vsel %vm7002, %v6420, -1e+30
      %v7114 = vsel %vm7002, %v6423, -1e+30
      %v7115 = vsel %vm7002, %v6428, -1e+30
      %v7116 = vsel %vm7002, %v6431, -1e+30
      %v7117 = vsel %vm7002, %v6436, -1e+30
      %v7118 = vsel %vm7002, %v6439, -1e+30
      %v7119 = vsel %vm7002, %v6444, -1e+30
      %v7120 = vsel %vm7002, %v6447, -1e+30
      %v7121 = vsel %vm7002, %v6452, -1e+30
      %v7122 = vsel %vm7002, %v6455, -1e+30
      %v7123 = vsel %vm7002, %v6460, -1e+30
      %v7124 = vsel %vm7002, %v6463, -1e+30
      %v7125 = vsel %vm7002, %v6468, -1e+30
      %v7126 = vsel %vm7002, %v6471, -1e+30
      %v7127 = vsel %vm7002, %v6476, -1e+30
      %v7128 = vsel %vm7002, %v6479, -1e+30
      %v7129 = vsel %vm7002, %v6484, -1e+30
      %v7130 = vsel %vm7002, %v6487, -1e+30
      %v7131 = vsel %vm7002, %v6492, -1e+30
      %v7132 = vsel %vm7002, %v6495, -1e+30
      %v7133 = vsel %vm7002, %v6500, -1e+30
      %v7134 = vsel %vm7002, %v6503, -1e+30
      %v7135 = vsel %vm7002, %v6508, -1e+30
      %v7136 = vsel %vm7002, %v6511, -1e+30
      %v7137 = vsel %vm7002, %v6516, -1e+30
      %v7138 = vsel %vm7002, %v6519, -1e+30
      %v7139 = vsel %vm7002, %v6524, -1e+30
      %v7140 = vsel %vm7002, %v6527, -1e+30
      %v7141 = vsel %vm7002, %v6532, -1e+30
      %v7142 = vsel %vm7002, %v6535, -1e+30
      %v7143 = vsel %vm7002, %v6540, -1e+30
      %v7144 = vsel %vm7002, %v6543, -1e+30
      %v7145 = vsel %vm7002, %v6548, -1e+30
      %v7146 = vsel %vm7002, %v6551, -1e+30
      %v7147 = vsel %vm7002, %v6556, -1e+30
      %v7148 = vsel %vm7002, %v6559, -1e+30
      %v7149 = vsel %vm7002, %v6564, -1e+30
      %v7150 = vsel %vm7002, %v6567, -1e+30
      %v7151 = vsel %vm7002, %v6572, -1e+30
      %v7152 = vsel %vm7002, %v6575, -1e+30
      %v7153 = vsel %vm7002, %v6580, -1e+30
      %v7154 = vsel %vm7002, %v6583, -1e+30
      %v7155 = vsel %vm7002, %v6588, -1e+30
      %v7156 = vsel %vm7002, %v6591, -1e+30
      %v7157 = vsel %vm7002, %v6596, -1e+30
      %v7158 = vsel %vm7002, %v6599, -1e+30
      %v7159 = vsel %vm7002, %v6604, -1e+30
      %v7160 = vsel %vm7002, %v6607, -1e+30
      %v7161 = vsel %vm7002, %v6612, -1e+30
      %v7162 = vsel %vm7002, %v6615, -1e+30
      %v7163 = vsel %vm7002, %v6620, -1e+30
      %v7164 = vsel %vm7002, %v6623, -1e+30
      %v7165 = vsel %vm7002, %v6628, -1e+30
      %v7166 = vsel %vm7002, %v6631, -1e+30
      %v7167 = vsel %vm7002, %v6636, -1e+30
      %v7168 = vsel %vm7002, %v6639, -1e+30
      %v7169 = vsel %vm7002, %v6644, -1e+30
      %v7170 = vsel %vm7002, %v6647, -1e+30
      %v7171 = vsel %vm7002, %v6652, -1e+30
      %v7172 = vsel %vm7002, %v6655, -1e+30
      %v7173 = vsel %vm7002, %v6660, -1e+30
      %v7174 = vsel %vm7002, %v6663, -1e+30
      %v7175 = vsel %vm7002, %v6668, -1e+30
      %v7176 = vsel %vm7002, %v6671, -1e+30
      %v7177 = vsel %vm7002, %v6676, -1e+30
      %v7178 = vsel %vm7002, %v6679, -1e+30
      %v7179 = vsel %vm7002, %v6684, -1e+30
      %v7180 = vsel %vm7002, %v6687, -1e+30
      %v7181 = vsel %vm7002, %v6692, -1e+30
      %v7182 = vsel %vm7002, %v6695, -1e+30
      %v7183 = vsel %vm7002, %v6700, -1e+30
      %v7184 = vsel %vm7002, %v6703, -1e+30
      %v7185 = vsel %vm7002, %v6708, -1e+30
      %v7186 = vsel %vm7002, %v6711, -1e+30
      %v7187 = vsel %vm7002, %v6716, -1e+30
      %v7188 = vsel %vm7002, %v6719, -1e+30
      %v7189 = vsel %vm7002, %v6724, -1e+30
      %v7190 = vsel %vm7002, %v6727, -1e+30
      %v7191 = vsel %vm7002, %v6732, -1e+30
      %v7192 = vsel %vm7002, %v6735, -1e+30
      %v7193 = vsel %vm7002, %v6740, -1e+30
      %v7194 = vsel %vm7002, %v6743, -1e+30
      %v7195 = vsel %vm7002, %v6748, -1e+30
      %v7196 = vsel %vm7002, %v6751, -1e+30
      %v7197 = vsel %vm7002, %v6756, -1e+30
      %v7198 = vsel %vm7002, %v6759, -1e+30
      %v7199 = vsel %vm7002, %v6764, -1e+30
      %v7200 = vsel %vm7002, %v6767, -1e+30
      %v7201 = vsel %vm7002, %v6772, -1e+30
      %v7202 = vsel %vm7002, %v6775, -1e+30
      %v7203 = vsel %vm7002, %v6780, -1e+30
      %v7204 = vsel %vm7002, %v6783, -1e+30
      %v7205 = vsel %vm7002, %v6788, -1e+30
      %v7206 = vsel %vm7002, %v6791, -1e+30
      %v7207 = vsel %vm7002, %v6796, -1e+30
      %v7208 = vsel %vm7002, %v6799, -1e+30
      %v7209 = vsel %vm7002, %v6804, -1e+30
      %v7210 = vsel %vm7002, %v6807, -1e+30
      %v7211 = vsel %vm7002, %v6812, -1e+30
      %v7212 = vsel %vm7002, %v6815, -1e+30
      %v7213 = vsel %vm7002, %v6820, -1e+30
      %v7214 = vsel %vm7002, %v6823, -1e+30
      %v7215 = vsel %vm7002, %v6828, -1e+30
      %v7216 = vsel %vm7002, %v6831, -1e+30
      %v7217 = vsel %vm7002, %v6836, -1e+30
      %v7218 = vsel %vm7002, %v6839, -1e+30
      %v7219 = vsel %vm7002, %v6844, -1e+30
      %v7220 = vsel %vm7002, %v6847, -1e+30
      %v7221 = vsel %vm7002, %v6852, -1e+30
      %v7222 = vsel %vm7002, %v6855, -1e+30
      %v7223 = vsel %vm7002, %v6860, -1e+30
      %v7224 = vsel %vm7002, %v6863, -1e+30
      %v7225 = vsel %vm7002, %v6868, -1e+30
      %v7226 = vsel %vm7002, %v6871, -1e+30
      %v7227 = vsel %vm7002, %v6876, -1e+30
      %v7228 = vsel %vm7002, %v6879, -1e+30
      %v7229 = vsel %vm7002, %v6884, -1e+30
      %v7230 = vsel %vm7002, %v6887, -1e+30
      %v7231 = vsel %vm7002, %v6892, -1e+30
      %v7232 = vsel %vm7002, %v6895, -1e+30
      %v7233 = vsel %vm7002, %v6900, -1e+30
      %v7234 = vsel %vm7002, %v6903, -1e+30
      %v7235 = vsel %vm7002, %v6908, -1e+30
      %v7236 = vsel %vm7002, %v6911, -1e+30
      %v7237 = vsel %vm7002, %v6916, -1e+30
      %v7238 = vsel %vm7002, %v6919, -1e+30
      %v7239 = vsel %vm7002, %v6924, -1e+30
      %v7240 = vsel %vm7002, %v6927, -1e+30
      %v7241 = vsel %vm7002, %v6932, -1e+30
      %v7242 = vsel %vm7002, %v6935, -1e+30
      %v7243 = vsel %vm7002, %v6940, -1e+30
      %v7244 = vsel %vm7002, %v6943, -1e+30
      %v7245 = vsel %vm7002, %v6948, -1e+30
      %v7246 = vsel %vm7002, %v6951, -1e+30
      %v7247 = vsel %vm7002, %v6956, -1e+30
      %v7248 = vsel %vm7002, %v6959, -1e+30
      %v7249 = vsel %vm7002, %v6964, -1e+30
      %v7250 = vsel %vm7002, %v6967, -1e+30
      %v7251 = vsel %vm7002, %v6972, -1e+30
      %v7252 = vsel %vm7002, %v6975, -1e+30
      %v7253 = vsel %vm7002, %v6980, -1e+30
      %v7254 = vsel %vm7002, %v6983, -1e+30
      %v7255 = vsel %vm7002, %v6988, -1e+30
      %v7256 = vsel %vm7002, %v6991, -1e+30
      %v7257 = vsel %vm7002, %v6996, -1e+30
      %v7258 = vsel %vm7002, %v6999, -1e+30
      %7259 = vmax.xlane.f32.xlu0 %v7003
      %v7260 = vpop.xlane.xlu0 %7259
      %7261 = vmax.xlane.f32.xlu0 %v7004
      %v7262 = vpop.xlane.xlu0 %7261
      %7263 = vmax.xlane.f32.xlu0 %v7005
      %v7264 = vpop.xlane.xlu0 %7263
      %7265 = vmax.xlane.f32.xlu0 %v7006
      %v7266 = vpop.xlane.xlu0 %7265
      %7267 = vmax.xlane.f32.xlu0 %v7007
      %v7268 = vpop.xlane.xlu0 %7267
      %7269 = vmax.xlane.f32.xlu0 %v7008
      %v7270 = vpop.xlane.xlu0 %7269
      %7271 = vmax.xlane.f32.xlu0 %v7009
      %v7272 = vpop.xlane.xlu0 %7271
      %7273 = vmax.xlane.f32.xlu0 %v7010
      %v7274 = vpop.xlane.xlu0 %7273
      %7275 = vmax.xlane.f32.xlu0 %v7011
      %v7276 = vpop.xlane.xlu0 %7275
      %7277 = vmax.xlane.f32.xlu0 %v7012
      %v7278 = vpop.xlane.xlu0 %7277
      %7279 = vmax.xlane.f32.xlu0 %v7013
      %v7280 = vpop.xlane.xlu0 %7279
      %7281 = vmax.xlane.f32.xlu0 %v7014
      %v7282 = vpop.xlane.xlu0 %7281
      %7283 = vmax.xlane.f32.xlu0 %v7015
      %v7284 = vpop.xlane.xlu0 %7283
      %7285 = vmax.xlane.f32.xlu0 %v7016
      %v7286 = vpop.xlane.xlu0 %7285
      %7287 = vmax.xlane.f32.xlu0 %v7017
      %v7288 = vpop.xlane.xlu0 %7287
      %7289 = vmax.xlane.f32.xlu0 %v7018
      %v7290 = vpop.xlane.xlu0 %7289
      %7291 = vmax.xlane.f32.xlu0 %v7019
      %v7292 = vpop.xlane.xlu0 %7291
      %7293 = vmax.xlane.f32.xlu0 %v7020
      %v7294 = vpop.xlane.xlu0 %7293
      %7295 = vmax.xlane.f32.xlu0 %v7021
      %v7296 = vpop.xlane.xlu0 %7295
      %7297 = vmax.xlane.f32.xlu0 %v7022
      %v7298 = vpop.xlane.xlu0 %7297
      %7299 = vmax.xlane.f32.xlu0 %v7023
      %v7300 = vpop.xlane.xlu0 %7299
      %7301 = vmax.xlane.f32.xlu0 %v7024
      %v7302 = vpop.xlane.xlu0 %7301
      %7303 = vmax.xlane.f32.xlu0 %v7025
      %v7304 = vpop.xlane.xlu0 %7303
      %7305 = vmax.xlane.f32.xlu0 %v7026
      %v7306 = vpop.xlane.xlu0 %7305
      %7307 = vmax.xlane.f32.xlu0 %v7027
      %v7308 = vpop.xlane.xlu0 %7307
      %7309 = vmax.xlane.f32.xlu0 %v7028
      %v7310 = vpop.xlane.xlu0 %7309
      %7311 = vmax.xlane.f32.xlu0 %v7029
      %v7312 = vpop.xlane.xlu0 %7311
      %7313 = vmax.xlane.f32.xlu0 %v7030
      %v7314 = vpop.xlane.xlu0 %7313
      %7315 = vmax.xlane.f32.xlu0 %v7031
      %v7316 = vpop.xlane.xlu0 %7315
      %7317 = vmax.xlane.f32.xlu0 %v7032
      %v7318 = vpop.xlane.xlu0 %7317
      %7319 = vmax.xlane.f32.xlu0 %v7033
      %v7320 = vpop.xlane.xlu0 %7319
      %7321 = vmax.xlane.f32.xlu0 %v7034
      %v7322 = vpop.xlane.xlu0 %7321
      %7323 = vmax.xlane.f32.xlu0 %v7035
      %v7324 = vpop.xlane.xlu0 %7323
      %7325 = vmax.xlane.f32.xlu0 %v7036
      %v7326 = vpop.xlane.xlu0 %7325
      %7327 = vmax.xlane.f32.xlu0 %v7037
      %v7328 = vpop.xlane.xlu0 %7327
      %7329 = vmax.xlane.f32.xlu0 %v7038
      %v7330 = vpop.xlane.xlu0 %7329
      %7331 = vmax.xlane.f32.xlu0 %v7039
      %v7332 = vpop.xlane.xlu0 %7331
      %7333 = vmax.xlane.f32.xlu0 %v7040
      %v7334 = vpop.xlane.xlu0 %7333
      %7335 = vmax.xlane.f32.xlu0 %v7041
      %v7336 = vpop.xlane.xlu0 %7335
      %7337 = vmax.xlane.f32.xlu0 %v7042
      %v7338 = vpop.xlane.xlu0 %7337
      %7339 = vmax.xlane.f32.xlu0 %v7043
      %v7340 = vpop.xlane.xlu0 %7339
      %7341 = vmax.xlane.f32.xlu0 %v7044
      %v7342 = vpop.xlane.xlu0 %7341
      %7343 = vmax.xlane.f32.xlu0 %v7045
      %v7344 = vpop.xlane.xlu0 %7343
      %7345 = vmax.xlane.f32.xlu0 %v7046
      %v7346 = vpop.xlane.xlu0 %7345
      %7347 = vmax.xlane.f32.xlu0 %v7047
      %v7348 = vpop.xlane.xlu0 %7347
      %7349 = vmax.xlane.f32.xlu0 %v7048
      %v7350 = vpop.xlane.xlu0 %7349
      %7351 = vmax.xlane.f32.xlu0 %v7049
      %v7352 = vpop.xlane.xlu0 %7351
      %7353 = vmax.xlane.f32.xlu0 %v7050
      %v7354 = vpop.xlane.xlu0 %7353
      %7355 = vmax.xlane.f32.xlu0 %v7051
      %v7356 = vpop.xlane.xlu0 %7355
      %7357 = vmax.xlane.f32.xlu0 %v7052
      %v7358 = vpop.xlane.xlu0 %7357
      %7359 = vmax.xlane.f32.xlu0 %v7053
      %v7360 = vpop.xlane.xlu0 %7359
      %7361 = vmax.xlane.f32.xlu0 %v7054
      %v7362 = vpop.xlane.xlu0 %7361
      %7363 = vmax.xlane.f32.xlu0 %v7055
      %v7364 = vpop.xlane.xlu0 %7363
      %7365 = vmax.xlane.f32.xlu0 %v7056
      %v7366 = vpop.xlane.xlu0 %7365
      %7367 = vmax.xlane.f32.xlu0 %v7057
      %v7368 = vpop.xlane.xlu0 %7367
      %7369 = vmax.xlane.f32.xlu0 %v7058
      %v7370 = vpop.xlane.xlu0 %7369
      %7371 = vmax.xlane.f32.xlu0 %v7059
      %v7372 = vpop.xlane.xlu0 %7371
      %7373 = vmax.xlane.f32.xlu0 %v7060
      %v7374 = vpop.xlane.xlu0 %7373
      %7375 = vmax.xlane.f32.xlu0 %v7061
      %v7376 = vpop.xlane.xlu0 %7375
      %7377 = vmax.xlane.f32.xlu0 %v7062
      %v7378 = vpop.xlane.xlu0 %7377
      %7379 = vmax.xlane.f32.xlu0 %v7063
      %v7380 = vpop.xlane.xlu0 %7379
      %7381 = vmax.xlane.f32.xlu0 %v7064
      %v7382 = vpop.xlane.xlu0 %7381
      %7383 = vmax.xlane.f32.xlu0 %v7065
      %v7384 = vpop.xlane.xlu0 %7383
      %7385 = vmax.xlane.f32.xlu0 %v7066
      %v7386 = vpop.xlane.xlu0 %7385
      %7387 = vmax.xlane.f32.xlu0 %v7067
      %v7388 = vpop.xlane.xlu0 %7387
      %7389 = vmax.xlane.f32.xlu0 %v7068
      %v7390 = vpop.xlane.xlu0 %7389
      %7391 = vmax.xlane.f32.xlu0 %v7069
      %v7392 = vpop.xlane.xlu0 %7391
      %7393 = vmax.xlane.f32.xlu0 %v7070
      %v7394 = vpop.xlane.xlu0 %7393
      %7395 = vmax.xlane.f32.xlu0 %v7071
      %v7396 = vpop.xlane.xlu0 %7395
      %7397 = vmax.xlane.f32.xlu0 %v7072
      %v7398 = vpop.xlane.xlu0 %7397
      %7399 = vmax.xlane.f32.xlu0 %v7073
      %v7400 = vpop.xlane.xlu0 %7399
      %7401 = vmax.xlane.f32.xlu0 %v7074
      %v7402 = vpop.xlane.xlu0 %7401
      %7403 = vmax.xlane.f32.xlu0 %v7075
      %v7404 = vpop.xlane.xlu0 %7403
      %7405 = vmax.xlane.f32.xlu0 %v7076
      %v7406 = vpop.xlane.xlu0 %7405
      %7407 = vmax.xlane.f32.xlu0 %v7077
      %v7408 = vpop.xlane.xlu0 %7407
      %7409 = vmax.xlane.f32.xlu0 %v7078
      %v7410 = vpop.xlane.xlu0 %7409
      %7411 = vmax.xlane.f32.xlu0 %v7079
      %v7412 = vpop.xlane.xlu0 %7411
      %7413 = vmax.xlane.f32.xlu0 %v7080
      %v7414 = vpop.xlane.xlu0 %7413
      %7415 = vmax.xlane.f32.xlu0 %v7081
      %v7416 = vpop.xlane.xlu0 %7415
      %7417 = vmax.xlane.f32.xlu0 %v7082
      %v7418 = vpop.xlane.xlu0 %7417
      %7419 = vmax.xlane.f32.xlu0 %v7083
      %v7420 = vpop.xlane.xlu0 %7419
      %7421 = vmax.xlane.f32.xlu0 %v7084
      %v7422 = vpop.xlane.xlu0 %7421
      %7423 = vmax.xlane.f32.xlu0 %v7085
      %v7424 = vpop.xlane.xlu0 %7423
      %7425 = vmax.xlane.f32.xlu0 %v7086
      %v7426 = vpop.xlane.xlu0 %7425
      %7427 = vmax.xlane.f32.xlu0 %v7087
      %v7428 = vpop.xlane.xlu0 %7427
      %7429 = vmax.xlane.f32.xlu0 %v7088
      %v7430 = vpop.xlane.xlu0 %7429
      %7431 = vmax.xlane.f32.xlu0 %v7089
      %v7432 = vpop.xlane.xlu0 %7431
      %7433 = vmax.xlane.f32.xlu0 %v7090
      %v7434 = vpop.xlane.xlu0 %7433
      %7435 = vmax.xlane.f32.xlu0 %v7091
      %v7436 = vpop.xlane.xlu0 %7435
      %7437 = vmax.xlane.f32.xlu0 %v7092
      %v7438 = vpop.xlane.xlu0 %7437
      %7439 = vmax.xlane.f32.xlu0 %v7093
      %v7440 = vpop.xlane.xlu0 %7439
      %7441 = vmax.xlane.f32.xlu0 %v7094
      %v7442 = vpop.xlane.xlu0 %7441
      %7443 = vmax.xlane.f32.xlu0 %v7095
      %v7444 = vpop.xlane.xlu0 %7443
      %7445 = vmax.xlane.f32.xlu0 %v7096
      %v7446 = vpop.xlane.xlu0 %7445
      %7447 = vmax.xlane.f32.xlu0 %v7097
      %v7448 = vpop.xlane.xlu0 %7447
      %7449 = vmax.xlane.f32.xlu0 %v7098
      %v7450 = vpop.xlane.xlu0 %7449
      %7451 = vmax.xlane.f32.xlu0 %v7099
      %v7452 = vpop.xlane.xlu0 %7451
      %7453 = vmax.xlane.f32.xlu0 %v7100
      %v7454 = vpop.xlane.xlu0 %7453
      %7455 = vmax.xlane.f32.xlu0 %v7101
      %v7456 = vpop.xlane.xlu0 %7455
      %7457 = vmax.xlane.f32.xlu0 %v7102
      %v7458 = vpop.xlane.xlu0 %7457
      %7459 = vmax.xlane.f32.xlu0 %v7103
      %v7460 = vpop.xlane.xlu0 %7459
      %7461 = vmax.xlane.f32.xlu0 %v7104
      %v7462 = vpop.xlane.xlu0 %7461
      %7463 = vmax.xlane.f32.xlu0 %v7105
      %v7464 = vpop.xlane.xlu0 %7463
      %7465 = vmax.xlane.f32.xlu0 %v7106
      %v7466 = vpop.xlane.xlu0 %7465
      %7467 = vmax.xlane.f32.xlu0 %v7107
      %v7468 = vpop.xlane.xlu0 %7467
      %7469 = vmax.xlane.f32.xlu0 %v7108
      %v7470 = vpop.xlane.xlu0 %7469
      %7471 = vmax.xlane.f32.xlu0 %v7109
      %v7472 = vpop.xlane.xlu0 %7471
      %7473 = vmax.xlane.f32.xlu0 %v7110
      %v7474 = vpop.xlane.xlu0 %7473
      %7475 = vmax.xlane.f32.xlu0 %v7111
      %v7476 = vpop.xlane.xlu0 %7475
      %7477 = vmax.xlane.f32.xlu0 %v7112
      %v7478 = vpop.xlane.xlu0 %7477
      %7479 = vmax.xlane.f32.xlu0 %v7113
      %v7480 = vpop.xlane.xlu0 %7479
      %7481 = vmax.xlane.f32.xlu0 %v7114
      %v7482 = vpop.xlane.xlu0 %7481
      %7483 = vmax.xlane.f32.xlu0 %v7115
      %v7484 = vpop.xlane.xlu0 %7483
      %7485 = vmax.xlane.f32.xlu0 %v7116
      %v7486 = vpop.xlane.xlu0 %7485
      %7487 = vmax.xlane.f32.xlu0 %v7117
      %v7488 = vpop.xlane.xlu0 %7487
      %7489 = vmax.xlane.f32.xlu0 %v7118
      %v7490 = vpop.xlane.xlu0 %7489
      %7491 = vmax.xlane.f32.xlu0 %v7119
      %v7492 = vpop.xlane.xlu0 %7491
      %7493 = vmax.xlane.f32.xlu0 %v7120
      %v7494 = vpop.xlane.xlu0 %7493
      %7495 = vmax.xlane.f32.xlu0 %v7121
      %v7496 = vpop.xlane.xlu0 %7495
      %7497 = vmax.xlane.f32.xlu0 %v7122
      %v7498 = vpop.xlane.xlu0 %7497
      %7499 = vmax.xlane.f32.xlu0 %v7123
      %v7500 = vpop.xlane.xlu0 %7499
      %7501 = vmax.xlane.f32.xlu0 %v7124
      %v7502 = vpop.xlane.xlu0 %7501
      %7503 = vmax.xlane.f32.xlu0 %v7125
      %v7504 = vpop.xlane.xlu0 %7503
      %7505 = vmax.xlane.f32.xlu0 %v7126
      %v7506 = vpop.xlane.xlu0 %7505
      %7507 = vmax.xlane.f32.xlu0 %v7127
      %v7508 = vpop.xlane.xlu0 %7507
      %7509 = vmax.xlane.f32.xlu0 %v7128
      %v7510 = vpop.xlane.xlu0 %7509
      %7511 = vmax.xlane.f32.xlu0 %v7129
      %v7512 = vpop.xlane.xlu0 %7511
      %7513 = vmax.xlane.f32.xlu0 %v7130
      %v7514 = vpop.xlane.xlu0 %7513
      %7515 = vmax.xlane.f32.xlu0 %v7131
      %v7516 = vpop.xlane.xlu0 %7515
      %7517 = vmax.xlane.f32.xlu0 %v7132
      %v7518 = vpop.xlane.xlu0 %7517
      %7519 = vmax.xlane.f32.xlu0 %v7133
      %v7520 = vpop.xlane.xlu0 %7519
      %7521 = vmax.xlane.f32.xlu0 %v7134
      %v7522 = vpop.xlane.xlu0 %7521
      %7523 = vmax.xlane.f32.xlu0 %v7135
      %v7524 = vpop.xlane.xlu0 %7523
      %7525 = vmax.xlane.f32.xlu0 %v7136
      %v7526 = vpop.xlane.xlu0 %7525
      %7527 = vmax.xlane.f32.xlu0 %v7137
      %v7528 = vpop.xlane.xlu0 %7527
      %7529 = vmax.xlane.f32.xlu0 %v7138
      %v7530 = vpop.xlane.xlu0 %7529
      %7531 = vmax.xlane.f32.xlu0 %v7139
      %v7532 = vpop.xlane.xlu0 %7531
      %7533 = vmax.xlane.f32.xlu0 %v7140
      %v7534 = vpop.xlane.xlu0 %7533
      %7535 = vmax.xlane.f32.xlu0 %v7141
      %v7536 = vpop.xlane.xlu0 %7535
      %7537 = vmax.xlane.f32.xlu0 %v7142
      %v7538 = vpop.xlane.xlu0 %7537
      %7539 = vmax.xlane.f32.xlu0 %v7143
      %v7540 = vpop.xlane.xlu0 %7539
      %7541 = vmax.xlane.f32.xlu0 %v7144
      %v7542 = vpop.xlane.xlu0 %7541
      %7543 = vmax.xlane.f32.xlu0 %v7145
      %v7544 = vpop.xlane.xlu0 %7543
      %7545 = vmax.xlane.f32.xlu0 %v7146
      %v7546 = vpop.xlane.xlu0 %7545
      %7547 = vmax.xlane.f32.xlu0 %v7147
      %v7548 = vpop.xlane.xlu0 %7547
      %7549 = vmax.xlane.f32.xlu0 %v7148
      %v7550 = vpop.xlane.xlu0 %7549
      %7551 = vmax.xlane.f32.xlu0 %v7149
      %v7552 = vpop.xlane.xlu0 %7551
      %7553 = vmax.xlane.f32.xlu0 %v7150
      %v7554 = vpop.xlane.xlu0 %7553
      %7555 = vmax.xlane.f32.xlu0 %v7151
      %v7556 = vpop.xlane.xlu0 %7555
      %7557 = vmax.xlane.f32.xlu0 %v7152
      %v7558 = vpop.xlane.xlu0 %7557
      %7559 = vmax.xlane.f32.xlu0 %v7153
      %v7560 = vpop.xlane.xlu0 %7559
      %7561 = vmax.xlane.f32.xlu0 %v7154
      %v7562 = vpop.xlane.xlu0 %7561
      %7563 = vmax.xlane.f32.xlu0 %v7155
      %v7564 = vpop.xlane.xlu0 %7563
      %7565 = vmax.xlane.f32.xlu0 %v7156
      %v7566 = vpop.xlane.xlu0 %7565
      %7567 = vmax.xlane.f32.xlu0 %v7157
      %v7568 = vpop.xlane.xlu0 %7567
      %7569 = vmax.xlane.f32.xlu0 %v7158
      %v7570 = vpop.xlane.xlu0 %7569
      %7571 = vmax.xlane.f32.xlu0 %v7159
      %v7572 = vpop.xlane.xlu0 %7571
      %7573 = vmax.xlane.f32.xlu0 %v7160
      %v7574 = vpop.xlane.xlu0 %7573
      %7575 = vmax.xlane.f32.xlu0 %v7161
      %v7576 = vpop.xlane.xlu0 %7575
      %7577 = vmax.xlane.f32.xlu0 %v7162
      %v7578 = vpop.xlane.xlu0 %7577
      %7579 = vmax.xlane.f32.xlu0 %v7163
      %v7580 = vpop.xlane.xlu0 %7579
      %7581 = vmax.xlane.f32.xlu0 %v7164
      %v7582 = vpop.xlane.xlu0 %7581
      %7583 = vmax.xlane.f32.xlu0 %v7165
      %v7584 = vpop.xlane.xlu0 %7583
      %7585 = vmax.xlane.f32.xlu0 %v7166
      %v7586 = vpop.xlane.xlu0 %7585
      %7587 = vmax.xlane.f32.xlu0 %v7167
      %v7588 = vpop.xlane.xlu0 %7587
      %7589 = vmax.xlane.f32.xlu0 %v7168
      %v7590 = vpop.xlane.xlu0 %7589
      %7591 = vmax.xlane.f32.xlu0 %v7169
      %v7592 = vpop.xlane.xlu0 %7591
      %7593 = vmax.xlane.f32.xlu0 %v7170
      %v7594 = vpop.xlane.xlu0 %7593
      %7595 = vmax.xlane.f32.xlu0 %v7171
      %v7596 = vpop.xlane.xlu0 %7595
      %7597 = vmax.xlane.f32.xlu0 %v7172
      %v7598 = vpop.xlane.xlu0 %7597
      %7599 = vmax.xlane.f32.xlu0 %v7173
      %v7600 = vpop.xlane.xlu0 %7599
      %7601 = vmax.xlane.f32.xlu0 %v7174
      %v7602 = vpop.xlane.xlu0 %7601
      %7603 = vmax.xlane.f32.xlu0 %v7175
      %v7604 = vpop.xlane.xlu0 %7603
      %7605 = vmax.xlane.f32.xlu0 %v7176
      %v7606 = vpop.xlane.xlu0 %7605
      %7607 = vmax.xlane.f32.xlu0 %v7177
      %v7608 = vpop.xlane.xlu0 %7607
      %7609 = vmax.xlane.f32.xlu0 %v7178
      %v7610 = vpop.xlane.xlu0 %7609
      %7611 = vmax.xlane.f32.xlu0 %v7179
      %v7612 = vpop.xlane.xlu0 %7611
      %7613 = vmax.xlane.f32.xlu0 %v7180
      %v7614 = vpop.xlane.xlu0 %7613
      %7615 = vmax.xlane.f32.xlu0 %v7181
      %v7616 = vpop.xlane.xlu0 %7615
      %7617 = vmax.xlane.f32.xlu0 %v7182
      %v7618 = vpop.xlane.xlu0 %7617
      %7619 = vmax.xlane.f32.xlu0 %v7183
      %v7620 = vpop.xlane.xlu0 %7619
      %7621 = vmax.xlane.f32.xlu0 %v7184
      %v7622 = vpop.xlane.xlu0 %7621
      %7623 = vmax.xlane.f32.xlu0 %v7185
      %v7624 = vpop.xlane.xlu0 %7623
      %7625 = vmax.xlane.f32.xlu0 %v7186
      %v7626 = vpop.xlane.xlu0 %7625
      %7627 = vmax.xlane.f32.xlu0 %v7187
      %v7628 = vpop.xlane.xlu0 %7627
      %7629 = vmax.xlane.f32.xlu0 %v7188
      %v7630 = vpop.xlane.xlu0 %7629
      %7631 = vmax.xlane.f32.xlu0 %v7189
      %v7632 = vpop.xlane.xlu0 %7631
      %7633 = vmax.xlane.f32.xlu0 %v7190
      %v7634 = vpop.xlane.xlu0 %7633
      %7635 = vmax.xlane.f32.xlu0 %v7191
      %v7636 = vpop.xlane.xlu0 %7635
      %7637 = vmax.xlane.f32.xlu0 %v7192
      %v7638 = vpop.xlane.xlu0 %7637
      %7639 = vmax.xlane.f32.xlu0 %v7193
      %v7640 = vpop.xlane.xlu0 %7639
      %7641 = vmax.xlane.f32.xlu0 %v7194
      %v7642 = vpop.xlane.xlu0 %7641
      %7643 = vmax.xlane.f32.xlu0 %v7195
      %v7644 = vpop.xlane.xlu0 %7643
      %7645 = vmax.xlane.f32.xlu0 %v7196
      %v7646 = vpop.xlane.xlu0 %7645
      %7647 = vmax.xlane.f32.xlu0 %v7197
      %v7648 = vpop.xlane.xlu0 %7647
      %7649 = vmax.xlane.f32.xlu0 %v7198
      %v7650 = vpop.xlane.xlu0 %7649
      %7651 = vmax.xlane.f32.xlu0 %v7199
      %v7652 = vpop.xlane.xlu0 %7651
      %7653 = vmax.xlane.f32.xlu0 %v7200
      %v7654 = vpop.xlane.xlu0 %7653
      %7655 = vmax.xlane.f32.xlu0 %v7201
      %v7656 = vpop.xlane.xlu0 %7655
      %7657 = vmax.xlane.f32.xlu0 %v7202
      %v7658 = vpop.xlane.xlu0 %7657
      %7659 = vmax.xlane.f32.xlu0 %v7203
      %v7660 = vpop.xlane.xlu0 %7659
      %7661 = vmax.xlane.f32.xlu0 %v7204
      %v7662 = vpop.xlane.xlu0 %7661
      %7663 = vmax.xlane.f32.xlu0 %v7205
      %v7664 = vpop.xlane.xlu0 %7663
      %7665 = vmax.xlane.f32.xlu0 %v7206
      %v7666 = vpop.xlane.xlu0 %7665
      %7667 = vmax.xlane.f32.xlu0 %v7207
      %v7668 = vpop.xlane.xlu0 %7667
      %7669 = vmax.xlane.f32.xlu0 %v7208
      %v7670 = vpop.xlane.xlu0 %7669
      %7671 = vmax.xlane.f32.xlu0 %v7209
      %v7672 = vpop.xlane.xlu0 %7671
      %7673 = vmax.xlane.f32.xlu0 %v7210
      %v7674 = vpop.xlane.xlu0 %7673
      %7675 = vmax.xlane.f32.xlu0 %v7211
      %v7676 = vpop.xlane.xlu0 %7675
      %7677 = vmax.xlane.f32.xlu0 %v7212
      %v7678 = vpop.xlane.xlu0 %7677
      %7679 = vmax.xlane.f32.xlu0 %v7213
      %v7680 = vpop.xlane.xlu0 %7679
      %7681 = vmax.xlane.f32.xlu0 %v7214
      %v7682 = vpop.xlane.xlu0 %7681
      %7683 = vmax.xlane.f32.xlu0 %v7215
      %v7684 = vpop.xlane.xlu0 %7683
      %7685 = vmax.xlane.f32.xlu0 %v7216
      %v7686 = vpop.xlane.xlu0 %7685
      %7687 = vmax.xlane.f32.xlu0 %v7217
      %v7688 = vpop.xlane.xlu0 %7687
      %7689 = vmax.xlane.f32.xlu0 %v7218
      %v7690 = vpop.xlane.xlu0 %7689
      %7691 = vmax.xlane.f32.xlu0 %v7219
      %v7692 = vpop.xlane.xlu0 %7691
      %7693 = vmax.xlane.f32.xlu0 %v7220
      %v7694 = vpop.xlane.xlu0 %7693
      %7695 = vmax.xlane.f32.xlu0 %v7221
      %v7696 = vpop.xlane.xlu0 %7695
      %7697 = vmax.xlane.f32.xlu0 %v7222
      %v7698 = vpop.xlane.xlu0 %7697
      %7699 = vmax.xlane.f32.xlu0 %v7223
      %v7700 = vpop.xlane.xlu0 %7699
      %7701 = vmax.xlane.f32.xlu0 %v7224
      %v7702 = vpop.xlane.xlu0 %7701
      %7703 = vmax.xlane.f32.xlu0 %v7225
      %v7704 = vpop.xlane.xlu0 %7703
      %7705 = vmax.xlane.f32.xlu0 %v7226
      %v7706 = vpop.xlane.xlu0 %7705
      %7707 = vmax.xlane.f32.xlu0 %v7227
      %v7708 = vpop.xlane.xlu0 %7707
      %7709 = vmax.xlane.f32.xlu0 %v7228
      %v7710 = vpop.xlane.xlu0 %7709
      %7711 = vmax.xlane.f32.xlu0 %v7229
      %v7712 = vpop.xlane.xlu0 %7711
      %7713 = vmax.xlane.f32.xlu0 %v7230
      %v7714 = vpop.xlane.xlu0 %7713
      %7715 = vmax.xlane.f32.xlu0 %v7231
      %v7716 = vpop.xlane.xlu0 %7715
      %7717 = vmax.xlane.f32.xlu0 %v7232
      %v7718 = vpop.xlane.xlu0 %7717
      %7719 = vmax.xlane.f32.xlu0 %v7233
      %v7720 = vpop.xlane.xlu0 %7719
      %7721 = vmax.xlane.f32.xlu0 %v7234
      %v7722 = vpop.xlane.xlu0 %7721
      %7723 = vmax.xlane.f32.xlu0 %v7235
      %v7724 = vpop.xlane.xlu0 %7723
      %7725 = vmax.xlane.f32.xlu0 %v7236
      %v7726 = vpop.xlane.xlu0 %7725
      %7727 = vmax.xlane.f32.xlu0 %v7237
      %v7728 = vpop.xlane.xlu0 %7727
      %7729 = vmax.xlane.f32.xlu0 %v7238
      %v7730 = vpop.xlane.xlu0 %7729
      %7731 = vmax.xlane.f32.xlu0 %v7239
      %v7732 = vpop.xlane.xlu0 %7731
      %7733 = vmax.xlane.f32.xlu0 %v7240
      %v7734 = vpop.xlane.xlu0 %7733
      %7735 = vmax.xlane.f32.xlu0 %v7241
      %v7736 = vpop.xlane.xlu0 %7735
      %7737 = vmax.xlane.f32.xlu0 %v7242
      %v7738 = vpop.xlane.xlu0 %7737
      %7739 = vmax.xlane.f32.xlu0 %v7243
      %v7740 = vpop.xlane.xlu0 %7739
      %7741 = vmax.xlane.f32.xlu0 %v7244
      %v7742 = vpop.xlane.xlu0 %7741
      %7743 = vmax.xlane.f32.xlu0 %v7245
      %v7744 = vpop.xlane.xlu0 %7743
      %7745 = vmax.xlane.f32.xlu0 %v7246
      %v7746 = vpop.xlane.xlu0 %7745
      %7747 = vmax.xlane.f32.xlu0 %v7247
      %v7748 = vpop.xlane.xlu0 %7747
      %7749 = vmax.xlane.f32.xlu0 %v7248
      %v7750 = vpop.xlane.xlu0 %7749
      %7751 = vmax.xlane.f32.xlu0 %v7249
      %v7752 = vpop.xlane.xlu0 %7751
      %7753 = vmax.xlane.f32.xlu0 %v7250
      %v7754 = vpop.xlane.xlu0 %7753
      %7755 = vmax.xlane.f32.xlu0 %v7251
      %v7756 = vpop.xlane.xlu0 %7755
      %7757 = vmax.xlane.f32.xlu0 %v7252
      %v7758 = vpop.xlane.xlu0 %7757
      %7759 = vmax.xlane.f32.xlu0 %v7253
      %v7760 = vpop.xlane.xlu0 %7759
      %7761 = vmax.xlane.f32.xlu0 %v7254
      %v7762 = vpop.xlane.xlu0 %7761
      %7763 = vmax.xlane.f32.xlu0 %v7255
      %v7764 = vpop.xlane.xlu0 %7763
      %7765 = vmax.xlane.f32.xlu0 %v7256
      %v7766 = vpop.xlane.xlu0 %7765
      %7767 = vmax.xlane.f32.xlu0 %v7257
      %v7768 = vpop.xlane.xlu0 %7767
      %7769 = vmax.xlane.f32.xlu0 %v7258
      %v7770 = vpop.xlane.xlu0 %7769
      %v7771 = vsub.f32 %v7003, %v7260
      %v7772 = vsub.f32 %v7004, %v7262
      %v7773 = vsub.f32 %v7005, %v7264
      %v7774 = vsub.f32 %v7006, %v7266
      %v7775 = vsub.f32 %v7007, %v7268
      %v7776 = vsub.f32 %v7008, %v7270
      %v7777 = vsub.f32 %v7009, %v7272
      %v7778 = vsub.f32 %v7010, %v7274
      %v7779 = vsub.f32 %v7011, %v7276
      %v7780 = vsub.f32 %v7012, %v7278
      %v7781 = vsub.f32 %v7013, %v7280
      %v7782 = vsub.f32 %v7014, %v7282
      %v7783 = vsub.f32 %v7015, %v7284
      %v7784 = vsub.f32 %v7016, %v7286
      %v7785 = vsub.f32 %v7017, %v7288
      %v7786 = vsub.f32 %v7018, %v7290
      %v7787 = vsub.f32 %v7019, %v7292
      %v7788 = vsub.f32 %v7020, %v7294
      %v7789 = vsub.f32 %v7021, %v7296
      %v7790 = vsub.f32 %v7022, %v7298
      %v7791 = vsub.f32 %v7023, %v7300
      %v7792 = vsub.f32 %v7024, %v7302
      %v7793 = vsub.f32 %v7025, %v7304
      %v7794 = vsub.f32 %v7026, %v7306
      %v7795 = vsub.f32 %v7027, %v7308
      %v7796 = vsub.f32 %v7028, %v7310
      %v7797 = vsub.f32 %v7029, %v7312
      %v7798 = vsub.f32 %v7030, %v7314
      %v7799 = vsub.f32 %v7031, %v7316
      %v7800 = vsub.f32 %v7032, %v7318
      %v7801 = vsub.f32 %v7033, %v7320
      %v7802 = vsub.f32 %v7034, %v7322
      %v7803 = vsub.f32 %v7035, %v7324
      %v7804 = vsub.f32 %v7036, %v7326
      %v7805 = vsub.f32 %v7037, %v7328
      %v7806 = vsub.f32 %v7038, %v7330
      %v7807 = vsub.f32 %v7039, %v7332
      %v7808 = vsub.f32 %v7040, %v7334
      %v7809 = vsub.f32 %v7041, %v7336
      %v7810 = vsub.f32 %v7042, %v7338
      %v7811 = vsub.f32 %v7043, %v7340
      %v7812 = vsub.f32 %v7044, %v7342
      %v7813 = vsub.f32 %v7045, %v7344
      %v7814 = vsub.f32 %v7046, %v7346
      %v7815 = vsub.f32 %v7047, %v7348
      %v7816 = vsub.f32 %v7048, %v7350
      %v7817 = vsub.f32 %v7049, %v7352
      %v7818 = vsub.f32 %v7050, %v7354
      %v7819 = vsub.f32 %v7051, %v7356
      %v7820 = vsub.f32 %v7052, %v7358
      %v7821 = vsub.f32 %v7053, %v7360
      %v7822 = vsub.f32 %v7054, %v7362
      %v7823 = vsub.f32 %v7055, %v7364
      %v7824 = vsub.f32 %v7056, %v7366
      %v7825 = vsub.f32 %v7057, %v7368
      %v7826 = vsub.f32 %v7058, %v7370
      %v7827 = vsub.f32 %v7059, %v7372
      %v7828 = vsub.f32 %v7060, %v7374
      %v7829 = vsub.f32 %v7061, %v7376
      %v7830 = vsub.f32 %v7062, %v7378
      %v7831 = vsub.f32 %v7063, %v7380
      %v7832 = vsub.f32 %v7064, %v7382
      %v7833 = vsub.f32 %v7065, %v7384
      %v7834 = vsub.f32 %v7066, %v7386
      %v7835 = vsub.f32 %v7067, %v7388
      %v7836 = vsub.f32 %v7068, %v7390
      %v7837 = vsub.f32 %v7069, %v7392
      %v7838 = vsub.f32 %v7070, %v7394
      %v7839 = vsub.f32 %v7071, %v7396
      %v7840 = vsub.f32 %v7072, %v7398
      %v7841 = vsub.f32 %v7073, %v7400
      %v7842 = vsub.f32 %v7074, %v7402
      %v7843 = vsub.f32 %v7075, %v7404
      %v7844 = vsub.f32 %v7076, %v7406
      %v7845 = vsub.f32 %v7077, %v7408
      %v7846 = vsub.f32 %v7078, %v7410
      %v7847 = vsub.f32 %v7079, %v7412
      %v7848 = vsub.f32 %v7080, %v7414
      %v7849 = vsub.f32 %v7081, %v7416
      %v7850 = vsub.f32 %v7082, %v7418
      %v7851 = vsub.f32 %v7083, %v7420
      %v7852 = vsub.f32 %v7084, %v7422
      %v7853 = vsub.f32 %v7085, %v7424
      %v7854 = vsub.f32 %v7086, %v7426
      %v7855 = vsub.f32 %v7087, %v7428
      %v7856 = vsub.f32 %v7088, %v7430
      %v7857 = vsub.f32 %v7089, %v7432
      %v7858 = vsub.f32 %v7090, %v7434
      %v7859 = vsub.f32 %v7091, %v7436
      %v7860 = vsub.f32 %v7092, %v7438
      %v7861 = vsub.f32 %v7093, %v7440
      %v7862 = vsub.f32 %v7094, %v7442
      %v7863 = vsub.f32 %v7095, %v7444
      %v7864 = vsub.f32 %v7096, %v7446
      %v7865 = vsub.f32 %v7097, %v7448
      %v7866 = vsub.f32 %v7098, %v7450
      %v7867 = vsub.f32 %v7099, %v7452
      %v7868 = vsub.f32 %v7100, %v7454
      %v7869 = vsub.f32 %v7101, %v7456
      %v7870 = vsub.f32 %v7102, %v7458
      %v7871 = vsub.f32 %v7103, %v7460
      %v7872 = vsub.f32 %v7104, %v7462
      %v7873 = vsub.f32 %v7105, %v7464
      %v7874 = vsub.f32 %v7106, %v7466
      %v7875 = vsub.f32 %v7107, %v7468
      %v7876 = vsub.f32 %v7108, %v7470
      %v7877 = vsub.f32 %v7109, %v7472
      %v7878 = vsub.f32 %v7110, %v7474
      %v7879 = vsub.f32 %v7111, %v7476
      %v7880 = vsub.f32 %v7112, %v7478
      %v7881 = vsub.f32 %v7113, %v7480
      %v7882 = vsub.f32 %v7114, %v7482
      %v7883 = vsub.f32 %v7115, %v7484
      %v7884 = vsub.f32 %v7116, %v7486
      %v7885 = vsub.f32 %v7117, %v7488
      %v7886 = vsub.f32 %v7118, %v7490
      %v7887 = vsub.f32 %v7119, %v7492
      %v7888 = vsub.f32 %v7120, %v7494
      %v7889 = vsub.f32 %v7121, %v7496
      %v7890 = vsub.f32 %v7122, %v7498
      %v7891 = vsub.f32 %v7123, %v7500
      %v7892 = vsub.f32 %v7124, %v7502
      %v7893 = vsub.f32 %v7125, %v7504
      %v7894 = vsub.f32 %v7126, %v7506
      %v7895 = vsub.f32 %v7127, %v7508
      %v7896 = vsub.f32 %v7128, %v7510
      %v7897 = vsub.f32 %v7129, %v7512
      %v7898 = vsub.f32 %v7130, %v7514
      %v7899 = vsub.f32 %v7131, %v7516
      %v7900 = vsub.f32 %v7132, %v7518
      %v7901 = vsub.f32 %v7133, %v7520
      %v7902 = vsub.f32 %v7134, %v7522
      %v7903 = vsub.f32 %v7135, %v7524
      %v7904 = vsub.f32 %v7136, %v7526
      %v7905 = vsub.f32 %v7137, %v7528
      %v7906 = vsub.f32 %v7138, %v7530
      %v7907 = vsub.f32 %v7139, %v7532
      %v7908 = vsub.f32 %v7140, %v7534
      %v7909 = vsub.f32 %v7141, %v7536
      %v7910 = vsub.f32 %v7142, %v7538
      %v7911 = vsub.f32 %v7143, %v7540
      %v7912 = vsub.f32 %v7144, %v7542
      %v7913 = vsub.f32 %v7145, %v7544
      %v7914 = vsub.f32 %v7146, %v7546
      %v7915 = vsub.f32 %v7147, %v7548
      %v7916 = vsub.f32 %v7148, %v7550
      %v7917 = vsub.f32 %v7149, %v7552
      %v7918 = vsub.f32 %v7150, %v7554
      %v7919 = vsub.f32 %v7151, %v7556
      %v7920 = vsub.f32 %v7152, %v7558
      %v7921 = vsub.f32 %v7153, %v7560
      %v7922 = vsub.f32 %v7154, %v7562
      %v7923 = vsub.f32 %v7155, %v7564
      %v7924 = vsub.f32 %v7156, %v7566
      %v7925 = vsub.f32 %v7157, %v7568
      %v7926 = vsub.f32 %v7158, %v7570
      %v7927 = vsub.f32 %v7159, %v7572
      %v7928 = vsub.f32 %v7160, %v7574
      %v7929 = vsub.f32 %v7161, %v7576
      %v7930 = vsub.f32 %v7162, %v7578
      %v7931 = vsub.f32 %v7163, %v7580
      %v7932 = vsub.f32 %v7164, %v7582
      %v7933 = vsub.f32 %v7165, %v7584
      %v7934 = vsub.f32 %v7166, %v7586
      %v7935 = vsub.f32 %v7167, %v7588
      %v7936 = vsub.f32 %v7168, %v7590
      %v7937 = vsub.f32 %v7169, %v7592
      %v7938 = vsub.f32 %v7170, %v7594
      %v7939 = vsub.f32 %v7171, %v7596
      %v7940 = vsub.f32 %v7172, %v7598
      %v7941 = vsub.f32 %v7173, %v7600
      %v7942 = vsub.f32 %v7174, %v7602
      %v7943 = vsub.f32 %v7175, %v7604
      %v7944 = vsub.f32 %v7176, %v7606
      %v7945 = vsub.f32 %v7177, %v7608
      %v7946 = vsub.f32 %v7178, %v7610
      %v7947 = vsub.f32 %v7179, %v7612
      %v7948 = vsub.f32 %v7180, %v7614
      %v7949 = vsub.f32 %v7181, %v7616
      %v7950 = vsub.f32 %v7182, %v7618
      %v7951 = vsub.f32 %v7183, %v7620
      %v7952 = vsub.f32 %v7184, %v7622
      %v7953 = vsub.f32 %v7185, %v7624
      %v7954 = vsub.f32 %v7186, %v7626
      %v7955 = vsub.f32 %v7187, %v7628
      %v7956 = vsub.f32 %v7188, %v7630
      %v7957 = vsub.f32 %v7189, %v7632
      %v7958 = vsub.f32 %v7190, %v7634
      %v7959 = vsub.f32 %v7191, %v7636
      %v7960 = vsub.f32 %v7192, %v7638
      %v7961 = vsub.f32 %v7193, %v7640
      %v7962 = vsub.f32 %v7194, %v7642
      %v7963 = vsub.f32 %v7195, %v7644
      %v7964 = vsub.f32 %v7196, %v7646
      %v7965 = vsub.f32 %v7197, %v7648
      %v7966 = vsub.f32 %v7198, %v7650
      %v7967 = vsub.f32 %v7199, %v7652
      %v7968 = vsub.f32 %v7200, %v7654
      %v7969 = vsub.f32 %v7201, %v7656
      %v7970 = vsub.f32 %v7202, %v7658
      %v7971 = vsub.f32 %v7203, %v7660
      %v7972 = vsub.f32 %v7204, %v7662
      %v7973 = vsub.f32 %v7205, %v7664
      %v7974 = vsub.f32 %v7206, %v7666
      %v7975 = vsub.f32 %v7207, %v7668
      %v7976 = vsub.f32 %v7208, %v7670
      %v7977 = vsub.f32 %v7209, %v7672
      %v7978 = vsub.f32 %v7210, %v7674
      %v7979 = vsub.f32 %v7211, %v7676
      %v7980 = vsub.f32 %v7212, %v7678
      %v7981 = vsub.f32 %v7213, %v7680
      %v7982 = vsub.f32 %v7214, %v7682
      %v7983 = vsub.f32 %v7215, %v7684
      %v7984 = vsub.f32 %v7216, %v7686
      %v7985 = vsub.f32 %v7217, %v7688
      %v7986 = vsub.f32 %v7218, %v7690
      %v7987 = vsub.f32 %v7219, %v7692
      %v7988 = vsub.f32 %v7220, %v7694
      %v7989 = vsub.f32 %v7221, %v7696
      %v7990 = vsub.f32 %v7222, %v7698
      %v7991 = vsub.f32 %v7223, %v7700
      %v7992 = vsub.f32 %v7224, %v7702
      %v7993 = vsub.f32 %v7225, %v7704
      %v7994 = vsub.f32 %v7226, %v7706
      %v7995 = vsub.f32 %v7227, %v7708
      %v7996 = vsub.f32 %v7228, %v7710
      %v7997 = vsub.f32 %v7229, %v7712
      %v7998 = vsub.f32 %v7230, %v7714
      %v7999 = vsub.f32 %v7231, %v7716
      %v8000 = vsub.f32 %v7232, %v7718
      %v8001 = vsub.f32 %v7233, %v7720
      %v8002 = vsub.f32 %v7234, %v7722
      %v8003 = vsub.f32 %v7235, %v7724
      %v8004 = vsub.f32 %v7236, %v7726
      %v8005 = vsub.f32 %v7237, %v7728
      %v8006 = vsub.f32 %v7238, %v7730
      %v8007 = vsub.f32 %v7239, %v7732
      %v8008 = vsub.f32 %v7240, %v7734
      %v8009 = vsub.f32 %v7241, %v7736
      %v8010 = vsub.f32 %v7242, %v7738
      %v8011 = vsub.f32 %v7243, %v7740
      %v8012 = vsub.f32 %v7244, %v7742
      %v8013 = vsub.f32 %v7245, %v7744
      %v8014 = vsub.f32 %v7246, %v7746
      %v8015 = vsub.f32 %v7247, %v7748
      %v8016 = vsub.f32 %v7248, %v7750
      %v8017 = vsub.f32 %v7249, %v7752
      %v8018 = vsub.f32 %v7250, %v7754
      %v8019 = vsub.f32 %v7251, %v7756
      %v8020 = vsub.f32 %v7252, %v7758
      %v8021 = vsub.f32 %v7253, %v7760
      %v8022 = vsub.f32 %v7254, %v7762
      %v8023 = vsub.f32 %v7255, %v7764
      %v8024 = vsub.f32 %v7256, %v7766
      %v8025 = vsub.f32 %v7257, %v7768
      %v8026 = vsub.f32 %v7258, %v7770
      %v8027 = vmul.f32 %v7771, 1.442695
      %v8028 = vpow.pop %v8027
      %v8029 = vmul.f32 %v7772, 1.442695
      %v8030 = vpow.pop %v8029
      %v8031 = vmul.f32 %v7773, 1.442695
      %v8032 = vpow.pop %v8031
      %v8033 = vmul.f32 %v7774, 1.442695
      %v8034 = vpow.pop %v8033
      %v8035 = vmul.f32 %v7775, 1.442695
      %v8036 = vpow.pop %v8035
      %v8037 = vmul.f32 %v7776, 1.442695
      %v8038 = vpow.pop %v8037
      %v8039 = vmul.f32 %v7777, 1.442695
      %v8040 = vpow.pop %v8039
      %v8041 = vmul.f32 %v7778, 1.442695
      %v8042 = vpow.pop %v8041
      %v8043 = vmul.f32 %v7779, 1.442695
      %v8044 = vpow.pop %v8043
      %v8045 = vmul.f32 %v7780, 1.442695
      %v8046 = vpow.pop %v8045
      %v8047 = vmul.f32 %v7781, 1.442695
      %v8048 = vpow.pop %v8047
      %v8049 = vmul.f32 %v7782, 1.442695
      %v8050 = vpow.pop %v8049
      %v8051 = vmul.f32 %v7783, 1.442695
      %v8052 = vpow.pop %v8051
      %v8053 = vmul.f32 %v7784, 1.442695
      %v8054 = vpow.pop %v8053
      %v8055 = vmul.f32 %v7785, 1.442695
      %v8056 = vpow.pop %v8055
      %v8057 = vmul.f32 %v7786, 1.442695
      %v8058 = vpow.pop %v8057
      %v8059 = vmul.f32 %v7787, 1.442695
      %v8060 = vpow.pop %v8059
      %v8061 = vmul.f32 %v7788, 1.442695
      %v8062 = vpow.pop %v8061
      %v8063 = vmul.f32 %v7789, 1.442695
      %v8064 = vpow.pop %v8063
      %v8065 = vmul.f32 %v7790, 1.442695
      %v8066 = vpow.pop %v8065
      %v8067 = vmul.f32 %v7791, 1.442695
      %v8068 = vpow.pop %v8067
      %v8069 = vmul.f32 %v7792, 1.442695
      %v8070 = vpow.pop %v8069
      %v8071 = vmul.f32 %v7793, 1.442695
      %v8072 = vpow.pop %v8071
      %v8073 = vmul.f32 %v7794, 1.442695
      %v8074 = vpow.pop %v8073
      %v8075 = vmul.f32 %v7795, 1.442695
      %v8076 = vpow.pop %v8075
      %v8077 = vmul.f32 %v7796, 1.442695
      %v8078 = vpow.pop %v8077
      %v8079 = vmul.f32 %v7797, 1.442695
      %v8080 = vpow.pop %v8079
      %v8081 = vmul.f32 %v7798, 1.442695
      %v8082 = vpow.pop %v8081
      %v8083 = vmul.f32 %v7799, 1.442695
      %v8084 = vpow.pop %v8083
      %v8085 = vmul.f32 %v7800, 1.442695
      %v8086 = vpow.pop %v8085
      %v8087 = vmul.f32 %v7801, 1.442695
      %v8088 = vpow.pop %v8087
      %v8089 = vmul.f32 %v7802, 1.442695
      %v8090 = vpow.pop %v8089
      %v8091 = vmul.f32 %v7803, 1.442695
      %v8092 = vpow.pop %v8091
      %v8093 = vmul.f32 %v7804, 1.442695
      %v8094 = vpow.pop %v8093
      %v8095 = vmul.f32 %v7805, 1.442695
      %v8096 = vpow.pop %v8095
      %v8097 = vmul.f32 %v7806, 1.442695
      %v8098 = vpow.pop %v8097
      %v8099 = vmul.f32 %v7807, 1.442695
      %v8100 = vpow.pop %v8099
      %v8101 = vmul.f32 %v7808, 1.442695
      %v8102 = vpow.pop %v8101
      %v8103 = vmul.f32 %v7809, 1.442695
      %v8104 = vpow.pop %v8103
      %v8105 = vmul.f32 %v7810, 1.442695
      %v8106 = vpow.pop %v8105
      %v8107 = vmul.f32 %v7811, 1.442695
      %v8108 = vpow.pop %v8107
      %v8109 = vmul.f32 %v7812, 1.442695
      %v8110 = vpow.pop %v8109
      %v8111 = vmul.f32 %v7813, 1.442695
      %v8112 = vpow.pop %v8111
      %v8113 = vmul.f32 %v7814, 1.442695
      %v8114 = vpow.pop %v8113
      %v8115 = vmul.f32 %v7815, 1.442695
      %v8116 = vpow.pop %v8115
      %v8117 = vmul.f32 %v7816, 1.442695
      %v8118 = vpow.pop %v8117
      %v8119 = vmul.f32 %v7817, 1.442695
      %v8120 = vpow.pop %v8119
      %v8121 = vmul.f32 %v7818, 1.442695
      %v8122 = vpow.pop %v8121
      %v8123 = vmul.f32 %v7819, 1.442695
      %v8124 = vpow.pop %v8123
      %v8125 = vmul.f32 %v7820, 1.442695
      %v8126 = vpow.pop %v8125
      %v8127 = vmul.f32 %v7821, 1.442695
      %v8128 = vpow.pop %v8127
      %v8129 = vmul.f32 %v7822, 1.442695
      %v8130 = vpow.pop %v8129
      %v8131 = vmul.f32 %v7823, 1.442695
      %v8132 = vpow.pop %v8131
      %v8133 = vmul.f32 %v7824, 1.442695
      %v8134 = vpow.pop %v8133
      %v8135 = vmul.f32 %v7825, 1.442695
      %v8136 = vpow.pop %v8135
      %v8137 = vmul.f32 %v7826, 1.442695
      %v8138 = vpow.pop %v8137
      %v8139 = vmul.f32 %v7827, 1.442695
      %v8140 = vpow.pop %v8139
      %v8141 = vmul.f32 %v7828, 1.442695
      %v8142 = vpow.pop %v8141
      %v8143 = vmul.f32 %v7829, 1.442695
      %v8144 = vpow.pop %v8143
      %v8145 = vmul.f32 %v7830, 1.442695
      %v8146 = vpow.pop %v8145
      %v8147 = vmul.f32 %v7831, 1.442695
      %v8148 = vpow.pop %v8147
      %v8149 = vmul.f32 %v7832, 1.442695
      %v8150 = vpow.pop %v8149
      %v8151 = vmul.f32 %v7833, 1.442695
      %v8152 = vpow.pop %v8151
      %v8153 = vmul.f32 %v7834, 1.442695
      %v8154 = vpow.pop %v8153
      %v8155 = vmul.f32 %v7835, 1.442695
      %v8156 = vpow.pop %v8155
      %v8157 = vmul.f32 %v7836, 1.442695
      %v8158 = vpow.pop %v8157
      %v8159 = vmul.f32 %v7837, 1.442695
      %v8160 = vpow.pop %v8159
      %v8161 = vmul.f32 %v7838, 1.442695
      %v8162 = vpow.pop %v8161
      %v8163 = vmul.f32 %v7839, 1.442695
      %v8164 = vpow.pop %v8163
      %v8165 = vmul.f32 %v7840, 1.442695
      %v8166 = vpow.pop %v8165
      %v8167 = vmul.f32 %v7841, 1.442695
      %v8168 = vpow.pop %v8167
      %v8169 = vmul.f32 %v7842, 1.442695
      %v8170 = vpow.pop %v8169
      %v8171 = vmul.f32 %v7843, 1.442695
      %v8172 = vpow.pop %v8171
      %v8173 = vmul.f32 %v7844, 1.442695
      %v8174 = vpow.pop %v8173
      %v8175 = vmul.f32 %v7845, 1.442695
      %v8176 = vpow.pop %v8175
      %v8177 = vmul.f32 %v7846, 1.442695
      %v8178 = vpow.pop %v8177
      %v8179 = vmul.f32 %v7847, 1.442695
      %v8180 = vpow.pop %v8179
      %v8181 = vmul.f32 %v7848, 1.442695
      %v8182 = vpow.pop %v8181
      %v8183 = vmul.f32 %v7849, 1.442695
      %v8184 = vpow.pop %v8183
      %v8185 = vmul.f32 %v7850, 1.442695
      %v8186 = vpow.pop %v8185
      %v8187 = vmul.f32 %v7851, 1.442695
      %v8188 = vpow.pop %v8187
      %v8189 = vmul.f32 %v7852, 1.442695
      %v8190 = vpow.pop %v8189
      %v8191 = vmul.f32 %v7853, 1.442695
      %v8192 = vpow.pop %v8191
      %v8193 = vmul.f32 %v7854, 1.442695
      %v8194 = vpow.pop %v8193
      %v8195 = vmul.f32 %v7855, 1.442695
      %v8196 = vpow.pop %v8195
      %v8197 = vmul.f32 %v7856, 1.442695
      %v8198 = vpow.pop %v8197
      %v8199 = vmul.f32 %v7857, 1.442695
      %v8200 = vpow.pop %v8199
      %v8201 = vmul.f32 %v7858, 1.442695
      %v8202 = vpow.pop %v8201
      %v8203 = vmul.f32 %v7859, 1.442695
      %v8204 = vpow.pop %v8203
      %v8205 = vmul.f32 %v7860, 1.442695
      %v8206 = vpow.pop %v8205
      %v8207 = vmul.f32 %v7861, 1.442695
      %v8208 = vpow.pop %v8207
      %v8209 = vmul.f32 %v7862, 1.442695
      %v8210 = vpow.pop %v8209
      %v8211 = vmul.f32 %v7863, 1.442695
      %v8212 = vpow.pop %v8211
      %v8213 = vmul.f32 %v7864, 1.442695
      %v8214 = vpow.pop %v8213
      %v8215 = vmul.f32 %v7865, 1.442695
      %v8216 = vpow.pop %v8215
      %v8217 = vmul.f32 %v7866, 1.442695
      %v8218 = vpow.pop %v8217
      %v8219 = vmul.f32 %v7867, 1.442695
      %v8220 = vpow.pop %v8219
      %v8221 = vmul.f32 %v7868, 1.442695
      %v8222 = vpow.pop %v8221
      %v8223 = vmul.f32 %v7869, 1.442695
      %v8224 = vpow.pop %v8223
      %v8225 = vmul.f32 %v7870, 1.442695
      %v8226 = vpow.pop %v8225
      %v8227 = vmul.f32 %v7871, 1.442695
      %v8228 = vpow.pop %v8227
      %v8229 = vmul.f32 %v7872, 1.442695
      %v8230 = vpow.pop %v8229
      %v8231 = vmul.f32 %v7873, 1.442695
      %v8232 = vpow.pop %v8231
      %v8233 = vmul.f32 %v7874, 1.442695
      %v8234 = vpow.pop %v8233
      %v8235 = vmul.f32 %v7875, 1.442695
      %v8236 = vpow.pop %v8235
      %v8237 = vmul.f32 %v7876, 1.442695
      %v8238 = vpow.pop %v8237
      %v8239 = vmul.f32 %v7877, 1.442695
      %v8240 = vpow.pop %v8239
      %v8241 = vmul.f32 %v7878, 1.442695
      %v8242 = vpow.pop %v8241
      %v8243 = vmul.f32 %v7879, 1.442695
      %v8244 = vpow.pop %v8243
      %v8245 = vmul.f32 %v7880, 1.442695
      %v8246 = vpow.pop %v8245
      %v8247 = vmul.f32 %v7881, 1.442695
      %v8248 = vpow.pop %v8247
      %v8249 = vmul.f32 %v7882, 1.442695
      %v8250 = vpow.pop %v8249
      %v8251 = vmul.f32 %v7883, 1.442695
      %v8252 = vpow.pop %v8251
      %v8253 = vmul.f32 %v7884, 1.442695
      %v8254 = vpow.pop %v8253
      %v8255 = vmul.f32 %v7885, 1.442695
      %v8256 = vpow.pop %v8255
      %v8257 = vmul.f32 %v7886, 1.442695
      %v8258 = vpow.pop %v8257
      %v8259 = vmul.f32 %v7887, 1.442695
      %v8260 = vpow.pop %v8259
      %v8261 = vmul.f32 %v7888, 1.442695
      %v8262 = vpow.pop %v8261
      %v8263 = vmul.f32 %v7889, 1.442695
      %v8264 = vpow.pop %v8263
      %v8265 = vmul.f32 %v7890, 1.442695
      %v8266 = vpow.pop %v8265
      %v8267 = vmul.f32 %v7891, 1.442695
      %v8268 = vpow.pop %v8267
      %v8269 = vmul.f32 %v7892, 1.442695
      %v8270 = vpow.pop %v8269
      %v8271 = vmul.f32 %v7893, 1.442695
      %v8272 = vpow.pop %v8271
      %v8273 = vmul.f32 %v7894, 1.442695
      %v8274 = vpow.pop %v8273
      %v8275 = vmul.f32 %v7895, 1.442695
      %v8276 = vpow.pop %v8275
      %v8277 = vmul.f32 %v7896, 1.442695
      %v8278 = vpow.pop %v8277
      %v8279 = vmul.f32 %v7897, 1.442695
      %v8280 = vpow.pop %v8279
      %v8281 = vmul.f32 %v7898, 1.442695
      %v8282 = vpow.pop %v8281
      %v8283 = vmul.f32 %v7899, 1.442695
      %v8284 = vpow.pop %v8283
      %v8285 = vmul.f32 %v7900, 1.442695
      %v8286 = vpow.pop %v8285
      %v8287 = vmul.f32 %v7901, 1.442695
      %v8288 = vpow.pop %v8287
      %v8289 = vmul.f32 %v7902, 1.442695
      %v8290 = vpow.pop %v8289
      %v8291 = vmul.f32 %v7903, 1.442695
      %v8292 = vpow.pop %v8291
      %v8293 = vmul.f32 %v7904, 1.442695
      %v8294 = vpow.pop %v8293
      %v8295 = vmul.f32 %v7905, 1.442695
      %v8296 = vpow.pop %v8295
      %v8297 = vmul.f32 %v7906, 1.442695
      %v8298 = vpow.pop %v8297
      %v8299 = vmul.f32 %v7907, 1.442695
      %v8300 = vpow.pop %v8299
      %v8301 = vmul.f32 %v7908, 1.442695
      %v8302 = vpow.pop %v8301
      %v8303 = vmul.f32 %v7909, 1.442695
      %v8304 = vpow.pop %v8303
      %v8305 = vmul.f32 %v7910, 1.442695
      %v8306 = vpow.pop %v8305
      %v8307 = vmul.f32 %v7911, 1.442695
      %v8308 = vpow.pop %v8307
      %v8309 = vmul.f32 %v7912, 1.442695
      %v8310 = vpow.pop %v8309
      %v8311 = vmul.f32 %v7913, 1.442695
      %v8312 = vpow.pop %v8311
      %v8313 = vmul.f32 %v7914, 1.442695
      %v8314 = vpow.pop %v8313
      %v8315 = vmul.f32 %v7915, 1.442695
      %v8316 = vpow.pop %v8315
      %v8317 = vmul.f32 %v7916, 1.442695
      %v8318 = vpow.pop %v8317
      %v8319 = vmul.f32 %v7917, 1.442695
      %v8320 = vpow.pop %v8319
      %v8321 = vmul.f32 %v7918, 1.442695
      %v8322 = vpow.pop %v8321
      %v8323 = vmul.f32 %v7919, 1.442695
      %v8324 = vpow.pop %v8323
      %v8325 = vmul.f32 %v7920, 1.442695
      %v8326 = vpow.pop %v8325
      %v8327 = vmul.f32 %v7921, 1.442695
      %v8328 = vpow.pop %v8327
      %v8329 = vmul.f32 %v7922, 1.442695
      %v8330 = vpow.pop %v8329
      %v8331 = vmul.f32 %v7923, 1.442695
      %v8332 = vpow.pop %v8331
      %v8333 = vmul.f32 %v7924, 1.442695
      %v8334 = vpow.pop %v8333
      %v8335 = vmul.f32 %v7925, 1.442695
      %v8336 = vpow.pop %v8335
      %v8337 = vmul.f32 %v7926, 1.442695
      %v8338 = vpow.pop %v8337
      %v8339 = vmul.f32 %v7927, 1.442695
      %v8340 = vpow.pop %v8339
      %v8341 = vmul.f32 %v7928, 1.442695
      %v8342 = vpow.pop %v8341
      %v8343 = vmul.f32 %v7929, 1.442695
      %v8344 = vpow.pop %v8343
      %v8345 = vmul.f32 %v7930, 1.442695
      %v8346 = vpow.pop %v8345
      %v8347 = vmul.f32 %v7931, 1.442695
      %v8348 = vpow.pop %v8347
      %v8349 = vmul.f32 %v7932, 1.442695
      %v8350 = vpow.pop %v8349
      %v8351 = vmul.f32 %v7933, 1.442695
      %v8352 = vpow.pop %v8351
      %v8353 = vmul.f32 %v7934, 1.442695
      %v8354 = vpow.pop %v8353
      %v8355 = vmul.f32 %v7935, 1.442695
      %v8356 = vpow.pop %v8355
      %v8357 = vmul.f32 %v7936, 1.442695
      %v8358 = vpow.pop %v8357
      %v8359 = vmul.f32 %v7937, 1.442695
      %v8360 = vpow.pop %v8359
      %v8361 = vmul.f32 %v7938, 1.442695
      %v8362 = vpow.pop %v8361
      %v8363 = vmul.f32 %v7939, 1.442695
      %v8364 = vpow.pop %v8363
      %v8365 = vmul.f32 %v7940, 1.442695
      %v8366 = vpow.pop %v8365
      %v8367 = vmul.f32 %v7941, 1.442695
      %v8368 = vpow.pop %v8367
      %v8369 = vmul.f32 %v7942, 1.442695
      %v8370 = vpow.pop %v8369
      %v8371 = vmul.f32 %v7943, 1.442695
      %v8372 = vpow.pop %v8371
      %v8373 = vmul.f32 %v7944, 1.442695
      %v8374 = vpow.pop %v8373
      %v8375 = vmul.f32 %v7945, 1.442695
      %v8376 = vpow.pop %v8375
      %v8377 = vmul.f32 %v7946, 1.442695
      %v8378 = vpow.pop %v8377
      %v8379 = vmul.f32 %v7947, 1.442695
      %v8380 = vpow.pop %v8379
      %v8381 = vmul.f32 %v7948, 1.442695
      %v8382 = vpow.pop %v8381
      %v8383 = vmul.f32 %v7949, 1.442695
      %v8384 = vpow.pop %v8383
      %v8385 = vmul.f32 %v7950, 1.442695
      %v8386 = vpow.pop %v8385
      %v8387 = vmul.f32 %v7951, 1.442695
      %v8388 = vpow.pop %v8387
      %v8389 = vmul.f32 %v7952, 1.442695
      %v8390 = vpow.pop %v8389
      %v8391 = vmul.f32 %v7953, 1.442695
      %v8392 = vpow.pop %v8391
      %v8393 = vmul.f32 %v7954, 1.442695
      %v8394 = vpow.pop %v8393
      %v8395 = vmul.f32 %v7955, 1.442695
      %v8396 = vpow.pop %v8395
      %v8397 = vmul.f32 %v7956, 1.442695
      %v8398 = vpow.pop %v8397
      %v8399 = vmul.f32 %v7957, 1.442695
      %v8400 = vpow.pop %v8399
      %v8401 = vmul.f32 %v7958, 1.442695
      %v8402 = vpow.pop %v8401
      %v8403 = vmul.f32 %v7959, 1.442695
      %v8404 = vpow.pop %v8403
      %v8405 = vmul.f32 %v7960, 1.442695
      %v8406 = vpow.pop %v8405
      %v8407 = vmul.f32 %v7961, 1.442695
      %v8408 = vpow.pop %v8407
      %v8409 = vmul.f32 %v7962, 1.442695
      %v8410 = vpow.pop %v8409
      %v8411 = vmul.f32 %v7963, 1.442695
      %v8412 = vpow.pop %v8411
      %v8413 = vmul.f32 %v7964, 1.442695
      %v8414 = vpow.pop %v8413
      %v8415 = vmul.f32 %v7965, 1.442695
      %v8416 = vpow.pop %v8415
      %v8417 = vmul.f32 %v7966, 1.442695
      %v8418 = vpow.pop %v8417
      %v8419 = vmul.f32 %v7967, 1.442695
      %v8420 = vpow.pop %v8419
      %v8421 = vmul.f32 %v7968, 1.442695
      %v8422 = vpow.pop %v8421
      %v8423 = vmul.f32 %v7969, 1.442695
      %v8424 = vpow.pop %v8423
      %v8425 = vmul.f32 %v7970, 1.442695
      %v8426 = vpow.pop %v8425
      %v8427 = vmul.f32 %v7971, 1.442695
      %v8428 = vpow.pop %v8427
      %v8429 = vmul.f32 %v7972, 1.442695
      %v8430 = vpow.pop %v8429
      %v8431 = vmul.f32 %v7973, 1.442695
      %v8432 = vpow.pop %v8431
      %v8433 = vmul.f32 %v7974, 1.442695
      %v8434 = vpow.pop %v8433
      %v8435 = vmul.f32 %v7975, 1.442695
      %v8436 = vpow.pop %v8435
      %v8437 = vmul.f32 %v7976, 1.442695
      %v8438 = vpow.pop %v8437
      %v8439 = vmul.f32 %v7977, 1.442695
      %v8440 = vpow.pop %v8439
      %v8441 = vmul.f32 %v7978, 1.442695
      %v8442 = vpow.pop %v8441
      %v8443 = vmul.f32 %v7979, 1.442695
      %v8444 = vpow.pop %v8443
      %v8445 = vmul.f32 %v7980, 1.442695
      %v8446 = vpow.pop %v8445
      %v8447 = vmul.f32 %v7981, 1.442695
      %v8448 = vpow.pop %v8447
      %v8449 = vmul.f32 %v7982, 1.442695
      %v8450 = vpow.pop %v8449
      %v8451 = vmul.f32 %v7983, 1.442695
      %v8452 = vpow.pop %v8451
      %v8453 = vmul.f32 %v7984, 1.442695
      %v8454 = vpow.pop %v8453
      %v8455 = vmul.f32 %v7985, 1.442695
      %v8456 = vpow.pop %v8455
      %v8457 = vmul.f32 %v7986, 1.442695
      %v8458 = vpow.pop %v8457
      %v8459 = vmul.f32 %v7987, 1.442695
      %v8460 = vpow.pop %v8459
      %v8461 = vmul.f32 %v7988, 1.442695
      %v8462 = vpow.pop %v8461
      %v8463 = vmul.f32 %v7989, 1.442695
      %v8464 = vpow.pop %v8463
      %v8465 = vmul.f32 %v7990, 1.442695
      %v8466 = vpow.pop %v8465
      %v8467 = vmul.f32 %v7991, 1.442695
      %v8468 = vpow.pop %v8467
      %v8469 = vmul.f32 %v7992, 1.442695
      %v8470 = vpow.pop %v8469
      %v8471 = vmul.f32 %v7993, 1.442695
      %v8472 = vpow.pop %v8471
      %v8473 = vmul.f32 %v7994, 1.442695
      %v8474 = vpow.pop %v8473
      %v8475 = vmul.f32 %v7995, 1.442695
      %v8476 = vpow.pop %v8475
      %v8477 = vmul.f32 %v7996, 1.442695
      %v8478 = vpow.pop %v8477
      %v8479 = vmul.f32 %v7997, 1.442695
      %v8480 = vpow.pop %v8479
      %v8481 = vmul.f32 %v7998, 1.442695
      %v8482 = vpow.pop %v8481
      %v8483 = vmul.f32 %v7999, 1.442695
      %v8484 = vpow.pop %v8483
      %v8485 = vmul.f32 %v8000, 1.442695
      %v8486 = vpow.pop %v8485
      %v8487 = vmul.f32 %v8001, 1.442695
      %v8488 = vpow.pop %v8487
      %v8489 = vmul.f32 %v8002, 1.442695
      %v8490 = vpow.pop %v8489
      %v8491 = vmul.f32 %v8003, 1.442695
      %v8492 = vpow.pop %v8491
      %v8493 = vmul.f32 %v8004, 1.442695
      %v8494 = vpow.pop %v8493
      %v8495 = vmul.f32 %v8005, 1.442695
      %v8496 = vpow.pop %v8495
      %v8497 = vmul.f32 %v8006, 1.442695
      %v8498 = vpow.pop %v8497
      %v8499 = vmul.f32 %v8007, 1.442695
      %v8500 = vpow.pop %v8499
      %v8501 = vmul.f32 %v8008, 1.442695
      %v8502 = vpow.pop %v8501
      %v8503 = vmul.f32 %v8009, 1.442695
      %v8504 = vpow.pop %v8503
      %v8505 = vmul.f32 %v8010, 1.442695
      %v8506 = vpow.pop %v8505
      %v8507 = vmul.f32 %v8011, 1.442695
      %v8508 = vpow.pop %v8507
      %v8509 = vmul.f32 %v8012, 1.442695
      %v8510 = vpow.pop %v8509
      %v8511 = vmul.f32 %v8013, 1.442695
      %v8512 = vpow.pop %v8511
      %v8513 = vmul.f32 %v8014, 1.442695
      %v8514 = vpow.pop %v8513
      %v8515 = vmul.f32 %v8015, 1.442695
      %v8516 = vpow.pop %v8515
      %v8517 = vmul.f32 %v8016, 1.442695
      %v8518 = vpow.pop %v8517
      %v8519 = vmul.f32 %v8017, 1.442695
      %v8520 = vpow.pop %v8519
      %v8521 = vmul.f32 %v8018, 1.442695
      %v8522 = vpow.pop %v8521
      %v8523 = vmul.f32 %v8019, 1.442695
      %v8524 = vpow.pop %v8523
      %v8525 = vmul.f32 %v8020, 1.442695
      %v8526 = vpow.pop %v8525
      %v8527 = vmul.f32 %v8021, 1.442695
      %v8528 = vpow.pop %v8527
      %v8529 = vmul.f32 %v8022, 1.442695
      %v8530 = vpow.pop %v8529
      %v8531 = vmul.f32 %v8023, 1.442695
      %v8532 = vpow.pop %v8531
      %v8533 = vmul.f32 %v8024, 1.442695
      %v8534 = vpow.pop %v8533
      %v8535 = vmul.f32 %v8025, 1.442695
      %v8536 = vpow.pop %v8535
      %v8537 = vmul.f32 %v8026, 1.442695
      %v8538 = vpow.pop %v8537
      %8539 = vadd.xlane.f32.xlu0 %v8028
      %v8540 = vpop.xlane.xlu0 %8539
      %8541 = vadd.xlane.f32.xlu0 %v8030
      %v8542 = vpop.xlane.xlu0 %8541
      %8543 = vadd.xlane.f32.xlu0 %v8032
      %v8544 = vpop.xlane.xlu0 %8543
      %8545 = vadd.xlane.f32.xlu0 %v8034
      %v8546 = vpop.xlane.xlu0 %8545
      %8547 = vadd.xlane.f32.xlu0 %v8036
      %v8548 = vpop.xlane.xlu0 %8547
      %8549 = vadd.xlane.f32.xlu0 %v8038
      %v8550 = vpop.xlane.xlu0 %8549
      %8551 = vadd.xlane.f32.xlu0 %v8040
      %v8552 = vpop.xlane.xlu0 %8551
      %8553 = vadd.xlane.f32.xlu0 %v8042
      %v8554 = vpop.xlane.xlu0 %8553
      %8555 = vadd.xlane.f32.xlu0 %v8044
      %v8556 = vpop.xlane.xlu0 %8555
      %8557 = vadd.xlane.f32.xlu0 %v8046
      %v8558 = vpop.xlane.xlu0 %8557
      %8559 = vadd.xlane.f32.xlu0 %v8048
      %v8560 = vpop.xlane.xlu0 %8559
      %8561 = vadd.xlane.f32.xlu0 %v8050
      %v8562 = vpop.xlane.xlu0 %8561
      %8563 = vadd.xlane.f32.xlu0 %v8052
      %v8564 = vpop.xlane.xlu0 %8563
      %8565 = vadd.xlane.f32.xlu0 %v8054
      %v8566 = vpop.xlane.xlu0 %8565
      %8567 = vadd.xlane.f32.xlu0 %v8056
      %v8568 = vpop.xlane.xlu0 %8567
      %8569 = vadd.xlane.f32.xlu0 %v8058
      %v8570 = vpop.xlane.xlu0 %8569
      %8571 = vadd.xlane.f32.xlu0 %v8060
      %v8572 = vpop.xlane.xlu0 %8571
      %8573 = vadd.xlane.f32.xlu0 %v8062
      %v8574 = vpop.xlane.xlu0 %8573
      %8575 = vadd.xlane.f32.xlu0 %v8064
      %v8576 = vpop.xlane.xlu0 %8575
      %8577 = vadd.xlane.f32.xlu0 %v8066
      %v8578 = vpop.xlane.xlu0 %8577
      %8579 = vadd.xlane.f32.xlu0 %v8068
      %v8580 = vpop.xlane.xlu0 %8579
      %8581 = vadd.xlane.f32.xlu0 %v8070
      %v8582 = vpop.xlane.xlu0 %8581
      %8583 = vadd.xlane.f32.xlu0 %v8072
      %v8584 = vpop.xlane.xlu0 %8583
      %8585 = vadd.xlane.f32.xlu0 %v8074
      %v8586 = vpop.xlane.xlu0 %8585
      %8587 = vadd.xlane.f32.xlu0 %v8076
      %v8588 = vpop.xlane.xlu0 %8587
      %8589 = vadd.xlane.f32.xlu0 %v8078
      %v8590 = vpop.xlane.xlu0 %8589
      %8591 = vadd.xlane.f32.xlu0 %v8080
      %v8592 = vpop.xlane.xlu0 %8591
      %8593 = vadd.xlane.f32.xlu0 %v8082
      %v8594 = vpop.xlane.xlu0 %8593
      %8595 = vadd.xlane.f32.xlu0 %v8084
      %v8596 = vpop.xlane.xlu0 %8595
      %8597 = vadd.xlane.f32.xlu0 %v8086
      %v8598 = vpop.xlane.xlu0 %8597
      %8599 = vadd.xlane.f32.xlu0 %v8088
      %v8600 = vpop.xlane.xlu0 %8599
      %8601 = vadd.xlane.f32.xlu0 %v8090
      %v8602 = vpop.xlane.xlu0 %8601
      %8603 = vadd.xlane.f32.xlu0 %v8092
      %v8604 = vpop.xlane.xlu0 %8603
      %8605 = vadd.xlane.f32.xlu0 %v8094
      %v8606 = vpop.xlane.xlu0 %8605
      %8607 = vadd.xlane.f32.xlu0 %v8096
      %v8608 = vpop.xlane.xlu0 %8607
      %8609 = vadd.xlane.f32.xlu0 %v8098
      %v8610 = vpop.xlane.xlu0 %8609
      %8611 = vadd.xlane.f32.xlu0 %v8100
      %v8612 = vpop.xlane.xlu0 %8611
      %8613 = vadd.xlane.f32.xlu0 %v8102
      %v8614 = vpop.xlane.xlu0 %8613
      %8615 = vadd.xlane.f32.xlu0 %v8104
      %v8616 = vpop.xlane.xlu0 %8615
      %8617 = vadd.xlane.f32.xlu0 %v8106
      %v8618 = vpop.xlane.xlu0 %8617
      %8619 = vadd.xlane.f32.xlu0 %v8108
      %v8620 = vpop.xlane.xlu0 %8619
      %8621 = vadd.xlane.f32.xlu0 %v8110
      %v8622 = vpop.xlane.xlu0 %8621
      %8623 = vadd.xlane.f32.xlu0 %v8112
      %v8624 = vpop.xlane.xlu0 %8623
      %8625 = vadd.xlane.f32.xlu0 %v8114
      %v8626 = vpop.xlane.xlu0 %8625
      %8627 = vadd.xlane.f32.xlu0 %v8116
      %v8628 = vpop.xlane.xlu0 %8627
      %8629 = vadd.xlane.f32.xlu0 %v8118
      %v8630 = vpop.xlane.xlu0 %8629
      %8631 = vadd.xlane.f32.xlu0 %v8120
      %v8632 = vpop.xlane.xlu0 %8631
      %8633 = vadd.xlane.f32.xlu0 %v8122
      %v8634 = vpop.xlane.xlu0 %8633
      %8635 = vadd.xlane.f32.xlu0 %v8124
      %v8636 = vpop.xlane.xlu0 %8635
      %8637 = vadd.xlane.f32.xlu0 %v8126
      %v8638 = vpop.xlane.xlu0 %8637
      %8639 = vadd.xlane.f32.xlu0 %v8128
      %v8640 = vpop.xlane.xlu0 %8639
      %8641 = vadd.xlane.f32.xlu0 %v8130
      %v8642 = vpop.xlane.xlu0 %8641
      %8643 = vadd.xlane.f32.xlu0 %v8132
      %v8644 = vpop.xlane.xlu0 %8643
      %8645 = vadd.xlane.f32.xlu0 %v8134
      %v8646 = vpop.xlane.xlu0 %8645
      %8647 = vadd.xlane.f32.xlu0 %v8136
      %v8648 = vpop.xlane.xlu0 %8647
      %8649 = vadd.xlane.f32.xlu0 %v8138
      %v8650 = vpop.xlane.xlu0 %8649
      %8651 = vadd.xlane.f32.xlu0 %v8140
      %v8652 = vpop.xlane.xlu0 %8651
      %8653 = vadd.xlane.f32.xlu0 %v8142
      %v8654 = vpop.xlane.xlu0 %8653
      %8655 = vadd.xlane.f32.xlu0 %v8144
      %v8656 = vpop.xlane.xlu0 %8655
      %8657 = vadd.xlane.f32.xlu0 %v8146
      %v8658 = vpop.xlane.xlu0 %8657
      %8659 = vadd.xlane.f32.xlu0 %v8148
      %v8660 = vpop.xlane.xlu0 %8659
      %8661 = vadd.xlane.f32.xlu0 %v8150
      %v8662 = vpop.xlane.xlu0 %8661
      %8663 = vadd.xlane.f32.xlu0 %v8152
      %v8664 = vpop.xlane.xlu0 %8663
      %8665 = vadd.xlane.f32.xlu0 %v8154
      %v8666 = vpop.xlane.xlu0 %8665
      %8667 = vadd.xlane.f32.xlu0 %v8156
      %v8668 = vpop.xlane.xlu0 %8667
      %8669 = vadd.xlane.f32.xlu0 %v8158
      %v8670 = vpop.xlane.xlu0 %8669
      %8671 = vadd.xlane.f32.xlu0 %v8160
      %v8672 = vpop.xlane.xlu0 %8671
      %8673 = vadd.xlane.f32.xlu0 %v8162
      %v8674 = vpop.xlane.xlu0 %8673
      %8675 = vadd.xlane.f32.xlu0 %v8164
      %v8676 = vpop.xlane.xlu0 %8675
      %8677 = vadd.xlane.f32.xlu0 %v8166
      %v8678 = vpop.xlane.xlu0 %8677
      %8679 = vadd.xlane.f32.xlu0 %v8168
      %v8680 = vpop.xlane.xlu0 %8679
      %8681 = vadd.xlane.f32.xlu0 %v8170
      %v8682 = vpop.xlane.xlu0 %8681
      %8683 = vadd.xlane.f32.xlu0 %v8172
      %v8684 = vpop.xlane.xlu0 %8683
      %8685 = vadd.xlane.f32.xlu0 %v8174
      %v8686 = vpop.xlane.xlu0 %8685
      %8687 = vadd.xlane.f32.xlu0 %v8176
      %v8688 = vpop.xlane.xlu0 %8687
      %8689 = vadd.xlane.f32.xlu0 %v8178
      %v8690 = vpop.xlane.xlu0 %8689
      %8691 = vadd.xlane.f32.xlu0 %v8180
      %v8692 = vpop.xlane.xlu0 %8691
      %8693 = vadd.xlane.f32.xlu0 %v8182
      %v8694 = vpop.xlane.xlu0 %8693
      %8695 = vadd.xlane.f32.xlu0 %v8184
      %v8696 = vpop.xlane.xlu0 %8695
      %8697 = vadd.xlane.f32.xlu0 %v8186
      %v8698 = vpop.xlane.xlu0 %8697
      %8699 = vadd.xlane.f32.xlu0 %v8188
      %v8700 = vpop.xlane.xlu0 %8699
      %8701 = vadd.xlane.f32.xlu0 %v8190
      %v8702 = vpop.xlane.xlu0 %8701
      %8703 = vadd.xlane.f32.xlu0 %v8192
      %v8704 = vpop.xlane.xlu0 %8703
      %8705 = vadd.xlane.f32.xlu0 %v8194
      %v8706 = vpop.xlane.xlu0 %8705
      %8707 = vadd.xlane.f32.xlu0 %v8196
      %v8708 = vpop.xlane.xlu0 %8707
      %8709 = vadd.xlane.f32.xlu0 %v8198
      %v8710 = vpop.xlane.xlu0 %8709
      %8711 = vadd.xlane.f32.xlu0 %v8200
      %v8712 = vpop.xlane.xlu0 %8711
      %8713 = vadd.xlane.f32.xlu0 %v8202
      %v8714 = vpop.xlane.xlu0 %8713
      %8715 = vadd.xlane.f32.xlu0 %v8204
      %v8716 = vpop.xlane.xlu0 %8715
      %8717 = vadd.xlane.f32.xlu0 %v8206
      %v8718 = vpop.xlane.xlu0 %8717
      %8719 = vadd.xlane.f32.xlu0 %v8208
      %v8720 = vpop.xlane.xlu0 %8719
      %8721 = vadd.xlane.f32.xlu0 %v8210
      %v8722 = vpop.xlane.xlu0 %8721
      %8723 = vadd.xlane.f32.xlu0 %v8212
      %v8724 = vpop.xlane.xlu0 %8723
      %8725 = vadd.xlane.f32.xlu0 %v8214
      %v8726 = vpop.xlane.xlu0 %8725
      %8727 = vadd.xlane.f32.xlu0 %v8216
      %v8728 = vpop.xlane.xlu0 %8727
      %8729 = vadd.xlane.f32.xlu0 %v8218
      %v8730 = vpop.xlane.xlu0 %8729
      %8731 = vadd.xlane.f32.xlu0 %v8220
      %v8732 = vpop.xlane.xlu0 %8731
      %8733 = vadd.xlane.f32.xlu0 %v8222
      %v8734 = vpop.xlane.xlu0 %8733
      %8735 = vadd.xlane.f32.xlu0 %v8224
      %v8736 = vpop.xlane.xlu0 %8735
      %8737 = vadd.xlane.f32.xlu0 %v8226
      %v8738 = vpop.xlane.xlu0 %8737
      %8739 = vadd.xlane.f32.xlu0 %v8228
      %v8740 = vpop.xlane.xlu0 %8739
      %8741 = vadd.xlane.f32.xlu0 %v8230
      %v8742 = vpop.xlane.xlu0 %8741
      %8743 = vadd.xlane.f32.xlu0 %v8232
      %v8744 = vpop.xlane.xlu0 %8743
      %8745 = vadd.xlane.f32.xlu0 %v8234
      %v8746 = vpop.xlane.xlu0 %8745
      %8747 = vadd.xlane.f32.xlu0 %v8236
      %v8748 = vpop.xlane.xlu0 %8747
      %8749 = vadd.xlane.f32.xlu0 %v8238
      %v8750 = vpop.xlane.xlu0 %8749
      %8751 = vadd.xlane.f32.xlu0 %v8240
      %v8752 = vpop.xlane.xlu0 %8751
      %8753 = vadd.xlane.f32.xlu0 %v8242
      %v8754 = vpop.xlane.xlu0 %8753
      %8755 = vadd.xlane.f32.xlu0 %v8244
      %v8756 = vpop.xlane.xlu0 %8755
      %8757 = vadd.xlane.f32.xlu0 %v8246
      %v8758 = vpop.xlane.xlu0 %8757
      %8759 = vadd.xlane.f32.xlu0 %v8248
      %v8760 = vpop.xlane.xlu0 %8759
      %8761 = vadd.xlane.f32.xlu0 %v8250
      %v8762 = vpop.xlane.xlu0 %8761
      %8763 = vadd.xlane.f32.xlu0 %v8252
      %v8764 = vpop.xlane.xlu0 %8763
      %8765 = vadd.xlane.f32.xlu0 %v8254
      %v8766 = vpop.xlane.xlu0 %8765
      %8767 = vadd.xlane.f32.xlu0 %v8256
      %v8768 = vpop.xlane.xlu0 %8767
      %8769 = vadd.xlane.f32.xlu0 %v8258
      %v8770 = vpop.xlane.xlu0 %8769
      %8771 = vadd.xlane.f32.xlu0 %v8260
      %v8772 = vpop.xlane.xlu0 %8771
      %8773 = vadd.xlane.f32.xlu0 %v8262
      %v8774 = vpop.xlane.xlu0 %8773
      %8775 = vadd.xlane.f32.xlu0 %v8264
      %v8776 = vpop.xlane.xlu0 %8775
      %8777 = vadd.xlane.f32.xlu0 %v8266
      %v8778 = vpop.xlane.xlu0 %8777
      %8779 = vadd.xlane.f32.xlu0 %v8268
      %v8780 = vpop.xlane.xlu0 %8779
      %8781 = vadd.xlane.f32.xlu0 %v8270
      %v8782 = vpop.xlane.xlu0 %8781
      %8783 = vadd.xlane.f32.xlu0 %v8272
      %v8784 = vpop.xlane.xlu0 %8783
      %8785 = vadd.xlane.f32.xlu0 %v8274
      %v8786 = vpop.xlane.xlu0 %8785
      %8787 = vadd.xlane.f32.xlu0 %v8276
      %v8788 = vpop.xlane.xlu0 %8787
      %8789 = vadd.xlane.f32.xlu0 %v8278
      %v8790 = vpop.xlane.xlu0 %8789
      %8791 = vadd.xlane.f32.xlu0 %v8280
      %v8792 = vpop.xlane.xlu0 %8791
      %8793 = vadd.xlane.f32.xlu0 %v8282
      %v8794 = vpop.xlane.xlu0 %8793
      %8795 = vadd.xlane.f32.xlu0 %v8284
      %v8796 = vpop.xlane.xlu0 %8795
      %8797 = vadd.xlane.f32.xlu0 %v8286
      %v8798 = vpop.xlane.xlu0 %8797
      %8799 = vadd.xlane.f32.xlu0 %v8288
      %v8800 = vpop.xlane.xlu0 %8799
      %8801 = vadd.xlane.f32.xlu0 %v8290
      %v8802 = vpop.xlane.xlu0 %8801
      %8803 = vadd.xlane.f32.xlu0 %v8292
      %v8804 = vpop.xlane.xlu0 %8803
      %8805 = vadd.xlane.f32.xlu0 %v8294
      %v8806 = vpop.xlane.xlu0 %8805
      %8807 = vadd.xlane.f32.xlu0 %v8296
      %v8808 = vpop.xlane.xlu0 %8807
      %8809 = vadd.xlane.f32.xlu0 %v8298
      %v8810 = vpop.xlane.xlu0 %8809
      %8811 = vadd.xlane.f32.xlu0 %v8300
      %v8812 = vpop.xlane.xlu0 %8811
      %8813 = vadd.xlane.f32.xlu0 %v8302
      %v8814 = vpop.xlane.xlu0 %8813
      %8815 = vadd.xlane.f32.xlu0 %v8304
      %v8816 = vpop.xlane.xlu0 %8815
      %8817 = vadd.xlane.f32.xlu0 %v8306
      %v8818 = vpop.xlane.xlu0 %8817
      %8819 = vadd.xlane.f32.xlu0 %v8308
      %v8820 = vpop.xlane.xlu0 %8819
      %8821 = vadd.xlane.f32.xlu0 %v8310
      %v8822 = vpop.xlane.xlu0 %8821
      %8823 = vadd.xlane.f32.xlu0 %v8312
      %v8824 = vpop.xlane.xlu0 %8823
      %8825 = vadd.xlane.f32.xlu0 %v8314
      %v8826 = vpop.xlane.xlu0 %8825
      %8827 = vadd.xlane.f32.xlu0 %v8316
      %v8828 = vpop.xlane.xlu0 %8827
      %8829 = vadd.xlane.f32.xlu0 %v8318
      %v8830 = vpop.xlane.xlu0 %8829
      %8831 = vadd.xlane.f32.xlu0 %v8320
      %v8832 = vpop.xlane.xlu0 %8831
      %8833 = vadd.xlane.f32.xlu0 %v8322
      %v8834 = vpop.xlane.xlu0 %8833
      %8835 = vadd.xlane.f32.xlu0 %v8324
      %v8836 = vpop.xlane.xlu0 %8835
      %8837 = vadd.xlane.f32.xlu0 %v8326
      %v8838 = vpop.xlane.xlu0 %8837
      %8839 = vadd.xlane.f32.xlu0 %v8328
      %v8840 = vpop.xlane.xlu0 %8839
      %8841 = vadd.xlane.f32.xlu0 %v8330
      %v8842 = vpop.xlane.xlu0 %8841
      %8843 = vadd.xlane.f32.xlu0 %v8332
      %v8844 = vpop.xlane.xlu0 %8843
      %8845 = vadd.xlane.f32.xlu0 %v8334
      %v8846 = vpop.xlane.xlu0 %8845
      %8847 = vadd.xlane.f32.xlu0 %v8336
      %v8848 = vpop.xlane.xlu0 %8847
      %8849 = vadd.xlane.f32.xlu0 %v8338
      %v8850 = vpop.xlane.xlu0 %8849
      %8851 = vadd.xlane.f32.xlu0 %v8340
      %v8852 = vpop.xlane.xlu0 %8851
      %8853 = vadd.xlane.f32.xlu0 %v8342
      %v8854 = vpop.xlane.xlu0 %8853
      %8855 = vadd.xlane.f32.xlu0 %v8344
      %v8856 = vpop.xlane.xlu0 %8855
      %8857 = vadd.xlane.f32.xlu0 %v8346
      %v8858 = vpop.xlane.xlu0 %8857
      %8859 = vadd.xlane.f32.xlu0 %v8348
      %v8860 = vpop.xlane.xlu0 %8859
      %8861 = vadd.xlane.f32.xlu0 %v8350
      %v8862 = vpop.xlane.xlu0 %8861
      %8863 = vadd.xlane.f32.xlu0 %v8352
      %v8864 = vpop.xlane.xlu0 %8863
      %8865 = vadd.xlane.f32.xlu0 %v8354
      %v8866 = vpop.xlane.xlu0 %8865
      %8867 = vadd.xlane.f32.xlu0 %v8356
      %v8868 = vpop.xlane.xlu0 %8867
      %8869 = vadd.xlane.f32.xlu0 %v8358
      %v8870 = vpop.xlane.xlu0 %8869
      %8871 = vadd.xlane.f32.xlu0 %v8360
      %v8872 = vpop.xlane.xlu0 %8871
      %8873 = vadd.xlane.f32.xlu0 %v8362
      %v8874 = vpop.xlane.xlu0 %8873
      %8875 = vadd.xlane.f32.xlu0 %v8364
      %v8876 = vpop.xlane.xlu0 %8875
      %8877 = vadd.xlane.f32.xlu0 %v8366
      %v8878 = vpop.xlane.xlu0 %8877
      %8879 = vadd.xlane.f32.xlu0 %v8368
      %v8880 = vpop.xlane.xlu0 %8879
      %8881 = vadd.xlane.f32.xlu0 %v8370
      %v8882 = vpop.xlane.xlu0 %8881
      %8883 = vadd.xlane.f32.xlu0 %v8372
      %v8884 = vpop.xlane.xlu0 %8883
      %8885 = vadd.xlane.f32.xlu0 %v8374
      %v8886 = vpop.xlane.xlu0 %8885
      %8887 = vadd.xlane.f32.xlu0 %v8376
      %v8888 = vpop.xlane.xlu0 %8887
      %8889 = vadd.xlane.f32.xlu0 %v8378
      %v8890 = vpop.xlane.xlu0 %8889
      %8891 = vadd.xlane.f32.xlu0 %v8380
      %v8892 = vpop.xlane.xlu0 %8891
      %8893 = vadd.xlane.f32.xlu0 %v8382
      %v8894 = vpop.xlane.xlu0 %8893
      %8895 = vadd.xlane.f32.xlu0 %v8384
      %v8896 = vpop.xlane.xlu0 %8895
      %8897 = vadd.xlane.f32.xlu0 %v8386
      %v8898 = vpop.xlane.xlu0 %8897
      %8899 = vadd.xlane.f32.xlu0 %v8388
      %v8900 = vpop.xlane.xlu0 %8899
      %8901 = vadd.xlane.f32.xlu0 %v8390
      %v8902 = vpop.xlane.xlu0 %8901
      %8903 = vadd.xlane.f32.xlu0 %v8392
      %v8904 = vpop.xlane.xlu0 %8903
      %8905 = vadd.xlane.f32.xlu0 %v8394
      %v8906 = vpop.xlane.xlu0 %8905
      %8907 = vadd.xlane.f32.xlu0 %v8396
      %v8908 = vpop.xlane.xlu0 %8907
      %8909 = vadd.xlane.f32.xlu0 %v8398
      %v8910 = vpop.xlane.xlu0 %8909
      %8911 = vadd.xlane.f32.xlu0 %v8400
      %v8912 = vpop.xlane.xlu0 %8911
      %8913 = vadd.xlane.f32.xlu0 %v8402
      %v8914 = vpop.xlane.xlu0 %8913
      %8915 = vadd.xlane.f32.xlu0 %v8404
      %v8916 = vpop.xlane.xlu0 %8915
      %8917 = vadd.xlane.f32.xlu0 %v8406
      %v8918 = vpop.xlane.xlu0 %8917
      %8919 = vadd.xlane.f32.xlu0 %v8408
      %v8920 = vpop.xlane.xlu0 %8919
      %8921 = vadd.xlane.f32.xlu0 %v8410
      %v8922 = vpop.xlane.xlu0 %8921
      %8923 = vadd.xlane.f32.xlu0 %v8412
      %v8924 = vpop.xlane.xlu0 %8923
      %8925 = vadd.xlane.f32.xlu0 %v8414
      %v8926 = vpop.xlane.xlu0 %8925
      %8927 = vadd.xlane.f32.xlu0 %v8416
      %v8928 = vpop.xlane.xlu0 %8927
      %8929 = vadd.xlane.f32.xlu0 %v8418
      %v8930 = vpop.xlane.xlu0 %8929
      %8931 = vadd.xlane.f32.xlu0 %v8420
      %v8932 = vpop.xlane.xlu0 %8931
      %8933 = vadd.xlane.f32.xlu0 %v8422
      %v8934 = vpop.xlane.xlu0 %8933
      %8935 = vadd.xlane.f32.xlu0 %v8424
      %v8936 = vpop.xlane.xlu0 %8935
      %8937 = vadd.xlane.f32.xlu0 %v8426
      %v8938 = vpop.xlane.xlu0 %8937
      %8939 = vadd.xlane.f32.xlu0 %v8428
      %v8940 = vpop.xlane.xlu0 %8939
      %8941 = vadd.xlane.f32.xlu0 %v8430
      %v8942 = vpop.xlane.xlu0 %8941
      %8943 = vadd.xlane.f32.xlu0 %v8432
      %v8944 = vpop.xlane.xlu0 %8943
      %8945 = vadd.xlane.f32.xlu0 %v8434
      %v8946 = vpop.xlane.xlu0 %8945
      %8947 = vadd.xlane.f32.xlu0 %v8436
      %v8948 = vpop.xlane.xlu0 %8947
      %8949 = vadd.xlane.f32.xlu0 %v8438
      %v8950 = vpop.xlane.xlu0 %8949
      %8951 = vadd.xlane.f32.xlu0 %v8440
      %v8952 = vpop.xlane.xlu0 %8951
      %8953 = vadd.xlane.f32.xlu0 %v8442
      %v8954 = vpop.xlane.xlu0 %8953
      %8955 = vadd.xlane.f32.xlu0 %v8444
      %v8956 = vpop.xlane.xlu0 %8955
      %8957 = vadd.xlane.f32.xlu0 %v8446
      %v8958 = vpop.xlane.xlu0 %8957
      %8959 = vadd.xlane.f32.xlu0 %v8448
      %v8960 = vpop.xlane.xlu0 %8959
      %8961 = vadd.xlane.f32.xlu0 %v8450
      %v8962 = vpop.xlane.xlu0 %8961
      %8963 = vadd.xlane.f32.xlu0 %v8452
      %v8964 = vpop.xlane.xlu0 %8963
      %8965 = vadd.xlane.f32.xlu0 %v8454
      %v8966 = vpop.xlane.xlu0 %8965
      %8967 = vadd.xlane.f32.xlu0 %v8456
      %v8968 = vpop.xlane.xlu0 %8967
      %8969 = vadd.xlane.f32.xlu0 %v8458
      %v8970 = vpop.xlane.xlu0 %8969
      %8971 = vadd.xlane.f32.xlu0 %v8460
      %v8972 = vpop.xlane.xlu0 %8971
      %8973 = vadd.xlane.f32.xlu0 %v8462
      %v8974 = vpop.xlane.xlu0 %8973
      %8975 = vadd.xlane.f32.xlu0 %v8464
      %v8976 = vpop.xlane.xlu0 %8975
      %8977 = vadd.xlane.f32.xlu0 %v8466
      %v8978 = vpop.xlane.xlu0 %8977
      %8979 = vadd.xlane.f32.xlu0 %v8468
      %v8980 = vpop.xlane.xlu0 %8979
      %8981 = vadd.xlane.f32.xlu0 %v8470
      %v8982 = vpop.xlane.xlu0 %8981
      %8983 = vadd.xlane.f32.xlu0 %v8472
      %v8984 = vpop.xlane.xlu0 %8983
      %8985 = vadd.xlane.f32.xlu0 %v8474
      %v8986 = vpop.xlane.xlu0 %8985
      %8987 = vadd.xlane.f32.xlu0 %v8476
      %v8988 = vpop.xlane.xlu0 %8987
      %8989 = vadd.xlane.f32.xlu0 %v8478
      %v8990 = vpop.xlane.xlu0 %8989
      %8991 = vadd.xlane.f32.xlu0 %v8480
      %v8992 = vpop.xlane.xlu0 %8991
      %8993 = vadd.xlane.f32.xlu0 %v8482
      %v8994 = vpop.xlane.xlu0 %8993
      %8995 = vadd.xlane.f32.xlu0 %v8484
      %v8996 = vpop.xlane.xlu0 %8995
      %8997 = vadd.xlane.f32.xlu0 %v8486
      %v8998 = vpop.xlane.xlu0 %8997
      %8999 = vadd.xlane.f32.xlu0 %v8488
      %v9000 = vpop.xlane.xlu0 %8999
      %9001 = vadd.xlane.f32.xlu0 %v8490
      %v9002 = vpop.xlane.xlu0 %9001
      %9003 = vadd.xlane.f32.xlu0 %v8492
      %v9004 = vpop.xlane.xlu0 %9003
      %9005 = vadd.xlane.f32.xlu0 %v8494
      %v9006 = vpop.xlane.xlu0 %9005
      %9007 = vadd.xlane.f32.xlu0 %v8496
      %v9008 = vpop.xlane.xlu0 %9007
      %9009 = vadd.xlane.f32.xlu0 %v8498
      %v9010 = vpop.xlane.xlu0 %9009
      %9011 = vadd.xlane.f32.xlu0 %v8500
      %v9012 = vpop.xlane.xlu0 %9011
      %9013 = vadd.xlane.f32.xlu0 %v8502
      %v9014 = vpop.xlane.xlu0 %9013
      %9015 = vadd.xlane.f32.xlu0 %v8504
      %v9016 = vpop.xlane.xlu0 %9015
      %9017 = vadd.xlane.f32.xlu0 %v8506
      %v9018 = vpop.xlane.xlu0 %9017
      %9019 = vadd.xlane.f32.xlu0 %v8508
      %v9020 = vpop.xlane.xlu0 %9019
      %9021 = vadd.xlane.f32.xlu0 %v8510
      %v9022 = vpop.xlane.xlu0 %9021
      %9023 = vadd.xlane.f32.xlu0 %v8512
      %v9024 = vpop.xlane.xlu0 %9023
      %9025 = vadd.xlane.f32.xlu0 %v8514
      %v9026 = vpop.xlane.xlu0 %9025
      %9027 = vadd.xlane.f32.xlu0 %v8516
      %v9028 = vpop.xlane.xlu0 %9027
      %9029 = vadd.xlane.f32.xlu0 %v8518
      %v9030 = vpop.xlane.xlu0 %9029
      %9031 = vadd.xlane.f32.xlu0 %v8520
      %v9032 = vpop.xlane.xlu0 %9031
      %9033 = vadd.xlane.f32.xlu0 %v8522
      %v9034 = vpop.xlane.xlu0 %9033
      %9035 = vadd.xlane.f32.xlu0 %v8524
      %v9036 = vpop.xlane.xlu0 %9035
      %9037 = vadd.xlane.f32.xlu0 %v8526
      %v9038 = vpop.xlane.xlu0 %9037
      %9039 = vadd.xlane.f32.xlu0 %v8528
      %v9040 = vpop.xlane.xlu0 %9039
      %9041 = vadd.xlane.f32.xlu0 %v8530
      %v9042 = vpop.xlane.xlu0 %9041
      %9043 = vadd.xlane.f32.xlu0 %v8532
      %v9044 = vpop.xlane.xlu0 %9043
      %9045 = vadd.xlane.f32.xlu0 %v8534
      %v9046 = vpop.xlane.xlu0 %9045
      %9047 = vadd.xlane.f32.xlu0 %v8536
      %v9048 = vpop.xlane.xlu0 %9047
      %9049 = vadd.xlane.f32.xlu0 %v8538
      %v9050 = vpop.xlane.xlu0 %9049
      %v9051 = vlog2.pop %v8540
      %v9052 = vmul.f32 %v9051, 0.6931472
      %v9053 = vlog2.pop %v8542
      %v9054 = vmul.f32 %v9053, 0.6931472
      %v9055 = vlog2.pop %v8544
      %v9056 = vmul.f32 %v9055, 0.6931472
      %v9057 = vlog2.pop %v8546
      %v9058 = vmul.f32 %v9057, 0.6931472
      %v9059 = vlog2.pop %v8548
      %v9060 = vmul.f32 %v9059, 0.6931472
      %v9061 = vlog2.pop %v8550
      %v9062 = vmul.f32 %v9061, 0.6931472
      %v9063 = vlog2.pop %v8552
      %v9064 = vmul.f32 %v9063, 0.6931472
      %v9065 = vlog2.pop %v8554
      %v9066 = vmul.f32 %v9065, 0.6931472
      %v9067 = vlog2.pop %v8556
      %v9068 = vmul.f32 %v9067, 0.6931472
      %v9069 = vlog2.pop %v8558
      %v9070 = vmul.f32 %v9069, 0.6931472
      %v9071 = vlog2.pop %v8560
      %v9072 = vmul.f32 %v9071, 0.6931472
      %v9073 = vlog2.pop %v8562
      %v9074 = vmul.f32 %v9073, 0.6931472
      %v9075 = vlog2.pop %v8564
      %v9076 = vmul.f32 %v9075, 0.6931472
      %v9077 = vlog2.pop %v8566
      %v9078 = vmul.f32 %v9077, 0.6931472
      %v9079 = vlog2.pop %v8568
      %v9080 = vmul.f32 %v9079, 0.6931472
      %v9081 = vlog2.pop %v8570
      %v9082 = vmul.f32 %v9081, 0.6931472
      %v9083 = vlog2.pop %v8572
      %v9084 = vmul.f32 %v9083, 0.6931472
      %v9085 = vlog2.pop %v8574
      %v9086 = vmul.f32 %v9085, 0.6931472
      %v9087 = vlog2.pop %v8576
      %v9088 = vmul.f32 %v9087, 0.6931472
      %v9089 = vlog2.pop %v8578
      %v9090 = vmul.f32 %v9089, 0.6931472
      %v9091 = vlog2.pop %v8580
      %v9092 = vmul.f32 %v9091, 0.6931472
      %v9093 = vlog2.pop %v8582
      %v9094 = vmul.f32 %v9093, 0.6931472
      %v9095 = vlog2.pop %v8584
      %v9096 = vmul.f32 %v9095, 0.6931472
      %v9097 = vlog2.pop %v8586
      %v9098 = vmul.f32 %v9097, 0.6931472
      %v9099 = vlog2.pop %v8588
      %v9100 = vmul.f32 %v9099, 0.6931472
      %v9101 = vlog2.pop %v8590
      %v9102 = vmul.f32 %v9101, 0.6931472
      %v9103 = vlog2.pop %v8592
      %v9104 = vmul.f32 %v9103, 0.6931472
      %v9105 = vlog2.pop %v8594
      %v9106 = vmul.f32 %v9105, 0.6931472
      %v9107 = vlog2.pop %v8596
      %v9108 = vmul.f32 %v9107, 0.6931472
      %v9109 = vlog2.pop %v8598
      %v9110 = vmul.f32 %v9109, 0.6931472
      %v9111 = vlog2.pop %v8600
      %v9112 = vmul.f32 %v9111, 0.6931472
      %v9113 = vlog2.pop %v8602
      %v9114 = vmul.f32 %v9113, 0.6931472
      %v9115 = vlog2.pop %v8604
      %v9116 = vmul.f32 %v9115, 0.6931472
      %v9117 = vlog2.pop %v8606
      %v9118 = vmul.f32 %v9117, 0.6931472
      %v9119 = vlog2.pop %v8608
      %v9120 = vmul.f32 %v9119, 0.6931472
      %v9121 = vlog2.pop %v8610
      %v9122 = vmul.f32 %v9121, 0.6931472
      %v9123 = vlog2.pop %v8612
      %v9124 = vmul.f32 %v9123, 0.6931472
      %v9125 = vlog2.pop %v8614
      %v9126 = vmul.f32 %v9125, 0.6931472
      %v9127 = vlog2.pop %v8616
      %v9128 = vmul.f32 %v9127, 0.6931472
      %v9129 = vlog2.pop %v8618
      %v9130 = vmul.f32 %v9129, 0.6931472
      %v9131 = vlog2.pop %v8620
      %v9132 = vmul.f32 %v9131, 0.6931472
      %v9133 = vlog2.pop %v8622
      %v9134 = vmul.f32 %v9133, 0.6931472
      %v9135 = vlog2.pop %v8624
      %v9136 = vmul.f32 %v9135, 0.6931472
      %v9137 = vlog2.pop %v8626
      %v9138 = vmul.f32 %v9137, 0.6931472
      %v9139 = vlog2.pop %v8628
      %v9140 = vmul.f32 %v9139, 0.6931472
      %v9141 = vlog2.pop %v8630
      %v9142 = vmul.f32 %v9141, 0.6931472
      %v9143 = vlog2.pop %v8632
      %v9144 = vmul.f32 %v9143, 0.6931472
      %v9145 = vlog2.pop %v8634
      %v9146 = vmul.f32 %v9145, 0.6931472
      %v9147 = vlog2.pop %v8636
      %v9148 = vmul.f32 %v9147, 0.6931472
      %v9149 = vlog2.pop %v8638
      %v9150 = vmul.f32 %v9149, 0.6931472
      %v9151 = vlog2.pop %v8640
      %v9152 = vmul.f32 %v9151, 0.6931472
      %v9153 = vlog2.pop %v8642
      %v9154 = vmul.f32 %v9153, 0.6931472
      %v9155 = vlog2.pop %v8644
      %v9156 = vmul.f32 %v9155, 0.6931472
      %v9157 = vlog2.pop %v8646
      %v9158 = vmul.f32 %v9157, 0.6931472
      %v9159 = vlog2.pop %v8648
      %v9160 = vmul.f32 %v9159, 0.6931472
      %v9161 = vlog2.pop %v8650
      %v9162 = vmul.f32 %v9161, 0.6931472
      %v9163 = vlog2.pop %v8652
      %v9164 = vmul.f32 %v9163, 0.6931472
      %v9165 = vlog2.pop %v8654
      %v9166 = vmul.f32 %v9165, 0.6931472
      %v9167 = vlog2.pop %v8656
      %v9168 = vmul.f32 %v9167, 0.6931472
      %v9169 = vlog2.pop %v8658
      %v9170 = vmul.f32 %v9169, 0.6931472
      %v9171 = vlog2.pop %v8660
      %v9172 = vmul.f32 %v9171, 0.6931472
      %v9173 = vlog2.pop %v8662
      %v9174 = vmul.f32 %v9173, 0.6931472
      %v9175 = vlog2.pop %v8664
      %v9176 = vmul.f32 %v9175, 0.6931472
      %v9177 = vlog2.pop %v8666
      %v9178 = vmul.f32 %v9177, 0.6931472
      %v9179 = vlog2.pop %v8668
      %v9180 = vmul.f32 %v9179, 0.6931472
      %v9181 = vlog2.pop %v8670
      %v9182 = vmul.f32 %v9181, 0.6931472
      %v9183 = vlog2.pop %v8672
      %v9184 = vmul.f32 %v9183, 0.6931472
      %v9185 = vlog2.pop %v8674
      %v9186 = vmul.f32 %v9185, 0.6931472
      %v9187 = vlog2.pop %v8676
      %v9188 = vmul.f32 %v9187, 0.6931472
      %v9189 = vlog2.pop %v8678
      %v9190 = vmul.f32 %v9189, 0.6931472
      %v9191 = vlog2.pop %v8680
      %v9192 = vmul.f32 %v9191, 0.6931472
      %v9193 = vlog2.pop %v8682
      %v9194 = vmul.f32 %v9193, 0.6931472
      %v9195 = vlog2.pop %v8684
      %v9196 = vmul.f32 %v9195, 0.6931472
      %v9197 = vlog2.pop %v8686
      %v9198 = vmul.f32 %v9197, 0.6931472
      %v9199 = vlog2.pop %v8688
      %v9200 = vmul.f32 %v9199, 0.6931472
      %v9201 = vlog2.pop %v8690
      %v9202 = vmul.f32 %v9201, 0.6931472
      %v9203 = vlog2.pop %v8692
      %v9204 = vmul.f32 %v9203, 0.6931472
      %v9205 = vlog2.pop %v8694
      %v9206 = vmul.f32 %v9205, 0.6931472
      %v9207 = vlog2.pop %v8696
      %v9208 = vmul.f32 %v9207, 0.6931472
      %v9209 = vlog2.pop %v8698
      %v9210 = vmul.f32 %v9209, 0.6931472
      %v9211 = vlog2.pop %v8700
      %v9212 = vmul.f32 %v9211, 0.6931472
      %v9213 = vlog2.pop %v8702
      %v9214 = vmul.f32 %v9213, 0.6931472
      %v9215 = vlog2.pop %v8704
      %v9216 = vmul.f32 %v9215, 0.6931472
      %v9217 = vlog2.pop %v8706
      %v9218 = vmul.f32 %v9217, 0.6931472
      %v9219 = vlog2.pop %v8708
      %v9220 = vmul.f32 %v9219, 0.6931472
      %v9221 = vlog2.pop %v8710
      %v9222 = vmul.f32 %v9221, 0.6931472
      %v9223 = vlog2.pop %v8712
      %v9224 = vmul.f32 %v9223, 0.6931472
      %v9225 = vlog2.pop %v8714
      %v9226 = vmul.f32 %v9225, 0.6931472
      %v9227 = vlog2.pop %v8716
      %v9228 = vmul.f32 %v9227, 0.6931472
      %v9229 = vlog2.pop %v8718
      %v9230 = vmul.f32 %v9229, 0.6931472
      %v9231 = vlog2.pop %v8720
      %v9232 = vmul.f32 %v9231, 0.6931472
      %v9233 = vlog2.pop %v8722
      %v9234 = vmul.f32 %v9233, 0.6931472
      %v9235 = vlog2.pop %v8724
      %v9236 = vmul.f32 %v9235, 0.6931472
      %v9237 = vlog2.pop %v8726
      %v9238 = vmul.f32 %v9237, 0.6931472
      %v9239 = vlog2.pop %v8728
      %v9240 = vmul.f32 %v9239, 0.6931472
      %v9241 = vlog2.pop %v8730
      %v9242 = vmul.f32 %v9241, 0.6931472
      %v9243 = vlog2.pop %v8732
      %v9244 = vmul.f32 %v9243, 0.6931472
      %v9245 = vlog2.pop %v8734
      %v9246 = vmul.f32 %v9245, 0.6931472
      %v9247 = vlog2.pop %v8736
      %v9248 = vmul.f32 %v9247, 0.6931472
      %v9249 = vlog2.pop %v8738
      %v9250 = vmul.f32 %v9249, 0.6931472
      %v9251 = vlog2.pop %v8740
      %v9252 = vmul.f32 %v9251, 0.6931472
      %v9253 = vlog2.pop %v8742
      %v9254 = vmul.f32 %v9253, 0.6931472
      %v9255 = vlog2.pop %v8744
      %v9256 = vmul.f32 %v9255, 0.6931472
      %v9257 = vlog2.pop %v8746
      %v9258 = vmul.f32 %v9257, 0.6931472
      %v9259 = vlog2.pop %v8748
      %v9260 = vmul.f32 %v9259, 0.6931472
      %v9261 = vlog2.pop %v8750
      %v9262 = vmul.f32 %v9261, 0.6931472
      %v9263 = vlog2.pop %v8752
      %v9264 = vmul.f32 %v9263, 0.6931472
      %v9265 = vlog2.pop %v8754
      %v9266 = vmul.f32 %v9265, 0.6931472
      %v9267 = vlog2.pop %v8756
      %v9268 = vmul.f32 %v9267, 0.6931472
      %v9269 = vlog2.pop %v8758
      %v9270 = vmul.f32 %v9269, 0.6931472
      %v9271 = vlog2.pop %v8760
      %v9272 = vmul.f32 %v9271, 0.6931472
      %v9273 = vlog2.pop %v8762
      %v9274 = vmul.f32 %v9273, 0.6931472
      %v9275 = vlog2.pop %v8764
      %v9276 = vmul.f32 %v9275, 0.6931472
      %v9277 = vlog2.pop %v8766
      %v9278 = vmul.f32 %v9277, 0.6931472
      %v9279 = vlog2.pop %v8768
      %v9280 = vmul.f32 %v9279, 0.6931472
      %v9281 = vlog2.pop %v8770
      %v9282 = vmul.f32 %v9281, 0.6931472
      %v9283 = vlog2.pop %v8772
      %v9284 = vmul.f32 %v9283, 0.6931472
      %v9285 = vlog2.pop %v8774
      %v9286 = vmul.f32 %v9285, 0.6931472
      %v9287 = vlog2.pop %v8776
      %v9288 = vmul.f32 %v9287, 0.6931472
      %v9289 = vlog2.pop %v8778
      %v9290 = vmul.f32 %v9289, 0.6931472
      %v9291 = vlog2.pop %v8780
      %v9292 = vmul.f32 %v9291, 0.6931472
      %v9293 = vlog2.pop %v8782
      %v9294 = vmul.f32 %v9293, 0.6931472
      %v9295 = vlog2.pop %v8784
      %v9296 = vmul.f32 %v9295, 0.6931472
      %v9297 = vlog2.pop %v8786
      %v9298 = vmul.f32 %v9297, 0.6931472
      %v9299 = vlog2.pop %v8788
      %v9300 = vmul.f32 %v9299, 0.6931472
      %v9301 = vlog2.pop %v8790
      %v9302 = vmul.f32 %v9301, 0.6931472
      %v9303 = vlog2.pop %v8792
      %v9304 = vmul.f32 %v9303, 0.6931472
      %v9305 = vlog2.pop %v8794
      %v9306 = vmul.f32 %v9305, 0.6931472
      %v9307 = vlog2.pop %v8796
      %v9308 = vmul.f32 %v9307, 0.6931472
      %v9309 = vlog2.pop %v8798
      %v9310 = vmul.f32 %v9309, 0.6931472
      %v9311 = vlog2.pop %v8800
      %v9312 = vmul.f32 %v9311, 0.6931472
      %v9313 = vlog2.pop %v8802
      %v9314 = vmul.f32 %v9313, 0.6931472
      %v9315 = vlog2.pop %v8804
      %v9316 = vmul.f32 %v9315, 0.6931472
      %v9317 = vlog2.pop %v8806
      %v9318 = vmul.f32 %v9317, 0.6931472
      %v9319 = vlog2.pop %v8808
      %v9320 = vmul.f32 %v9319, 0.6931472
      %v9321 = vlog2.pop %v8810
      %v9322 = vmul.f32 %v9321, 0.6931472
      %v9323 = vlog2.pop %v8812
      %v9324 = vmul.f32 %v9323, 0.6931472
      %v9325 = vlog2.pop %v8814
      %v9326 = vmul.f32 %v9325, 0.6931472
      %v9327 = vlog2.pop %v8816
      %v9328 = vmul.f32 %v9327, 0.6931472
      %v9329 = vlog2.pop %v8818
      %v9330 = vmul.f32 %v9329, 0.6931472
      %v9331 = vlog2.pop %v8820
      %v9332 = vmul.f32 %v9331, 0.6931472
      %v9333 = vlog2.pop %v8822
      %v9334 = vmul.f32 %v9333, 0.6931472
      %v9335 = vlog2.pop %v8824
      %v9336 = vmul.f32 %v9335, 0.6931472
      %v9337 = vlog2.pop %v8826
      %v9338 = vmul.f32 %v9337, 0.6931472
      %v9339 = vlog2.pop %v8828
      %v9340 = vmul.f32 %v9339, 0.6931472
      %v9341 = vlog2.pop %v8830
      %v9342 = vmul.f32 %v9341, 0.6931472
      %v9343 = vlog2.pop %v8832
      %v9344 = vmul.f32 %v9343, 0.6931472
      %v9345 = vlog2.pop %v8834
      %v9346 = vmul.f32 %v9345, 0.6931472
      %v9347 = vlog2.pop %v8836
      %v9348 = vmul.f32 %v9347, 0.6931472
      %v9349 = vlog2.pop %v8838
      %v9350 = vmul.f32 %v9349, 0.6931472
      %v9351 = vlog2.pop %v8840
      %v9352 = vmul.f32 %v9351, 0.6931472
      %v9353 = vlog2.pop %v8842
      %v9354 = vmul.f32 %v9353, 0.6931472
      %v9355 = vlog2.pop %v8844
      %v9356 = vmul.f32 %v9355, 0.6931472
      %v9357 = vlog2.pop %v8846
      %v9358 = vmul.f32 %v9357, 0.6931472
      %v9359 = vlog2.pop %v8848
      %v9360 = vmul.f32 %v9359, 0.6931472
      %v9361 = vlog2.pop %v8850
      %v9362 = vmul.f32 %v9361, 0.6931472
      %v9363 = vlog2.pop %v8852
      %v9364 = vmul.f32 %v9363, 0.6931472
      %v9365 = vlog2.pop %v8854
      %v9366 = vmul.f32 %v9365, 0.6931472
      %v9367 = vlog2.pop %v8856
      %v9368 = vmul.f32 %v9367, 0.6931472
      %v9369 = vlog2.pop %v8858
      %v9370 = vmul.f32 %v9369, 0.6931472
      %v9371 = vlog2.pop %v8860
      %v9372 = vmul.f32 %v9371, 0.6931472
      %v9373 = vlog2.pop %v8862
      %v9374 = vmul.f32 %v9373, 0.6931472
      %v9375 = vlog2.pop %v8864
      %v9376 = vmul.f32 %v9375, 0.6931472
      %v9377 = vlog2.pop %v8866
      %v9378 = vmul.f32 %v9377, 0.6931472
      %v9379 = vlog2.pop %v8868
      %v9380 = vmul.f32 %v9379, 0.6931472
      %v9381 = vlog2.pop %v8870
      %v9382 = vmul.f32 %v9381, 0.6931472
      %v9383 = vlog2.pop %v8872
      %v9384 = vmul.f32 %v9383, 0.6931472
      %v9385 = vlog2.pop %v8874
      %v9386 = vmul.f32 %v9385, 0.6931472
      %v9387 = vlog2.pop %v8876
      %v9388 = vmul.f32 %v9387, 0.6931472
      %v9389 = vlog2.pop %v8878
      %v9390 = vmul.f32 %v9389, 0.6931472
      %v9391 = vlog2.pop %v8880
      %v9392 = vmul.f32 %v9391, 0.6931472
      %v9393 = vlog2.pop %v8882
      %v9394 = vmul.f32 %v9393, 0.6931472
      %v9395 = vlog2.pop %v8884
      %v9396 = vmul.f32 %v9395, 0.6931472
      %v9397 = vlog2.pop %v8886
      %v9398 = vmul.f32 %v9397, 0.6931472
      %v9399 = vlog2.pop %v8888
      %v9400 = vmul.f32 %v9399, 0.6931472
      %v9401 = vlog2.pop %v8890
      %v9402 = vmul.f32 %v9401, 0.6931472
      %v9403 = vlog2.pop %v8892
      %v9404 = vmul.f32 %v9403, 0.6931472
      %v9405 = vlog2.pop %v8894
      %v9406 = vmul.f32 %v9405, 0.6931472
      %v9407 = vlog2.pop %v8896
      %v9408 = vmul.f32 %v9407, 0.6931472
      %v9409 = vlog2.pop %v8898
      %v9410 = vmul.f32 %v9409, 0.6931472
      %v9411 = vlog2.pop %v8900
      %v9412 = vmul.f32 %v9411, 0.6931472
      %v9413 = vlog2.pop %v8902
      %v9414 = vmul.f32 %v9413, 0.6931472
      %v9415 = vlog2.pop %v8904
      %v9416 = vmul.f32 %v9415, 0.6931472
      %v9417 = vlog2.pop %v8906
      %v9418 = vmul.f32 %v9417, 0.6931472
      %v9419 = vlog2.pop %v8908
      %v9420 = vmul.f32 %v9419, 0.6931472
      %v9421 = vlog2.pop %v8910
      %v9422 = vmul.f32 %v9421, 0.6931472
      %v9423 = vlog2.pop %v8912
      %v9424 = vmul.f32 %v9423, 0.6931472
      %v9425 = vlog2.pop %v8914
      %v9426 = vmul.f32 %v9425, 0.6931472
      %v9427 = vlog2.pop %v8916
      %v9428 = vmul.f32 %v9427, 0.6931472
      %v9429 = vlog2.pop %v8918
      %v9430 = vmul.f32 %v9429, 0.6931472
      %v9431 = vlog2.pop %v8920
      %v9432 = vmul.f32 %v9431, 0.6931472
      %v9433 = vlog2.pop %v8922
      %v9434 = vmul.f32 %v9433, 0.6931472
      %v9435 = vlog2.pop %v8924
      %v9436 = vmul.f32 %v9435, 0.6931472
      %v9437 = vlog2.pop %v8926
      %v9438 = vmul.f32 %v9437, 0.6931472
      %v9439 = vlog2.pop %v8928
      %v9440 = vmul.f32 %v9439, 0.6931472
      %v9441 = vlog2.pop %v8930
      %v9442 = vmul.f32 %v9441, 0.6931472
      %v9443 = vlog2.pop %v8932
      %v9444 = vmul.f32 %v9443, 0.6931472
      %v9445 = vlog2.pop %v8934
      %v9446 = vmul.f32 %v9445, 0.6931472
      %v9447 = vlog2.pop %v8936
      %v9448 = vmul.f32 %v9447, 0.6931472
      %v9449 = vlog2.pop %v8938
      %v9450 = vmul.f32 %v9449, 0.6931472
      %v9451 = vlog2.pop %v8940
      %v9452 = vmul.f32 %v9451, 0.6931472
      %v9453 = vlog2.pop %v8942
      %v9454 = vmul.f32 %v9453, 0.6931472
      %v9455 = vlog2.pop %v8944
      %v9456 = vmul.f32 %v9455, 0.6931472
      %v9457 = vlog2.pop %v8946
      %v9458 = vmul.f32 %v9457, 0.6931472
      %v9459 = vlog2.pop %v8948
      %v9460 = vmul.f32 %v9459, 0.6931472
      %v9461 = vlog2.pop %v8950
      %v9462 = vmul.f32 %v9461, 0.6931472
      %v9463 = vlog2.pop %v8952
      %v9464 = vmul.f32 %v9463, 0.6931472
      %v9465 = vlog2.pop %v8954
      %v9466 = vmul.f32 %v9465, 0.6931472
      %v9467 = vlog2.pop %v8956
      %v9468 = vmul.f32 %v9467, 0.6931472
      %v9469 = vlog2.pop %v8958
      %v9470 = vmul.f32 %v9469, 0.6931472
      %v9471 = vlog2.pop %v8960
      %v9472 = vmul.f32 %v9471, 0.6931472
      %v9473 = vlog2.pop %v8962
      %v9474 = vmul.f32 %v9473, 0.6931472
      %v9475 = vlog2.pop %v8964
      %v9476 = vmul.f32 %v9475, 0.6931472
      %v9477 = vlog2.pop %v8966
      %v9478 = vmul.f32 %v9477, 0.6931472
      %v9479 = vlog2.pop %v8968
      %v9480 = vmul.f32 %v9479, 0.6931472
      %v9481 = vlog2.pop %v8970
      %v9482 = vmul.f32 %v9481, 0.6931472
      %v9483 = vlog2.pop %v8972
      %v9484 = vmul.f32 %v9483, 0.6931472
      %v9485 = vlog2.pop %v8974
      %v9486 = vmul.f32 %v9485, 0.6931472
      %v9487 = vlog2.pop %v8976
      %v9488 = vmul.f32 %v9487, 0.6931472
      %v9489 = vlog2.pop %v8978
      %v9490 = vmul.f32 %v9489, 0.6931472
      %v9491 = vlog2.pop %v8980
      %v9492 = vmul.f32 %v9491, 0.6931472
      %v9493 = vlog2.pop %v8982
      %v9494 = vmul.f32 %v9493, 0.6931472
      %v9495 = vlog2.pop %v8984
      %v9496 = vmul.f32 %v9495, 0.6931472
      %v9497 = vlog2.pop %v8986
      %v9498 = vmul.f32 %v9497, 0.6931472
      %v9499 = vlog2.pop %v8988
      %v9500 = vmul.f32 %v9499, 0.6931472
      %v9501 = vlog2.pop %v8990
      %v9502 = vmul.f32 %v9501, 0.6931472
      %v9503 = vlog2.pop %v8992
      %v9504 = vmul.f32 %v9503, 0.6931472
      %v9505 = vlog2.pop %v8994
      %v9506 = vmul.f32 %v9505, 0.6931472
      %v9507 = vlog2.pop %v8996
      %v9508 = vmul.f32 %v9507, 0.6931472
      %v9509 = vlog2.pop %v8998
      %v9510 = vmul.f32 %v9509, 0.6931472
      %v9511 = vlog2.pop %v9000
      %v9512 = vmul.f32 %v9511, 0.6931472
      %v9513 = vlog2.pop %v9002
      %v9514 = vmul.f32 %v9513, 0.6931472
      %v9515 = vlog2.pop %v9004
      %v9516 = vmul.f32 %v9515, 0.6931472
      %v9517 = vlog2.pop %v9006
      %v9518 = vmul.f32 %v9517, 0.6931472
      %v9519 = vlog2.pop %v9008
      %v9520 = vmul.f32 %v9519, 0.6931472
      %v9521 = vlog2.pop %v9010
      %v9522 = vmul.f32 %v9521, 0.6931472
      %v9523 = vlog2.pop %v9012
      %v9524 = vmul.f32 %v9523, 0.6931472
      %v9525 = vlog2.pop %v9014
      %v9526 = vmul.f32 %v9525, 0.6931472
      %v9527 = vlog2.pop %v9016
      %v9528 = vmul.f32 %v9527, 0.6931472
      %v9529 = vlog2.pop %v9018
      %v9530 = vmul.f32 %v9529, 0.6931472
      %v9531 = vlog2.pop %v9020
      %v9532 = vmul.f32 %v9531, 0.6931472
      %v9533 = vlog2.pop %v9022
      %v9534 = vmul.f32 %v9533, 0.6931472
      %v9535 = vlog2.pop %v9024
      %v9536 = vmul.f32 %v9535, 0.6931472
      %v9537 = vlog2.pop %v9026
      %v9538 = vmul.f32 %v9537, 0.6931472
      %v9539 = vlog2.pop %v9028
      %v9540 = vmul.f32 %v9539, 0.6931472
      %v9541 = vlog2.pop %v9030
      %v9542 = vmul.f32 %v9541, 0.6931472
      %v9543 = vlog2.pop %v9032
      %v9544 = vmul.f32 %v9543, 0.6931472
      %v9545 = vlog2.pop %v9034
      %v9546 = vmul.f32 %v9545, 0.6931472
      %v9547 = vlog2.pop %v9036
      %v9548 = vmul.f32 %v9547, 0.6931472
      %v9549 = vlog2.pop %v9038
      %v9550 = vmul.f32 %v9549, 0.6931472
      %v9551 = vlog2.pop %v9040
      %v9552 = vmul.f32 %v9551, 0.6931472
      %v9553 = vlog2.pop %v9042
      %v9554 = vmul.f32 %v9553, 0.6931472
      %v9555 = vlog2.pop %v9044
      %v9556 = vmul.f32 %v9555, 0.6931472
      %v9557 = vlog2.pop %v9046
      %v9558 = vmul.f32 %v9557, 0.6931472
      %v9559 = vlog2.pop %v9048
      %v9560 = vmul.f32 %v9559, 0.6931472
      %v9561 = vlog2.pop %v9050
      %v9562 = vmul.f32 %v9561, 0.6931472
      %v9563 = vsub.f32 %v7771, %v9052
      %v9564 = vsub.f32 %v7772, %v9054
      %v9565 = vsub.f32 %v7773, %v9056
      %v9566 = vsub.f32 %v7774, %v9058
      %v9567 = vsub.f32 %v7775, %v9060
      %v9568 = vsub.f32 %v7776, %v9062
      %v9569 = vsub.f32 %v7777, %v9064
      %v9570 = vsub.f32 %v7778, %v9066
      %v9571 = vsub.f32 %v7779, %v9068
      %v9572 = vsub.f32 %v7780, %v9070
      %v9573 = vsub.f32 %v7781, %v9072
      %v9574 = vsub.f32 %v7782, %v9074
      %v9575 = vsub.f32 %v7783, %v9076
      %v9576 = vsub.f32 %v7784, %v9078
      %v9577 = vsub.f32 %v7785, %v9080
      %v9578 = vsub.f32 %v7786, %v9082
      %v9579 = vsub.f32 %v7787, %v9084
      %v9580 = vsub.f32 %v7788, %v9086
      %v9581 = vsub.f32 %v7789, %v9088
      %v9582 = vsub.f32 %v7790, %v9090
      %v9583 = vsub.f32 %v7791, %v9092
      %v9584 = vsub.f32 %v7792, %v9094
      %v9585 = vsub.f32 %v7793, %v9096
      %v9586 = vsub.f32 %v7794, %v9098
      %v9587 = vsub.f32 %v7795, %v9100
      %v9588 = vsub.f32 %v7796, %v9102
      %v9589 = vsub.f32 %v7797, %v9104
      %v9590 = vsub.f32 %v7798, %v9106
      %v9591 = vsub.f32 %v7799, %v9108
      %v9592 = vsub.f32 %v7800, %v9110
      %v9593 = vsub.f32 %v7801, %v9112
      %v9594 = vsub.f32 %v7802, %v9114
      %v9595 = vsub.f32 %v7803, %v9116
      %v9596 = vsub.f32 %v7804, %v9118
      %v9597 = vsub.f32 %v7805, %v9120
      %v9598 = vsub.f32 %v7806, %v9122
      %v9599 = vsub.f32 %v7807, %v9124
      %v9600 = vsub.f32 %v7808, %v9126
      %v9601 = vsub.f32 %v7809, %v9128
      %v9602 = vsub.f32 %v7810, %v9130
      %v9603 = vsub.f32 %v7811, %v9132
      %v9604 = vsub.f32 %v7812, %v9134
      %v9605 = vsub.f32 %v7813, %v9136
      %v9606 = vsub.f32 %v7814, %v9138
      %v9607 = vsub.f32 %v7815, %v9140
      %v9608 = vsub.f32 %v7816, %v9142
      %v9609 = vsub.f32 %v7817, %v9144
      %v9610 = vsub.f32 %v7818, %v9146
      %v9611 = vsub.f32 %v7819, %v9148
      %v9612 = vsub.f32 %v7820, %v9150
      %v9613 = vsub.f32 %v7821, %v9152
      %v9614 = vsub.f32 %v7822, %v9154
      %v9615 = vsub.f32 %v7823, %v9156
      %v9616 = vsub.f32 %v7824, %v9158
      %v9617 = vsub.f32 %v7825, %v9160
      %v9618 = vsub.f32 %v7826, %v9162
      %v9619 = vsub.f32 %v7827, %v9164
      %v9620 = vsub.f32 %v7828, %v9166
      %v9621 = vsub.f32 %v7829, %v9168
      %v9622 = vsub.f32 %v7830, %v9170
      %v9623 = vsub.f32 %v7831, %v9172
      %v9624 = vsub.f32 %v7832, %v9174
      %v9625 = vsub.f32 %v7833, %v9176
      %v9626 = vsub.f32 %v7834, %v9178
      %v9627 = vsub.f32 %v7835, %v9180
      %v9628 = vsub.f32 %v7836, %v9182
      %v9629 = vsub.f32 %v7837, %v9184
      %v9630 = vsub.f32 %v7838, %v9186
      %v9631 = vsub.f32 %v7839, %v9188
      %v9632 = vsub.f32 %v7840, %v9190
      %v9633 = vsub.f32 %v7841, %v9192
      %v9634 = vsub.f32 %v7842, %v9194
      %v9635 = vsub.f32 %v7843, %v9196
      %v9636 = vsub.f32 %v7844, %v9198
      %v9637 = vsub.f32 %v7845, %v9200
      %v9638 = vsub.f32 %v7846, %v9202
      %v9639 = vsub.f32 %v7847, %v9204
      %v9640 = vsub.f32 %v7848, %v9206
      %v9641 = vsub.f32 %v7849, %v9208
      %v9642 = vsub.f32 %v7850, %v9210
      %v9643 = vsub.f32 %v7851, %v9212
      %v9644 = vsub.f32 %v7852, %v9214
      %v9645 = vsub.f32 %v7853, %v9216
      %v9646 = vsub.f32 %v7854, %v9218
      %v9647 = vsub.f32 %v7855, %v9220
      %v9648 = vsub.f32 %v7856, %v9222
      %v9649 = vsub.f32 %v7857, %v9224
      %v9650 = vsub.f32 %v7858, %v9226
      %v9651 = vsub.f32 %v7859, %v9228
      %v9652 = vsub.f32 %v7860, %v9230
      %v9653 = vsub.f32 %v7861, %v9232
      %v9654 = vsub.f32 %v7862, %v9234
      %v9655 = vsub.f32 %v7863, %v9236
      %v9656 = vsub.f32 %v7864, %v9238
      %v9657 = vsub.f32 %v7865, %v9240
      %v9658 = vsub.f32 %v7866, %v9242
      %v9659 = vsub.f32 %v7867, %v9244
      %v9660 = vsub.f32 %v7868, %v9246
      %v9661 = vsub.f32 %v7869, %v9248
      %v9662 = vsub.f32 %v7870, %v9250
      %v9663 = vsub.f32 %v7871, %v9252
      %v9664 = vsub.f32 %v7872, %v9254
      %v9665 = vsub.f32 %v7873, %v9256
      %v9666 = vsub.f32 %v7874, %v9258
      %v9667 = vsub.f32 %v7875, %v9260
      %v9668 = vsub.f32 %v7876, %v9262
      %v9669 = vsub.f32 %v7877, %v9264
      %v9670 = vsub.f32 %v7878, %v9266
      %v9671 = vsub.f32 %v7879, %v9268
      %v9672 = vsub.f32 %v7880, %v9270
      %v9673 = vsub.f32 %v7881, %v9272
      %v9674 = vsub.f32 %v7882, %v9274
      %v9675 = vsub.f32 %v7883, %v9276
      %v9676 = vsub.f32 %v7884, %v9278
      %v9677 = vsub.f32 %v7885, %v9280
      %v9678 = vsub.f32 %v7886, %v9282
      %v9679 = vsub.f32 %v7887, %v9284
      %v9680 = vsub.f32 %v7888, %v9286
      %v9681 = vsub.f32 %v7889, %v9288
      %v9682 = vsub.f32 %v7890, %v9290
      %v9683 = vsub.f32 %v7891, %v9292
      %v9684 = vsub.f32 %v7892, %v9294
      %v9685 = vsub.f32 %v7893, %v9296
      %v9686 = vsub.f32 %v7894, %v9298
      %v9687 = vsub.f32 %v7895, %v9300
      %v9688 = vsub.f32 %v7896, %v9302
      %v9689 = vsub.f32 %v7897, %v9304
      %v9690 = vsub.f32 %v7898, %v9306
      %v9691 = vsub.f32 %v7899, %v9308
      %v9692 = vsub.f32 %v7900, %v9310
      %v9693 = vsub.f32 %v7901, %v9312
      %v9694 = vsub.f32 %v7902, %v9314
      %v9695 = vsub.f32 %v7903, %v9316
      %v9696 = vsub.f32 %v7904, %v9318
      %v9697 = vsub.f32 %v7905, %v9320
      %v9698 = vsub.f32 %v7906, %v9322
      %v9699 = vsub.f32 %v7907, %v9324
      %v9700 = vsub.f32 %v7908, %v9326
      %v9701 = vsub.f32 %v7909, %v9328
      %v9702 = vsub.f32 %v7910, %v9330
      %v9703 = vsub.f32 %v7911, %v9332
      %v9704 = vsub.f32 %v7912, %v9334
      %v9705 = vsub.f32 %v7913, %v9336
      %v9706 = vsub.f32 %v7914, %v9338
      %v9707 = vsub.f32 %v7915, %v9340
      %v9708 = vsub.f32 %v7916, %v9342
      %v9709 = vsub.f32 %v7917, %v9344
      %v9710 = vsub.f32 %v7918, %v9346
      %v9711 = vsub.f32 %v7919, %v9348
      %v9712 = vsub.f32 %v7920, %v9350
      %v9713 = vsub.f32 %v7921, %v9352
      %v9714 = vsub.f32 %v7922, %v9354
      %v9715 = vsub.f32 %v7923, %v9356
      %v9716 = vsub.f32 %v7924, %v9358
      %v9717 = vsub.f32 %v7925, %v9360
      %v9718 = vsub.f32 %v7926, %v9362
      %v9719 = vsub.f32 %v7927, %v9364
      %v9720 = vsub.f32 %v7928, %v9366
      %v9721 = vsub.f32 %v7929, %v9368
      %v9722 = vsub.f32 %v7930, %v9370
      %v9723 = vsub.f32 %v7931, %v9372
      %v9724 = vsub.f32 %v7932, %v9374
      %v9725 = vsub.f32 %v7933, %v9376
      %v9726 = vsub.f32 %v7934, %v9378
      %v9727 = vsub.f32 %v7935, %v9380
      %v9728 = vsub.f32 %v7936, %v9382
      %v9729 = vsub.f32 %v7937, %v9384
      %v9730 = vsub.f32 %v7938, %v9386
      %v9731 = vsub.f32 %v7939, %v9388
      %v9732 = vsub.f32 %v7940, %v9390
      %v9733 = vsub.f32 %v7941, %v9392
      %v9734 = vsub.f32 %v7942, %v9394
      %v9735 = vsub.f32 %v7943, %v9396
      %v9736 = vsub.f32 %v7944, %v9398
      %v9737 = vsub.f32 %v7945, %v9400
      %v9738 = vsub.f32 %v7946, %v9402
      %v9739 = vsub.f32 %v7947, %v9404
      %v9740 = vsub.f32 %v7948, %v9406
      %v9741 = vsub.f32 %v7949, %v9408
      %v9742 = vsub.f32 %v7950, %v9410
      %v9743 = vsub.f32 %v7951, %v9412
      %v9744 = vsub.f32 %v7952, %v9414
      %v9745 = vsub.f32 %v7953, %v9416
      %v9746 = vsub.f32 %v7954, %v9418
      %v9747 = vsub.f32 %v7955, %v9420
      %v9748 = vsub.f32 %v7956, %v9422
      %v9749 = vsub.f32 %v7957, %v9424
      %v9750 = vsub.f32 %v7958, %v9426
      %v9751 = vsub.f32 %v7959, %v9428
      %v9752 = vsub.f32 %v7960, %v9430
      %v9753 = vsub.f32 %v7961, %v9432
      %v9754 = vsub.f32 %v7962, %v9434
      %v9755 = vsub.f32 %v7963, %v9436
      %v9756 = vsub.f32 %v7964, %v9438
      %v9757 = vsub.f32 %v7965, %v9440
      %v9758 = vsub.f32 %v7966, %v9442
      %v9759 = vsub.f32 %v7967, %v9444
      %v9760 = vsub.f32 %v7968, %v9446
      %v9761 = vsub.f32 %v7969, %v9448
      %v9762 = vsub.f32 %v7970, %v9450
      %v9763 = vsub.f32 %v7971, %v9452
      %v9764 = vsub.f32 %v7972, %v9454
      %v9765 = vsub.f32 %v7973, %v9456
      %v9766 = vsub.f32 %v7974, %v9458
      %v9767 = vsub.f32 %v7975, %v9460
      %v9768 = vsub.f32 %v7976, %v9462
      %v9769 = vsub.f32 %v7977, %v9464
      %v9770 = vsub.f32 %v7978, %v9466
      %v9771 = vsub.f32 %v7979, %v9468
      %v9772 = vsub.f32 %v7980, %v9470
      %v9773 = vsub.f32 %v7981, %v9472
      %v9774 = vsub.f32 %v7982, %v9474
      %v9775 = vsub.f32 %v7983, %v9476
      %v9776 = vsub.f32 %v7984, %v9478
      %v9777 = vsub.f32 %v7985, %v9480
      %v9778 = vsub.f32 %v7986, %v9482
      %v9779 = vsub.f32 %v7987, %v9484
      %v9780 = vsub.f32 %v7988, %v9486
      %v9781 = vsub.f32 %v7989, %v9488
      %v9782 = vsub.f32 %v7990, %v9490
      %v9783 = vsub.f32 %v7991, %v9492
      %v9784 = vsub.f32 %v7992, %v9494
      %v9785 = vsub.f32 %v7993, %v9496
      %v9786 = vsub.f32 %v7994, %v9498
      %v9787 = vsub.f32 %v7995, %v9500
      %v9788 = vsub.f32 %v7996, %v9502
      %v9789 = vsub.f32 %v7997, %v9504
      %v9790 = vsub.f32 %v7998, %v9506
      %v9791 = vsub.f32 %v7999, %v9508
      %v9792 = vsub.f32 %v8000, %v9510
      %v9793 = vsub.f32 %v8001, %v9512
      %v9794 = vsub.f32 %v8002, %v9514
      %v9795 = vsub.f32 %v8003, %v9516
      %v9796 = vsub.f32 %v8004, %v9518
      %v9797 = vsub.f32 %v8005, %v9520
      %v9798 = vsub.f32 %v8006, %v9522
      %v9799 = vsub.f32 %v8007, %v9524
      %v9800 = vsub.f32 %v8008, %v9526
      %v9801 = vsub.f32 %v8009, %v9528
      %v9802 = vsub.f32 %v8010, %v9530
      %v9803 = vsub.f32 %v8011, %v9532
      %v9804 = vsub.f32 %v8012, %v9534
      %v9805 = vsub.f32 %v8013, %v9536
      %v9806 = vsub.f32 %v8014, %v9538
      %v9807 = vsub.f32 %v8015, %v9540
      %v9808 = vsub.f32 %v8016, %v9542
      %v9809 = vsub.f32 %v8017, %v9544
      %v9810 = vsub.f32 %v8018, %v9546
      %v9811 = vsub.f32 %v8019, %v9548
      %v9812 = vsub.f32 %v8020, %v9550
      %v9813 = vsub.f32 %v8021, %v9552
      %v9814 = vsub.f32 %v8022, %v9554
      %v9815 = vsub.f32 %v8023, %v9556
      %v9816 = vsub.f32 %v8024, %v9558
      %v9817 = vsub.f32 %v8025, %v9560
      %v9818 = vsub.f32 %v8026, %v9562
      %vm9819 = vcmask 261120
      %9820 = vst.msk [vmem:[%s199] sm:$0xff] %vm9819, %v9563
      %9821 = vst.msk [vmem:[%s199 + $0x8] sm:$0xff] %vm9819, %v9564
      %9822 = vst.msk [vmem:[%s199 + $0x10] sm:$0xff] %vm9819, %v9565
      %9823 = vst.msk [vmem:[%s199 + $0x18] sm:$0xff] %vm9819, %v9566
      %9824 = vst.msk [vmem:[%s199 + $0x20] sm:$0xff] %vm9819, %v9567
      %9825 = vst.msk [vmem:[%s199 + $0x28] sm:$0xff] %vm9819, %v9568
      %9826 = vst.msk [vmem:[%s199 + $0x30] sm:$0xff] %vm9819, %v9569
      %9827 = vst.msk [vmem:[%s199 + $0x38] sm:$0xff] %vm9819, %v9570
      %9828 = vst.msk [vmem:[%s199 + $0x40] sm:$0xff] %vm9819, %v9571
      %9829 = vst.msk [vmem:[%s199 + $0x48] sm:$0xff] %vm9819, %v9572
      %9830 = vst.msk [vmem:[%s199 + $0x50] sm:$0xff] %vm9819, %v9573
      %9831 = vst.msk [vmem:[%s199 + $0x58] sm:$0xff] %vm9819, %v9574
      %9832 = vst.msk [vmem:[%s199 + $0x60] sm:$0xff] %vm9819, %v9575
      %9833 = vst.msk [vmem:[%s199 + $0x68] sm:$0xff] %vm9819, %v9576
      %9834 = vst.msk [vmem:[%s199 + $0x70] sm:$0xff] %vm9819, %v9577
      %9835 = vst.msk [vmem:[%s199 + $0x78] sm:$0xff] %vm9819, %v9578
      %9836 = vst.msk [vmem:[%s199 + $0x80] sm:$0xff] %vm9819, %v9579
      %9837 = vst.msk [vmem:[%s199 + $0x88] sm:$0xff] %vm9819, %v9580
      %9838 = vst.msk [vmem:[%s199 + $0x90] sm:$0xff] %vm9819, %v9581
      %9839 = vst.msk [vmem:[%s199 + $0x98] sm:$0xff] %vm9819, %v9582
      %9840 = vst.msk [vmem:[%s199 + $0xa0] sm:$0xff] %vm9819, %v9583
      %9841 = vst.msk [vmem:[%s199 + $0xa8] sm:$0xff] %vm9819, %v9584
      %9842 = vst.msk [vmem:[%s199 + $0xb0] sm:$0xff] %vm9819, %v9585
      %9843 = vst.msk [vmem:[%s199 + $0xb8] sm:$0xff] %vm9819, %v9586
      %9844 = vst.msk [vmem:[%s199 + $0xc0] sm:$0xff] %vm9819, %v9587
      %9845 = vst.msk [vmem:[%s199 + $0xc8] sm:$0xff] %vm9819, %v9588
      %9846 = vst.msk [vmem:[%s199 + $0xd0] sm:$0xff] %vm9819, %v9589
      %9847 = vst.msk [vmem:[%s199 + $0xd8] sm:$0xff] %vm9819, %v9590
      %9848 = vst.msk [vmem:[%s199 + $0xe0] sm:$0xff] %vm9819, %v9591
      %9849 = vst.msk [vmem:[%s199 + $0xe8] sm:$0xff] %vm9819, %v9592
      %9850 = vst.msk [vmem:[%s199 + $0xf0] sm:$0xff] %vm9819, %v9593
      %9851 = vst.msk [vmem:[%s199 + $0xf8] sm:$0xff] %vm9819, %v9594
      %9852 = vst.msk [vmem:[%s199 + $0x100] sm:$0xff] %vm9819, %v9595
      %9853 = vst.msk [vmem:[%s199 + $0x108] sm:$0xff] %vm9819, %v9596
      %9854 = vst.msk [vmem:[%s199 + $0x110] sm:$0xff] %vm9819, %v9597
      %9855 = vst.msk [vmem:[%s199 + $0x118] sm:$0xff] %vm9819, %v9598
      %9856 = vst.msk [vmem:[%s199 + $0x120] sm:$0xff] %vm9819, %v9599
      %9857 = vst.msk [vmem:[%s199 + $0x128] sm:$0xff] %vm9819, %v9600
      %9858 = vst.msk [vmem:[%s199 + $0x130] sm:$0xff] %vm9819, %v9601
      %9859 = vst.msk [vmem:[%s199 + $0x138] sm:$0xff] %vm9819, %v9602
      %9860 = vst.msk [vmem:[%s199 + $0x140] sm:$0xff] %vm9819, %v9603
      %9861 = vst.msk [vmem:[%s199 + $0x148] sm:$0xff] %vm9819, %v9604
      %9862 = vst.msk [vmem:[%s199 + $0x150] sm:$0xff] %vm9819, %v9605
      %9863 = vst.msk [vmem:[%s199 + $0x158] sm:$0xff] %vm9819, %v9606
      %9864 = vst.msk [vmem:[%s199 + $0x160] sm:$0xff] %vm9819, %v9607
      %9865 = vst.msk [vmem:[%s199 + $0x168] sm:$0xff] %vm9819, %v9608
      %9866 = vst.msk [vmem:[%s199 + $0x170] sm:$0xff] %vm9819, %v9609
      %9867 = vst.msk [vmem:[%s199 + $0x178] sm:$0xff] %vm9819, %v9610
      %9868 = vst.msk [vmem:[%s199 + $0x180] sm:$0xff] %vm9819, %v9611
      %9869 = vst.msk [vmem:[%s199 + $0x188] sm:$0xff] %vm9819, %v9612
      %9870 = vst.msk [vmem:[%s199 + $0x190] sm:$0xff] %vm9819, %v9613
      %9871 = vst.msk [vmem:[%s199 + $0x198] sm:$0xff] %vm9819, %v9614
      %9872 = vst.msk [vmem:[%s199 + $0x1a0] sm:$0xff] %vm9819, %v9615
      %9873 = vst.msk [vmem:[%s199 + $0x1a8] sm:$0xff] %vm9819, %v9616
      %9874 = vst.msk [vmem:[%s199 + $0x1b0] sm:$0xff] %vm9819, %v9617
      %9875 = vst.msk [vmem:[%s199 + $0x1b8] sm:$0xff] %vm9819, %v9618
      %9876 = vst.msk [vmem:[%s199 + $0x1c0] sm:$0xff] %vm9819, %v9619
      %9877 = vst.msk [vmem:[%s199 + $0x1c8] sm:$0xff] %vm9819, %v9620
      %9878 = vst.msk [vmem:[%s199 + $0x1d0] sm:$0xff] %vm9819, %v9621
      %9879 = vst.msk [vmem:[%s199 + $0x1d8] sm:$0xff] %vm9819, %v9622
      %9880 = vst.msk [vmem:[%s199 + $0x1e0] sm:$0xff] %vm9819, %v9623
      %9881 = vst.msk [vmem:[%s199 + $0x1e8] sm:$0xff] %vm9819, %v9624
      %9882 = vst.msk [vmem:[%s199 + $0x1f0] sm:$0xff] %vm9819, %v9625
      %9883 = vst.msk [vmem:[%s199 + $0x1f8] sm:$0xff] %vm9819, %v9626
      %9884 = vst.msk [vmem:[%s199 + $0x200] sm:$0xff] %vm9819, %v9627
      %9885 = vst.msk [vmem:[%s199 + $0x208] sm:$0xff] %vm9819, %v9628
      %9886 = vst.msk [vmem:[%s199 + $0x210] sm:$0xff] %vm9819, %v9629
      %9887 = vst.msk [vmem:[%s199 + $0x218] sm:$0xff] %vm9819, %v9630
      %9888 = vst.msk [vmem:[%s199 + $0x220] sm:$0xff] %vm9819, %v9631
      %9889 = vst.msk [vmem:[%s199 + $0x228] sm:$0xff] %vm9819, %v9632
      %9890 = vst.msk [vmem:[%s199 + $0x230] sm:$0xff] %vm9819, %v9633
      %9891 = vst.msk [vmem:[%s199 + $0x238] sm:$0xff] %vm9819, %v9634
      %9892 = vst.msk [vmem:[%s199 + $0x240] sm:$0xff] %vm9819, %v9635
      %9893 = vst.msk [vmem:[%s199 + $0x248] sm:$0xff] %vm9819, %v9636
      %9894 = vst.msk [vmem:[%s199 + $0x250] sm:$0xff] %vm9819, %v9637
      %9895 = vst.msk [vmem:[%s199 + $0x258] sm:$0xff] %vm9819, %v9638
      %9896 = vst.msk [vmem:[%s199 + $0x260] sm:$0xff] %vm9819, %v9639
      %9897 = vst.msk [vmem:[%s199 + $0x268] sm:$0xff] %vm9819, %v9640
      %9898 = vst.msk [vmem:[%s199 + $0x270] sm:$0xff] %vm9819, %v9641
      %9899 = vst.msk [vmem:[%s199 + $0x278] sm:$0xff] %vm9819, %v9642
      %9900 = vst.msk [vmem:[%s199 + $0x280] sm:$0xff] %vm9819, %v9643
      %9901 = vst.msk [vmem:[%s199 + $0x288] sm:$0xff] %vm9819, %v9644
      %9902 = vst.msk [vmem:[%s199 + $0x290] sm:$0xff] %vm9819, %v9645
      %9903 = vst.msk [vmem:[%s199 + $0x298] sm:$0xff] %vm9819, %v9646
      %9904 = vst.msk [vmem:[%s199 + $0x2a0] sm:$0xff] %vm9819, %v9647
      %9905 = vst.msk [vmem:[%s199 + $0x2a8] sm:$0xff] %vm9819, %v9648
      %9906 = vst.msk [vmem:[%s199 + $0x2b0] sm:$0xff] %vm9819, %v9649
      %9907 = vst.msk [vmem:[%s199 + $0x2b8] sm:$0xff] %vm9819, %v9650
      %9908 = vst.msk [vmem:[%s199 + $0x2c0] sm:$0xff] %vm9819, %v9651
      %9909 = vst.msk [vmem:[%s199 + $0x2c8] sm:$0xff] %vm9819, %v9652
      %9910 = vst.msk [vmem:[%s199 + $0x2d0] sm:$0xff] %vm9819, %v9653
      %9911 = vst.msk [vmem:[%s199 + $0x2d8] sm:$0xff] %vm9819, %v9654
      %9912 = vst.msk [vmem:[%s199 + $0x2e0] sm:$0xff] %vm9819, %v9655
      %9913 = vst.msk [vmem:[%s199 + $0x2e8] sm:$0xff] %vm9819, %v9656
      %9914 = vst.msk [vmem:[%s199 + $0x2f0] sm:$0xff] %vm9819, %v9657
      %9915 = vst.msk [vmem:[%s199 + $0x2f8] sm:$0xff] %vm9819, %v9658
      %9916 = vst.msk [vmem:[%s199 + $0x300] sm:$0xff] %vm9819, %v9659
      %9917 = vst.msk [vmem:[%s199 + $0x308] sm:$0xff] %vm9819, %v9660
      %9918 = vst.msk [vmem:[%s199 + $0x310] sm:$0xff] %vm9819, %v9661
      %9919 = vst.msk [vmem:[%s199 + $0x318] sm:$0xff] %vm9819, %v9662
      %9920 = vst.msk [vmem:[%s199 + $0x320] sm:$0xff] %vm9819, %v9663
      %9921 = vst.msk [vmem:[%s199 + $0x328] sm:$0xff] %vm9819, %v9664
      %9922 = vst.msk [vmem:[%s199 + $0x330] sm:$0xff] %vm9819, %v9665
      %9923 = vst.msk [vmem:[%s199 + $0x338] sm:$0xff] %vm9819, %v9666
      %9924 = vst.msk [vmem:[%s199 + $0x340] sm:$0xff] %vm9819, %v9667
      %9925 = vst.msk [vmem:[%s199 + $0x348] sm:$0xff] %vm9819, %v9668
      %9926 = vst.msk [vmem:[%s199 + $0x350] sm:$0xff] %vm9819, %v9669
      %9927 = vst.msk [vmem:[%s199 + $0x358] sm:$0xff] %vm9819, %v9670
      %9928 = vst.msk [vmem:[%s199 + $0x360] sm:$0xff] %vm9819, %v9671
      %9929 = vst.msk [vmem:[%s199 + $0x368] sm:$0xff] %vm9819, %v9672
      %9930 = vst.msk [vmem:[%s199 + $0x370] sm:$0xff] %vm9819, %v9673
      %9931 = vst.msk [vmem:[%s199 + $0x378] sm:$0xff] %vm9819, %v9674
      %9932 = vst.msk [vmem:[%s199 + $0x380] sm:$0xff] %vm9819, %v9675
      %9933 = vst.msk [vmem:[%s199 + $0x388] sm:$0xff] %vm9819, %v9676
      %9934 = vst.msk [vmem:[%s199 + $0x390] sm:$0xff] %vm9819, %v9677
      %9935 = vst.msk [vmem:[%s199 + $0x398] sm:$0xff] %vm9819, %v9678
      %9936 = vst.msk [vmem:[%s199 + $0x3a0] sm:$0xff] %vm9819, %v9679
      %9937 = vst.msk [vmem:[%s199 + $0x3a8] sm:$0xff] %vm9819, %v9680
      %9938 = vst.msk [vmem:[%s199 + $0x3b0] sm:$0xff] %vm9819, %v9681
      %9939 = vst.msk [vmem:[%s199 + $0x3b8] sm:$0xff] %vm9819, %v9682
      %9940 = vst.msk [vmem:[%s199 + $0x3c0] sm:$0xff] %vm9819, %v9683
      %9941 = vst.msk [vmem:[%s199 + $0x3c8] sm:$0xff] %vm9819, %v9684
      %9942 = vst.msk [vmem:[%s199 + $0x3d0] sm:$0xff] %vm9819, %v9685
      %9943 = vst.msk [vmem:[%s199 + $0x3d8] sm:$0xff] %vm9819, %v9686
      %9944 = vst.msk [vmem:[%s199 + $0x3e0] sm:$0xff] %vm9819, %v9687
      %9945 = vst.msk [vmem:[%s199 + $0x3e8] sm:$0xff] %vm9819, %v9688
      %9946 = vst.msk [vmem:[%s199 + $0x3f0] sm:$0xff] %vm9819, %v9689
      %9947 = vst.msk [vmem:[%s199 + $0x3f8] sm:$0xff] %vm9819, %v9690
      %9948 = vst.msk [vmem:[%s199 + $0x400] sm:$0xff] %vm9819, %v9691
      %9949 = vst.msk [vmem:[%s199 + $0x408] sm:$0xff] %vm9819, %v9692
      %9950 = vst.msk [vmem:[%s199 + $0x410] sm:$0xff] %vm9819, %v9693
      %9951 = vst.msk [vmem:[%s199 + $0x418] sm:$0xff] %vm9819, %v9694
      %9952 = vst.msk [vmem:[%s199 + $0x420] sm:$0xff] %vm9819, %v9695
      %9953 = vst.msk [vmem:[%s199 + $0x428] sm:$0xff] %vm9819, %v9696
      %9954 = vst.msk [vmem:[%s199 + $0x430] sm:$0xff] %vm9819, %v9697
      %9955 = vst.msk [vmem:[%s199 + $0x438] sm:$0xff] %vm9819, %v9698
      %9956 = vst.msk [vmem:[%s199 + $0x440] sm:$0xff] %vm9819, %v9699
      %9957 = vst.msk [vmem:[%s199 + $0x448] sm:$0xff] %vm9819, %v9700
      %9958 = vst.msk [vmem:[%s199 + $0x450] sm:$0xff] %vm9819, %v9701
      %9959 = vst.msk [vmem:[%s199 + $0x458] sm:$0xff] %vm9819, %v9702
      %9960 = vst.msk [vmem:[%s199 + $0x460] sm:$0xff] %vm9819, %v9703
      %9961 = vst.msk [vmem:[%s199 + $0x468] sm:$0xff] %vm9819, %v9704
      %9962 = vst.msk [vmem:[%s199 + $0x470] sm:$0xff] %vm9819, %v9705
      %9963 = vst.msk [vmem:[%s199 + $0x478] sm:$0xff] %vm9819, %v9706
      %9964 = vst.msk [vmem:[%s199 + $0x480] sm:$0xff] %vm9819, %v9707
      %9965 = vst.msk [vmem:[%s199 + $0x488] sm:$0xff] %vm9819, %v9708
      %9966 = vst.msk [vmem:[%s199 + $0x490] sm:$0xff] %vm9819, %v9709
      %9967 = vst.msk [vmem:[%s199 + $0x498] sm:$0xff] %vm9819, %v9710
      %9968 = vst.msk [vmem:[%s199 + $0x4a0] sm:$0xff] %vm9819, %v9711
      %9969 = vst.msk [vmem:[%s199 + $0x4a8] sm:$0xff] %vm9819, %v9712
      %9970 = vst.msk [vmem:[%s199 + $0x4b0] sm:$0xff] %vm9819, %v9713
      %9971 = vst.msk [vmem:[%s199 + $0x4b8] sm:$0xff] %vm9819, %v9714
      %9972 = vst.msk [vmem:[%s199 + $0x4c0] sm:$0xff] %vm9819, %v9715
      %9973 = vst.msk [vmem:[%s199 + $0x4c8] sm:$0xff] %vm9819, %v9716
      %9974 = vst.msk [vmem:[%s199 + $0x4d0] sm:$0xff] %vm9819, %v9717
      %9975 = vst.msk [vmem:[%s199 + $0x4d8] sm:$0xff] %vm9819, %v9718
      %9976 = vst.msk [vmem:[%s199 + $0x4e0] sm:$0xff] %vm9819, %v9719
      %9977 = vst.msk [vmem:[%s199 + $0x4e8] sm:$0xff] %vm9819, %v9720
      %9978 = vst.msk [vmem:[%s199 + $0x4f0] sm:$0xff] %vm9819, %v9721
      %9979 = vst.msk [vmem:[%s199 + $0x4f8] sm:$0xff] %vm9819, %v9722
      %9980 = vst.msk [vmem:[%s199 + $0x500] sm:$0xff] %vm9819, %v9723
      %9981 = vst.msk [vmem:[%s199 + $0x508] sm:$0xff] %vm9819, %v9724
      %9982 = vst.msk [vmem:[%s199 + $0x510] sm:$0xff] %vm9819, %v9725
      %9983 = vst.msk [vmem:[%s199 + $0x518] sm:$0xff] %vm9819, %v9726
      %9984 = vst.msk [vmem:[%s199 + $0x520] sm:$0xff] %vm9819, %v9727
      %9985 = vst.msk [vmem:[%s199 + $0x528] sm:$0xff] %vm9819, %v9728
      %9986 = vst.msk [vmem:[%s199 + $0x530] sm:$0xff] %vm9819, %v9729
      %9987 = vst.msk [vmem:[%s199 + $0x538] sm:$0xff] %vm9819, %v9730
      %9988 = vst.msk [vmem:[%s199 + $0x540] sm:$0xff] %vm9819, %v9731
      %9989 = vst.msk [vmem:[%s199 + $0x548] sm:$0xff] %vm9819, %v9732
      %9990 = vst.msk [vmem:[%s199 + $0x550] sm:$0xff] %vm9819, %v9733
      %9991 = vst.msk [vmem:[%s199 + $0x558] sm:$0xff] %vm9819, %v9734
      %9992 = vst.msk [vmem:[%s199 + $0x560] sm:$0xff] %vm9819, %v9735
      %9993 = vst.msk [vmem:[%s199 + $0x568] sm:$0xff] %vm9819, %v9736
      %9994 = vst.msk [vmem:[%s199 + $0x570] sm:$0xff] %vm9819, %v9737
      %9995 = vst.msk [vmem:[%s199 + $0x578] sm:$0xff] %vm9819, %v9738
      %9996 = vst.msk [vmem:[%s199 + $0x580] sm:$0xff] %vm9819, %v9739
      %9997 = vst.msk [vmem:[%s199 + $0x588] sm:$0xff] %vm9819, %v9740
      %9998 = vst.msk [vmem:[%s199 + $0x590] sm:$0xff] %vm9819, %v9741
      %9999 = vst.msk [vmem:[%s199 + $0x598] sm:$0xff] %vm9819, %v9742
      %10000 = vst.msk [vmem:[%s199 + $0x5a0] sm:$0xff] %vm9819, %v9743
      %10001 = vst.msk [vmem:[%s199 + $0x5a8] sm:$0xff] %vm9819, %v9744
      %10002 = vst.msk [vmem:[%s199 + $0x5b0] sm:$0xff] %vm9819, %v9745
      %10003 = vst.msk [vmem:[%s199 + $0x5b8] sm:$0xff] %vm9819, %v9746
      %10004 = vst.msk [vmem:[%s199 + $0x5c0] sm:$0xff] %vm9819, %v9747
      %10005 = vst.msk [vmem:[%s199 + $0x5c8] sm:$0xff] %vm9819, %v9748
      %10006 = vst.msk [vmem:[%s199 + $0x5d0] sm:$0xff] %vm9819, %v9749
      %10007 = vst.msk [vmem:[%s199 + $0x5d8] sm:$0xff] %vm9819, %v9750
      %10008 = vst.msk [vmem:[%s199 + $0x5e0] sm:$0xff] %vm9819, %v9751
      %10009 = vst.msk [vmem:[%s199 + $0x5e8] sm:$0xff] %vm9819, %v9752
      %10010 = vst.msk [vmem:[%s199 + $0x5f0] sm:$0xff] %vm9819, %v9753
      %10011 = vst.msk [vmem:[%s199 + $0x5f8] sm:$0xff] %vm9819, %v9754
      %10012 = vst.msk [vmem:[%s199 + $0x600] sm:$0xff] %vm9819, %v9755
      %10013 = vst.msk [vmem:[%s199 + $0x608] sm:$0xff] %vm9819, %v9756
      %10014 = vst.msk [vmem:[%s199 + $0x610] sm:$0xff] %vm9819, %v9757
      %10015 = vst.msk [vmem:[%s199 + $0x618] sm:$0xff] %vm9819, %v9758
      %10016 = vst.msk [vmem:[%s199 + $0x620] sm:$0xff] %vm9819, %v9759
      %10017 = vst.msk [vmem:[%s199 + $0x628] sm:$0xff] %vm9819, %v9760
      %10018 = vst.msk [vmem:[%s199 + $0x630] sm:$0xff] %vm9819, %v9761
      %10019 = vst.msk [vmem:[%s199 + $0x638] sm:$0xff] %vm9819, %v9762
      %10020 = vst.msk [vmem:[%s199 + $0x640] sm:$0xff] %vm9819, %v9763
      %10021 = vst.msk [vmem:[%s199 + $0x648] sm:$0xff] %vm9819, %v9764
      %10022 = vst.msk [vmem:[%s199 + $0x650] sm:$0xff] %vm9819, %v9765
      %10023 = vst.msk [vmem:[%s199 + $0x658] sm:$0xff] %vm9819, %v9766
      %10024 = vst.msk [vmem:[%s199 + $0x660] sm:$0xff] %vm9819, %v9767
      %10025 = vst.msk [vmem:[%s199 + $0x668] sm:$0xff] %vm9819, %v9768
      %10026 = vst.msk [vmem:[%s199 + $0x670] sm:$0xff] %vm9819, %v9769
      %10027 = vst.msk [vmem:[%s199 + $0x678] sm:$0xff] %vm9819, %v9770
      %10028 = vst.msk [vmem:[%s199 + $0x680] sm:$0xff] %vm9819, %v9771
      %10029 = vst.msk [vmem:[%s199 + $0x688] sm:$0xff] %vm9819, %v9772
      %10030 = vst.msk [vmem:[%s199 + $0x690] sm:$0xff] %vm9819, %v9773
      %10031 = vst.msk [vmem:[%s199 + $0x698] sm:$0xff] %vm9819, %v9774
      %10032 = vst.msk [vmem:[%s199 + $0x6a0] sm:$0xff] %vm9819, %v9775
      %10033 = vst.msk [vmem:[%s199 + $0x6a8] sm:$0xff] %vm9819, %v9776
      %10034 = vst.msk [vmem:[%s199 + $0x6b0] sm:$0xff] %vm9819, %v9777
      %10035 = vst.msk [vmem:[%s199 + $0x6b8] sm:$0xff] %vm9819, %v9778
      %10036 = vst.msk [vmem:[%s199 + $0x6c0] sm:$0xff] %vm9819, %v9779
      %10037 = vst.msk [vmem:[%s199 + $0x6c8] sm:$0xff] %vm9819, %v9780
      %10038 = vst.msk [vmem:[%s199 + $0x6d0] sm:$0xff] %vm9819, %v9781
      %10039 = vst.msk [vmem:[%s199 + $0x6d8] sm:$0xff] %vm9819, %v9782
      %10040 = vst.msk [vmem:[%s199 + $0x6e0] sm:$0xff] %vm9819, %v9783
      %10041 = vst.msk [vmem:[%s199 + $0x6e8] sm:$0xff] %vm9819, %v9784
      %10042 = vst.msk [vmem:[%s199 + $0x6f0] sm:$0xff] %vm9819, %v9785
      %10043 = vst.msk [vmem:[%s199 + $0x6f8] sm:$0xff] %vm9819, %v9786
      %10044 = vst.msk [vmem:[%s199 + $0x700] sm:$0xff] %vm9819, %v9787
      %10045 = vst.msk [vmem:[%s199 + $0x708] sm:$0xff] %vm9819, %v9788
      %10046 = vst.msk [vmem:[%s199 + $0x710] sm:$0xff] %vm9819, %v9789
      %10047 = vst.msk [vmem:[%s199 + $0x718] sm:$0xff] %vm9819, %v9790
      %10048 = vst.msk [vmem:[%s199 + $0x720] sm:$0xff] %vm9819, %v9791
      %10049 = vst.msk [vmem:[%s199 + $0x728] sm:$0xff] %vm9819, %v9792
      %10050 = vst.msk [vmem:[%s199 + $0x730] sm:$0xff] %vm9819, %v9793
      %10051 = vst.msk [vmem:[%s199 + $0x738] sm:$0xff] %vm9819, %v9794
      %10052 = vst.msk [vmem:[%s199 + $0x740] sm:$0xff] %vm9819, %v9795
      %10053 = vst.msk [vmem:[%s199 + $0x748] sm:$0xff] %vm9819, %v9796
      %10054 = vst.msk [vmem:[%s199 + $0x750] sm:$0xff] %vm9819, %v9797
      %10055 = vst.msk [vmem:[%s199 + $0x758] sm:$0xff] %vm9819, %v9798
      %10056 = vst.msk [vmem:[%s199 + $0x760] sm:$0xff] %vm9819, %v9799
      %10057 = vst.msk [vmem:[%s199 + $0x768] sm:$0xff] %vm9819, %v9800
      %10058 = vst.msk [vmem:[%s199 + $0x770] sm:$0xff] %vm9819, %v9801
      %10059 = vst.msk [vmem:[%s199 + $0x778] sm:$0xff] %vm9819, %v9802
      %10060 = vst.msk [vmem:[%s199 + $0x780] sm:$0xff] %vm9819, %v9803
      %10061 = vst.msk [vmem:[%s199 + $0x788] sm:$0xff] %vm9819, %v9804
      %10062 = vst.msk [vmem:[%s199 + $0x790] sm:$0xff] %vm9819, %v9805
      %10063 = vst.msk [vmem:[%s199 + $0x798] sm:$0xff] %vm9819, %v9806
      %10064 = vst.msk [vmem:[%s199 + $0x7a0] sm:$0xff] %vm9819, %v9807
      %10065 = vst.msk [vmem:[%s199 + $0x7a8] sm:$0xff] %vm9819, %v9808
      %10066 = vst.msk [vmem:[%s199 + $0x7b0] sm:$0xff] %vm9819, %v9809
      %10067 = vst.msk [vmem:[%s199 + $0x7b8] sm:$0xff] %vm9819, %v9810
      %10068 = vst.msk [vmem:[%s199 + $0x7c0] sm:$0xff] %vm9819, %v9811
      %10069 = vst.msk [vmem:[%s199 + $0x7c8] sm:$0xff] %vm9819, %v9812
      %10070 = vst.msk [vmem:[%s199 + $0x7d0] sm:$0xff] %vm9819, %v9813
      %10071 = vst.msk [vmem:[%s199 + $0x7d8] sm:$0xff] %vm9819, %v9814
      %10072 = vst.msk [vmem:[%s199 + $0x7e0] sm:$0xff] %vm9819, %v9815
      %10073 = vst.msk [vmem:[%s199 + $0x7e8] sm:$0xff] %vm9819, %v9816
      %10074 = vst.msk [vmem:[%s199 + $0x7f0] sm:$0xff] %vm9819, %v9817
      %10075 = vst.msk [vmem:[%s199 + $0x7f8] sm:$0xff] %vm9819, %v9818
      %s10076 = smul.u32 256, %s15
      %p10077 = scmp.lt.s32.totalorder %s10076, 511
      %s10078 = scalar_select %p10077, %s10076, 511
      %s10079 = smul.addr %s10078, 8
      %s10080 = scalar_lea.vmem %s4, %s10079
      // Predicated region
      $region37: #{tpu_custom_call.1} parent=35 // pred_check
        %p10081 = pneg %p122
      $region38: #{tpu_custom_call.1} parent=35 // pred_check_branch
        %10083 = sbr.rel (%p10081) target = $region40
      $region39: #{tpu_custom_call.1} parent=35 // pred_region
        %s10084 = smul.u32 256, %s15
      $region40: #{tpu_custom_call.1} parent=35 // pred_fallthru
        _
    $region36: #{tpu_custom_call.1} parent=5 // pred_fallthru
      _
    %p10085 = scmp.le.s32.totalorder 2, %s10
    // Predicated region
    $region41: #{tpu_custom_call.1} parent=5 // pred_check
      %p10086 = pneg %p10085
    $region42: #{tpu_custom_call.1} parent=5 // pred_check_branch
      %10088 = sbr.rel (%p10086) target = $region44
    $region43: #{tpu_custom_call.1} parent=5 // pred_region
      %s10089 = ssub.s32 %s10, 2
      // Predicated region
      $region45: #{tpu_custom_call.1} parent=43 // pred_check
        %p10090 = pneg %p128
      $region46: #{tpu_custom_call.1} parent=43 // pred_check_branch
        %10092 = sbr.rel (%p10090) target = $region48
      $region47: #{tpu_custom_call.1} parent=43 // pred_region
        %s10093 = smul.u32 256, %s16
        %p10094 = scmp.lt.s32.totalorder %s10093, 511
        %s10095 = scalar_select %p10094, %s10093, 511
        %s10096 = smul.addr %s10095, 8
        %s10097 = scalar_lea.vmem %s4, %s10096
      $region48: #{tpu_custom_call.1} parent=43 // pred_fallthru
        _
    $region44: #{tpu_custom_call.1} parent=5 // pred_fallthru
      _
  $region6: #{tpu_custom_call.1} parent=0 // loop_footer
    %s14 = sadd.s32 1, %s10
  $region7: #{tpu_custom_call.1} parent=0 // loop_footer_branch
    %9 = sbr.rel target = $region3
  $region8: #{tpu_custom_call.1} parent=0 // loop_exit
    _

</llo_original>
